<compile_context>
chip_gen: v6e
topology: v6e:2x2x1
jax: 0.10.0
libtpu: 0.0.40
codegen_flags: <defaults>
</compile_context>

<pallas_src>
import functools

import jax
import jax.numpy as jnp
from jax.experimental import pallas as pl
from jax.experimental.pallas import tpu as pltpu

LANES = 128
_BN_EPS = 1e-5


def _round_up(x, m):
    return (x + m - 1) // m * m


def _vmem_limit():
    """Scoped-VMEM limit: ~3/4 of physical (96 MiB on v5e/v6e, 48 MiB on v7x)."""
    cap = 64 * 1024 * 1024
    try:
        cap = int(getattr(pltpu.get_tpu_info(), "vmem_capacity_bytes", cap))
    except Exception:
        pass
    return int(min(100 * 1024 * 1024, cap * 3 // 4))


def _pick_row_tile(h, w, cinp, coutp, budget=8 * 1024 * 1024):
    """Largest divisor of H whose per-tile VMEM footprint (halo scratch +
    im2col patch + f32 conv result + double-buffered bf16 output) stays under
    `budget`, preferring M = th*W to be a multiple of 256 (full MXU passes)."""
    def tile_bytes(t):
        return ((t + 2) * (w + 2) * cinp * 2      # halo/activation scratch (bf16)
                + t * w * 9 * cinp * 2            # im2col patch scratch (bf16)
                + t * w * coutp * 4               # f32 conv result
                + 2 * t * w * coutp * 2)          # double-buffered bf16 out tile
    divs = [t for t in range(1, h + 1) if h % t == 0 and tile_bytes(t) <= budget]
    if not divs:
        return 1
    pref = [t for t in divs if (t * w) % 256 == 0]
    return max(pref) if pref else max(divs)


def _pick_flat_tile(rows, coutp, budget=4 * 1024 * 1024):
    """Row tile for the final elementwise pass: large lane-dense blocks."""
    if rows * coutp * 6 <= budget:
        return rows
    cands = [t for t in range(8, rows, 8)
             if rows % t == 0 and t * coutp * 6 <= budget]
    return max(cands) if cands else rows


# ---------------------------------------------------------------------------
# Conv pass: fused (prev-layer BN+ReLU) + zero-halo + 3x3 conv (im2col matmul)
#            + per-(image, row-tile) BatchNorm partial statistics.
# ---------------------------------------------------------------------------
def _conv3x3_kernel(y_in_ref, scale_ref, shift_ref, w_ref,
                    y_out_ref, stats_ref, xbuf, pbuf, *, apply_act):
    # y_in_ref   : (H, W, CinP)      bf16   previous conv output (pre-BN) / input
    # scale/shift: (1, CinP)         f32    previous layer's BN scale / shift
    # w_ref      : (9*CinP, CoutP)   bf16   HWIO weights flattened for im2col
    # y_out_ref  : (TH, W, CoutP)    bf16   this layer's pre-BN conv output tile
    # stats_ref  : (2, CoutP)        f32    [tile sum, tile centered sum-of-squares]
    # xbuf       : (TH+2, W+2, CinP) bf16   activated + zero-halo'd input tile
    # pbuf       : (TH*W, 9*CinP)    bf16   im2col patch
    th, w_sp, coutp = y_out_ref.shape
    cinp = y_in_ref.shape[-1]
    r = pl.program_id(1)
    row0 = r * th

    if apply_act:
        sc = scale_ref[0]
        sh = shift_ref[0]

    def act(v):
        # Fused BN(scale/shift) + ReLU of the *previous* layer on the input path.
        if apply_act:
            v = jnp.maximum(v.astype(jnp.float32) * sc + sh, 0.0)
        return v.astype(xbuf.dtype)

    # Fused 1-pixel zero padding: clear scratch, then fill interior rows and
    # the top/bottom halo rows when they exist (image borders stay zero).
    xbuf[...] = jnp.zeros_like(xbuf)
    xbuf[pl.ds(1, th), pl.ds(1, w_sp), :] = act(y_in_ref[pl.ds(row0, th), :, :])

    @pl.when(r > 0)
    def _():
        xbuf[pl.ds(0, 1), pl.ds(1, w_sp), :] = act(
            y_in_ref[pl.ds(row0 - 1, 1), :, :])

    @pl.when(r < pl.num_programs(1) - 1)
    def _():
        xbuf[pl.ds(th + 1, 1), pl.ds(1, w_sp), :] = act(
            y_in_ref[pl.ds(row0 + th, 1), :, :])

    # im2col patch: 9 shifted lane-dense (CinP=128) views packed along K.
    for dy in range(3):
        for dx in range(3):
            k = dy * 3 + dx
            tap = xbuf[pl.ds(dy, th), pl.ds(dx, w_sp), :].reshape(th * w_sp, cinp)
            pbuf[:, pl.ds(k * cinp, cinp)] = tap

    # Single MXU contraction (K = 9*CinP), bf16 operands, f32 accumulation.
    acc = jnp.dot(pbuf[...], w_ref[...], preferred_element_type=jnp.float32)
    y_out_ref[...] = acc.reshape(th, w_sp, coutp).astype(y_out_ref.dtype)

    # Per-(image, row-tile) BN partials: sum + *centered* sum of squares (f32).
    inv_cnt = 1.0 / float(th * w_sp)
    tsum = jnp.sum(acc, axis=0, keepdims=True)
    tcss = jnp.sum((acc - tsum * inv_cnt) ** 2, axis=0, keepdims=True)
    stats_ref[0:1, :] = tsum
    stats_ref[1:2, :] = tcss


def _conv3x3_pass(y_in, scale, shift, w_mat, apply_act):
    n, h, w_sp, cinp = y_in.shape
    coutp = w_mat.shape[-1]
    th = _pick_row_tile(h, w_sp, cinp, coutp)
    n_r = h // th
    kernel = functools.partial(_conv3x3_kernel, apply_act=apply_act)
    y, stats = pl.pallas_call(
        kernel,
        out_shape=(jax.ShapeDtypeStruct((n, h, w_sp, coutp), jnp.bfloat16),
                   jax.ShapeDtypeStruct((n, n_r, 2, coutp), jnp.float32)),
        grid=(n, n_r),
        in_specs=[
            # Full image per batch index, resident across the row-tile axis
            # (re-DMA'd only when the batch index changes); the kernel slices
            # (th+2)-row halo windows out of it with pl.ds.
            pl.BlockSpec((None, h, w_sp, cinp), lambda i, r: (i, 0, 0, 0)),
            pl.BlockSpec((1, cinp), lambda i, r: (0, 0)),
            pl.BlockSpec((1, cinp), lambda i, r: (0, 0)),
            pl.BlockSpec((9 * cinp, coutp), lambda i, r: (0, 0)),
        ],
        out_specs=(
            pl.BlockSpec((None, th, w_sp, coutp), lambda i, r: (i, r, 0, 0)),
            pl.BlockSpec((None, None, 2, coutp), lambda i, r: (i, r, 0, 0)),
        ),
        scratch_shapes=[
            pltpu.VMEM((th + 2, w_sp + 2, cinp), jnp.bfloat16),
            pltpu.VMEM((th * w_sp, 9 * cinp), jnp.bfloat16),
        ],
        compiler_params=pltpu.CompilerParams(
            dimension_semantics=("parallel", "parallel"),
            vmem_limit_bytes=_vmem_limit()),
    )(y_in, scale, shift, w_mat)
    return y, stats, th


def _bn_coeffs(stats, cnt_tile, total):
    """Merge per-(image, row-tile) [sum, centered-SS] into BN scale/shift
    (batch statistics, biased variance, gamma=1 / beta=0). Numerically stable:
    total variance = (sum of within-group CSS + cnt * spread of group means)."""
    gsum = stats[:, :, 0, :]                     # (N, R, C)
    gcss = stats[:, :, 1, :]                     # (N, R, C)
    gmean = gsum / jnp.float32(cnt_tile)
    grand = jnp.sum(gsum, axis=(0, 1)) / jnp.float32(total)
    var = (jnp.sum(gcss, axis=(0, 1))
           + jnp.float32(cnt_tile) * jnp.sum((gmean - grand) ** 2, axis=(0, 1))
           ) / jnp.float32(total)
    scale = jax.lax.rsqrt(var + jnp.float32(_BN_EPS))
    shift = -grand * scale
    return scale.reshape(1, -1), shift.reshape(1, -1)


# ---------------------------------------------------------------------------
# Final pass: apply the last BN (scale/shift) + ReLU, large lane-dense blocks.
# ---------------------------------------------------------------------------
def _bn_relu_kernel(y_ref, scale_ref, shift_ref, o_ref):
    o_ref[...] = jnp.maximum(
        y_ref[...].astype(jnp.float32) * scale_ref[0] + shift_ref[0], 0.0)


def _bn_relu_pass(y_flat, scale, shift):
    rows, coutp = y_flat.shape
    tr = _pick_flat_tile(rows, coutp)
    return pl.pallas_call(
        _bn_relu_kernel,
        out_shape=jax.ShapeDtypeStruct((rows, coutp), jnp.float32),
        grid=(rows // tr,),
        in_specs=[
            pl.BlockSpec((tr, coutp), lambda i: (i, 0)),
            pl.BlockSpec((1, coutp), lambda i: (0, 0)),
            pl.BlockSpec((1, coutp), lambda i: (0, 0)),
        ],
        out_specs=pl.BlockSpec((tr, coutp), lambda i: (i, 0)),
        compiler_params=pltpu.CompilerParams(
            dimension_semantics=("parallel",),
            vmem_limit_bytes=_vmem_limit()),
    )(y_flat, scale, shift)


@jax.jit
def vgg_block(x_nchw, w1, b1, w2, b2):
    """VGGBlock forward: (conv3x3 -> BatchNorm(batch stats) -> ReLU) x 2.

    x_nchw : (N, Cin, H, W)    float32  (PyTorch layout)
    w1     : (3, 3, Cin, Cmid) float32  (PyTorch (Cmid,Cin,3,3) permuted to HWIO)
    w2     : (3, 3, Cmid, Cout) float32
    b1, b2 : conv biases -- exactly cancelled by the following BatchNorm's mean
             subtraction (batch statistics), so accepted but unused.
    """
    del b1, b2  # mathematically a no-op given BN with batch statistics follows
    n, cin, h, w_sp = x_nchw.shape
    cmid, cout = w1.shape[-1], w2.shape[-1]
    cinp = _round_up(cin, LANES)
    cmidp = _round_up(cmid, LANES)
    coutp = _round_up(cout, LANES)

    # Lane-dense channel padding (input AND output channels -> x128) so the
    # im2col K dimension and the MXU result columns are fully dense.  Padded
    # channels stay exactly zero through conv / BN / ReLU and are sliced off.
    x = jnp.transpose(x_nchw, (0, 2, 3, 1))                      # NCHW -> NHWC
    x = jnp.pad(x, ((0, 0),) * 3 + ((0, cinp - cin),)).astype(jnp.bfloat16)
    w1m = jnp.pad(w1, ((0, 0), (0, 0), (0, cinp - cin), (0, cmidp - cmid))
                  ).astype(jnp.bfloat16).reshape(9 * cinp, cmidp)
    w2m = jnp.pad(w2, ((0, 0), (0, 0), (0, cmidp - cmid), (0, coutp - cout))
                  ).astype(jnp.bfloat16).reshape(9 * cmidp, coutp)

    total = n * h * w_sp
    one = jnp.ones((1, cinp), jnp.float32)
    zero = jnp.zeros((1, cinp), jnp.float32)

    # Layer 1: conv + partial BN stats (input used as-is).
    y1, stats1, th1 = _conv3x3_pass(x, one, zero, w1m, apply_act=False)
    scale1, shift1 = _bn_coeffs(stats1, th1 * w_sp, total)

    # Layer 2: conv with layer-1's BN + ReLU fused into the input path
    # (the post-activation intermediate never touches HBM).
    y2, stats2, th2 = _conv3x3_pass(y1, scale1, shift1, w2m, apply_act=True)
    scale2, shift2 = _bn_coeffs(stats2, th2 * w_sp, total)

    # Final BN + ReLU on the last conv output.
    out = _bn_relu_pass(y2.reshape(total, coutp), scale2, shift2)
    out = out.reshape(n, h, w_sp, coutp)[..., :cout]
    return jnp.transpose(out, (0, 3, 1, 2))                      # NHWC -> NCHW


def _ref_conv_bn_relu(x_nhwc, w, b):
    """Pure-JAX f32 reference (XLA conv) for correctness checking (bias included
    to demonstrate it is cancelled by BN)."""
    y = jax.lax.conv_general_dilated(
        x_nhwc, w, window_strides=(1, 1), padding=((1, 1), (1, 1)),
        dimension_numbers=("NHWC", "HWIO", "NHWC"))
    y = y + b.reshape(1, 1, 1, -1)
    mean = jnp.mean(y, axis=(0, 1, 2), keepdims=True)
    var = jnp.mean((y - mean) ** 2, axis=(0, 1, 2), keepdims=True)
    return jnp.maximum((y - mean) / jnp.sqrt(var + _BN_EPS), 0.0)


if __name__ == "__main__":
    # VGGBlock(in=4, mid=8, out=8) on (2, 4, 16, 16).
    N, Cin, H, W = 2, 4, 16, 16
    Cmid, Cout = 8, 8

    key = jax.random.PRNGKey(0)
    kx, k1, kb1, k2, kb2 = jax.random.split(key, 5)
    x = jax.random.normal(kx, (N, Cin, H, W), jnp.float32)
    w1 = jax.random.normal(k1, (3, 3, Cin, Cmid), jnp.float32) * 0.1   # HWIO
    b1 = jax.random.normal(kb1, (Cmid,), jnp.float32) * 0.1
    w2 = jax.random.normal(k2, (3, 3, Cmid, Cout), jnp.float32) * 0.1  # HWIO
    b2 = jax.random.normal(kb2, (Cout,), jnp.float32) * 0.1

    out = jax.block_until_ready(vgg_block(x, w1, b1, w2, b2))
    assert out.shape == (N, Cout, H, W), out.shape

    # Cross-check against the pure-JAX f32 reference.  The kernel path uses
    # bf16 matmul operands and bf16 inter-layer activations (f32 accumulation
    # and statistics), so tolerances reflect bf16 through two conv+BN stages.
    xh = jnp.transpose(x, (0, 2, 3, 1))
    ref = _ref_conv_bn_relu(_ref_conv_bn_relu(xh, w1, b1), w2, b2)
    ref = jnp.transpose(ref, (0, 3, 1, 2))
    max_err = float(jnp.max(jnp.abs(out - ref)))
    mean_err = float(jnp.mean(jnp.abs(out - ref)))
    assert max_err < 1e-1 and mean_err < 3e-2, (max_err, mean_err)

    print("KERNEL_OK")
</pallas_src>

<mosaic_0001>
module attributes {stable_mosaic.version = 11 : i64} {
  func.func @_bn_relu_kernel(%arg0: i32, %arg1: memref<512x128xbf16, #tpu.memory_space<vmem>>, %arg2: memref<1x128xf32, #tpu.memory_space<vmem>>, %arg3: memref<1x128xf32, #tpu.memory_space<vmem>>, %arg4: memref<512x128xf32, #tpu.memory_space<vmem>>) attributes {dimension_semantics = [#tpu.dimension_semantics<parallel>], iteration_bounds = array<i64: 1>, scalar_prefetch = 0 : i64, scratch_operands = 0 : i64, tpu.core_type = #tpu.core_type<tc>, window_params = [{transform_indices = @transform_0, window_bounds = array<i64: 512, 128>}, {pipeline_mode = #tpu.pipeline_mode<synchronous>, transform_indices = @transform_1, window_bounds = array<i64: 1, 128>}, {pipeline_mode = #tpu.pipeline_mode<synchronous>, transform_indices = @transform_2, window_bounds = array<i64: 1, 128>}, {transform_indices = @transform_3, window_bounds = array<i64: 512, 128>}]} {
    %c0 = arith.constant 0 : index
    %c0_0 = arith.constant 0 : index
    %0 = vector.load %arg1[%c0, %c0_0] : memref<512x128xbf16, #tpu.memory_space<vmem>>, vector<512x128xbf16>
    %1 = arith.extf %0 : vector<512x128xbf16> to vector<512x128xf32>
    %c0_1 = arith.constant 0 : index
    %c0_2 = arith.constant 0 : index
    %2 = vector.load %arg2[%c0_1, %c0_2] : memref<1x128xf32, #tpu.memory_space<vmem>>, vector<1x128xf32>
    %3 = vector.shape_cast %2 : vector<1x128xf32> to vector<128xf32>
    %4 = vector.shape_cast %3 : vector<128xf32> to vector<1x128xf32>
    %5 = vector.broadcast %4 : vector<1x128xf32> to vector<512x128xf32>
    %6 = arith.mulf %1, %5 : vector<512x128xf32>
    %c0_3 = arith.constant 0 : index
    %c0_4 = arith.constant 0 : index
    %7 = vector.load %arg3[%c0_3, %c0_4] : memref<1x128xf32, #tpu.memory_space<vmem>>, vector<1x128xf32>
    %8 = vector.shape_cast %7 : vector<1x128xf32> to vector<128xf32>
    %9 = vector.shape_cast %8 : vector<128xf32> to vector<1x128xf32>
    %10 = vector.broadcast %9 : vector<1x128xf32> to vector<512x128xf32>
    %11 = arith.addf %6, %10 : vector<512x128xf32>
    %cst = arith.constant 0.000000e+00 : f32
    %12 = vector.broadcast %cst : f32 to vector<512x128xf32>
    %13 = arith.maximumf %11, %12 : vector<512x128xf32>
    %c0_5 = arith.constant 0 : index
    %c0_6 = arith.constant 0 : index
    %14 = vector.load %arg4[%c0_5, %c0_6] : memref<512x128xf32, #tpu.memory_space<vmem>>, vector<512x128xf32>
    tpu.vector_store %arg4[%c0_5, %c0_6], %13 {strides = array<i32>} : memref<512x128xf32, #tpu.memory_space<vmem>>, vector<512x128xf32>,
    return
  }
  func.func @transform_0(%arg0: i32) -> (i32, i32) {
    %c0_i32 = arith.constant 0 : i32
    %c0_i32_0 = arith.constant 0 : i32
    return %arg0, %c0_i32 : i32, i32
  }
  func.func @transform_1(%arg0: i32) -> (i32, i32) {
    %c0_i32 = arith.constant 0 : i32
    %c0_i32_0 = arith.constant 0 : i32
    %c0_i32_1 = arith.constant 0 : i32
    return %c0_i32, %c0_i32_0 : i32, i32
  }
  func.func @transform_2(%arg0: i32) -> (i32, i32) {
    %c0_i32 = arith.constant 0 : i32
    %c0_i32_0 = arith.constant 0 : i32
    %c0_i32_1 = arith.constant 0 : i32
    return %c0_i32, %c0_i32_0 : i32, i32
  }
  func.func @transform_3(%arg0: i32) -> (i32, i32) {
    %c0_i32 = arith.constant 0 : i32
    %c0_i32_0 = arith.constant 0 : i32
    return %arg0, %c0_i32 : i32, i32
  }
}

module attributes {stable_mosaic.version = 11 : i64} {
  func.func @_conv3x3_kernel(%arg0: i32, %arg1: i32, %arg2: memref<1x16x16x128xbf16, #tpu.memory_space<vmem>>, %arg3: memref<1x128xf32, #tpu.memory_space<vmem>>, %arg4: memref<1x128xf32, #tpu.memory_space<vmem>>, %arg5: memref<1152x128xbf16, #tpu.memory_space<vmem>>, %arg6: memref<1x16x16x128xbf16, #tpu.memory_space<vmem>>, %arg7: memref<1x1x2x128xf32, #tpu.memory_space<vmem>>, %arg8: memref<18x18x128xbf16, #tpu.memory_space<vmem>>, %arg9: memref<256x1152xbf16, #tpu.memory_space<vmem>>) attributes {dimension_semantics = [#tpu.dimension_semantics<parallel>, #tpu.dimension_semantics<parallel>], iteration_bounds = array<i64: 2, 1>, scalar_prefetch = 0 : i64, scratch_operands = 2 : i64, tpu.core_type = #tpu.core_type<tc>, window_params = [{transform_indices = @transform_0, window_bounds = array<i64: 1, 16, 16, 128>}, {pipeline_mode = #tpu.pipeline_mode<synchronous>, transform_indices = @transform_1, window_bounds = array<i64: 1, 128>}, {pipeline_mode = #tpu.pipeline_mode<synchronous>, transform_indices = @transform_2, window_bounds = array<i64: 1, 128>}, {pipeline_mode = #tpu.pipeline_mode<synchronous>, transform_indices = @transform_3, window_bounds = array<i64: 1152, 128>}, {transform_indices = @transform_4, window_bounds = array<i64: 1, 16, 16, 128>}, {transform_indices = @transform_5, window_bounds = array<i64: 1, 1, 2, 128>}]} {
    %c16_i32 = arith.constant 16 : i32
    %0 = arith.muli %arg1, %c16_i32 : i32
    %cst = arith.constant 0.000000e+00 : bf16
    %1 = vector.broadcast %cst : bf16 to vector<18x18x128xbf16>
    %c0 = arith.constant 0 : index
    %c0_0 = arith.constant 0 : index
    %c0_1 = arith.constant 0 : index
    %2 = vector.load %arg8[%c0, %c0_0, %c0_1] : memref<18x18x128xbf16, #tpu.memory_space<vmem>>, vector<18x18x128xbf16>
    tpu.vector_store %arg8[%c0, %c0_0, %c0_1], %1 {strides = array<i32>} : memref<18x18x128xbf16, #tpu.memory_space<vmem>>, vector<18x18x128xbf16>,
    %c0_2 = arith.constant 0 : index
    %3 = arith.index_cast %0 : i32 to index
    %c0_3 = arith.constant 0 : index
    %c0_4 = arith.constant 0 : index
    %4 = vector.load %arg2[%c0_2, %3, %c0_3, %c0_4] : memref<1x16x16x128xbf16, #tpu.memory_space<vmem>>, vector<1x16x16x128xbf16>
    %5 = vector.shape_cast %4 : vector<1x16x16x128xbf16> to vector<16x16x128xbf16>
    %c1 = arith.constant 1 : index
    %c1_5 = arith.constant 1 : index
    %c0_6 = arith.constant 0 : index
    %6 = vector.load %arg8[%c1, %c1_5, %c0_6] : memref<18x18x128xbf16, #tpu.memory_space<vmem>>, vector<16x16x128xbf16>
    tpu.vector_store %arg8[%c1, %c1_5, %c0_6], %5 {strides = array<i32>} : memref<18x18x128xbf16, #tpu.memory_space<vmem>>, vector<16x16x128xbf16>,
    %c0_i32 = arith.constant 0 : i32
    %7 = arith.cmpi sgt, %arg1, %c0_i32 : i32
    %8 = arith.extui %7 : i1 to i32
    %c0_i32_7 = arith.constant 0 : i32
    %9 = arith.cmpi ne, %8, %c0_i32_7 : i32
    scf.if %9 {
      %c1_i32 = arith.constant 1 : i32
      %63 = arith.subi %0, %c1_i32 : i32
      %c0_66 = arith.constant 0 : index
      %64 = arith.index_cast %63 : i32 to index
      %c0_67 = arith.constant 0 : index
      %c0_68 = arith.constant 0 : index
      %65 = vector.load %arg2[%c0_66, %64, %c0_67, %c0_68] : memref<1x16x16x128xbf16, #tpu.memory_space<vmem>>, vector<1x1x16x128xbf16>
      %66 = vector.shape_cast %65 : vector<1x1x16x128xbf16> to vector<1x16x128xbf16>
      %c0_69 = arith.constant 0 : index
      %c1_70 = arith.constant 1 : index
      %c0_71 = arith.constant 0 : index
      %67 = vector.load %arg8[%c0_69, %c1_70, %c0_71] : memref<18x18x128xbf16, #tpu.memory_space<vmem>>, vector<1x16x128xbf16>
      tpu.vector_store %arg8[%c0_69, %c1_70, %c0_71], %66 {strides = array<i32>} : memref<18x18x128xbf16, #tpu.memory_space<vmem>>, vector<1x16x128xbf16>,
    } else {
    }
    %c0_i32_8 = arith.constant 0 : i32
    %10 = arith.cmpi slt, %arg1, %c0_i32_8 : i32
    %11 = arith.extui %10 : i1 to i32
    %c0_i32_9 = arith.constant 0 : i32
    %12 = arith.cmpi ne, %11, %c0_i32_9 : i32
    scf.if %12 {
      %c16_i32_66 = arith.constant 16 : i32
      %63 = arith.addi %0, %c16_i32_66 : i32
      %c0_67 = arith.constant 0 : index
      %64 = arith.index_cast %63 : i32 to index
      %c0_68 = arith.constant 0 : index
      %c0_69 = arith.constant 0 : index
      %65 = vector.load %arg2[%c0_67, %64, %c0_68, %c0_69] : memref<1x16x16x128xbf16, #tpu.memory_space<vmem>>, vector<1x1x16x128xbf16>
      %66 = vector.shape_cast %65 : vector<1x1x16x128xbf16> to vector<1x16x128xbf16>
      %c17 = arith.constant 17 : index
      %c1_70 = arith.constant 1 : index
      %c0_71 = arith.constant 0 : index
      %67 = vector.load %arg8[%c17, %c1_70, %c0_71] : memref<18x18x128xbf16, #tpu.memory_space<vmem>>, vector<1x16x128xbf16>
      tpu.vector_store %arg8[%c17, %c1_70, %c0_71], %66 {strides = array<i32>} : memref<18x18x128xbf16, #tpu.memory_space<vmem>>, vector<1x16x128xbf16>,
    } else {
    }
    %c0_10 = arith.constant 0 : index
    %c0_11 = arith.constant 0 : index
    %c0_12 = arith.constant 0 : index
    %13 = vector.load %arg8[%c0_10, %c0_11, %c0_12] : memref<18x18x128xbf16, #tpu.memory_space<vmem>>, vector<16x16x128xbf16>
    %14 = vector.shape_cast %13 : vector<16x16x128xbf16> to vector<256x128xbf16>
    %c0_13 = arith.constant 0 : index
    %c0_14 = arith.constant 0 : index
    %15 = vector.load %arg9[%c0_13, %c0_14] : memref<256x1152xbf16, #tpu.memory_space<vmem>>, vector<256x128xbf16>
    tpu.vector_store %arg9[%c0_13, %c0_14], %14 {strides = array<i32>} : memref<256x1152xbf16, #tpu.memory_space<vmem>>, vector<256x128xbf16>,
    %c0_15 = arith.constant 0 : index
    %c1_16 = arith.constant 1 : index
    %c0_17 = arith.constant 0 : index
    %16 = vector.load %arg8[%c0_15, %c1_16, %c0_17] : memref<18x18x128xbf16, #tpu.memory_space<vmem>>, vector<16x16x128xbf16>
    %17 = vector.shape_cast %16 : vector<16x16x128xbf16> to vector<256x128xbf16>
    %c0_18 = arith.constant 0 : index
    %c128 = arith.constant 128 : index
    %18 = vector.load %arg9[%c0_18, %c128] : memref<256x1152xbf16, #tpu.memory_space<vmem>>, vector<256x128xbf16>
    tpu.vector_store %arg9[%c0_18, %c128], %17 {strides = array<i32>} : memref<256x1152xbf16, #tpu.memory_space<vmem>>, vector<256x128xbf16>,
    %c0_19 = arith.constant 0 : index
    %c2 = arith.constant 2 : index
    %c0_20 = arith.constant 0 : index
    %19 = vector.load %arg8[%c0_19, %c2, %c0_20] : memref<18x18x128xbf16, #tpu.memory_space<vmem>>, vector<16x16x128xbf16>
    %20 = vector.shape_cast %19 : vector<16x16x128xbf16> to vector<256x128xbf16>
    %c0_21 = arith.constant 0 : index
    %c256 = arith.constant 256 : index
    %21 = vector.load %arg9[%c0_21, %c256] : memref<256x1152xbf16, #tpu.memory_space<vmem>>, vector<256x128xbf16>
    tpu.vector_store %arg9[%c0_21, %c256], %20 {strides = array<i32>} : memref<256x1152xbf16, #tpu.memory_space<vmem>>, vector<256x128xbf16>,
    %c1_22 = arith.constant 1 : index
    %c0_23 = arith.constant 0 : index
    %c0_24 = arith.constant 0 : index
    %22 = vector.load %arg8[%c1_22, %c0_23, %c0_24] : memref<18x18x128xbf16, #tpu.memory_space<vmem>>, vector<16x16x128xbf16>
    %23 = vector.shape_cast %22 : vector<16x16x128xbf16> to vector<256x128xbf16>
    %c0_25 = arith.constant 0 : index
    %c384 = arith.constant 384 : index
    %24 = vector.load %arg9[%c0_25, %c384] : memref<256x1152xbf16, #tpu.memory_space<vmem>>, vector<256x128xbf16>
    tpu.vector_store %arg9[%c0_25, %c384], %23 {strides = array<i32>} : memref<256x1152xbf16, #tpu.memory_space<vmem>>, vector<256x128xbf16>,
    %c1_26 = arith.constant 1 : index
    %c1_27 = arith.constant 1 : index
    %c0_28 = arith.constant 0 : index
    %25 = vector.load %arg8[%c1_26, %c1_27, %c0_28] : memref<18x18x128xbf16, #tpu.memory_space<vmem>>, vector<16x16x128xbf16>
    %26 = vector.shape_cast %25 : vector<16x16x128xbf16> to vector<256x128xbf16>
    %c0_29 = arith.constant 0 : index
    %c512 = arith.constant 512 : index
    %27 = vector.load %arg9[%c0_29, %c512] : memref<256x1152xbf16, #tpu.memory_space<vmem>>, vector<256x128xbf16>
    tpu.vector_store %arg9[%c0_29, %c512], %26 {strides = array<i32>} : memref<256x1152xbf16, #tpu.memory_space<vmem>>, vector<256x128xbf16>,
    %c1_30 = arith.constant 1 : index
    %c2_31 = arith.constant 2 : index
    %c0_32 = arith.constant 0 : index
    %28 = vector.load %arg8[%c1_30, %c2_31, %c0_32] : memref<18x18x128xbf16, #tpu.memory_space<vmem>>, vector<16x16x128xbf16>
    %29 = vector.shape_cast %28 : vector<16x16x128xbf16> to vector<256x128xbf16>
    %c0_33 = arith.constant 0 : index
    %c640 = arith.constant 640 : index
    %30 = vector.load %arg9[%c0_33, %c640] : memref<256x1152xbf16, #tpu.memory_space<vmem>>, vector<256x128xbf16>
    tpu.vector_store %arg9[%c0_33, %c640], %29 {strides = array<i32>} : memref<256x1152xbf16, #tpu.memory_space<vmem>>, vector<256x128xbf16>,
    %c2_34 = arith.constant 2 : index
    %c0_35 = arith.constant 0 : index
    %c0_36 = arith.constant 0 : index
    %31 = vector.load %arg8[%c2_34, %c0_35, %c0_36] : memref<18x18x128xbf16, #tpu.memory_space<vmem>>, vector<16x16x128xbf16>
    %32 = vector.shape_cast %31 : vector<16x16x128xbf16> to vector<256x128xbf16>
    %c0_37 = arith.constant 0 : index
    %c768 = arith.constant 768 : index
    %33 = vector.load %arg9[%c0_37, %c768] : memref<256x1152xbf16, #tpu.memory_space<vmem>>, vector<256x128xbf16>
    tpu.vector_store %arg9[%c0_37, %c768], %32 {strides = array<i32>} : memref<256x1152xbf16, #tpu.memory_space<vmem>>, vector<256x128xbf16>,
    %c2_38 = arith.constant 2 : index
    %c1_39 = arith.constant 1 : index
    %c0_40 = arith.constant 0 : index
    %34 = vector.load %arg8[%c2_38, %c1_39, %c0_40] : memref<18x18x128xbf16, #tpu.memory_space<vmem>>, vector<16x16x128xbf16>
    %35 = vector.shape_cast %34 : vector<16x16x128xbf16> to vector<256x128xbf16>
    %c0_41 = arith.constant 0 : index
    %c896 = arith.constant 896 : index
    %36 = vector.load %arg9[%c0_41, %c896] : memref<256x1152xbf16, #tpu.memory_space<vmem>>, vector<256x128xbf16>
    tpu.vector_store %arg9[%c0_41, %c896], %35 {strides = array<i32>} : memref<256x1152xbf16, #tpu.memory_space<vmem>>, vector<256x128xbf16>,
    %c2_42 = arith.constant 2 : index
    %c2_43 = arith.constant 2 : index
    %c0_44 = arith.constant 0 : index
    %37 = vector.load %arg8[%c2_42, %c2_43, %c0_44] : memref<18x18x128xbf16, #tpu.memory_space<vmem>>, vector<16x16x128xbf16>
    %38 = vector.shape_cast %37 : vector<16x16x128xbf16> to vector<256x128xbf16>
    %c0_45 = arith.constant 0 : index
    %c1024 = arith.constant 1024 : index
    %39 = vector.load %arg9[%c0_45, %c1024] : memref<256x1152xbf16, #tpu.memory_space<vmem>>, vector<256x128xbf16>
    tpu.vector_store %arg9[%c0_45, %c1024], %38 {strides = array<i32>} : memref<256x1152xbf16, #tpu.memory_space<vmem>>, vector<256x128xbf16>,
    %c0_46 = arith.constant 0 : index
    %c0_47 = arith.constant 0 : index
    %40 = vector.load %arg9[%c0_46, %c0_47] : memref<256x1152xbf16, #tpu.memory_space<vmem>>, vector<256x1152xbf16>
    %c0_48 = arith.constant 0 : index
    %c0_49 = arith.constant 0 : index
    %41 = vector.load %arg5[%c0_48, %c0_49] : memref<1152x128xbf16, #tpu.memory_space<vmem>>, vector<1152x128xbf16>
    %cst_50 = arith.constant dense<0.000000e+00> : vector<256x128xf32>
    %42 = tpu.matmul %40, %41, %cst_50 {dimension_numbers = #tpu.dot_dimension_numbers<[1], [0], [0], [1], [0, 0, 1, 1], [], []>} : vector<256x1152xbf16>, vector<1152x128xbf16>, vector<256x128xf32> -> vector<256x128xf32>
    %43 = vector.shape_cast %42 : vector<256x128xf32> to vector<16x16x128xf32>
    %44 = arith.truncf %43 : vector<16x16x128xf32> to vector<16x16x128xbf16>
    %c0_51 = arith.constant 0 : index
    %c0_52 = arith.constant 0 : index
    %c0_53 = arith.constant 0 : index
    %c0_54 = arith.constant 0 : index
    %45 = vector.load %arg6[%c0_51, %c0_52, %c0_53, %c0_54] : memref<1x16x16x128xbf16, #tpu.memory_space<vmem>>, vector<1x16x16x128xbf16>
    %46 = vector.shape_cast %45 : vector<1x16x16x128xbf16> to vector<16x16x128xbf16>
    %47 = vector.shape_cast %44 : vector<16x16x128xbf16> to vector<1x16x16x128xbf16>
    tpu.vector_store %arg6[%c0_51, %c0_52, %c0_53, %c0_54], %47 {strides = array<i32>} : memref<1x16x16x128xbf16, #tpu.memory_space<vmem>>, vector<1x16x16x128xbf16>,
    %cst_55 = arith.constant dense<0.000000e+00> : vector<128xf32>
    %48 = vector.multi_reduction <add>, %42, %cst_55 [0] : vector<256x128xf32> to vector<128xf32>
    %49 = vector.shape_cast %48 : vector<128xf32> to vector<1x128xf32>
    %cst_56 = arith.constant 3.906250e-03 : f32
    %50 = vector.broadcast %cst_56 : f32 to vector<1x128xf32>
    %51 = arith.mulf %49, %50 : vector<1x128xf32>
    %52 = vector.broadcast %51 : vector<1x128xf32> to vector<256x128xf32>
    %53 = arith.subf %42, %52 : vector<256x128xf32>
    %54 = arith.mulf %53, %53 : vector<256x128xf32>
    %cst_57 = arith.constant dense<0.000000e+00> : vector<128xf32>
    %55 = vector.multi_reduction <add>, %54, %cst_57 [0] : vector<256x128xf32> to vector<128xf32>
    %56 = vector.shape_cast %55 : vector<128xf32> to vector<1x128xf32>
    %c0_58 = arith.constant 0 : index
    %c0_59 = arith.constant 0 : index
    %c0_60 = arith.constant 0 : index
    %c0_61 = arith.constant 0 : index
    %57 = vector.load %arg7[%c0_58, %c0_59, %c0_60, %c0_61] : memref<1x1x2x128xf32, #tpu.memory_space<vmem>>, vector<1x1x1x128xf32>
    %58 = vector.shape_cast %57 : vector<1x1x1x128xf32> to vector<1x128xf32>
    %59 = vector.shape_cast %49 : vector<1x128xf32> to vector<1x1x1x128xf32>
    tpu.vector_store %arg7[%c0_58, %c0_59, %c0_60, %c0_61], %59 {strides = array<i32>} : memref<1x1x2x128xf32, #tpu.memory_space<vmem>>, vector<1x1x1x128xf32>,
    %c0_62 = arith.constant 0 : index
    %c0_63 = arith.constant 0 : index
    %c1_64 = arith.constant 1 : index
    %c0_65 = arith.constant 0 : index
    %60 = vector.load %arg7[%c0_62, %c0_63, %c1_64, %c0_65] : memref<1x1x2x128xf32, #tpu.memory_space<vmem>>, vector<1x1x1x128xf32>
    %61 = vector.shape_cast %60 : vector<1x1x1x128xf32> to vector<1x128xf32>
    %62 = vector.shape_cast %56 : vector<1x128xf32> to vector<1x1x1x128xf32>
    tpu.vector_store %arg7[%c0_62, %c0_63, %c1_64, %c0_65], %62 {strides = array<i32>} : memref<1x1x2x128xf32, #tpu.memory_space<vmem>>, vector<1x1x1x128xf32>,
    return
  }
  func.func @transform_0(%arg0: i32, %arg1: i32) -> (i32, i32, i32, i32) {
    %c0_i32 = arith.constant 0 : i32
    %c0_i32_0 = arith.constant 0 : i32
    %c0_i32_1 = arith.constant 0 : i32
    %c0_i32_2 = arith.constant 0 : i32
    return %arg0, %c0_i32, %c0_i32_0, %c0_i32_1 : i32, i32, i32, i32
  }
  func.func @transform_1(%arg0: i32, %arg1: i32) -> (i32, i32) {
    %c0_i32 = arith.constant 0 : i32
    %c0_i32_0 = arith.constant 0 : i32
    %c0_i32_1 = arith.constant 0 : i32
    return %c0_i32, %c0_i32_0 : i32, i32
  }
  func.func @transform_2(%arg0: i32, %arg1: i32) -> (i32, i32) {
    %c0_i32 = arith.constant 0 : i32
    %c0_i32_0 = arith.constant 0 : i32
    %c0_i32_1 = arith.constant 0 : i32
    return %c0_i32, %c0_i32_0 : i32, i32
  }
  func.func @transform_3(%arg0: i32, %arg1: i32) -> (i32, i32) {
    %c0_i32 = arith.constant 0 : i32
    %c0_i32_0 = arith.constant 0 : i32
    %c0_i32_1 = arith.constant 0 : i32
    return %c0_i32, %c0_i32_0 : i32, i32
  }
  func.func @transform_4(%arg0: i32, %arg1: i32) -> (i32, i32, i32, i32) {
    %c0_i32 = arith.constant 0 : i32
    %c0_i32_0 = arith.constant 0 : i32
    %c0_i32_1 = arith.constant 0 : i32
    return %arg0, %arg1, %c0_i32, %c0_i32_0 : i32, i32, i32, i32
  }
  func.func @transform_5(%arg0: i32, %arg1: i32) -> (i32, i32, i32, i32) {
    %c0_i32 = arith.constant 0 : i32
    %c0_i32_0 = arith.constant 0 : i32
    %c0_i32_1 = arith.constant 0 : i32
    return %arg0, %arg1, %c0_i32, %c0_i32_0 : i32, i32, i32, i32
  }
}

module attributes {stable_mosaic.version = 11 : i64} {
  func.func @_conv3x3_kernel(%arg0: i32, %arg1: i32, %arg2: memref<1x16x16x128xbf16, #tpu.memory_space<vmem>>, %arg3: memref<1x128xf32, #tpu.memory_space<vmem>>, %arg4: memref<1x128xf32, #tpu.memory_space<vmem>>, %arg5: memref<1152x128xbf16, #tpu.memory_space<vmem>>, %arg6: memref<1x16x16x128xbf16, #tpu.memory_space<vmem>>, %arg7: memref<1x1x2x128xf32, #tpu.memory_space<vmem>>, %arg8: memref<18x18x128xbf16, #tpu.memory_space<vmem>>, %arg9: memref<256x1152xbf16, #tpu.memory_space<vmem>>) attributes {dimension_semantics = [#tpu.dimension_semantics<parallel>, #tpu.dimension_semantics<parallel>], iteration_bounds = array<i64: 2, 1>, scalar_prefetch = 0 : i64, scratch_operands = 2 : i64, tpu.core_type = #tpu.core_type<tc>, window_params = [{transform_indices = @transform_0, window_bounds = array<i64: 1, 16, 16, 128>}, {pipeline_mode = #tpu.pipeline_mode<synchronous>, transform_indices = @transform_1, window_bounds = array<i64: 1, 128>}, {pipeline_mode = #tpu.pipeline_mode<synchronous>, transform_indices = @transform_2, window_bounds = array<i64: 1, 128>}, {pipeline_mode = #tpu.pipeline_mode<synchronous>, transform_indices = @transform_3, window_bounds = array<i64: 1152, 128>}, {transform_indices = @transform_4, window_bounds = array<i64: 1, 16, 16, 128>}, {transform_indices = @transform_5, window_bounds = array<i64: 1, 1, 2, 128>}]} {
    %c16_i32 = arith.constant 16 : i32
    %0 = arith.muli %arg1, %c16_i32 : i32
    %c0 = arith.constant 0 : index
    %c0_0 = arith.constant 0 : index
    %1 = vector.load %arg3[%c0, %c0_0] : memref<1x128xf32, #tpu.memory_space<vmem>>, vector<1x128xf32>
    %2 = vector.shape_cast %1 : vector<1x128xf32> to vector<128xf32>
    %c0_1 = arith.constant 0 : index
    %c0_2 = arith.constant 0 : index
    %3 = vector.load %arg4[%c0_1, %c0_2] : memref<1x128xf32, #tpu.memory_space<vmem>>, vector<1x128xf32>
    %4 = vector.shape_cast %3 : vector<1x128xf32> to vector<128xf32>
    %cst = arith.constant 0.000000e+00 : bf16
    %5 = vector.broadcast %cst : bf16 to vector<18x18x128xbf16>
    %c0_3 = arith.constant 0 : index
    %c0_4 = arith.constant 0 : index
    %c0_5 = arith.constant 0 : index
    %6 = vector.load %arg8[%c0_3, %c0_4, %c0_5] : memref<18x18x128xbf16, #tpu.memory_space<vmem>>, vector<18x18x128xbf16>
    tpu.vector_store %arg8[%c0_3, %c0_4, %c0_5], %5 {strides = array<i32>} : memref<18x18x128xbf16, #tpu.memory_space<vmem>>, vector<18x18x128xbf16>,
    %c0_6 = arith.constant 0 : index
    %7 = arith.index_cast %0 : i32 to index
    %c0_7 = arith.constant 0 : index
    %c0_8 = arith.constant 0 : index
    %8 = vector.load %arg2[%c0_6, %7, %c0_7, %c0_8] : memref<1x16x16x128xbf16, #tpu.memory_space<vmem>>, vector<1x16x16x128xbf16>
    %9 = vector.shape_cast %8 : vector<1x16x16x128xbf16> to vector<16x16x128xbf16>
    %10 = arith.extf %9 : vector<16x16x128xbf16> to vector<16x16x128xf32>
    %11 = vector.shape_cast %2 : vector<128xf32> to vector<1x1x128xf32>
    %12 = vector.broadcast %11 : vector<1x1x128xf32> to vector<16x16x128xf32>
    %13 = arith.mulf %10, %12 : vector<16x16x128xf32>
    %14 = vector.shape_cast %4 : vector<128xf32> to vector<1x1x128xf32>
    %15 = vector.broadcast %14 : vector<1x1x128xf32> to vector<16x16x128xf32>
    %16 = arith.addf %13, %15 : vector<16x16x128xf32>
    %cst_9 = arith.constant 0.000000e+00 : f32
    %17 = vector.broadcast %cst_9 : f32 to vector<16x16x128xf32>
    %18 = arith.maximumf %16, %17 : vector<16x16x128xf32>
    %19 = arith.truncf %18 : vector<16x16x128xf32> to vector<16x16x128xbf16>
    %c1 = arith.constant 1 : index
    %c1_10 = arith.constant 1 : index
    %c0_11 = arith.constant 0 : index
    %20 = vector.load %arg8[%c1, %c1_10, %c0_11] : memref<18x18x128xbf16, #tpu.memory_space<vmem>>, vector<16x16x128xbf16>
    tpu.vector_store %arg8[%c1, %c1_10, %c0_11], %19 {strides = array<i32>} : memref<18x18x128xbf16, #tpu.memory_space<vmem>>, vector<16x16x128xbf16>,
    %c0_i32 = arith.constant 0 : i32
    %21 = arith.cmpi sgt, %arg1, %c0_i32 : i32
    %22 = arith.extui %21 : i1 to i32
    %c0_i32_12 = arith.constant 0 : i32
    %23 = arith.cmpi ne, %22, %c0_i32_12 : i32
    scf.if %23 {
      %c1_i32 = arith.constant 1 : i32
      %77 = arith.subi %0, %c1_i32 : i32
      %c0_71 = arith.constant 0 : index
      %78 = arith.index_cast %77 : i32 to index
      %c0_72 = arith.constant 0 : index
      %c0_73 = arith.constant 0 : index
      %79 = vector.load %arg2[%c0_71, %78, %c0_72, %c0_73] : memref<1x16x16x128xbf16, #tpu.memory_space<vmem>>, vector<1x1x16x128xbf16>
      %80 = vector.shape_cast %79 : vector<1x1x16x128xbf16> to vector<1x16x128xbf16>
      %81 = arith.extf %80 : vector<1x16x128xbf16> to vector<1x16x128xf32>
      %82 = vector.shape_cast %2 : vector<128xf32> to vector<1x1x128xf32>
      %83 = vector.broadcast %82 : vector<1x1x128xf32> to vector<1x16x128xf32>
      %84 = arith.mulf %81, %83 : vector<1x16x128xf32>
      %85 = vector.shape_cast %4 : vector<128xf32> to vector<1x1x128xf32>
      %86 = vector.broadcast %85 : vector<1x1x128xf32> to vector<1x16x128xf32>
      %87 = arith.addf %84, %86 : vector<1x16x128xf32>
      %cst_74 = arith.constant 0.000000e+00 : f32
      %88 = vector.broadcast %cst_74 : f32 to vector<1x16x128xf32>
      %89 = arith.maximumf %87, %88 : vector<1x16x128xf32>
      %90 = arith.truncf %89 : vector<1x16x128xf32> to vector<1x16x128xbf16>
      %c0_75 = arith.constant 0 : index
      %c1_76 = arith.constant 1 : index
      %c0_77 = arith.constant 0 : index
      %91 = vector.load %arg8[%c0_75, %c1_76, %c0_77] : memref<18x18x128xbf16, #tpu.memory_space<vmem>>, vector<1x16x128xbf16>
      tpu.vector_store %arg8[%c0_75, %c1_76, %c0_77], %90 {strides = array<i32>} : memref<18x18x128xbf16, #tpu.memory_space<vmem>>, vector<1x16x128xbf16>,
    } else {
    }
    %c0_i32_13 = arith.constant 0 : i32
    %24 = arith.cmpi slt, %arg1, %c0_i32_13 : i32
    %25 = arith.extui %24 : i1 to i32
    %c0_i32_14 = arith.constant 0 : i32
    %26 = arith.cmpi ne, %25, %c0_i32_14 : i32
    scf.if %26 {
      %c16_i32_71 = arith.constant 16 : i32
      %77 = arith.addi %0, %c16_i32_71 : i32
      %c0_72 = arith.constant 0 : index
      %78 = arith.index_cast %77 : i32 to index
      %c0_73 = arith.constant 0 : index
      %c0_74 = arith.constant 0 : index
      %79 = vector.load %arg2[%c0_72, %78, %c0_73, %c0_74] : memref<1x16x16x128xbf16, #tpu.memory_space<vmem>>, vector<1x1x16x128xbf16>
      %80 = vector.shape_cast %79 : vector<1x1x16x128xbf16> to vector<1x16x128xbf16>
      %81 = arith.extf %80 : vector<1x16x128xbf16> to vector<1x16x128xf32>
      %82 = vector.shape_cast %2 : vector<128xf32> to vector<1x1x128xf32>
      %83 = vector.broadcast %82 : vector<1x1x128xf32> to vector<1x16x128xf32>
      %84 = arith.mulf %81, %83 : vector<1x16x128xf32>
      %85 = vector.shape_cast %4 : vector<128xf32> to vector<1x1x128xf32>
      %86 = vector.broadcast %85 : vector<1x1x128xf32> to vector<1x16x128xf32>
      %87 = arith.addf %84, %86 : vector<1x16x128xf32>
      %cst_75 = arith.constant 0.000000e+00 : f32
      %88 = vector.broadcast %cst_75 : f32 to vector<1x16x128xf32>
      %89 = arith.maximumf %87, %88 : vector<1x16x128xf32>
      %90 = arith.truncf %89 : vector<1x16x128xf32> to vector<1x16x128xbf16>
      %c17 = arith.constant 17 : index
      %c1_76 = arith.constant 1 : index
      %c0_77 = arith.constant 0 : index
      %91 = vector.load %arg8[%c17, %c1_76, %c0_77] : memref<18x18x128xbf16, #tpu.memory_space<vmem>>, vector<1x16x128xbf16>
      tpu.vector_store %arg8[%c17, %c1_76, %c0_77], %90 {strides = array<i32>} : memref<18x18x128xbf16, #tpu.memory_space<vmem>>, vector<1x16x128xbf16>,
    } else {
    }
    %c0_15 = arith.constant 0 : index
    %c0_16 = arith.constant 0 : index
    %c0_17 = arith.constant 0 : index
    %27 = vector.load %arg8[%c0_15, %c0_16, %c0_17] : memref<18x18x128xbf16, #tpu.memory_space<vmem>>, vector<16x16x128xbf16>
    %28 = vector.shape_cast %27 : vector<16x16x128xbf16> to vector<256x128xbf16>
    %c0_18 = arith.constant 0 : index
    %c0_19 = arith.constant 0 : index
    %29 = vector.load %arg9[%c0_18, %c0_19] : memref<256x1152xbf16, #tpu.memory_space<vmem>>, vector<256x128xbf16>
    tpu.vector_store %arg9[%c0_18, %c0_19], %28 {strides = array<i32>} : memref<256x1152xbf16, #tpu.memory_space<vmem>>, vector<256x128xbf16>,
    %c0_20 = arith.constant 0 : index
    %c1_21 = arith.constant 1 : index
    %c0_22 = arith.constant 0 : index
    %30 = vector.load %arg8[%c0_20, %c1_21, %c0_22] : memref<18x18x128xbf16, #tpu.memory_space<vmem>>, vector<16x16x128xbf16>
    %31 = vector.shape_cast %30 : vector<16x16x128xbf16> to vector<256x128xbf16>
    %c0_23 = arith.constant 0 : index
    %c128 = arith.constant 128 : index
    %32 = vector.load %arg9[%c0_23, %c128] : memref<256x1152xbf16, #tpu.memory_space<vmem>>, vector<256x128xbf16>
    tpu.vector_store %arg9[%c0_23, %c128], %31 {strides = array<i32>} : memref<256x1152xbf16, #tpu.memory_space<vmem>>, vector<256x128xbf16>,
    %c0_24 = arith.constant 0 : index
    %c2 = arith.constant 2 : index
    %c0_25 = arith.constant 0 : index
    %33 = vector.load %arg8[%c0_24, %c2, %c0_25] : memref<18x18x128xbf16, #tpu.memory_space<vmem>>, vector<16x16x128xbf16>
    %34 = vector.shape_cast %33 : vector<16x16x128xbf16> to vector<256x128xbf16>
    %c0_26 = arith.constant 0 : index
    %c256 = arith.constant 256 : index
    %35 = vector.load %arg9[%c0_26, %c256] : memref<256x1152xbf16, #tpu.memory_space<vmem>>, vector<256x128xbf16>
    tpu.vector_store %arg9[%c0_26, %c256], %34 {strides = array<i32>} : memref<256x1152xbf16, #tpu.memory_space<vmem>>, vector<256x128xbf16>,
    %c1_27 = arith.constant 1 : index
    %c0_28 = arith.constant 0 : index
    %c0_29 = arith.constant 0 : index
    %36 = vector.load %arg8[%c1_27, %c0_28, %c0_29] : memref<18x18x128xbf16, #tpu.memory_space<vmem>>, vector<16x16x128xbf16>
    %37 = vector.shape_cast %36 : vector<16x16x128xbf16> to vector<256x128xbf16>
    %c0_30 = arith.constant 0 : index
    %c384 = arith.constant 384 : index
    %38 = vector.load %arg9[%c0_30, %c384] : memref<256x1152xbf16, #tpu.memory_space<vmem>>, vector<256x128xbf16>
    tpu.vector_store %arg9[%c0_30, %c384], %37 {strides = array<i32>} : memref<256x1152xbf16, #tpu.memory_space<vmem>>, vector<256x128xbf16>,
    %c1_31 = arith.constant 1 : index
    %c1_32 = arith.constant 1 : index
    %c0_33 = arith.constant 0 : index
    %39 = vector.load %arg8[%c1_31, %c1_32, %c0_33] : memref<18x18x128xbf16, #tpu.memory_space<vmem>>, vector<16x16x128xbf16>
    %40 = vector.shape_cast %39 : vector<16x16x128xbf16> to vector<256x128xbf16>
    %c0_34 = arith.constant 0 : index
    %c512 = arith.constant 512 : index
    %41 = vector.load %arg9[%c0_34, %c512] : memref<256x1152xbf16, #tpu.memory_space<vmem>>, vector<256x128xbf16>
    tpu.vector_store %arg9[%c0_34, %c512], %40 {strides = array<i32>} : memref<256x1152xbf16, #tpu.memory_space<vmem>>, vector<256x128xbf16>,
    %c1_35 = arith.constant 1 : index
    %c2_36 = arith.constant 2 : index
    %c0_37 = arith.constant 0 : index
    %42 = vector.load %arg8[%c1_35, %c2_36, %c0_37] : memref<18x18x128xbf16, #tpu.memory_space<vmem>>, vector<16x16x128xbf16>
    %43 = vector.shape_cast %42 : vector<16x16x128xbf16> to vector<256x128xbf16>
    %c0_38 = arith.constant 0 : index
    %c640 = arith.constant 640 : index
    %44 = vector.load %arg9[%c0_38, %c640] : memref<256x1152xbf16, #tpu.memory_space<vmem>>, vector<256x128xbf16>
    tpu.vector_store %arg9[%c0_38, %c640], %43 {strides = array<i32>} : memref<256x1152xbf16, #tpu.memory_space<vmem>>, vector<256x128xbf16>,
    %c2_39 = arith.constant 2 : index
    %c0_40 = arith.constant 0 : index
    %c0_41 = arith.constant 0 : index
    %45 = vector.load %arg8[%c2_39, %c0_40, %c0_41] : memref<18x18x128xbf16, #tpu.memory_space<vmem>>, vector<16x16x128xbf16>
    %46 = vector.shape_cast %45 : vector<16x16x128xbf16> to vector<256x128xbf16>
    %c0_42 = arith.constant 0 : index
    %c768 = arith.constant 768 : index
    %47 = vector.load %arg9[%c0_42, %c768] : memref<256x1152xbf16, #tpu.memory_space<vmem>>, vector<256x128xbf16>
    tpu.vector_store %arg9[%c0_42, %c768], %46 {strides = array<i32>} : memref<256x1152xbf16, #tpu.memory_space<vmem>>, vector<256x128xbf16>,
    %c2_43 = arith.constant 2 : index
    %c1_44 = arith.constant 1 : index
    %c0_45 = arith.constant 0 : index
    %48 = vector.load %arg8[%c2_43, %c1_44, %c0_45] : memref<18x18x128xbf16, #tpu.memory_space<vmem>>, vector<16x16x128xbf16>
    %49 = vector.shape_cast %48 : vector<16x16x128xbf16> to vector<256x128xbf16>
    %c0_46 = arith.constant 0 : index
    %c896 = arith.constant 896 : index
    %50 = vector.load %arg9[%c0_46, %c896] : memref<256x1152xbf16, #tpu.memory_space<vmem>>, vector<256x128xbf16>
    tpu.vector_store %arg9[%c0_46, %c896], %49 {strides = array<i32>} : memref<256x1152xbf16, #tpu.memory_space<vmem>>, vector<256x128xbf16>,
    %c2_47 = arith.constant 2 : index
    %c2_48 = arith.constant 2 : index
    %c0_49 = arith.constant 0 : index
    %51 = vector.load %arg8[%c2_47, %c2_48, %c0_49] : memref<18x18x128xbf16, #tpu.memory_space<vmem>>, vector<16x16x128xbf16>
    %52 = vector.shape_cast %51 : vector<16x16x128xbf16> to vector<256x128xbf16>
    %c0_50 = arith.constant 0 : index
    %c1024 = arith.constant 1024 : index
    %53 = vector.load %arg9[%c0_50, %c1024] : memref<256x1152xbf16, #tpu.memory_space<vmem>>, vector<256x128xbf16>
    tpu.vector_store %arg9[%c0_50, %c1024], %52 {strides = array<i32>} : memref<256x1152xbf16, #tpu.memory_space<vmem>>, vector<256x128xbf16>,
    %c0_51 = arith.constant 0 : index
    %c0_52 = arith.constant 0 : index
    %54 = vector.load %arg9[%c0_51, %c0_52] : memref<256x1152xbf16, #tpu.memory_space<vmem>>, vector<256x1152xbf16>
    %c0_53 = arith.constant 0 : index
    %c0_54 = arith.constant 0 : index
    %55 = vector.load %arg5[%c0_53, %c0_54] : memref<1152x128xbf16, #tpu.memory_space<vmem>>, vector<1152x128xbf16>
    %cst_55 = arith.constant dense<0.000000e+00> : vector<256x128xf32>
    %56 = tpu.matmul %54, %55, %cst_55 {dimension_numbers = #tpu.dot_dimension_numbers<[1], [0], [0], [1], [0, 0, 1, 1], [], []>} : vector<256x1152xbf16>, vector<1152x128xbf16>, vector<256x128xf32> -> vector<256x128xf32>
    %57 = vector.shape_cast %56 : vector<256x128xf32> to vector<16x16x128xf32>
    %58 = arith.truncf %57 : vector<16x16x128xf32> to vector<16x16x128xbf16>
    %c0_56 = arith.constant 0 : index
    %c0_57 = arith.constant 0 : index
    %c0_58 = arith.constant 0 : index
    %c0_59 = arith.constant 0 : index
    %59 = vector.load %arg6[%c0_56, %c0_57, %c0_58, %c0_59] : memref<1x16x16x128xbf16, #tpu.memory_space<vmem>>, vector<1x16x16x128xbf16>
    %60 = vector.shape_cast %59 : vector<1x16x16x128xbf16> to vector<16x16x128xbf16>
    %61 = vector.shape_cast %58 : vector<16x16x128xbf16> to vector<1x16x16x128xbf16>
    tpu.vector_store %arg6[%c0_56, %c0_57, %c0_58, %c0_59], %61 {strides = array<i32>} : memref<1x16x16x128xbf16, #tpu.memory_space<vmem>>, vector<1x16x16x128xbf16>,
    %cst_60 = arith.constant dense<0.000000e+00> : vector<128xf32>
    %62 = vector.multi_reduction <add>, %56, %cst_60 [0] : vector<256x128xf32> to vector<128xf32>
    %63 = vector.shape_cast %62 : vector<128xf32> to vector<1x128xf32>
    %cst_61 = arith.constant 3.906250e-03 : f32
    %64 = vector.broadcast %cst_61 : f32 to vector<1x128xf32>
    %65 = arith.mulf %63, %64 : vector<1x128xf32>
    %66 = vector.broadcast %65 : vector<1x128xf32> to vector<256x128xf32>
    %67 = arith.subf %56, %66 : vector<256x128xf32>
    %68 = arith.mulf %67, %67 : vector<256x128xf32>
    %cst_62 = arith.constant dense<0.000000e+00> : vector<128xf32>
    %69 = vector.multi_reduction <add>, %68, %cst_62 [0] : vector<256x128xf32> to vector<128xf32>
    %70 = vector.shape_cast %69 : vector<128xf32> to vector<1x128xf32>
    %c0_63 = arith.constant 0 : index
    %c0_64 = arith.constant 0 : index
    %c0_65 = arith.constant 0 : index
    %c0_66 = arith.constant 0 : index
    %71 = vector.load %arg7[%c0_63, %c0_64, %c0_65, %c0_66] : memref<1x1x2x128xf32, #tpu.memory_space<vmem>>, vector<1x1x1x128xf32>
    %72 = vector.shape_cast %71 : vector<1x1x1x128xf32> to vector<1x128xf32>
    %73 = vector.shape_cast %63 : vector<1x128xf32> to vector<1x1x1x128xf32>
    tpu.vector_store %arg7[%c0_63, %c0_64, %c0_65, %c0_66], %73 {strides = array<i32>} : memref<1x1x2x128xf32, #tpu.memory_space<vmem>>, vector<1x1x1x128xf32>,
    %c0_67 = arith.constant 0 : index
    %c0_68 = arith.constant 0 : index
    %c1_69 = arith.constant 1 : index
    %c0_70 = arith.constant 0 : index
    %74 = vector.load %arg7[%c0_67, %c0_68, %c1_69, %c0_70] : memref<1x1x2x128xf32, #tpu.memory_space<vmem>>, vector<1x1x1x128xf32>
    %75 = vector.shape_cast %74 : vector<1x1x1x128xf32> to vector<1x128xf32>
    %76 = vector.shape_cast %70 : vector<1x128xf32> to vector<1x1x1x128xf32>
    tpu.vector_store %arg7[%c0_67, %c0_68, %c1_69, %c0_70], %76 {strides = array<i32>} : memref<1x1x2x128xf32, #tpu.memory_space<vmem>>, vector<1x1x1x128xf32>,
    return
  }
  func.func @transform_0(%arg0: i32, %arg1: i32) -> (i32, i32, i32, i32) {
    %c0_i32 = arith.constant 0 : i32
    %c0_i32_0 = arith.constant 0 : i32
    %c0_i32_1 = arith.constant 0 : i32
    %c0_i32_2 = arith.constant 0 : i32
    return %arg0, %c0_i32, %c0_i32_0, %c0_i32_1 : i32, i32, i32, i32
  }
  func.func @transform_1(%arg0: i32, %arg1: i32) -> (i32, i32) {
    %c0_i32 = arith.constant 0 : i32
    %c0_i32_0 = arith.constant 0 : i32
    %c0_i32_1 = arith.constant 0 : i32
    return %c0_i32, %c0_i32_0 : i32, i32
  }
  func.func @transform_2(%arg0: i32, %arg1: i32) -> (i32, i32) {
    %c0_i32 = arith.constant 0 : i32
    %c0_i32_0 = arith.constant 0 : i32
    %c0_i32_1 = arith.constant 0 : i32
    return %c0_i32, %c0_i32_0 : i32, i32
  }
  func.func @transform_3(%arg0: i32, %arg1: i32) -> (i32, i32) {
    %c0_i32 = arith.constant 0 : i32
    %c0_i32_0 = arith.constant 0 : i32
    %c0_i32_1 = arith.constant 0 : i32
    return %c0_i32, %c0_i32_0 : i32, i32
  }
  func.func @transform_4(%arg0: i32, %arg1: i32) -> (i32, i32, i32, i32) {
    %c0_i32 = arith.constant 0 : i32
    %c0_i32_0 = arith.constant 0 : i32
    %c0_i32_1 = arith.constant 0 : i32
    return %arg0, %arg1, %c0_i32, %c0_i32_0 : i32, i32, i32, i32
  }
  func.func @transform_5(%arg0: i32, %arg1: i32) -> (i32, i32, i32, i32) {
    %c0_i32 = arith.constant 0 : i32
    %c0_i32_0 = arith.constant 0 : i32
    %c0_i32_1 = arith.constant 0 : i32
    return %arg0, %arg1, %c0_i32, %c0_i32_0 : i32, i32, i32, i32
  }
}

</mosaic_0001>

<llo_original>
// kernel: vgg_block.5
$region0: #{vgg_block.5}
  #allocation0 [shape = 'u32[]', space=smem, size = 0x4, offset = 0x4, fixed_abs, tag = 'smem constant byte address 0x4 - core index']
  #allocation1 [shape = 'u32[144,128]{1,0:T(1,128)}', space=vmem, size = 0x12000, scoped, tag = 'internal scratch']
  %s0 = inlined_call_operand.vmem [shape: bf16[512,128], index: 0, kind: input, shape index: {}]
  %s1 = inlined_call_operand.vmem [shape: f32[1,128], index: 1, kind: input, shape index: {}]
  %s2 = inlined_call_operand.vmem [shape: f32[1,128], index: 2, kind: input, shape index: {}]
  %s3 = inlined_call_operand.vmem [shape: f32[512,128], index: 3, kind: output, shape index: {}]
  %s4 = sld [smem:[#allocation0]]
  $region22: #{vgg_block.5} parent=0
    _
  %s6 = ssub.s32 1, %s4
  %s7 = scalar_select 0, %s6, %s4
  // Predicated region
  $region2: #{vgg_block.5} parent=0 // pred_check
    _
  $region3: #{vgg_block.5} parent=0 // pred_check_branch
    %9 = sbr.rel (0) target = $region5
  $region4: #{vgg_block.5} parent=0 // pred_region
    _
  $region5: #{vgg_block.5} parent=0 // pred_fallthru
    _
  // Predicated region
  $region6: #{vgg_block.5} parent=0 // pred_check
    _
  $region7: #{vgg_block.5} parent=0 // pred_check_branch
    %11 = sbr.rel (0) target = $region9
  $region8: #{vgg_block.5} parent=0 // pred_region
    _
  $region9: #{vgg_block.5} parent=0 // pred_fallthru
    _
  // Predicated region
  $region10: #{vgg_block.5} parent=0 // pred_check
    _
  $region11: #{vgg_block.5} parent=0 // pred_check_branch
    %13 = sbr.rel (0) target = $region13
  $region12: #{vgg_block.5} parent=0 // pred_region
    _
  $region13: #{vgg_block.5} parent=0 // pred_fallthru
    _
  %v14 = vld [vmem:[%s0] sm:$0xf]
  %v15 = vld [vmem:[%s0 + $0x4] sm:$0xf]
  %v16 = vld [vmem:[%s0 + $0x8] sm:$0xf]
  %v17 = vld [vmem:[%s0 + $0xc] sm:$0xf]
  %v18 = vld [vmem:[%s0 + $0x10] sm:$0xf]
  %v19 = vld [vmem:[%s0 + $0x14] sm:$0xf]
  %v20 = vld [vmem:[%s0 + $0x18] sm:$0xf]
  %v21 = vld [vmem:[%s0 + $0x1c] sm:$0xf]
  %v22 = vld [vmem:[%s0 + $0x20] sm:$0xf]
  %v23 = vld [vmem:[%s0 + $0x24] sm:$0xf]
  %v24 = vld [vmem:[%s0 + $0x28] sm:$0xf]
  %v25 = vld [vmem:[%s0 + $0x2c] sm:$0xf]
  %v26 = vld [vmem:[%s0 + $0x30] sm:$0xf]
  %v27 = vld [vmem:[%s0 + $0x34] sm:$0xf]
  %v28 = vld [vmem:[%s0 + $0x38] sm:$0xf]
  %v29 = vld [vmem:[%s0 + $0x3c] sm:$0xf]
  %v30 = vld [vmem:[%s0 + $0x40] sm:$0xf]
  %v31 = vld [vmem:[%s0 + $0x44] sm:$0xf]
  %v32 = vld [vmem:[%s0 + $0x48] sm:$0xf]
  %v33 = vld [vmem:[%s0 + $0x4c] sm:$0xf]
  %v34 = vld [vmem:[%s0 + $0x50] sm:$0xf]
  %v35 = vld [vmem:[%s0 + $0x54] sm:$0xf]
  %v36 = vld [vmem:[%s0 + $0x58] sm:$0xf]
  %v37 = vld [vmem:[%s0 + $0x5c] sm:$0xf]
  %v38 = vld [vmem:[%s0 + $0x60] sm:$0xf]
  %v39 = vld [vmem:[%s0 + $0x64] sm:$0xf]
  %v40 = vld [vmem:[%s0 + $0x68] sm:$0xf]
  %v41 = vld [vmem:[%s0 + $0x6c] sm:$0xf]
  %v42 = vld [vmem:[%s0 + $0x70] sm:$0xf]
  %v43 = vld [vmem:[%s0 + $0x74] sm:$0xf]
  %v44 = vld [vmem:[%s0 + $0x78] sm:$0xf]
  %v45 = vld [vmem:[%s0 + $0x7c] sm:$0xf]
  %v46 = vld [vmem:[%s0 + $0x80] sm:$0xf]
  %v47 = vld [vmem:[%s0 + $0x84] sm:$0xf]
  %v48 = vld [vmem:[%s0 + $0x88] sm:$0xf]
  %v49 = vld [vmem:[%s0 + $0x8c] sm:$0xf]
  %v50 = vld [vmem:[%s0 + $0x90] sm:$0xf]
  %v51 = vld [vmem:[%s0 + $0x94] sm:$0xf]
  %v52 = vld [vmem:[%s0 + $0x98] sm:$0xf]
  %v53 = vld [vmem:[%s0 + $0x9c] sm:$0xf]
  %v54 = vld [vmem:[%s0 + $0xa0] sm:$0xf]
  %v55 = vld [vmem:[%s0 + $0xa4] sm:$0xf]
  %v56 = vld [vmem:[%s0 + $0xa8] sm:$0xf]
  %v57 = vld [vmem:[%s0 + $0xac] sm:$0xf]
  %v58 = vld [vmem:[%s0 + $0xb0] sm:$0xf]
  %v59 = vld [vmem:[%s0 + $0xb4] sm:$0xf]
  %v60 = vld [vmem:[%s0 + $0xb8] sm:$0xf]
  %v61 = vld [vmem:[%s0 + $0xbc] sm:$0xf]
  %v62 = vld [vmem:[%s0 + $0xc0] sm:$0xf]
  %v63 = vld [vmem:[%s0 + $0xc4] sm:$0xf]
  %v64 = vld [vmem:[%s0 + $0xc8] sm:$0xf]
  %v65 = vld [vmem:[%s0 + $0xcc] sm:$0xf]
  %v66 = vld [vmem:[%s0 + $0xd0] sm:$0xf]
  %v67 = vld [vmem:[%s0 + $0xd4] sm:$0xf]
  %v68 = vld [vmem:[%s0 + $0xd8] sm:$0xf]
  %v69 = vld [vmem:[%s0 + $0xdc] sm:$0xf]
  %v70 = vld [vmem:[%s0 + $0xe0] sm:$0xf]
  %v71 = vld [vmem:[%s0 + $0xe4] sm:$0xf]
  %v72 = vld [vmem:[%s0 + $0xe8] sm:$0xf]
  %v73 = vld [vmem:[%s0 + $0xec] sm:$0xf]
  %v74 = vld [vmem:[%s0 + $0xf0] sm:$0xf]
  %v75 = vld [vmem:[%s0 + $0xf4] sm:$0xf]
  %v76 = vld [vmem:[%s0 + $0xf8] sm:$0xf]
  %v77 = vld [vmem:[%s0 + $0xfc] sm:$0xf]
  %v78 = vunpack.c.l.bf16 %v14
  %v79 = vunpack.c.l.bf16 %v15
  %v80 = vunpack.c.l.bf16 %v16
  %v81 = vunpack.c.l.bf16 %v17
  %v82 = vunpack.c.l.bf16 %v18
  %v83 = vunpack.c.l.bf16 %v19
  %v84 = vunpack.c.l.bf16 %v20
  %v85 = vunpack.c.l.bf16 %v21
  %v86 = vunpack.c.l.bf16 %v22
  %v87 = vunpack.c.l.bf16 %v23
  %v88 = vunpack.c.l.bf16 %v24
  %v89 = vunpack.c.l.bf16 %v25
  %v90 = vunpack.c.l.bf16 %v26
  %v91 = vunpack.c.l.bf16 %v27
  %v92 = vunpack.c.l.bf16 %v28
  %v93 = vunpack.c.l.bf16 %v29
  %v94 = vunpack.c.l.bf16 %v30
  %v95 = vunpack.c.l.bf16 %v31
  %v96 = vunpack.c.l.bf16 %v32
  %v97 = vunpack.c.l.bf16 %v33
  %v98 = vunpack.c.l.bf16 %v34
  %v99 = vunpack.c.l.bf16 %v35
  %v100 = vunpack.c.l.bf16 %v36
  %v101 = vunpack.c.l.bf16 %v37
  %v102 = vunpack.c.l.bf16 %v38
  %v103 = vunpack.c.l.bf16 %v39
  %v104 = vunpack.c.l.bf16 %v40
  %v105 = vunpack.c.l.bf16 %v41
  %v106 = vunpack.c.l.bf16 %v42
  %v107 = vunpack.c.l.bf16 %v43
  %v108 = vunpack.c.l.bf16 %v44
  %v109 = vunpack.c.l.bf16 %v45
  %v110 = vunpack.c.l.bf16 %v46
  %v111 = vunpack.c.l.bf16 %v47
  %v112 = vunpack.c.l.bf16 %v48
  %v113 = vunpack.c.l.bf16 %v49
  %v114 = vunpack.c.l.bf16 %v50
  %v115 = vunpack.c.l.bf16 %v51
  %v116 = vunpack.c.l.bf16 %v52
  %v117 = vunpack.c.l.bf16 %v53
  %v118 = vunpack.c.l.bf16 %v54
  %v119 = vunpack.c.l.bf16 %v55
  %v120 = vunpack.c.l.bf16 %v56
  %v121 = vunpack.c.l.bf16 %v57
  %v122 = vunpack.c.l.bf16 %v58
  %v123 = vunpack.c.l.bf16 %v59
  %v124 = vunpack.c.l.bf16 %v60
  %v125 = vunpack.c.l.bf16 %v61
  %v126 = vunpack.c.l.bf16 %v62
  %v127 = vunpack.c.l.bf16 %v63
  %v128 = vunpack.c.l.bf16 %v64
  %v129 = vunpack.c.l.bf16 %v65
  %v130 = vunpack.c.l.bf16 %v66
  %v131 = vunpack.c.l.bf16 %v67
  %v132 = vunpack.c.l.bf16 %v68
  %v133 = vunpack.c.l.bf16 %v69
  %v134 = vunpack.c.l.bf16 %v70
  %v135 = vunpack.c.l.bf16 %v71
  %v136 = vunpack.c.l.bf16 %v72
  %v137 = vunpack.c.l.bf16 %v73
  %v138 = vunpack.c.l.bf16 %v74
  %v139 = vunpack.c.l.bf16 %v75
  %v140 = vunpack.c.l.bf16 %v76
  %v141 = vunpack.c.l.bf16 %v77
  %v142 = vld [vmem:[%s1] sm:$0x1]
  %v144 = vlaneseq
  %v145 = vshrl.u32 %v144, 7
  %v146 = vsub.s32 0, %v145
  %v147 = vrot.slane %v142, %v146
  %v149 = vmul.f32 %v78, %v147
  %v150 = vmul.f32 %v79, %v147
  %v151 = vmul.f32 %v80, %v147
  %v152 = vmul.f32 %v81, %v147
  %v153 = vmul.f32 %v82, %v147
  %v154 = vmul.f32 %v83, %v147
  %v155 = vmul.f32 %v84, %v147
  %v156 = vmul.f32 %v85, %v147
  %v157 = vmul.f32 %v86, %v147
  %v158 = vmul.f32 %v87, %v147
  %v159 = vmul.f32 %v88, %v147
  %v160 = vmul.f32 %v89, %v147
  %v161 = vmul.f32 %v90, %v147
  %v162 = vmul.f32 %v91, %v147
  %v163 = vmul.f32 %v92, %v147
  %v164 = vmul.f32 %v93, %v147
  %v165 = vmul.f32 %v94, %v147
  %v166 = vmul.f32 %v95, %v147
  %v167 = vmul.f32 %v96, %v147
  %v168 = vmul.f32 %v97, %v147
  %v169 = vmul.f32 %v98, %v147
  %v170 = vmul.f32 %v99, %v147
  %v171 = vmul.f32 %v100, %v147
  %v172 = vmul.f32 %v101, %v147
  %v173 = vmul.f32 %v102, %v147
  %v174 = vmul.f32 %v103, %v147
  %v175 = vmul.f32 %v104, %v147
  %v176 = vmul.f32 %v105, %v147
  %v177 = vmul.f32 %v106, %v147
  %v178 = vmul.f32 %v107, %v147
  %v179 = vmul.f32 %v108, %v147
  %v180 = vmul.f32 %v109, %v147
  %v181 = vmul.f32 %v110, %v147
  %v182 = vmul.f32 %v111, %v147
  %v183 = vmul.f32 %v112, %v147
  %v184 = vmul.f32 %v113, %v147
  %v185 = vmul.f32 %v114, %v147
  %v186 = vmul.f32 %v115, %v147
  %v187 = vmul.f32 %v116, %v147
  %v188 = vmul.f32 %v117, %v147
  %v189 = vmul.f32 %v118, %v147
  %v190 = vmul.f32 %v119, %v147
  %v191 = vmul.f32 %v120, %v147
  %v192 = vmul.f32 %v121, %v147
  %v193 = vmul.f32 %v122, %v147
  %v194 = vmul.f32 %v123, %v147
  %v195 = vmul.f32 %v124, %v147
  %v196 = vmul.f32 %v125, %v147
  %v197 = vmul.f32 %v126, %v147
  %v198 = vmul.f32 %v127, %v147
  %v199 = vmul.f32 %v128, %v147
  %v200 = vmul.f32 %v129, %v147
  %v201 = vmul.f32 %v130, %v147
  %v202 = vmul.f32 %v131, %v147
  %v203 = vmul.f32 %v132, %v147
  %v204 = vmul.f32 %v133, %v147
  %v205 = vmul.f32 %v134, %v147
  %v206 = vmul.f32 %v135, %v147
  %v207 = vmul.f32 %v136, %v147
  %v208 = vmul.f32 %v137, %v147
  %v209 = vmul.f32 %v138, %v147
  %v210 = vmul.f32 %v139, %v147
  %v211 = vmul.f32 %v140, %v147
  %v212 = vmul.f32 %v141, %v147
  %v213 = vld [vmem:[%s2] sm:$0x1]
  %v215 = vlaneseq
  %v216 = vshrl.u32 %v215, 7
  %v217 = vsub.s32 0, %v216
  %v218 = vrot.slane %v213, %v217
  %v220 = vadd.f32 %v149, %v218
  %v221 = vadd.f32 %v150, %v218
  %v222 = vadd.f32 %v151, %v218
  %v223 = vadd.f32 %v152, %v218
  %v224 = vadd.f32 %v153, %v218
  %v225 = vadd.f32 %v154, %v218
  %v226 = vadd.f32 %v155, %v218
  %v227 = vadd.f32 %v156, %v218
  %v228 = vadd.f32 %v157, %v218
  %v229 = vadd.f32 %v158, %v218
  %v230 = vadd.f32 %v159, %v218
  %v231 = vadd.f32 %v160, %v218
  %v232 = vadd.f32 %v161, %v218
  %v233 = vadd.f32 %v162, %v218
  %v234 = vadd.f32 %v163, %v218
  %v235 = vadd.f32 %v164, %v218
  %v236 = vadd.f32 %v165, %v218
  %v237 = vadd.f32 %v166, %v218
  %v238 = vadd.f32 %v167, %v218
  %v239 = vadd.f32 %v168, %v218
  %v240 = vadd.f32 %v169, %v218
  %v241 = vadd.f32 %v170, %v218
  %v242 = vadd.f32 %v171, %v218
  %v243 = vadd.f32 %v172, %v218
  %v244 = vadd.f32 %v173, %v218
  %v245 = vadd.f32 %v174, %v218
  %v246 = vadd.f32 %v175, %v218
  %v247 = vadd.f32 %v176, %v218
  %v248 = vadd.f32 %v177, %v218
  %v249 = vadd.f32 %v178, %v218
  %v250 = vadd.f32 %v179, %v218
  %v251 = vadd.f32 %v180, %v218
  %v252 = vadd.f32 %v181, %v218
  %v253 = vadd.f32 %v182, %v218
  %v254 = vadd.f32 %v183, %v218
  %v255 = vadd.f32 %v184, %v218
  %v256 = vadd.f32 %v185, %v218
  %v257 = vadd.f32 %v186, %v218
  %v258 = vadd.f32 %v187, %v218
  %v259 = vadd.f32 %v188, %v218
  %v260 = vadd.f32 %v189, %v218
  %v261 = vadd.f32 %v190, %v218
  %v262 = vadd.f32 %v191, %v218
  %v263 = vadd.f32 %v192, %v218
  %v264 = vadd.f32 %v193, %v218
  %v265 = vadd.f32 %v194, %v218
  %v266 = vadd.f32 %v195, %v218
  %v267 = vadd.f32 %v196, %v218
  %v268 = vadd.f32 %v197, %v218
  %v269 = vadd.f32 %v198, %v218
  %v270 = vadd.f32 %v199, %v218
  %v271 = vadd.f32 %v200, %v218
  %v272 = vadd.f32 %v201, %v218
  %v273 = vadd.f32 %v202, %v218
  %v274 = vadd.f32 %v203, %v218
  %v275 = vadd.f32 %v204, %v218
  %v276 = vadd.f32 %v205, %v218
  %v277 = vadd.f32 %v206, %v218
  %v278 = vadd.f32 %v207, %v218
  %v279 = vadd.f32 %v208, %v218
  %v280 = vadd.f32 %v209, %v218
  %v281 = vadd.f32 %v210, %v218
  %v282 = vadd.f32 %v211, %v218
  %v283 = vadd.f32 %v212, %v218
  %v284 = vmax.f32 %v220, 0.0
  %v285 = vmax.f32 %v221, 0.0
  %v286 = vmax.f32 %v222, 0.0
  %v287 = vmax.f32 %v223, 0.0
  %v288 = vmax.f32 %v224, 0.0
  %v289 = vmax.f32 %v225, 0.0
  %v290 = vmax.f32 %v226, 0.0
  %v291 = vmax.f32 %v227, 0.0
  %v292 = vmax.f32 %v228, 0.0
  %v293 = vmax.f32 %v229, 0.0
  %v294 = vmax.f32 %v230, 0.0
  %v295 = vmax.f32 %v231, 0.0
  %v296 = vmax.f32 %v232, 0.0
  %v297 = vmax.f32 %v233, 0.0
  %v298 = vmax.f32 %v234, 0.0
  %v299 = vmax.f32 %v235, 0.0
  %v300 = vmax.f32 %v236, 0.0
  %v301 = vmax.f32 %v237, 0.0
  %v302 = vmax.f32 %v238, 0.0
  %v303 = vmax.f32 %v239, 0.0
  %v304 = vmax.f32 %v240, 0.0
  %v305 = vmax.f32 %v241, 0.0
  %v306 = vmax.f32 %v242, 0.0
  %v307 = vmax.f32 %v243, 0.0
  %v308 = vmax.f32 %v244, 0.0
  %v309 = vmax.f32 %v245, 0.0
  %v310 = vmax.f32 %v246, 0.0
  %v311 = vmax.f32 %v247, 0.0
  %v312 = vmax.f32 %v248, 0.0
  %v313 = vmax.f32 %v249, 0.0
  %v314 = vmax.f32 %v250, 0.0
  %v315 = vmax.f32 %v251, 0.0
  %v316 = vmax.f32 %v252, 0.0
  %v317 = vmax.f32 %v253, 0.0
  %v318 = vmax.f32 %v254, 0.0
  %v319 = vmax.f32 %v255, 0.0
  %v320 = vmax.f32 %v256, 0.0
  %v321 = vmax.f32 %v257, 0.0
  %v322 = vmax.f32 %v258, 0.0
  %v323 = vmax.f32 %v259, 0.0
  %v324 = vmax.f32 %v260, 0.0
  %v325 = vmax.f32 %v261, 0.0
  %v326 = vmax.f32 %v262, 0.0
  %v327 = vmax.f32 %v263, 0.0
  %v328 = vmax.f32 %v264, 0.0
  %v329 = vmax.f32 %v265, 0.0
  %v330 = vmax.f32 %v266, 0.0
  %v331 = vmax.f32 %v267, 0.0
  %v332 = vmax.f32 %v268, 0.0
  %v333 = vmax.f32 %v269, 0.0
  %v334 = vmax.f32 %v270, 0.0
  %v335 = vmax.f32 %v271, 0.0
  %v336 = vmax.f32 %v272, 0.0
  %v337 = vmax.f32 %v273, 0.0
  %v338 = vmax.f32 %v274, 0.0
  %v339 = vmax.f32 %v275, 0.0
  %v340 = vmax.f32 %v276, 0.0
  %v341 = vmax.f32 %v277, 0.0
  %v342 = vmax.f32 %v278, 0.0
  %v343 = vmax.f32 %v279, 0.0
  %v344 = vmax.f32 %v280, 0.0
  %v345 = vmax.f32 %v281, 0.0
  %v346 = vmax.f32 %v282, 0.0
  %v347 = vmax.f32 %v283, 0.0
  %348 = vst [vmem:[%s3] sm:$0xff] %v284
  %349 = vst [vmem:[%s3 + $0x8] sm:$0xff] %v285
  %350 = vst [vmem:[%s3 + $0x10] sm:$0xff] %v286
  %351 = vst [vmem:[%s3 + $0x18] sm:$0xff] %v287
  %352 = vst [vmem:[%s3 + $0x20] sm:$0xff] %v288
  %353 = vst [vmem:[%s3 + $0x28] sm:$0xff] %v289
  %354 = vst [vmem:[%s3 + $0x30] sm:$0xff] %v290
  %355 = vst [vmem:[%s3 + $0x38] sm:$0xff] %v291
  %356 = vst [vmem:[%s3 + $0x40] sm:$0xff] %v292
  %357 = vst [vmem:[%s3 + $0x48] sm:$0xff] %v293
  %358 = vst [vmem:[%s3 + $0x50] sm:$0xff] %v294
  %359 = vst [vmem:[%s3 + $0x58] sm:$0xff] %v295
  %360 = vst [vmem:[%s3 + $0x60] sm:$0xff] %v296
  %361 = vst [vmem:[%s3 + $0x68] sm:$0xff] %v297
  %362 = vst [vmem:[%s3 + $0x70] sm:$0xff] %v298
  %363 = vst [vmem:[%s3 + $0x78] sm:$0xff] %v299
  %364 = vst [vmem:[%s3 + $0x80] sm:$0xff] %v300
  %365 = vst [vmem:[%s3 + $0x88] sm:$0xff] %v301
  %366 = vst [vmem:[%s3 + $0x90] sm:$0xff] %v302
  %367 = vst [vmem:[%s3 + $0x98] sm:$0xff] %v303
  %368 = vst [vmem:[%s3 + $0xa0] sm:$0xff] %v304
  %369 = vst [vmem:[%s3 + $0xa8] sm:$0xff] %v305
  %370 = vst [vmem:[%s3 + $0xb0] sm:$0xff] %v306
  %371 = vst [vmem:[%s3 + $0xb8] sm:$0xff] %v307
  %372 = vst [vmem:[%s3 + $0xc0] sm:$0xff] %v308
  %373 = vst [vmem:[%s3 + $0xc8] sm:$0xff] %v309
  %374 = vst [vmem:[%s3 + $0xd0] sm:$0xff] %v310
  %375 = vst [vmem:[%s3 + $0xd8] sm:$0xff] %v311
  %376 = vst [vmem:[%s3 + $0xe0] sm:$0xff] %v312
  %377 = vst [vmem:[%s3 + $0xe8] sm:$0xff] %v313
  %378 = vst [vmem:[%s3 + $0xf0] sm:$0xff] %v314
  %379 = vst [vmem:[%s3 + $0xf8] sm:$0xff] %v315
  %380 = vst [vmem:[%s3 + $0x100] sm:$0xff] %v316
  %381 = vst [vmem:[%s3 + $0x108] sm:$0xff] %v317
  %382 = vst [vmem:[%s3 + $0x110] sm:$0xff] %v318
  %383 = vst [vmem:[%s3 + $0x118] sm:$0xff] %v319
  %384 = vst [vmem:[%s3 + $0x120] sm:$0xff] %v320
  %385 = vst [vmem:[%s3 + $0x128] sm:$0xff] %v321
  %386 = vst [vmem:[%s3 + $0x130] sm:$0xff] %v322
  %387 = vst [vmem:[%s3 + $0x138] sm:$0xff] %v323
  %388 = vst [vmem:[%s3 + $0x140] sm:$0xff] %v324
  %389 = vst [vmem:[%s3 + $0x148] sm:$0xff] %v325
  %390 = vst [vmem:[%s3 + $0x150] sm:$0xff] %v326
  %391 = vst [vmem:[%s3 + $0x158] sm:$0xff] %v327
  %392 = vst [vmem:[%s3 + $0x160] sm:$0xff] %v328
  %393 = vst [vmem:[%s3 + $0x168] sm:$0xff] %v329
  %394 = vst [vmem:[%s3 + $0x170] sm:$0xff] %v330
  %395 = vst [vmem:[%s3 + $0x178] sm:$0xff] %v331
  %396 = vst [vmem:[%s3 + $0x180] sm:$0xff] %v332
  %397 = vst [vmem:[%s3 + $0x188] sm:$0xff] %v333
  %398 = vst [vmem:[%s3 + $0x190] sm:$0xff] %v334
  %399 = vst [vmem:[%s3 + $0x198] sm:$0xff] %v335
  %400 = vst [vmem:[%s3 + $0x1a0] sm:$0xff] %v336
  %401 = vst [vmem:[%s3 + $0x1a8] sm:$0xff] %v337
  %402 = vst [vmem:[%s3 + $0x1b0] sm:$0xff] %v338
  %403 = vst [vmem:[%s3 + $0x1b8] sm:$0xff] %v339
  %404 = vst [vmem:[%s3 + $0x1c0] sm:$0xff] %v340
  %405 = vst [vmem:[%s3 + $0x1c8] sm:$0xff] %v341
  %406 = vst [vmem:[%s3 + $0x1d0] sm:$0xff] %v342
  %407 = vst [vmem:[%s3 + $0x1d8] sm:$0xff] %v343
  %408 = vst [vmem:[%s3 + $0x1e0] sm:$0xff] %v344
  %409 = vst [vmem:[%s3 + $0x1e8] sm:$0xff] %v345
  %410 = vst [vmem:[%s3 + $0x1f0] sm:$0xff] %v346
  %411 = vst [vmem:[%s3 + $0x1f8] sm:$0xff] %v347
  // Predicated region
  $region14: #{vgg_block.5} parent=0 // pred_check
    _
  $region15: #{vgg_block.5} parent=0 // pred_check_branch
    %413 = sbr.rel (0) target = $region17
  $region16: #{vgg_block.5} parent=0 // pred_region
    _
  $region17: #{vgg_block.5} parent=0 // pred_fallthru
    _
  // Predicated region
  $region18: #{vgg_block.5} parent=0 // pred_check
    _
  $region19: #{vgg_block.5} parent=0 // pred_check_branch
    %415 = sbr.rel (0) target = $region21
  $region20: #{vgg_block.5} parent=0 // pred_region
    _
  $region21: #{vgg_block.5} parent=0 // pred_fallthru
    _

// kernel: vgg_block.3
$region0: #{vgg_block.3}
  #allocation0 [shape = 'u32[]', space=smem, size = 0x4, offset = 0x4, fixed_abs, tag = 'smem constant byte address 0x4 - core index']
  #allocation1 [shape = 'u32[144,128]{1,0:T(1,128)}', space=vmem, size = 0x12000, scoped, tag = 'internal scratch']
  #allocation2 [shape = 'bf16[18,18,128]{2,1,0:T(8,128)(2,1)}', space=vmem, size = 0x1b000, scoped, tag = 'scratch operand']
  #allocation3 [shape = 'bf16[256,1152]{1,0:T(8,128)(2,1)}', space=vmem, size = 0x90000, scoped, tag = 'scratch operand']
  %s0 = inlined_call_operand.vmem [shape: bf16[2,16,16,128], index: 0, kind: input, shape index: {}]
  %s1 = inlined_call_operand.vmem [shape: f32[1,128], index: 1, kind: input, shape index: {}]
  %s2 = inlined_call_operand.vmem [shape: f32[1,128], index: 2, kind: input, shape index: {}]
  %s3 = inlined_call_operand.vmem [shape: bf16[1152,128], index: 3, kind: input, shape index: {}]
  %s4 = inlined_call_operand.vmem [shape: bf16[2,16,16,128], index: 4, kind: output, shape index: {0}]
  %s5 = inlined_call_operand.vmem [shape: f32[2,1,2,128], index: 5, kind: output, shape index: {1}]
  %6 = xla_tuple %s4, %s5
  %s7 = sld [smem:[#allocation0]]
  $region65: #{vgg_block.3} parent=0
    _
  %s9 = ssub.s32 1, %s7
  %s10 = scalar_select 0, %s9, %s7
  loop: start=0, step=1, limit=4
  $region2: #{vgg_block.3} parent=0 // loop_pre_header
    _
  $region3: #{vgg_block.3} parent=0 // loop_header
    %s12 = sphi 0, %s16
    %p13 = scmp.ge.s32.totalorder %s12, 4
    %s19 = sphi 0, %s31
    %s20 = sphi 0, %s27
    %s21 = sphi 0, %s19
    %s22 = sphi 0, %s20
    %s23 = sphi 0, %s21
    %s24 = sphi 0, %s22
    %s34 = sphi 0, %s36
    %s37 = sphi 0, %s34
    %s38 = sphi 0, %s37
    %s54 = sphi 0, %s38
    %s58 = sphi 0, %s58
    %s60 = sphi 0, %s58
    %s61 = sphi 0, %s60
    %s75 = sphi 0, %s61
    %s79 = sphi 0, %s79
    %s81 = sphi 0, %s79
    %s82 = sphi 0, %s81
    %s96 = sphi 0, %s82
    %s100 = sphi 0, %s100
    %s102 = sphi 0, %s100
    %s103 = sphi 0, %s102
    %s117 = sphi 0, %s103
    %s125 = sphi 0, %s127
    %s128 = sphi 0, %s125
    %s129 = sphi 0, %s128
    %s145 = sphi 0, %s129
    %s153 = sphi 0, %s155
    %s156 = sphi 0, %s153
    %s157 = sphi 0, %s156
    %s173 = sphi 0, %s157
  $region4: #{vgg_block.3} parent=0 // loop_header_branch
    %15 = sbr.rel (%p13) target = $region8
  $region5: #{vgg_block.3} parent=0 // loop_body
    %s17 = ssub.s32 %s12, 1
    %s18 = ssub.s32 %s12, 2
    %s25 = sadd.s32 1, %s20
    %p26 = scmp.ge.s32.totalorder %s25, 1
    %s27 = scalar_select %p26, 0, %s25
    %s28 = sadd.s32 1, %s19
    %s29 = scalar_select %p26, %s28, %s19
    %p30 = scmp.ge.s32.totalorder %s29, 2
    %s31 = scalar_select %p30, 0, %s29
    %s32 = ssub.s32 %s19, %s31
    %p33 = scmp.eq.s32.totalorder %s32, 0
    %s35 = sadd.s32 %s34, 1
    %s36 = scalar_select %p33, %s34, %s35
    %p39 = pneg %p33
    %p40 = scmp.eq.s32.totalorder %s12, 1
    %p41 = por %p39, %p40
    %p42 = scmp.ne.s32.totalorder %s34, %s37
    %p43 = scmp.eq.s32.totalorder %s12, 0
    %p44 = por %p42, %p43
    %p45 = scmp.ne.s32.totalorder %s34, %s37
    %p46 = scmp.eq.s32.totalorder %s17, 1
    %p47 = por %p45, %p46
    %p48 = scmp.ne.s32.totalorder %s37, %s38
    %p49 = scmp.eq.s32.totalorder %s17, 0
    %p50 = por %p48, %p49
    %p51 = scmp.ne.s32.totalorder %s37, %s38
    %p52 = scmp.eq.s32.totalorder %s18, 1
    %p53 = por %p51, %p52
    %p55 = scmp.ne.s32.totalorder %s38, %s54
    %p56 = scmp.eq.s32.totalorder %s18, 0
    %p57 = por %p55, %p56
    %s59 = sadd.s32 %s58, 1
    %p62 = scmp.eq.s32.totalorder %s12, 1
    %p63 = scmp.ne.s32.totalorder %s58, %s60
    %p64 = scmp.eq.s32.totalorder %s12, 0
    %p65 = por %p63, %p64
    %p66 = scmp.ne.s32.totalorder %s58, %s60
    %p67 = scmp.eq.s32.totalorder %s17, 1
    %p68 = por %p66, %p67
    %p69 = scmp.ne.s32.totalorder %s60, %s61
    %p70 = scmp.eq.s32.totalorder %s17, 0
    %p71 = por %p69, %p70
    %p72 = scmp.ne.s32.totalorder %s60, %s61
    %p73 = scmp.eq.s32.totalorder %s18, 1
    %p74 = por %p72, %p73
    %p76 = scmp.ne.s32.totalorder %s61, %s75
    %p77 = scmp.eq.s32.totalorder %s18, 0
    %p78 = por %p76, %p77
    %s80 = sadd.s32 %s79, 1
    %p83 = scmp.eq.s32.totalorder %s12, 1
    %p84 = scmp.ne.s32.totalorder %s79, %s81
    %p85 = scmp.eq.s32.totalorder %s12, 0
    %p86 = por %p84, %p85
    %p87 = scmp.ne.s32.totalorder %s79, %s81
    %p88 = scmp.eq.s32.totalorder %s17, 1
    %p89 = por %p87, %p88
    %p90 = scmp.ne.s32.totalorder %s81, %s82
    %p91 = scmp.eq.s32.totalorder %s17, 0
    %p92 = por %p90, %p91
    %p93 = scmp.ne.s32.totalorder %s81, %s82
    %p94 = scmp.eq.s32.totalorder %s18, 1
    %p95 = por %p93, %p94
    %p97 = scmp.ne.s32.totalorder %s82, %s96
    %p98 = scmp.eq.s32.totalorder %s18, 0
    %p99 = por %p97, %p98
    %s101 = sadd.s32 %s100, 1
    %p104 = scmp.eq.s32.totalorder %s12, 1
    %p105 = scmp.ne.s32.totalorder %s100, %s102
    %p106 = scmp.eq.s32.totalorder %s12, 0
    %p107 = por %p105, %p106
    %p108 = scmp.ne.s32.totalorder %s100, %s102
    %p109 = scmp.eq.s32.totalorder %s17, 1
    %p110 = por %p108, %p109
    %p111 = scmp.ne.s32.totalorder %s102, %s103
    %p112 = scmp.eq.s32.totalorder %s17, 0
    %p113 = por %p111, %p112
    %p114 = scmp.ne.s32.totalorder %s102, %s103
    %p115 = scmp.eq.s32.totalorder %s18, 1
    %p116 = por %p114, %p115
    %p118 = scmp.ne.s32.totalorder %s103, %s117
    %p119 = scmp.eq.s32.totalorder %s18, 0
    %p120 = por %p118, %p119
    %s121 = ssub.s32 %s19, %s31
    %s122 = ssub.s32 %s20, %s27
    %s123 = sor.u32 %s121, %s122
    %p124 = scmp.eq.s32.totalorder %s123, 0
    %s126 = sadd.s32 %s125, 1
    %s127 = scalar_select %p124, %s125, %s126
    %p130 = pneg %p124
    %p131 = scmp.eq.s32.totalorder %s12, 1
    %p132 = por %p130, %p131
    %p133 = scmp.ne.s32.totalorder %s125, %s128
    %p134 = scmp.eq.s32.totalorder %s12, 0
    %p135 = por %p133, %p134
    %p136 = scmp.ne.s32.totalorder %s125, %s128
    %p137 = scmp.eq.s32.totalorder %s17, 1
    %p138 = por %p136, %p137
    %p139 = scmp.ne.s32.totalorder %s128, %s129
    %p140 = scmp.eq.s32.totalorder %s17, 0
    %p141 = por %p139, %p140
    %p142 = scmp.ne.s32.totalorder %s128, %s129
    %p143 = scmp.eq.s32.totalorder %s18, 1
    %p144 = por %p142, %p143
    %p146 = scmp.ne.s32.totalorder %s129, %s145
    %p147 = scmp.eq.s32.totalorder %s18, 0
    %p148 = por %p146, %p147
    %s149 = ssub.s32 %s19, %s31
    %s150 = ssub.s32 %s20, %s27
    %s151 = sor.u32 %s149, %s150
    %p152 = scmp.eq.s32.totalorder %s151, 0
    %s154 = sadd.s32 %s153, 1
    %s155 = scalar_select %p152, %s153, %s154
    %p158 = pneg %p152
    %p159 = scmp.eq.s32.totalorder %s12, 1
    %p160 = por %p158, %p159
    %p161 = scmp.ne.s32.totalorder %s153, %s156
    %p162 = scmp.eq.s32.totalorder %s12, 0
    %p163 = por %p161, %p162
    %p164 = scmp.ne.s32.totalorder %s153, %s156
    %p165 = scmp.eq.s32.totalorder %s17, 1
    %p166 = por %p164, %p165
    %p167 = scmp.ne.s32.totalorder %s156, %s157
    %p168 = scmp.eq.s32.totalorder %s17, 0
    %p169 = por %p167, %p168
    %p170 = scmp.ne.s32.totalorder %s156, %s157
    %p171 = scmp.eq.s32.totalorder %s18, 1
    %p172 = por %p170, %p171
    %p174 = scmp.ne.s32.totalorder %s157, %s173
    %p175 = scmp.eq.s32.totalorder %s18, 0
    %p176 = por %p174, %p175
    %p177 = scmp.le.s32.totalorder 1, %s12
    %p178 = scmp.lt.s32.totalorder %s12, 3
    %p179 = pnand %p177, %p178
    %p180 = pneg %p179
    // Predicated region
    $region9: #{vgg_block.3} parent=5 // pred_check
      _
    $region10: #{vgg_block.3} parent=5 // pred_check_branch
      %182 = sbr.rel (%p179) target = $region12
    $region11: #{vgg_block.3} parent=5 // pred_region
      %s183 = ssub.s32 %s12, 1
      // Predicated region
      $region13: #{vgg_block.3} parent=11 // pred_check
        %p184 = pneg %p71
      $region14: #{vgg_block.3} parent=11 // pred_check_branch
        %186 = sbr.rel (%p184) target = $region16
      $region15: #{vgg_block.3} parent=11 // pred_region
        _
      $region16: #{vgg_block.3} parent=11 // pred_fallthru
        _
      // Predicated region
      $region17: #{vgg_block.3} parent=11 // pred_check
        %p187 = pneg %p92
      $region18: #{vgg_block.3} parent=11 // pred_check_branch
        %189 = sbr.rel (%p187) target = $region20
      $region19: #{vgg_block.3} parent=11 // pred_region
        _
      $region20: #{vgg_block.3} parent=11 // pred_fallthru
        _
      // Predicated region
      $region21: #{vgg_block.3} parent=11 // pred_check
        %p190 = pneg %p113
      $region22: #{vgg_block.3} parent=11 // pred_check_branch
        %192 = sbr.rel (%p190) target = $region24
      $region23: #{vgg_block.3} parent=11 // pred_region
        _
      $region24: #{vgg_block.3} parent=11 // pred_fallthru
        _
    $region12: #{vgg_block.3} parent=5 // pred_fallthru
      _
    %p193 = scmp.lt.s32.totalorder %s12, 2
    // Predicated region
    $region25: #{vgg_block.3} parent=5 // pred_check
      %p194 = pneg %p193
    $region26: #{vgg_block.3} parent=5 // pred_check_branch
      %196 = sbr.rel (%p194) target = $region28
    $region27: #{vgg_block.3} parent=5 // pred_region
      // Predicated region
      $region29: #{vgg_block.3} parent=27 // pred_check
        %p197 = pneg %p44
      $region30: #{vgg_block.3} parent=27 // pred_check_branch
        %199 = sbr.rel (%p197) target = $region32
      $region31: #{vgg_block.3} parent=27 // pred_region
        %p200 = scmp.lt.s32.totalorder %s19, 1
        %s201 = scalar_select %p200, %s19, 1
        %s202 = smul.addr %s201, 32
        %s203 = smul.addr %s202, 4
        %s204 = scalar_lea.vmem %s0, %s203
      $region32: #{vgg_block.3} parent=27 // pred_fallthru
        _
    $region28: #{vgg_block.3} parent=5 // pred_fallthru
      _
    %p205 = scmp.le.s32.totalorder 1, %s12
    %p206 = scmp.lt.s32.totalorder %s12, 3
    %p207 = pnand %p205, %p206
    %p208 = pneg %p207
    // Predicated region
    $region33: #{vgg_block.3} parent=5 // pred_check
      _
    $region34: #{vgg_block.3} parent=5 // pred_check_branch
      %210 = sbr.rel (%p207) target = $region36
    $region35: #{vgg_block.3} parent=5 // pred_region
      %s211 = ssub.s32 %s12, 1
      %p212 = scmp.lt.s32.totalorder %s21, 1
      %s213 = scalar_select %p212, %s21, 1
      %s214 = smul.addr %s213, 32
      %s215 = smul.addr %s214, 4
      %s216 = scalar_lea.vmem %s0, %s215
      %p217 = pneg %p50
      %p218 = pneg %p47
      %p219 = pneg %p71
      %p220 = pneg %p68
      %p221 = pneg %p92
      %p222 = pneg %p89
      %p223 = pneg %p113
      %p224 = pneg %p110
      %p225 = pneg %p141
      %p226 = pneg %p138
      %s227 = smul.u32 16, %s22
      %p228 = scmp.lt.s32.totalorder %s21, 1
      %s229 = scalar_select %p228, %s21, 1
      %p230 = scmp.lt.s32.totalorder %s227, 15
      %s231 = scalar_select %p230, %s227, 15
      %s232 = smul.addr %s231, 2
      %s233 = smul.addr %s229, 32
      %s234 = sadd.s32 %s232, %s233
      %s235 = smul.addr %s234, 4
      %s236 = scalar_lea.vmem %s4, %s235
      %p237 = pneg %p169
      %p238 = pneg %p166
      %p239 = scmp.lt.s32.totalorder %s21, 1
      %s240 = scalar_select %p239, %s21, 1
      %p241 = scmp.lt.s32.totalorder %s22, 0
      %s242 = scalar_select %p241, %s22, 0
      %s243 = sadd.s32 %s242, %s240
      %s244 = smul.addr %s243, 2
      %s245 = scalar_lea.vmem %s5, %s244
      %p246 = scmp.lt.s32.totalorder %s21, 1
      %s247 = scalar_select %p246, %s21, 1
      %s248 = smul.addr %s247, 32
      %s249 = smul.addr %s248, 4
      %s250 = scalar_lea.vmem %s0, %s249
      %s251 = smul.u32 16, %s22
      %p252 = scmp.lt.s32.totalorder %s21, 1
      %s253 = scalar_select %p252, %s21, 1
      %p254 = scmp.lt.s32.totalorder %s251, 15
      %s255 = scalar_select %p254, %s251, 15
      %s256 = smul.addr %s255, 2
      %s257 = smul.addr %s253, 32
      %s258 = sadd.s32 %s256, %s257
      %s259 = smul.addr %s258, 4
      %s260 = scalar_lea.vmem %s4, %s259
      %s261 = smul.u32 16, %s22
      %p262 = scmp.lt.s32.totalorder %s21, 1
      %s263 = scalar_select %p262, %s21, 1
      %p264 = scmp.lt.s32.totalorder %s22, 0
      %s265 = scalar_select %p264, %s22, 0
      %s266 = sadd.s32 %s265, %s263
      %s267 = smul.addr %s266, 2
      %s268 = scalar_lea.vmem %s5, %s267
      %s270 = smul.u32 %s22, 16
      %271 = vst [vmem:[#allocation2] sm:$0xf] 0
      %272 = vst [vmem:[#allocation2 + $0x4] sm:$0xf] 0
      %273 = vst [vmem:[#allocation2 + $0x8] sm:$0x1] 0
      %274 = vst [vmem:[#allocation2 + $0xc] sm:$0xf] 0
      %275 = vst [vmem:[#allocation2 + $0x10] sm:$0xf] 0
      %276 = vst [vmem:[#allocation2 + $0x14] sm:$0x1] 0
      %277 = vst [vmem:[#allocation2 + $0x18] sm:$0xf] 0
      %278 = vst [vmem:[#allocation2 + $0x1c] sm:$0xf] 0
      %279 = vst [vmem:[#allocation2 + $0x20] sm:$0x1] 0
      %280 = vst [vmem:[#allocation2 + $0x24] sm:$0xf] 0
      %281 = vst [vmem:[#allocation2 + $0x28] sm:$0xf] 0
      %282 = vst [vmem:[#allocation2 + $0x2c] sm:$0x1] 0
      %283 = vst [vmem:[#allocation2 + $0x30] sm:$0xf] 0
      %284 = vst [vmem:[#allocation2 + $0x34] sm:$0xf] 0
      %285 = vst [vmem:[#allocation2 + $0x38] sm:$0x1] 0
      %286 = vst [vmem:[#allocation2 + $0x3c] sm:$0xf] 0
      %287 = vst [vmem:[#allocation2 + $0x40] sm:$0xf] 0
      %288 = vst [vmem:[#allocation2 + $0x44] sm:$0x1] 0
      %289 = vst [vmem:[#allocation2 + $0x48] sm:$0xf] 0
      %290 = vst [vmem:[#allocation2 + $0x4c] sm:$0xf] 0
      %291 = vst [vmem:[#allocation2 + $0x50] sm:$0x1] 0
      %292 = vst [vmem:[#allocation2 + $0x54] sm:$0xf] 0
      %293 = vst [vmem:[#allocation2 + $0x58] sm:$0xf] 0
      %294 = vst [vmem:[#allocation2 + $0x5c] sm:$0x1] 0
      %295 = vst [vmem:[#allocation2 + $0x60] sm:$0xf] 0
      %296 = vst [vmem:[#allocation2 + $0x64] sm:$0xf] 0
      %297 = vst [vmem:[#allocation2 + $0x68] sm:$0x1] 0
      %298 = vst [vmem:[#allocation2 + $0x6c] sm:$0xf] 0
      %299 = vst [vmem:[#allocation2 + $0x70] sm:$0xf] 0
      %300 = vst [vmem:[#allocation2 + $0x74] sm:$0x1] 0
      %301 = vst [vmem:[#allocation2 + $0x78] sm:$0xf] 0
      %302 = vst [vmem:[#allocation2 + $0x7c] sm:$0xf] 0
      %303 = vst [vmem:[#allocation2 + $0x80] sm:$0x1] 0
      %304 = vst [vmem:[#allocation2 + $0x84] sm:$0xf] 0
      %305 = vst [vmem:[#allocation2 + $0x88] sm:$0xf] 0
      %306 = vst [vmem:[#allocation2 + $0x8c] sm:$0x1] 0
      %307 = vst [vmem:[#allocation2 + $0x90] sm:$0xf] 0
      %308 = vst [vmem:[#allocation2 + $0x94] sm:$0xf] 0
      %309 = vst [vmem:[#allocation2 + $0x98] sm:$0x1] 0
      %310 = vst [vmem:[#allocation2 + $0x9c] sm:$0xf] 0
      %311 = vst [vmem:[#allocation2 + $0xa0] sm:$0xf] 0
      %312 = vst [vmem:[#allocation2 + $0xa4] sm:$0x1] 0
      %313 = vst [vmem:[#allocation2 + $0xa8] sm:$0xf] 0
      %314 = vst [vmem:[#allocation2 + $0xac] sm:$0xf] 0
      %315 = vst [vmem:[#allocation2 + $0xb0] sm:$0x1] 0
      %316 = vst [vmem:[#allocation2 + $0xb4] sm:$0xf] 0
      %317 = vst [vmem:[#allocation2 + $0xb8] sm:$0xf] 0
      %318 = vst [vmem:[#allocation2 + $0xbc] sm:$0x1] 0
      %319 = vst [vmem:[#allocation2 + $0xc0] sm:$0xf] 0
      %320 = vst [vmem:[#allocation2 + $0xc4] sm:$0xf] 0
      %321 = vst [vmem:[#allocation2 + $0xc8] sm:$0x1] 0
      %322 = vst [vmem:[#allocation2 + $0xcc] sm:$0xf] 0
      %323 = vst [vmem:[#allocation2 + $0xd0] sm:$0xf] 0
      %324 = vst [vmem:[#allocation2 + $0xd4] sm:$0x1] 0
      %s325 = smul.u32 %s270, 2
      %s326 = smul.addr %s325, 4
      %s327 = scalar_lea.vmem %s250, %s326
      %v328 = vld [vmem:[%s327] sm:$0xf]
      %v329 = vld [vmem:[%s327 + $0x4] sm:$0xf]
      %v330 = vld [vmem:[%s327 + $0x8] sm:$0xf]
      %v331 = vld [vmem:[%s327 + $0xc] sm:$0xf]
      %v332 = vld [vmem:[%s327 + $0x10] sm:$0xf]
      %v333 = vld [vmem:[%s327 + $0x14] sm:$0xf]
      %v334 = vld [vmem:[%s327 + $0x18] sm:$0xf]
      %v335 = vld [vmem:[%s327 + $0x1c] sm:$0xf]
      %v336 = vld [vmem:[%s327 + $0x20] sm:$0xf]
      %v337 = vld [vmem:[%s327 + $0x24] sm:$0xf]
      %v338 = vld [vmem:[%s327 + $0x28] sm:$0xf]
      %v339 = vld [vmem:[%s327 + $0x2c] sm:$0xf]
      %v340 = vld [vmem:[%s327 + $0x30] sm:$0xf]
      %v341 = vld [vmem:[%s327 + $0x34] sm:$0xf]
      %v342 = vld [vmem:[%s327 + $0x38] sm:$0xf]
      %v343 = vld [vmem:[%s327 + $0x3c] sm:$0xf]
      %v344 = vld [vmem:[%s327 + $0x40] sm:$0xf]
      %v345 = vld [vmem:[%s327 + $0x44] sm:$0xf]
      %v346 = vld [vmem:[%s327 + $0x48] sm:$0xf]
      %v347 = vld [vmem:[%s327 + $0x4c] sm:$0xf]
      %v348 = vld [vmem:[%s327 + $0x50] sm:$0xf]
      %v349 = vld [vmem:[%s327 + $0x54] sm:$0xf]
      %v350 = vld [vmem:[%s327 + $0x58] sm:$0xf]
      %v351 = vld [vmem:[%s327 + $0x5c] sm:$0xf]
      %v352 = vld [vmem:[%s327 + $0x60] sm:$0xf]
      %v353 = vld [vmem:[%s327 + $0x64] sm:$0xf]
      %v354 = vld [vmem:[%s327 + $0x68] sm:$0xf]
      %v355 = vld [vmem:[%s327 + $0x6c] sm:$0xf]
      %v356 = vld [vmem:[%s327 + $0x70] sm:$0xf]
      %v357 = vld [vmem:[%s327 + $0x74] sm:$0xf]
      %v358 = vld [vmem:[%s327 + $0x78] sm:$0xf]
      %v359 = vld [vmem:[%s327 + $0x7c] sm:$0xf]
      %vm360 = vsmask.f32 256
      %vm361 = vsmask.f32 4368
      %vm362 = vmor %vm360, %vm361
      %v364 = vshrl.u32 %v328, 16
      %v366 = vrot.slane %v364, 7
      %v367 = vshll.u32 %v328, 16
      %v369 = vor.u32 %v366, %v367
      %v370 = vrot.slane %v366, 4
      %v372 = vshrl.u32 %v329, 16
      %v374 = vrot.slane %v372, 7
      %v375 = vshll.u32 %v329, 16
      %v377 = vor.u32 %v374, %v375
      %v378 = vsel %vm362, %v370, %v377
      %v379 = vrot.slane %v374, 4
      %v381 = vshrl.u32 %v330, 16
      %v383 = vrot.slane %v381, 7
      %v384 = vshll.u32 %v330, 16
      %v386 = vor.u32 %v383, %v384
      %v387 = vrot.slane %v383, 4
      %v389 = vshrl.u32 %v331, 16
      %v391 = vrot.slane %v389, 7
      %v392 = vshll.u32 %v331, 16
      %v394 = vor.u32 %v391, %v392
      %v395 = vsel %vm362, %v387, %v394
      %v396 = vrot.slane %v391, 4
      %v398 = vshrl.u32 %v332, 16
      %v400 = vrot.slane %v398, 7
      %v401 = vshll.u32 %v332, 16
      %v403 = vor.u32 %v400, %v401
      %v404 = vrot.slane %v400, 4
      %v406 = vshrl.u32 %v333, 16
      %v408 = vrot.slane %v406, 7
      %v409 = vshll.u32 %v333, 16
      %v411 = vor.u32 %v408, %v409
      %v412 = vsel %vm362, %v404, %v411
      %v413 = vrot.slane %v408, 4
      %v415 = vshrl.u32 %v334, 16
      %v417 = vrot.slane %v415, 7
      %v418 = vshll.u32 %v334, 16
      %v420 = vor.u32 %v417, %v418
      %v421 = vrot.slane %v417, 4
      %v423 = vshrl.u32 %v335, 16
      %v425 = vrot.slane %v423, 7
      %v426 = vshll.u32 %v335, 16
      %v428 = vor.u32 %v425, %v426
      %v429 = vsel %vm362, %v421, %v428
      %v430 = vrot.slane %v425, 4
      %v432 = vshrl.u32 %v336, 16
      %v434 = vrot.slane %v432, 7
      %v435 = vshll.u32 %v336, 16
      %v437 = vor.u32 %v434, %v435
      %v438 = vrot.slane %v434, 4
      %v440 = vshrl.u32 %v337, 16
      %v442 = vrot.slane %v440, 7
      %v443 = vshll.u32 %v337, 16
      %v445 = vor.u32 %v442, %v443
      %v446 = vsel %vm362, %v438, %v445
      %v447 = vrot.slane %v442, 4
      %v449 = vshrl.u32 %v338, 16
      %v451 = vrot.slane %v449, 7
      %v452 = vshll.u32 %v338, 16
      %v454 = vor.u32 %v451, %v452
      %v455 = vrot.slane %v451, 4
      %v457 = vshrl.u32 %v339, 16
      %v459 = vrot.slane %v457, 7
      %v460 = vshll.u32 %v339, 16
      %v462 = vor.u32 %v459, %v460
      %v463 = vsel %vm362, %v455, %v462
      %v464 = vrot.slane %v459, 4
      %v466 = vshrl.u32 %v340, 16
      %v468 = vrot.slane %v466, 7
      %v469 = vshll.u32 %v340, 16
      %v471 = vor.u32 %v468, %v469
      %v472 = vrot.slane %v468, 4
      %v474 = vshrl.u32 %v341, 16
      %v476 = vrot.slane %v474, 7
      %v477 = vshll.u32 %v341, 16
      %v479 = vor.u32 %v476, %v477
      %v480 = vsel %vm362, %v472, %v479
      %v481 = vrot.slane %v476, 4
      %v483 = vshrl.u32 %v342, 16
      %v485 = vrot.slane %v483, 7
      %v486 = vshll.u32 %v342, 16
      %v488 = vor.u32 %v485, %v486
      %v489 = vrot.slane %v485, 4
      %v491 = vshrl.u32 %v343, 16
      %v493 = vrot.slane %v491, 7
      %v494 = vshll.u32 %v343, 16
      %v496 = vor.u32 %v493, %v494
      %v497 = vsel %vm362, %v489, %v496
      %v498 = vrot.slane %v493, 4
      %v500 = vshrl.u32 %v344, 16
      %v502 = vrot.slane %v500, 7
      %v503 = vshll.u32 %v344, 16
      %v505 = vor.u32 %v502, %v503
      %v506 = vrot.slane %v502, 4
      %v508 = vshrl.u32 %v345, 16
      %v510 = vrot.slane %v508, 7
      %v511 = vshll.u32 %v345, 16
      %v513 = vor.u32 %v510, %v511
      %v514 = vsel %vm362, %v506, %v513
      %v515 = vrot.slane %v510, 4
      %v517 = vshrl.u32 %v346, 16
      %v519 = vrot.slane %v517, 7
      %v520 = vshll.u32 %v346, 16
      %v522 = vor.u32 %v519, %v520
      %v523 = vrot.slane %v519, 4
      %v525 = vshrl.u32 %v347, 16
      %v527 = vrot.slane %v525, 7
      %v528 = vshll.u32 %v347, 16
      %v530 = vor.u32 %v527, %v528
      %v531 = vsel %vm362, %v523, %v530
      %v532 = vrot.slane %v527, 4
      %v534 = vshrl.u32 %v348, 16
      %v536 = vrot.slane %v534, 7
      %v537 = vshll.u32 %v348, 16
      %v539 = vor.u32 %v536, %v537
      %v540 = vrot.slane %v536, 4
      %v542 = vshrl.u32 %v349, 16
      %v544 = vrot.slane %v542, 7
      %v545 = vshll.u32 %v349, 16
      %v547 = vor.u32 %v544, %v545
      %v548 = vsel %vm362, %v540, %v547
      %v549 = vrot.slane %v544, 4
      %v551 = vshrl.u32 %v350, 16
      %v553 = vrot.slane %v551, 7
      %v554 = vshll.u32 %v350, 16
      %v556 = vor.u32 %v553, %v554
      %v557 = vrot.slane %v553, 4
      %v559 = vshrl.u32 %v351, 16
      %v561 = vrot.slane %v559, 7
      %v562 = vshll.u32 %v351, 16
      %v564 = vor.u32 %v561, %v562
      %v565 = vsel %vm362, %v557, %v564
      %v566 = vrot.slane %v561, 4
      %v568 = vshrl.u32 %v352, 16
      %v570 = vrot.slane %v568, 7
      %v571 = vshll.u32 %v352, 16
      %v573 = vor.u32 %v570, %v571
      %v574 = vrot.slane %v570, 4
      %v576 = vshrl.u32 %v353, 16
      %v578 = vrot.slane %v576, 7
      %v579 = vshll.u32 %v353, 16
      %v581 = vor.u32 %v578, %v579
      %v582 = vsel %vm362, %v574, %v581
      %v583 = vrot.slane %v578, 4
      %v585 = vshrl.u32 %v354, 16
      %v587 = vrot.slane %v585, 7
      %v588 = vshll.u32 %v354, 16
      %v590 = vor.u32 %v587, %v588
      %v591 = vrot.slane %v587, 4
      %v593 = vshrl.u32 %v355, 16
      %v595 = vrot.slane %v593, 7
      %v596 = vshll.u32 %v355, 16
      %v598 = vor.u32 %v595, %v596
      %v599 = vsel %vm362, %v591, %v598
      %v600 = vrot.slane %v595, 4
      %v602 = vshrl.u32 %v356, 16
      %v604 = vrot.slane %v602, 7
      %v605 = vshll.u32 %v356, 16
      %v607 = vor.u32 %v604, %v605
      %v608 = vrot.slane %v604, 4
      %v610 = vshrl.u32 %v357, 16
      %v612 = vrot.slane %v610, 7
      %v613 = vshll.u32 %v357, 16
      %v615 = vor.u32 %v612, %v613
      %v616 = vsel %vm362, %v608, %v615
      %v617 = vrot.slane %v612, 4
      %v619 = vshrl.u32 %v358, 16
      %v621 = vrot.slane %v619, 7
      %v622 = vshll.u32 %v358, 16
      %v624 = vor.u32 %v621, %v622
      %v625 = vrot.slane %v621, 4
      %v627 = vshrl.u32 %v359, 16
      %v629 = vrot.slane %v627, 7
      %v630 = vshll.u32 %v359, 16
      %v632 = vor.u32 %v629, %v630
      %v633 = vsel %vm362, %v625, %v632
      %v634 = vrot.slane %v629, 4
      %s683 = scalar_lea.vmem [#allocation2], 12
      %vm684 = vcmask 1043456
      %vm685 = vsmask.f32 7938
      %vm686 = vmand %vm684, %vm685
      %v687 = vld [vmem:[%s683] sm:$0xf]
      %v688 = vsel %vm686, %v369, %v687
      %689 = vst [vmem:[%s683] sm:$0xf] %v688
      %690 = vst [vmem:[%s683 + $0x4] sm:$0xf] %v378
      %vm691 = vcmask 1040384
      %vm692 = vmand %vm691, %vm360
      %v693 = vld [vmem:[%s683 + $0x8] sm:$0x1]
      %v694 = vsel %vm692, %v379, %v693
      %695 = vst [vmem:[%s683 + $0x8] sm:$0x1] %v694
      %v696 = vld [vmem:[%s683 + $0xc] sm:$0xf]
      %v697 = vsel %vm686, %v386, %v696
      %698 = vst [vmem:[%s683 + $0xc] sm:$0xf] %v697
      %699 = vst [vmem:[%s683 + $0x10] sm:$0xf] %v395
      %v700 = vld [vmem:[%s683 + $0x14] sm:$0x1]
      %v701 = vsel %vm692, %v396, %v700
      %702 = vst [vmem:[%s683 + $0x14] sm:$0x1] %v701
      %v703 = vld [vmem:[%s683 + $0x18] sm:$0xf]
      %v704 = vsel %vm686, %v403, %v703
      %705 = vst [vmem:[%s683 + $0x18] sm:$0xf] %v704
      %706 = vst [vmem:[%s683 + $0x1c] sm:$0xf] %v412
      %v707 = vld [vmem:[%s683 + $0x20] sm:$0x1]
      %v708 = vsel %vm692, %v413, %v707
      %709 = vst [vmem:[%s683 + $0x20] sm:$0x1] %v708
      %v710 = vld [vmem:[%s683 + $0x24] sm:$0xf]
      %v711 = vsel %vm686, %v420, %v710
      %712 = vst [vmem:[%s683 + $0x24] sm:$0xf] %v711
      %713 = vst [vmem:[%s683 + $0x28] sm:$0xf] %v429
      %v714 = vld [vmem:[%s683 + $0x2c] sm:$0x1]
      %v715 = vsel %vm692, %v430, %v714
      %716 = vst [vmem:[%s683 + $0x2c] sm:$0x1] %v715
      %v717 = vld [vmem:[%s683 + $0x30] sm:$0xf]
      %v718 = vsel %vm686, %v437, %v717
      %719 = vst [vmem:[%s683 + $0x30] sm:$0xf] %v718
      %720 = vst [vmem:[%s683 + $0x34] sm:$0xf] %v446
      %v721 = vld [vmem:[%s683 + $0x38] sm:$0x1]
      %v722 = vsel %vm692, %v447, %v721
      %723 = vst [vmem:[%s683 + $0x38] sm:$0x1] %v722
      %v724 = vld [vmem:[%s683 + $0x3c] sm:$0xf]
      %v725 = vsel %vm686, %v454, %v724
      %726 = vst [vmem:[%s683 + $0x3c] sm:$0xf] %v725
      %727 = vst [vmem:[%s683 + $0x40] sm:$0xf] %v463
      %v728 = vld [vmem:[%s683 + $0x44] sm:$0x1]
      %v729 = vsel %vm692, %v464, %v728
      %730 = vst [vmem:[%s683 + $0x44] sm:$0x1] %v729
      %v731 = vld [vmem:[%s683 + $0x48] sm:$0xf]
      %v732 = vsel %vm686, %v471, %v731
      %733 = vst [vmem:[%s683 + $0x48] sm:$0xf] %v732
      %734 = vst [vmem:[%s683 + $0x4c] sm:$0xf] %v480
      %v735 = vld [vmem:[%s683 + $0x50] sm:$0x1]
      %v736 = vsel %vm692, %v481, %v735
      %737 = vst [vmem:[%s683 + $0x50] sm:$0x1] %v736
      %v738 = vld [vmem:[%s683 + $0x54] sm:$0xf]
      %v739 = vsel %vm686, %v488, %v738
      %740 = vst [vmem:[%s683 + $0x54] sm:$0xf] %v739
      %741 = vst [vmem:[%s683 + $0x58] sm:$0xf] %v497
      %v742 = vld [vmem:[%s683 + $0x5c] sm:$0x1]
      %v743 = vsel %vm692, %v498, %v742
      %744 = vst [vmem:[%s683 + $0x5c] sm:$0x1] %v743
      %v745 = vld [vmem:[%s683 + $0x60] sm:$0xf]
      %v746 = vsel %vm686, %v505, %v745
      %747 = vst [vmem:[%s683 + $0x60] sm:$0xf] %v746
      %748 = vst [vmem:[%s683 + $0x64] sm:$0xf] %v514
      %v749 = vld [vmem:[%s683 + $0x68] sm:$0x1]
      %v750 = vsel %vm692, %v515, %v749
      %751 = vst [vmem:[%s683 + $0x68] sm:$0x1] %v750
      %v752 = vld [vmem:[%s683 + $0x6c] sm:$0xf]
      %v753 = vsel %vm686, %v522, %v752
      %754 = vst [vmem:[%s683 + $0x6c] sm:$0xf] %v753
      %755 = vst [vmem:[%s683 + $0x70] sm:$0xf] %v531
      %v756 = vld [vmem:[%s683 + $0x74] sm:$0x1]
      %v757 = vsel %vm692, %v532, %v756
      %758 = vst [vmem:[%s683 + $0x74] sm:$0x1] %v757
      %v759 = vld [vmem:[%s683 + $0x78] sm:$0xf]
      %v760 = vsel %vm686, %v539, %v759
      %761 = vst [vmem:[%s683 + $0x78] sm:$0xf] %v760
      %762 = vst [vmem:[%s683 + $0x7c] sm:$0xf] %v548
      %v763 = vld [vmem:[%s683 + $0x80] sm:$0x1]
      %v764 = vsel %vm692, %v549, %v763
      %765 = vst [vmem:[%s683 + $0x80] sm:$0x1] %v764
      %v766 = vld [vmem:[%s683 + $0x84] sm:$0xf]
      %v767 = vsel %vm686, %v556, %v766
      %768 = vst [vmem:[%s683 + $0x84] sm:$0xf] %v767
      %769 = vst [vmem:[%s683 + $0x88] sm:$0xf] %v565
      %v770 = vld [vmem:[%s683 + $0x8c] sm:$0x1]
      %v771 = vsel %vm692, %v566, %v770
      %772 = vst [vmem:[%s683 + $0x8c] sm:$0x1] %v771
      %v773 = vld [vmem:[%s683 + $0x90] sm:$0xf]
      %v774 = vsel %vm686, %v573, %v773
      %775 = vst [vmem:[%s683 + $0x90] sm:$0xf] %v774
      %776 = vst [vmem:[%s683 + $0x94] sm:$0xf] %v582
      %v777 = vld [vmem:[%s683 + $0x98] sm:$0x1]
      %v778 = vsel %vm692, %v583, %v777
      %779 = vst [vmem:[%s683 + $0x98] sm:$0x1] %v778
      %v780 = vld [vmem:[%s683 + $0x9c] sm:$0xf]
      %v781 = vsel %vm686, %v590, %v780
      %782 = vst [vmem:[%s683 + $0x9c] sm:$0xf] %v781
      %783 = vst [vmem:[%s683 + $0xa0] sm:$0xf] %v599
      %v784 = vld [vmem:[%s683 + $0xa4] sm:$0x1]
      %v785 = vsel %vm692, %v600, %v784
      %786 = vst [vmem:[%s683 + $0xa4] sm:$0x1] %v785
      %v787 = vld [vmem:[%s683 + $0xa8] sm:$0xf]
      %v788 = vsel %vm686, %v607, %v787
      %789 = vst [vmem:[%s683 + $0xa8] sm:$0xf] %v788
      %790 = vst [vmem:[%s683 + $0xac] sm:$0xf] %v616
      %v791 = vld [vmem:[%s683 + $0xb0] sm:$0x1]
      %v792 = vsel %vm692, %v617, %v791
      %793 = vst [vmem:[%s683 + $0xb0] sm:$0x1] %v792
      %v794 = vld [vmem:[%s683 + $0xb4] sm:$0xf]
      %v795 = vsel %vm686, %v624, %v794
      %796 = vst [vmem:[%s683 + $0xb4] sm:$0xf] %v795
      %797 = vst [vmem:[%s683 + $0xb8] sm:$0xf] %v633
      %v798 = vld [vmem:[%s683 + $0xbc] sm:$0x1]
      %v799 = vsel %vm692, %v634, %v798
      %800 = vst [vmem:[%s683 + $0xbc] sm:$0x1] %v799
      %p801 = scmp.gt.s32.totalorder %s22, 0
      // Predicated region
      $region37: #{vgg_block.3} parent=35 // pred_check
        %p802 = pneg %p801
      $region38: #{vgg_block.3} parent=35 // pred_check_branch
        %804 = sbr.rel (%p802) target = $region40
      $region39: #{vgg_block.3} parent=35 // pred_region
        %s805 = ssub.s32 %s270, 1
        %s806 = smul.u32 %s805, 2
        %s807 = smul.addr %s806, 4
        %s808 = scalar_lea.vmem %s250, %s807
        %v809 = vld [vmem:[%s808] sm:$0xf]
        %v810 = vld [vmem:[%s808 + $0x4] sm:$0xf]
        %v812 = vshrl.u32 %v809, 16
        %v814 = vrot.slane %v812, 7
        %v815 = vshll.u32 %v809, 16
        %v817 = vor.u32 %v814, %v815
        %v818 = vrot.slane %v814, 4
        %v820 = vshrl.u32 %v810, 16
        %v822 = vrot.slane %v820, 7
        %v823 = vshll.u32 %v810, 16
        %v825 = vor.u32 %v822, %v823
        %v826 = vsel %vm362, %v818, %v825
        %v827 = vrot.slane %v822, 4
        %v831 = vld [vmem:[#allocation2] sm:$0xf]
        %v832 = vsel %vm686, %v817, %v831
        %833 = vst [vmem:[#allocation2] sm:$0xf] %v832
        %834 = vst [vmem:[#allocation2 + $0x4] sm:$0xf] %v826
        %v835 = vld [vmem:[#allocation2 + $0x8] sm:$0x1]
        %v836 = vsel %vm692, %v827, %v835
        %837 = vst [vmem:[#allocation2 + $0x8] sm:$0x1] %v836
      $region40: #{vgg_block.3} parent=35 // pred_fallthru
        _
      %p838 = scmp.lt.s32.totalorder %s22, 0
      // Predicated region
      $region41: #{vgg_block.3} parent=35 // pred_check
        %p839 = pneg %p838
      $region42: #{vgg_block.3} parent=35 // pred_check_branch
        %841 = sbr.rel (%p839) target = $region44
      $region43: #{vgg_block.3} parent=35 // pred_region
        %s842 = sadd.s32 %s270, 16
        %s843 = smul.u32 %s842, 2
        %s844 = smul.addr %s843, 4
        %s845 = scalar_lea.vmem %s250, %s844
        %v846 = vld [vmem:[%s845] sm:$0xf]
        %v847 = vld [vmem:[%s845 + $0x4] sm:$0xf]
        %v849 = vshrl.u32 %v846, 16
        %v851 = vrot.slane %v849, 7
        %v852 = vshll.u32 %v846, 16
        %v854 = vor.u32 %v851, %v852
        %v855 = vrot.slane %v851, 4
        %v857 = vshrl.u32 %v847, 16
        %v859 = vrot.slane %v857, 7
        %v860 = vshll.u32 %v847, 16
        %v862 = vor.u32 %v859, %v860
        %v863 = vsel %vm362, %v855, %v862
        %v864 = vrot.slane %v859, 4
        %s868 = scalar_lea.vmem [#allocation2], 204
        %v869 = vld [vmem:[%s868] sm:$0xf]
        %v870 = vsel %vm686, %v854, %v869
        %871 = vst [vmem:[%s868] sm:$0xf] %v870
        %872 = vst [vmem:[%s868 + $0x4] sm:$0xf] %v863
        %v873 = vld [vmem:[%s868 + $0x8] sm:$0x1]
        %v874 = vsel %vm692, %v864, %v873
        %875 = vst [vmem:[%s868 + $0x8] sm:$0x1] %v874
      $region44: #{vgg_block.3} parent=35 // pred_fallthru
        _
      %v876 = vld [vmem:[#allocation2] sm:$0xf]
      %v877 = vld [vmem:[#allocation2 + $0x4] sm:$0xf]
      %v878 = vld [vmem:[#allocation2 + $0xc] sm:$0xf]
      %v879 = vld [vmem:[#allocation2 + $0x10] sm:$0xf]
      %v880 = vld [vmem:[#allocation2 + $0x18] sm:$0xf]
      %v881 = vld [vmem:[#allocation2 + $0x1c] sm:$0xf]
      %v882 = vld [vmem:[#allocation2 + $0x24] sm:$0xf]
      %v883 = vld [vmem:[#allocation2 + $0x28] sm:$0xf]
      %v884 = vld [vmem:[#allocation2 + $0x30] sm:$0xf]
      %v885 = vld [vmem:[#allocation2 + $0x34] sm:$0xf]
      %v886 = vld [vmem:[#allocation2 + $0x3c] sm:$0xf]
      %v887 = vld [vmem:[#allocation2 + $0x40] sm:$0xf]
      %v888 = vld [vmem:[#allocation2 + $0x48] sm:$0xf]
      %v889 = vld [vmem:[#allocation2 + $0x4c] sm:$0xf]
      %v890 = vld [vmem:[#allocation2 + $0x54] sm:$0xf]
      %v891 = vld [vmem:[#allocation2 + $0x58] sm:$0xf]
      %v892 = vld [vmem:[#allocation2 + $0x60] sm:$0xf]
      %v893 = vld [vmem:[#allocation2 + $0x64] sm:$0xf]
      %v894 = vld [vmem:[#allocation2 + $0x6c] sm:$0xf]
      %v895 = vld [vmem:[#allocation2 + $0x70] sm:$0xf]
      %v896 = vld [vmem:[#allocation2 + $0x78] sm:$0xf]
      %v897 = vld [vmem:[#allocation2 + $0x7c] sm:$0xf]
      %v898 = vld [vmem:[#allocation2 + $0x84] sm:$0xf]
      %v899 = vld [vmem:[#allocation2 + $0x88] sm:$0xf]
      %v900 = vld [vmem:[#allocation2 + $0x90] sm:$0xf]
      %v901 = vld [vmem:[#allocation2 + $0x94] sm:$0xf]
      %v902 = vld [vmem:[#allocation2 + $0x9c] sm:$0xf]
      %v903 = vld [vmem:[#allocation2 + $0xa0] sm:$0xf]
      %v904 = vld [vmem:[#allocation2 + $0xa8] sm:$0xf]
      %v905 = vld [vmem:[#allocation2 + $0xac] sm:$0xf]
      %v906 = vld [vmem:[#allocation2 + $0xb4] sm:$0xf]
      %v907 = vld [vmem:[#allocation2 + $0xb8] sm:$0xf]
      %908 = vst [vmem:[#allocation3] sm:$0xf] %v876
      %909 = vst [vmem:[#allocation3 + $0x24] sm:$0xf] %v877
      %910 = vst [vmem:[#allocation3 + $0x48] sm:$0xf] %v878
      %911 = vst [vmem:[#allocation3 + $0x6c] sm:$0xf] %v879
      %912 = vst [vmem:[#allocation3 + $0x90] sm:$0xf] %v880
      %913 = vst [vmem:[#allocation3 + $0xb4] sm:$0xf] %v881
      %914 = vst [vmem:[#allocation3 + $0xd8] sm:$0xf] %v882
      %915 = vst [vmem:[#allocation3 + $0xfc] sm:$0xf] %v883
      %916 = vst [vmem:[#allocation3 + $0x120] sm:$0xf] %v884
      %917 = vst [vmem:[#allocation3 + $0x144] sm:$0xf] %v885
      %918 = vst [vmem:[#allocation3 + $0x168] sm:$0xf] %v886
      %919 = vst [vmem:[#allocation3 + $0x18c] sm:$0xf] %v887
      %920 = vst [vmem:[#allocation3 + $0x1b0] sm:$0xf] %v888
      %921 = vst [vmem:[#allocation3 + $0x1d4] sm:$0xf] %v889
      %922 = vst [vmem:[#allocation3 + $0x1f8] sm:$0xf] %v890
      %923 = vst [vmem:[#allocation3 + $0x21c] sm:$0xf] %v891
      %924 = vst [vmem:[#allocation3 + $0x240] sm:$0xf] %v892
      %925 = vst [vmem:[#allocation3 + $0x264] sm:$0xf] %v893
      %926 = vst [vmem:[#allocation3 + $0x288] sm:$0xf] %v894
      %927 = vst [vmem:[#allocation3 + $0x2ac] sm:$0xf] %v895
      %928 = vst [vmem:[#allocation3 + $0x2d0] sm:$0xf] %v896
      %929 = vst [vmem:[#allocation3 + $0x2f4] sm:$0xf] %v897
      %930 = vst [vmem:[#allocation3 + $0x318] sm:$0xf] %v898
      %931 = vst [vmem:[#allocation3 + $0x33c] sm:$0xf] %v899
      %932 = vst [vmem:[#allocation3 + $0x360] sm:$0xf] %v900
      %933 = vst [vmem:[#allocation3 + $0x384] sm:$0xf] %v901
      %934 = vst [vmem:[#allocation3 + $0x3a8] sm:$0xf] %v902
      %935 = vst [vmem:[#allocation3 + $0x3cc] sm:$0xf] %v903
      %936 = vst [vmem:[#allocation3 + $0x3f0] sm:$0xf] %v904
      %937 = vst [vmem:[#allocation3 + $0x414] sm:$0xf] %v905
      %938 = vst [vmem:[#allocation3 + $0x438] sm:$0xf] %v906
      %939 = vst [vmem:[#allocation3 + $0x45c] sm:$0xf] %v907
      %v940 = vld [vmem:[#allocation2] sm:$0xf]
      %v941 = vld [vmem:[#allocation2 + $0x4] sm:$0xf]
      %v942 = vld [vmem:[#allocation2 + $0x8] sm:$0x1]
      %v943 = vld [vmem:[#allocation2 + $0xc] sm:$0xf]
      %v944 = vld [vmem:[#allocation2 + $0x10] sm:$0xf]
      %v945 = vld [vmem:[#allocation2 + $0x14] sm:$0x1]
      %v946 = vld [vmem:[#allocation2 + $0x18] sm:$0xf]
      %v947 = vld [vmem:[#allocation2 + $0x1c] sm:$0xf]
      %v948 = vld [vmem:[#allocation2 + $0x20] sm:$0x1]
      %v949 = vld [vmem:[#allocation2 + $0x24] sm:$0xf]
      %v950 = vld [vmem:[#allocation2 + $0x28] sm:$0xf]
      %v951 = vld [vmem:[#allocation2 + $0x2c] sm:$0x1]
      %v952 = vld [vmem:[#allocation2 + $0x30] sm:$0xf]
      %v953 = vld [vmem:[#allocation2 + $0x34] sm:$0xf]
      %v954 = vld [vmem:[#allocation2 + $0x38] sm:$0x1]
      %v955 = vld [vmem:[#allocation2 + $0x3c] sm:$0xf]
      %v956 = vld [vmem:[#allocation2 + $0x40] sm:$0xf]
      %v957 = vld [vmem:[#allocation2 + $0x44] sm:$0x1]
      %v958 = vld [vmem:[#allocation2 + $0x48] sm:$0xf]
      %v959 = vld [vmem:[#allocation2 + $0x4c] sm:$0xf]
      %v960 = vld [vmem:[#allocation2 + $0x50] sm:$0x1]
      %v961 = vld [vmem:[#allocation2 + $0x54] sm:$0xf]
      %v962 = vld [vmem:[#allocation2 + $0x58] sm:$0xf]
      %v963 = vld [vmem:[#allocation2 + $0x5c] sm:$0x1]
      %v964 = vld [vmem:[#allocation2 + $0x60] sm:$0xf]
      %v965 = vld [vmem:[#allocation2 + $0x64] sm:$0xf]
      %v966 = vld [vmem:[#allocation2 + $0x68] sm:$0x1]
      %v967 = vld [vmem:[#allocation2 + $0x6c] sm:$0xf]
      %v968 = vld [vmem:[#allocation2 + $0x70] sm:$0xf]
      %v969 = vld [vmem:[#allocation2 + $0x74] sm:$0x1]
      %v970 = vld [vmem:[#allocation2 + $0x78] sm:$0xf]
      %v971 = vld [vmem:[#allocation2 + $0x7c] sm:$0xf]
      %v972 = vld [vmem:[#allocation2 + $0x80] sm:$0x1]
      %v973 = vld [vmem:[#allocation2 + $0x84] sm:$0xf]
      %v974 = vld [vmem:[#allocation2 + $0x88] sm:$0xf]
      %v975 = vld [vmem:[#allocation2 + $0x8c] sm:$0x1]
      %v976 = vld [vmem:[#allocation2 + $0x90] sm:$0xf]
      %v977 = vld [vmem:[#allocation2 + $0x94] sm:$0xf]
      %v978 = vld [vmem:[#allocation2 + $0x98] sm:$0x1]
      %v979 = vld [vmem:[#allocation2 + $0x9c] sm:$0xf]
      %v980 = vld [vmem:[#allocation2 + $0xa0] sm:$0xf]
      %v981 = vld [vmem:[#allocation2 + $0xa4] sm:$0x1]
      %v982 = vld [vmem:[#allocation2 + $0xa8] sm:$0xf]
      %v983 = vld [vmem:[#allocation2 + $0xac] sm:$0xf]
      %v984 = vld [vmem:[#allocation2 + $0xb0] sm:$0x1]
      %v985 = vld [vmem:[#allocation2 + $0xb4] sm:$0xf]
      %v986 = vld [vmem:[#allocation2 + $0xb8] sm:$0xf]
      %v987 = vld [vmem:[#allocation2 + $0xbc] sm:$0x1]
      %vm988 = vsmask.f32 3328
      %vm989 = vsmask.f32 7440
      %vm990 = vmor %vm988, %vm989
      %v992 = vshrl.u32 %v940, 16
      %v994 = vrot.slane %v992, 4
      %v995 = vshll.u32 %v940, 16
      %v997 = vrot.slane %v995, 5
      %v998 = vor.u32 %v994, %v997
      %v999 = vrot.slane %v998, 4
      %v1001 = vshll.u32 %v941, 16
      %v1003 = vrot.slane %v1001, 5
      %v1004 = vsel %vm990, %v999, %v1003
      %v1005 = vshrl.u32 %v941, 16
      %v1007 = vrot.slane %v1005, 4
      %v1008 = vor.u32 %v1007, %v1003
      %v1009 = vrot.slane %v1008, 4
      %v1011 = vshll.u32 %v942, 16
      %v1013 = vrot.slane %v1011, 5
      %v1014 = vsel %vm990, %v1009, %v1013
      %v1016 = vshrl.u32 %v943, 16
      %v1018 = vrot.slane %v1016, 4
      %v1019 = vshll.u32 %v943, 16
      %v1021 = vrot.slane %v1019, 5
      %v1022 = vor.u32 %v1018, %v1021
      %v1023 = vrot.slane %v1022, 4
      %v1025 = vshll.u32 %v944, 16
      %v1027 = vrot.slane %v1025, 5
      %v1028 = vsel %vm990, %v1023, %v1027
      %v1029 = vshrl.u32 %v944, 16
      %v1031 = vrot.slane %v1029, 4
      %v1032 = vor.u32 %v1031, %v1027
      %v1033 = vrot.slane %v1032, 4
      %v1035 = vshll.u32 %v945, 16
      %v1037 = vrot.slane %v1035, 5
      %v1038 = vsel %vm990, %v1033, %v1037
      %v1040 = vshrl.u32 %v946, 16
      %v1042 = vrot.slane %v1040, 4
      %v1043 = vshll.u32 %v946, 16
      %v1045 = vrot.slane %v1043, 5
      %v1046 = vor.u32 %v1042, %v1045
      %v1047 = vrot.slane %v1046, 4
      %v1049 = vshll.u32 %v947, 16
      %v1051 = vrot.slane %v1049, 5
      %v1052 = vsel %vm990, %v1047, %v1051
      %v1053 = vshrl.u32 %v947, 16
      %v1055 = vrot.slane %v1053, 4
      %v1056 = vor.u32 %v1055, %v1051
      %v1057 = vrot.slane %v1056, 4
      %v1059 = vshll.u32 %v948, 16
      %v1061 = vrot.slane %v1059, 5
      %v1062 = vsel %vm990, %v1057, %v1061
      %v1064 = vshrl.u32 %v949, 16
      %v1066 = vrot.slane %v1064, 4
      %v1067 = vshll.u32 %v949, 16
      %v1069 = vrot.slane %v1067, 5
      %v1070 = vor.u32 %v1066, %v1069
      %v1071 = vrot.slane %v1070, 4
      %v1073 = vshll.u32 %v950, 16
      %v1075 = vrot.slane %v1073, 5
      %v1076 = vsel %vm990, %v1071, %v1075
      %v1077 = vshrl.u32 %v950, 16
      %v1079 = vrot.slane %v1077, 4
      %v1080 = vor.u32 %v1079, %v1075
      %v1081 = vrot.slane %v1080, 4
      %v1083 = vshll.u32 %v951, 16
      %v1085 = vrot.slane %v1083, 5
      %v1086 = vsel %vm990, %v1081, %v1085
      %v1088 = vshrl.u32 %v952, 16
      %v1090 = vrot.slane %v1088, 4
      %v1091 = vshll.u32 %v952, 16
      %v1093 = vrot.slane %v1091, 5
      %v1094 = vor.u32 %v1090, %v1093
      %v1095 = vrot.slane %v1094, 4
      %v1097 = vshll.u32 %v953, 16
      %v1099 = vrot.slane %v1097, 5
      %v1100 = vsel %vm990, %v1095, %v1099
      %v1101 = vshrl.u32 %v953, 16
      %v1103 = vrot.slane %v1101, 4
      %v1104 = vor.u32 %v1103, %v1099
      %v1105 = vrot.slane %v1104, 4
      %v1107 = vshll.u32 %v954, 16
      %v1109 = vrot.slane %v1107, 5
      %v1110 = vsel %vm990, %v1105, %v1109
      %v1112 = vshrl.u32 %v955, 16
      %v1114 = vrot.slane %v1112, 4
      %v1115 = vshll.u32 %v955, 16
      %v1117 = vrot.slane %v1115, 5
      %v1118 = vor.u32 %v1114, %v1117
      %v1119 = vrot.slane %v1118, 4
      %v1121 = vshll.u32 %v956, 16
      %v1123 = vrot.slane %v1121, 5
      %v1124 = vsel %vm990, %v1119, %v1123
      %v1125 = vshrl.u32 %v956, 16
      %v1127 = vrot.slane %v1125, 4
      %v1128 = vor.u32 %v1127, %v1123
      %v1129 = vrot.slane %v1128, 4
      %v1131 = vshll.u32 %v957, 16
      %v1133 = vrot.slane %v1131, 5
      %v1134 = vsel %vm990, %v1129, %v1133
      %v1136 = vshrl.u32 %v958, 16
      %v1138 = vrot.slane %v1136, 4
      %v1139 = vshll.u32 %v958, 16
      %v1141 = vrot.slane %v1139, 5
      %v1142 = vor.u32 %v1138, %v1141
      %v1143 = vrot.slane %v1142, 4
      %v1145 = vshll.u32 %v959, 16
      %v1147 = vrot.slane %v1145, 5
      %v1148 = vsel %vm990, %v1143, %v1147
      %v1149 = vshrl.u32 %v959, 16
      %v1151 = vrot.slane %v1149, 4
      %v1152 = vor.u32 %v1151, %v1147
      %v1153 = vrot.slane %v1152, 4
      %v1155 = vshll.u32 %v960, 16
      %v1157 = vrot.slane %v1155, 5
      %v1158 = vsel %vm990, %v1153, %v1157
      %v1160 = vshrl.u32 %v961, 16
      %v1162 = vrot.slane %v1160, 4
      %v1163 = vshll.u32 %v961, 16
      %v1165 = vrot.slane %v1163, 5
      %v1166 = vor.u32 %v1162, %v1165
      %v1167 = vrot.slane %v1166, 4
      %v1169 = vshll.u32 %v962, 16
      %v1171 = vrot.slane %v1169, 5
      %v1172 = vsel %vm990, %v1167, %v1171
      %v1173 = vshrl.u32 %v962, 16
      %v1175 = vrot.slane %v1173, 4
      %v1176 = vor.u32 %v1175, %v1171
      %v1177 = vrot.slane %v1176, 4
      %v1179 = vshll.u32 %v963, 16
      %v1181 = vrot.slane %v1179, 5
      %v1182 = vsel %vm990, %v1177, %v1181
      %v1184 = vshrl.u32 %v964, 16
      %v1186 = vrot.slane %v1184, 4
      %v1187 = vshll.u32 %v964, 16
      %v1189 = vrot.slane %v1187, 5
      %v1190 = vor.u32 %v1186, %v1189
      %v1191 = vrot.slane %v1190, 4
      %v1193 = vshll.u32 %v965, 16
      %v1195 = vrot.slane %v1193, 5
      %v1196 = vsel %vm990, %v1191, %v1195
      %v1197 = vshrl.u32 %v965, 16
      %v1199 = vrot.slane %v1197, 4
      %v1200 = vor.u32 %v1199, %v1195
      %v1201 = vrot.slane %v1200, 4
      %v1203 = vshll.u32 %v966, 16
      %v1205 = vrot.slane %v1203, 5
      %v1206 = vsel %vm990, %v1201, %v1205
      %v1208 = vshrl.u32 %v967, 16
      %v1210 = vrot.slane %v1208, 4
      %v1211 = vshll.u32 %v967, 16
      %v1213 = vrot.slane %v1211, 5
      %v1214 = vor.u32 %v1210, %v1213
      %v1215 = vrot.slane %v1214, 4
      %v1217 = vshll.u32 %v968, 16
      %v1219 = vrot.slane %v1217, 5
      %v1220 = vsel %vm990, %v1215, %v1219
      %v1221 = vshrl.u32 %v968, 16
      %v1223 = vrot.slane %v1221, 4
      %v1224 = vor.u32 %v1223, %v1219
      %v1225 = vrot.slane %v1224, 4
      %v1227 = vshll.u32 %v969, 16
      %v1229 = vrot.slane %v1227, 5
      %v1230 = vsel %vm990, %v1225, %v1229
      %v1232 = vshrl.u32 %v970, 16
      %v1234 = vrot.slane %v1232, 4
      %v1235 = vshll.u32 %v970, 16
      %v1237 = vrot.slane %v1235, 5
      %v1238 = vor.u32 %v1234, %v1237
      %v1239 = vrot.slane %v1238, 4
      %v1241 = vshll.u32 %v971, 16
      %v1243 = vrot.slane %v1241, 5
      %v1244 = vsel %vm990, %v1239, %v1243
      %v1245 = vshrl.u32 %v971, 16
      %v1247 = vrot.slane %v1245, 4
      %v1248 = vor.u32 %v1247, %v1243
      %v1249 = vrot.slane %v1248, 4
      %v1251 = vshll.u32 %v972, 16
      %v1253 = vrot.slane %v1251, 5
      %v1254 = vsel %vm990, %v1249, %v1253
      %v1256 = vshrl.u32 %v973, 16
      %v1258 = vrot.slane %v1256, 4
      %v1259 = vshll.u32 %v973, 16
      %v1261 = vrot.slane %v1259, 5
      %v1262 = vor.u32 %v1258, %v1261
      %v1263 = vrot.slane %v1262, 4
      %v1265 = vshll.u32 %v974, 16
      %v1267 = vrot.slane %v1265, 5
      %v1268 = vsel %vm990, %v1263, %v1267
      %v1269 = vshrl.u32 %v974, 16
      %v1271 = vrot.slane %v1269, 4
      %v1272 = vor.u32 %v1271, %v1267
      %v1273 = vrot.slane %v1272, 4
      %v1275 = vshll.u32 %v975, 16
      %v1277 = vrot.slane %v1275, 5
      %v1278 = vsel %vm990, %v1273, %v1277
      %v1280 = vshrl.u32 %v976, 16
      %v1282 = vrot.slane %v1280, 4
      %v1283 = vshll.u32 %v976, 16
      %v1285 = vrot.slane %v1283, 5
      %v1286 = vor.u32 %v1282, %v1285
      %v1287 = vrot.slane %v1286, 4
      %v1289 = vshll.u32 %v977, 16
      %v1291 = vrot.slane %v1289, 5
      %v1292 = vsel %vm990, %v1287, %v1291
      %v1293 = vshrl.u32 %v977, 16
      %v1295 = vrot.slane %v1293, 4
      %v1296 = vor.u32 %v1295, %v1291
      %v1297 = vrot.slane %v1296, 4
      %v1299 = vshll.u32 %v978, 16
      %v1301 = vrot.slane %v1299, 5
      %v1302 = vsel %vm990, %v1297, %v1301
      %v1304 = vshrl.u32 %v979, 16
      %v1306 = vrot.slane %v1304, 4
      %v1307 = vshll.u32 %v979, 16
      %v1309 = vrot.slane %v1307, 5
      %v1310 = vor.u32 %v1306, %v1309
      %v1311 = vrot.slane %v1310, 4
      %v1313 = vshll.u32 %v980, 16
      %v1315 = vrot.slane %v1313, 5
      %v1316 = vsel %vm990, %v1311, %v1315
      %v1317 = vshrl.u32 %v980, 16
      %v1319 = vrot.slane %v1317, 4
      %v1320 = vor.u32 %v1319, %v1315
      %v1321 = vrot.slane %v1320, 4
      %v1323 = vshll.u32 %v981, 16
      %v1325 = vrot.slane %v1323, 5
      %v1326 = vsel %vm990, %v1321, %v1325
      %v1328 = vshrl.u32 %v982, 16
      %v1330 = vrot.slane %v1328, 4
      %v1331 = vshll.u32 %v982, 16
      %v1333 = vrot.slane %v1331, 5
      %v1334 = vor.u32 %v1330, %v1333
      %v1335 = vrot.slane %v1334, 4
      %v1337 = vshll.u32 %v983, 16
      %v1339 = vrot.slane %v1337, 5
      %v1340 = vsel %vm990, %v1335, %v1339
      %v1341 = vshrl.u32 %v983, 16
      %v1343 = vrot.slane %v1341, 4
      %v1344 = vor.u32 %v1343, %v1339
      %v1345 = vrot.slane %v1344, 4
      %v1347 = vshll.u32 %v984, 16
      %v1349 = vrot.slane %v1347, 5
      %v1350 = vsel %vm990, %v1345, %v1349
      %v1352 = vshrl.u32 %v985, 16
      %v1354 = vrot.slane %v1352, 4
      %v1355 = vshll.u32 %v985, 16
      %v1357 = vrot.slane %v1355, 5
      %v1358 = vor.u32 %v1354, %v1357
      %v1359 = vrot.slane %v1358, 4
      %v1361 = vshll.u32 %v986, 16
      %v1363 = vrot.slane %v1361, 5
      %v1364 = vsel %vm990, %v1359, %v1363
      %v1365 = vshrl.u32 %v986, 16
      %v1367 = vrot.slane %v1365, 4
      %v1368 = vor.u32 %v1367, %v1363
      %v1369 = vrot.slane %v1368, 4
      %v1371 = vshll.u32 %v987, 16
      %v1373 = vrot.slane %v1371, 5
      %v1374 = vsel %vm990, %v1369, %v1373
      %1407 = vst [vmem:[#allocation3 + $0x4] sm:$0xf] %v1004
      %1408 = vst [vmem:[#allocation3 + $0x28] sm:$0xf] %v1014
      %1409 = vst [vmem:[#allocation3 + $0x4c] sm:$0xf] %v1028
      %1410 = vst [vmem:[#allocation3 + $0x70] sm:$0xf] %v1038
      %1411 = vst [vmem:[#allocation3 + $0x94] sm:$0xf] %v1052
      %1412 = vst [vmem:[#allocation3 + $0xb8] sm:$0xf] %v1062
      %1413 = vst [vmem:[#allocation3 + $0xdc] sm:$0xf] %v1076
      %1414 = vst [vmem:[#allocation3 + $0x100] sm:$0xf] %v1086
      %1415 = vst [vmem:[#allocation3 + $0x124] sm:$0xf] %v1100
      %1416 = vst [vmem:[#allocation3 + $0x148] sm:$0xf] %v1110
      %1417 = vst [vmem:[#allocation3 + $0x16c] sm:$0xf] %v1124
      %1418 = vst [vmem:[#allocation3 + $0x190] sm:$0xf] %v1134
      %1419 = vst [vmem:[#allocation3 + $0x1b4] sm:$0xf] %v1148
      %1420 = vst [vmem:[#allocation3 + $0x1d8] sm:$0xf] %v1158
      %1421 = vst [vmem:[#allocation3 + $0x1fc] sm:$0xf] %v1172
      %1422 = vst [vmem:[#allocation3 + $0x220] sm:$0xf] %v1182
      %1423 = vst [vmem:[#allocation3 + $0x244] sm:$0xf] %v1196
      %1424 = vst [vmem:[#allocation3 + $0x268] sm:$0xf] %v1206
      %1425 = vst [vmem:[#allocation3 + $0x28c] sm:$0xf] %v1220
      %1426 = vst [vmem:[#allocation3 + $0x2b0] sm:$0xf] %v1230
      %1427 = vst [vmem:[#allocation3 + $0x2d4] sm:$0xf] %v1244
      %1428 = vst [vmem:[#allocation3 + $0x2f8] sm:$0xf] %v1254
      %1429 = vst [vmem:[#allocation3 + $0x31c] sm:$0xf] %v1268
      %1430 = vst [vmem:[#allocation3 + $0x340] sm:$0xf] %v1278
      %1431 = vst [vmem:[#allocation3 + $0x364] sm:$0xf] %v1292
      %1432 = vst [vmem:[#allocation3 + $0x388] sm:$0xf] %v1302
      %1433 = vst [vmem:[#allocation3 + $0x3ac] sm:$0xf] %v1316
      %1434 = vst [vmem:[#allocation3 + $0x3d0] sm:$0xf] %v1326
      %1435 = vst [vmem:[#allocation3 + $0x3f4] sm:$0xf] %v1340
      %1436 = vst [vmem:[#allocation3 + $0x418] sm:$0xf] %v1350
      %1437 = vst [vmem:[#allocation3 + $0x43c] sm:$0xf] %v1364
      %1438 = vst [vmem:[#allocation3 + $0x460] sm:$0xf] %v1374
      %v1439 = vld [vmem:[#allocation2] sm:$0xe]
      %v1440 = vld [vmem:[#allocation2 + $0x4] sm:$0xf]
      %v1441 = vld [vmem:[#allocation2 + $0x8] sm:$0x1]
      %v1442 = vld [vmem:[#allocation2 + $0xc] sm:$0xe]
      %v1443 = vld [vmem:[#allocation2 + $0x10] sm:$0xf]
      %v1444 = vld [vmem:[#allocation2 + $0x14] sm:$0x1]
      %v1445 = vld [vmem:[#allocation2 + $0x18] sm:$0xe]
      %v1446 = vld [vmem:[#allocation2 + $0x1c] sm:$0xf]
      %v1447 = vld [vmem:[#allocation2 + $0x20] sm:$0x1]
      %v1448 = vld [vmem:[#allocation2 + $0x24] sm:$0xe]
      %v1449 = vld [vmem:[#allocation2 + $0x28] sm:$0xf]
      %v1450 = vld [vmem:[#allocation2 + $0x2c] sm:$0x1]
      %v1451 = vld [vmem:[#allocation2 + $0x30] sm:$0xe]
      %v1452 = vld [vmem:[#allocation2 + $0x34] sm:$0xf]
      %v1453 = vld [vmem:[#allocation2 + $0x38] sm:$0x1]
      %v1454 = vld [vmem:[#allocation2 + $0x3c] sm:$0xe]
      %v1455 = vld [vmem:[#allocation2 + $0x40] sm:$0xf]
      %v1456 = vld [vmem:[#allocation2 + $0x44] sm:$0x1]
      %v1457 = vld [vmem:[#allocation2 + $0x48] sm:$0xe]
      %v1458 = vld [vmem:[#allocation2 + $0x4c] sm:$0xf]
      %v1459 = vld [vmem:[#allocation2 + $0x50] sm:$0x1]
      %v1460 = vld [vmem:[#allocation2 + $0x54] sm:$0xe]
      %v1461 = vld [vmem:[#allocation2 + $0x58] sm:$0xf]
      %v1462 = vld [vmem:[#allocation2 + $0x5c] sm:$0x1]
      %v1463 = vld [vmem:[#allocation2 + $0x60] sm:$0xe]
      %v1464 = vld [vmem:[#allocation2 + $0x64] sm:$0xf]
      %v1465 = vld [vmem:[#allocation2 + $0x68] sm:$0x1]
      %v1466 = vld [vmem:[#allocation2 + $0x6c] sm:$0xe]
      %v1467 = vld [vmem:[#allocation2 + $0x70] sm:$0xf]
      %v1468 = vld [vmem:[#allocation2 + $0x74] sm:$0x1]
      %v1469 = vld [vmem:[#allocation2 + $0x78] sm:$0xe]
      %v1470 = vld [vmem:[#allocation2 + $0x7c] sm:$0xf]
      %v1471 = vld [vmem:[#allocation2 + $0x80] sm:$0x1]
      %v1472 = vld [vmem:[#allocation2 + $0x84] sm:$0xe]
      %v1473 = vld [vmem:[#allocation2 + $0x88] sm:$0xf]
      %v1474 = vld [vmem:[#allocation2 + $0x8c] sm:$0x1]
      %v1475 = vld [vmem:[#allocation2 + $0x90] sm:$0xe]
      %v1476 = vld [vmem:[#allocation2 + $0x94] sm:$0xf]
      %v1477 = vld [vmem:[#allocation2 + $0x98] sm:$0x1]
      %v1478 = vld [vmem:[#allocation2 + $0x9c] sm:$0xe]
      %v1479 = vld [vmem:[#allocation2 + $0xa0] sm:$0xf]
      %v1480 = vld [vmem:[#allocation2 + $0xa4] sm:$0x1]
      %v1481 = vld [vmem:[#allocation2 + $0xa8] sm:$0xe]
      %v1482 = vld [vmem:[#allocation2 + $0xac] sm:$0xf]
      %v1483 = vld [vmem:[#allocation2 + $0xb0] sm:$0x1]
      %v1484 = vld [vmem:[#allocation2 + $0xb4] sm:$0xe]
      %v1485 = vld [vmem:[#allocation2 + $0xb8] sm:$0xf]
      %v1486 = vld [vmem:[#allocation2 + $0xbc] sm:$0x1]
      %vm1535 = vcmask 1042432
      %vm1536 = vcmask 1046532
      %vm1537 = vmor %vm1535, %vm1536
      %v1538 = vrot.slane %v1439, 5
      %v1539 = vrot.slane %v1538, 4
      %v1540 = vrot.slane %v1440, 5
      %v1541 = vsel %vm1537, %v1539, %v1540
      %v1542 = vrot.slane %v1540, 4
      %v1543 = vrot.slane %v1441, 5
      %v1544 = vsel %vm1537, %v1542, %v1543
      %v1545 = vrot.slane %v1442, 5
      %v1546 = vrot.slane %v1545, 4
      %v1547 = vrot.slane %v1443, 5
      %v1548 = vsel %vm1537, %v1546, %v1547
      %v1549 = vrot.slane %v1547, 4
      %v1550 = vrot.slane %v1444, 5
      %v1551 = vsel %vm1537, %v1549, %v1550
      %v1552 = vrot.slane %v1445, 5
      %v1553 = vrot.slane %v1552, 4
      %v1554 = vrot.slane %v1446, 5
      %v1555 = vsel %vm1537, %v1553, %v1554
      %v1556 = vrot.slane %v1554, 4
      %v1557 = vrot.slane %v1447, 5
      %v1558 = vsel %vm1537, %v1556, %v1557
      %v1559 = vrot.slane %v1448, 5
      %v1560 = vrot.slane %v1559, 4
      %v1561 = vrot.slane %v1449, 5
      %v1562 = vsel %vm1537, %v1560, %v1561
      %v1563 = vrot.slane %v1561, 4
      %v1564 = vrot.slane %v1450, 5
      %v1565 = vsel %vm1537, %v1563, %v1564
      %v1566 = vrot.slane %v1451, 5
      %v1567 = vrot.slane %v1566, 4
      %v1568 = vrot.slane %v1452, 5
      %v1569 = vsel %vm1537, %v1567, %v1568
      %v1570 = vrot.slane %v1568, 4
      %v1571 = vrot.slane %v1453, 5
      %v1572 = vsel %vm1537, %v1570, %v1571
      %v1573 = vrot.slane %v1454, 5
      %v1574 = vrot.slane %v1573, 4
      %v1575 = vrot.slane %v1455, 5
      %v1576 = vsel %vm1537, %v1574, %v1575
      %v1577 = vrot.slane %v1575, 4
      %v1578 = vrot.slane %v1456, 5
      %v1579 = vsel %vm1537, %v1577, %v1578
      %v1580 = vrot.slane %v1457, 5
      %v1581 = vrot.slane %v1580, 4
      %v1582 = vrot.slane %v1458, 5
      %v1583 = vsel %vm1537, %v1581, %v1582
      %v1584 = vrot.slane %v1582, 4
      %v1585 = vrot.slane %v1459, 5
      %v1586 = vsel %vm1537, %v1584, %v1585
      %v1587 = vrot.slane %v1460, 5
      %v1588 = vrot.slane %v1587, 4
      %v1589 = vrot.slane %v1461, 5
      %v1590 = vsel %vm1537, %v1588, %v1589
      %v1591 = vrot.slane %v1589, 4
      %v1592 = vrot.slane %v1462, 5
      %v1593 = vsel %vm1537, %v1591, %v1592
      %v1594 = vrot.slane %v1463, 5
      %v1595 = vrot.slane %v1594, 4
      %v1596 = vrot.slane %v1464, 5
      %v1597 = vsel %vm1537, %v1595, %v1596
      %v1598 = vrot.slane %v1596, 4
      %v1599 = vrot.slane %v1465, 5
      %v1600 = vsel %vm1537, %v1598, %v1599
      %v1601 = vrot.slane %v1466, 5
      %v1602 = vrot.slane %v1601, 4
      %v1603 = vrot.slane %v1467, 5
      %v1604 = vsel %vm1537, %v1602, %v1603
      %v1605 = vrot.slane %v1603, 4
      %v1606 = vrot.slane %v1468, 5
      %v1607 = vsel %vm1537, %v1605, %v1606
      %v1608 = vrot.slane %v1469, 5
      %v1609 = vrot.slane %v1608, 4
      %v1610 = vrot.slane %v1470, 5
      %v1611 = vsel %vm1537, %v1609, %v1610
      %v1612 = vrot.slane %v1610, 4
      %v1613 = vrot.slane %v1471, 5
      %v1614 = vsel %vm1537, %v1612, %v1613
      %v1615 = vrot.slane %v1472, 5
      %v1616 = vrot.slane %v1615, 4
      %v1617 = vrot.slane %v1473, 5
      %v1618 = vsel %vm1537, %v1616, %v1617
      %v1619 = vrot.slane %v1617, 4
      %v1620 = vrot.slane %v1474, 5
      %v1621 = vsel %vm1537, %v1619, %v1620
      %v1622 = vrot.slane %v1475, 5
      %v1623 = vrot.slane %v1622, 4
      %v1624 = vrot.slane %v1476, 5
      %v1625 = vsel %vm1537, %v1623, %v1624
      %v1626 = vrot.slane %v1624, 4
      %v1627 = vrot.slane %v1477, 5
      %v1628 = vsel %vm1537, %v1626, %v1627
      %v1629 = vrot.slane %v1478, 5
      %v1630 = vrot.slane %v1629, 4
      %v1631 = vrot.slane %v1479, 5
      %v1632 = vsel %vm1537, %v1630, %v1631
      %v1633 = vrot.slane %v1631, 4
      %v1634 = vrot.slane %v1480, 5
      %v1635 = vsel %vm1537, %v1633, %v1634
      %v1636 = vrot.slane %v1481, 5
      %v1637 = vrot.slane %v1636, 4
      %v1638 = vrot.slane %v1482, 5
      %v1639 = vsel %vm1537, %v1637, %v1638
      %v1640 = vrot.slane %v1638, 4
      %v1641 = vrot.slane %v1483, 5
      %v1642 = vsel %vm1537, %v1640, %v1641
      %v1643 = vrot.slane %v1484, 5
      %v1644 = vrot.slane %v1643, 4
      %v1645 = vrot.slane %v1485, 5
      %v1646 = vsel %vm1537, %v1644, %v1645
      %v1647 = vrot.slane %v1645, 4
      %v1648 = vrot.slane %v1486, 5
      %v1649 = vsel %vm1537, %v1647, %v1648
      %1682 = vst [vmem:[#allocation3 + $0x8] sm:$0xf] %v1541
      %1683 = vst [vmem:[#allocation3 + $0x2c] sm:$0xf] %v1544
      %1684 = vst [vmem:[#allocation3 + $0x50] sm:$0xf] %v1548
      %1685 = vst [vmem:[#allocation3 + $0x74] sm:$0xf] %v1551
      %1686 = vst [vmem:[#allocation3 + $0x98] sm:$0xf] %v1555
      %1687 = vst [vmem:[#allocation3 + $0xbc] sm:$0xf] %v1558
      %1688 = vst [vmem:[#allocation3 + $0xe0] sm:$0xf] %v1562
      %1689 = vst [vmem:[#allocation3 + $0x104] sm:$0xf] %v1565
      %1690 = vst [vmem:[#allocation3 + $0x128] sm:$0xf] %v1569
      %1691 = vst [vmem:[#allocation3 + $0x14c] sm:$0xf] %v1572
      %1692 = vst [vmem:[#allocation3 + $0x170] sm:$0xf] %v1576
      %1693 = vst [vmem:[#allocation3 + $0x194] sm:$0xf] %v1579
      %1694 = vst [vmem:[#allocation3 + $0x1b8] sm:$0xf] %v1583
      %1695 = vst [vmem:[#allocation3 + $0x1dc] sm:$0xf] %v1586
      %1696 = vst [vmem:[#allocation3 + $0x200] sm:$0xf] %v1590
      %1697 = vst [vmem:[#allocation3 + $0x224] sm:$0xf] %v1593
      %1698 = vst [vmem:[#allocation3 + $0x248] sm:$0xf] %v1597
      %1699 = vst [vmem:[#allocation3 + $0x26c] sm:$0xf] %v1600
      %1700 = vst [vmem:[#allocation3 + $0x290] sm:$0xf] %v1604
      %1701 = vst [vmem:[#allocation3 + $0x2b4] sm:$0xf] %v1607
      %1702 = vst [vmem:[#allocation3 + $0x2d8] sm:$0xf] %v1611
      %1703 = vst [vmem:[#allocation3 + $0x2fc] sm:$0xf] %v1614
      %1704 = vst [vmem:[#allocation3 + $0x320] sm:$0xf] %v1618
      %1705 = vst [vmem:[#allocation3 + $0x344] sm:$0xf] %v1621
      %1706 = vst [vmem:[#allocation3 + $0x368] sm:$0xf] %v1625
      %1707 = vst [vmem:[#allocation3 + $0x38c] sm:$0xf] %v1628
      %1708 = vst [vmem:[#allocation3 + $0x3b0] sm:$0xf] %v1632
      %1709 = vst [vmem:[#allocation3 + $0x3d4] sm:$0xf] %v1635
      %1710 = vst [vmem:[#allocation3 + $0x3f8] sm:$0xf] %v1639
      %1711 = vst [vmem:[#allocation3 + $0x41c] sm:$0xf] %v1642
      %1712 = vst [vmem:[#allocation3 + $0x440] sm:$0xf] %v1646
      %1713 = vst [vmem:[#allocation3 + $0x464] sm:$0xf] %v1649
      %v1714 = vld [vmem:[%s683] sm:$0xf]
      %v1715 = vld [vmem:[%s683 + $0x4] sm:$0xf]
      %v1716 = vld [vmem:[%s683 + $0xc] sm:$0xf]
      %v1717 = vld [vmem:[%s683 + $0x10] sm:$0xf]
      %v1718 = vld [vmem:[%s683 + $0x18] sm:$0xf]
      %v1719 = vld [vmem:[%s683 + $0x1c] sm:$0xf]
      %v1720 = vld [vmem:[%s683 + $0x24] sm:$0xf]
      %v1721 = vld [vmem:[%s683 + $0x28] sm:$0xf]
      %v1722 = vld [vmem:[%s683 + $0x30] sm:$0xf]
      %v1723 = vld [vmem:[%s683 + $0x34] sm:$0xf]
      %v1724 = vld [vmem:[%s683 + $0x3c] sm:$0xf]
      %v1725 = vld [vmem:[%s683 + $0x40] sm:$0xf]
      %v1726 = vld [vmem:[%s683 + $0x48] sm:$0xf]
      %v1727 = vld [vmem:[%s683 + $0x4c] sm:$0xf]
      %v1728 = vld [vmem:[%s683 + $0x54] sm:$0xf]
      %v1729 = vld [vmem:[%s683 + $0x58] sm:$0xf]
      %v1730 = vld [vmem:[%s683 + $0x60] sm:$0xf]
      %v1731 = vld [vmem:[%s683 + $0x64] sm:$0xf]
      %v1732 = vld [vmem:[%s683 + $0x6c] sm:$0xf]
      %v1733 = vld [vmem:[%s683 + $0x70] sm:$0xf]
      %v1734 = vld [vmem:[%s683 + $0x78] sm:$0xf]
      %v1735 = vld [vmem:[%s683 + $0x7c] sm:$0xf]
      %v1736 = vld [vmem:[%s683 + $0x84] sm:$0xf]
      %v1737 = vld [vmem:[%s683 + $0x88] sm:$0xf]
      %v1738 = vld [vmem:[%s683 + $0x90] sm:$0xf]
      %v1739 = vld [vmem:[%s683 + $0x94] sm:$0xf]
      %v1740 = vld [vmem:[%s683 + $0x9c] sm:$0xf]
      %v1741 = vld [vmem:[%s683 + $0xa0] sm:$0xf]
      %v1742 = vld [vmem:[%s683 + $0xa8] sm:$0xf]
      %v1743 = vld [vmem:[%s683 + $0xac] sm:$0xf]
      %v1744 = vld [vmem:[%s683 + $0xb4] sm:$0xf]
      %v1745 = vld [vmem:[%s683 + $0xb8] sm:$0xf]
      %1746 = vst [vmem:[#allocation3 + $0xc] sm:$0xf] %v1714
      %1747 = vst [vmem:[#allocation3 + $0x30] sm:$0xf] %v1715
      %1748 = vst [vmem:[#allocation3 + $0x54] sm:$0xf] %v1716
      %1749 = vst [vmem:[#allocation3 + $0x78] sm:$0xf] %v1717
      %1750 = vst [vmem:[#allocation3 + $0x9c] sm:$0xf] %v1718
      %1751 = vst [vmem:[#allocation3 + $0xc0] sm:$0xf] %v1719
      %1752 = vst [vmem:[#allocation3 + $0xe4] sm:$0xf] %v1720
      %1753 = vst [vmem:[#allocation3 + $0x108] sm:$0xf] %v1721
      %1754 = vst [vmem:[#allocation3 + $0x12c] sm:$0xf] %v1722
      %1755 = vst [vmem:[#allocation3 + $0x150] sm:$0xf] %v1723
      %1756 = vst [vmem:[#allocation3 + $0x174] sm:$0xf] %v1724
      %1757 = vst [vmem:[#allocation3 + $0x198] sm:$0xf] %v1725
      %1758 = vst [vmem:[#allocation3 + $0x1bc] sm:$0xf] %v1726
      %1759 = vst [vmem:[#allocation3 + $0x1e0] sm:$0xf] %v1727
      %1760 = vst [vmem:[#allocation3 + $0x204] sm:$0xf] %v1728
      %1761 = vst [vmem:[#allocation3 + $0x228] sm:$0xf] %v1729
      %1762 = vst [vmem:[#allocation3 + $0x24c] sm:$0xf] %v1730
      %1763 = vst [vmem:[#allocation3 + $0x270] sm:$0xf] %v1731
      %1764 = vst [vmem:[#allocation3 + $0x294] sm:$0xf] %v1732
      %1765 = vst [vmem:[#allocation3 + $0x2b8] sm:$0xf] %v1733
      %1766 = vst [vmem:[#allocation3 + $0x2dc] sm:$0xf] %v1734
      %1767 = vst [vmem:[#allocation3 + $0x300] sm:$0xf] %v1735
      %1768 = vst [vmem:[#allocation3 + $0x324] sm:$0xf] %v1736
      %1769 = vst [vmem:[#allocation3 + $0x348] sm:$0xf] %v1737
      %1770 = vst [vmem:[#allocation3 + $0x36c] sm:$0xf] %v1738
      %1771 = vst [vmem:[#allocation3 + $0x390] sm:$0xf] %v1739
      %1772 = vst [vmem:[#allocation3 + $0x3b4] sm:$0xf] %v1740
      %1773 = vst [vmem:[#allocation3 + $0x3d8] sm:$0xf] %v1741
      %1774 = vst [vmem:[#allocation3 + $0x3fc] sm:$0xf] %v1742
      %1775 = vst [vmem:[#allocation3 + $0x420] sm:$0xf] %v1743
      %1776 = vst [vmem:[#allocation3 + $0x444] sm:$0xf] %v1744
      %1777 = vst [vmem:[#allocation3 + $0x468] sm:$0xf] %v1745
      %v1778 = vld [vmem:[%s683] sm:$0xf]
      %v1779 = vld [vmem:[%s683 + $0x4] sm:$0xf]
      %v1780 = vld [vmem:[%s683 + $0x8] sm:$0x1]
      %v1781 = vld [vmem:[%s683 + $0xc] sm:$0xf]
      %v1782 = vld [vmem:[%s683 + $0x10] sm:$0xf]
      %v1783 = vld [vmem:[%s683 + $0x14] sm:$0x1]
      %v1784 = vld [vmem:[%s683 + $0x18] sm:$0xf]
      %v1785 = vld [vmem:[%s683 + $0x1c] sm:$0xf]
      %v1786 = vld [vmem:[%s683 + $0x20] sm:$0x1]
      %v1787 = vld [vmem:[%s683 + $0x24] sm:$0xf]
      %v1788 = vld [vmem:[%s683 + $0x28] sm:$0xf]
      %v1789 = vld [vmem:[%s683 + $0x2c] sm:$0x1]
      %v1790 = vld [vmem:[%s683 + $0x30] sm:$0xf]
      %v1791 = vld [vmem:[%s683 + $0x34] sm:$0xf]
      %v1792 = vld [vmem:[%s683 + $0x38] sm:$0x1]
      %v1793 = vld [vmem:[%s683 + $0x3c] sm:$0xf]
      %v1794 = vld [vmem:[%s683 + $0x40] sm:$0xf]
      %v1795 = vld [vmem:[%s683 + $0x44] sm:$0x1]
      %v1796 = vld [vmem:[%s683 + $0x48] sm:$0xf]
      %v1797 = vld [vmem:[%s683 + $0x4c] sm:$0xf]
      %v1798 = vld [vmem:[%s683 + $0x50] sm:$0x1]
      %v1799 = vld [vmem:[%s683 + $0x54] sm:$0xf]
      %v1800 = vld [vmem:[%s683 + $0x58] sm:$0xf]
      %v1801 = vld [vmem:[%s683 + $0x5c] sm:$0x1]
      %v1802 = vld [vmem:[%s683 + $0x60] sm:$0xf]
      %v1803 = vld [vmem:[%s683 + $0x64] sm:$0xf]
      %v1804 = vld [vmem:[%s683 + $0x68] sm:$0x1]
      %v1805 = vld [vmem:[%s683 + $0x6c] sm:$0xf]
      %v1806 = vld [vmem:[%s683 + $0x70] sm:$0xf]
      %v1807 = vld [vmem:[%s683 + $0x74] sm:$0x1]
      %v1808 = vld [vmem:[%s683 + $0x78] sm:$0xf]
      %v1809 = vld [vmem:[%s683 + $0x7c] sm:$0xf]
      %v1810 = vld [vmem:[%s683 + $0x80] sm:$0x1]
      %v1811 = vld [vmem:[%s683 + $0x84] sm:$0xf]
      %v1812 = vld [vmem:[%s683 + $0x88] sm:$0xf]
      %v1813 = vld [vmem:[%s683 + $0x8c] sm:$0x1]
      %v1814 = vld [vmem:[%s683 + $0x90] sm:$0xf]
      %v1815 = vld [vmem:[%s683 + $0x94] sm:$0xf]
      %v1816 = vld [vmem:[%s683 + $0x98] sm:$0x1]
      %v1817 = vld [vmem:[%s683 + $0x9c] sm:$0xf]
      %v1818 = vld [vmem:[%s683 + $0xa0] sm:$0xf]
      %v1819 = vld [vmem:[%s683 + $0xa4] sm:$0x1]
      %v1820 = vld [vmem:[%s683 + $0xa8] sm:$0xf]
      %v1821 = vld [vmem:[%s683 + $0xac] sm:$0xf]
      %v1822 = vld [vmem:[%s683 + $0xb0] sm:$0x1]
      %v1823 = vld [vmem:[%s683 + $0xb4] sm:$0xf]
      %v1824 = vld [vmem:[%s683 + $0xb8] sm:$0xf]
      %v1825 = vld [vmem:[%s683 + $0xbc] sm:$0x1]
      %v1827 = vshrl.u32 %v1778, 16
      %v1829 = vrot.slane %v1827, 4
      %v1830 = vshll.u32 %v1778, 16
      %v1832 = vrot.slane %v1830, 5
      %v1833 = vor.u32 %v1829, %v1832
      %v1834 = vrot.slane %v1833, 4
      %v1836 = vshll.u32 %v1779, 16
      %v1838 = vrot.slane %v1836, 5
      %v1839 = vsel %vm990, %v1834, %v1838
      %v1840 = vshrl.u32 %v1779, 16
      %v1842 = vrot.slane %v1840, 4
      %v1843 = vor.u32 %v1842, %v1838
      %v1844 = vrot.slane %v1843, 4
      %v1846 = vshll.u32 %v1780, 16
      %v1848 = vrot.slane %v1846, 5
      %v1849 = vsel %vm990, %v1844, %v1848
      %v1851 = vshrl.u32 %v1781, 16
      %v1853 = vrot.slane %v1851, 4
      %v1854 = vshll.u32 %v1781, 16
      %v1856 = vrot.slane %v1854, 5
      %v1857 = vor.u32 %v1853, %v1856
      %v1858 = vrot.slane %v1857, 4
      %v1860 = vshll.u32 %v1782, 16
      %v1862 = vrot.slane %v1860, 5
      %v1863 = vsel %vm990, %v1858, %v1862
      %v1864 = vshrl.u32 %v1782, 16
      %v1866 = vrot.slane %v1864, 4
      %v1867 = vor.u32 %v1866, %v1862
      %v1868 = vrot.slane %v1867, 4
      %v1870 = vshll.u32 %v1783, 16
      %v1872 = vrot.slane %v1870, 5
      %v1873 = vsel %vm990, %v1868, %v1872
      %v1875 = vshrl.u32 %v1784, 16
      %v1877 = vrot.slane %v1875, 4
      %v1878 = vshll.u32 %v1784, 16
      %v1880 = vrot.slane %v1878, 5
      %v1881 = vor.u32 %v1877, %v1880
      %v1882 = vrot.slane %v1881, 4
      %v1884 = vshll.u32 %v1785, 16
      %v1886 = vrot.slane %v1884, 5
      %v1887 = vsel %vm990, %v1882, %v1886
      %v1888 = vshrl.u32 %v1785, 16
      %v1890 = vrot.slane %v1888, 4
      %v1891 = vor.u32 %v1890, %v1886
      %v1892 = vrot.slane %v1891, 4
      %v1894 = vshll.u32 %v1786, 16
      %v1896 = vrot.slane %v1894, 5
      %v1897 = vsel %vm990, %v1892, %v1896
      %v1899 = vshrl.u32 %v1787, 16
      %v1901 = vrot.slane %v1899, 4
      %v1902 = vshll.u32 %v1787, 16
      %v1904 = vrot.slane %v1902, 5
      %v1905 = vor.u32 %v1901, %v1904
      %v1906 = vrot.slane %v1905, 4
      %v1908 = vshll.u32 %v1788, 16
      %v1910 = vrot.slane %v1908, 5
      %v1911 = vsel %vm990, %v1906, %v1910
      %v1912 = vshrl.u32 %v1788, 16
      %v1914 = vrot.slane %v1912, 4
      %v1915 = vor.u32 %v1914, %v1910
      %v1916 = vrot.slane %v1915, 4
      %v1918 = vshll.u32 %v1789, 16
      %v1920 = vrot.slane %v1918, 5
      %v1921 = vsel %vm990, %v1916, %v1920
      %v1923 = vshrl.u32 %v1790, 16
      %v1925 = vrot.slane %v1923, 4
      %v1926 = vshll.u32 %v1790, 16
      %v1928 = vrot.slane %v1926, 5
      %v1929 = vor.u32 %v1925, %v1928
      %v1930 = vrot.slane %v1929, 4
      %v1932 = vshll.u32 %v1791, 16
      %v1934 = vrot.slane %v1932, 5
      %v1935 = vsel %vm990, %v1930, %v1934
      %v1936 = vshrl.u32 %v1791, 16
      %v1938 = vrot.slane %v1936, 4
      %v1939 = vor.u32 %v1938, %v1934
      %v1940 = vrot.slane %v1939, 4
      %v1942 = vshll.u32 %v1792, 16
      %v1944 = vrot.slane %v1942, 5
      %v1945 = vsel %vm990, %v1940, %v1944
      %v1947 = vshrl.u32 %v1793, 16
      %v1949 = vrot.slane %v1947, 4
      %v1950 = vshll.u32 %v1793, 16
      %v1952 = vrot.slane %v1950, 5
      %v1953 = vor.u32 %v1949, %v1952
      %v1954 = vrot.slane %v1953, 4
      %v1956 = vshll.u32 %v1794, 16
      %v1958 = vrot.slane %v1956, 5
      %v1959 = vsel %vm990, %v1954, %v1958
      %v1960 = vshrl.u32 %v1794, 16
      %v1962 = vrot.slane %v1960, 4
      %v1963 = vor.u32 %v1962, %v1958
      %v1964 = vrot.slane %v1963, 4
      %v1966 = vshll.u32 %v1795, 16
      %v1968 = vrot.slane %v1966, 5
      %v1969 = vsel %vm990, %v1964, %v1968
      %v1971 = vshrl.u32 %v1796, 16
      %v1973 = vrot.slane %v1971, 4
      %v1974 = vshll.u32 %v1796, 16
      %v1976 = vrot.slane %v1974, 5
      %v1977 = vor.u32 %v1973, %v1976
      %v1978 = vrot.slane %v1977, 4
      %v1980 = vshll.u32 %v1797, 16
      %v1982 = vrot.slane %v1980, 5
      %v1983 = vsel %vm990, %v1978, %v1982
      %v1984 = vshrl.u32 %v1797, 16
      %v1986 = vrot.slane %v1984, 4
      %v1987 = vor.u32 %v1986, %v1982
      %v1988 = vrot.slane %v1987, 4
      %v1990 = vshll.u32 %v1798, 16
      %v1992 = vrot.slane %v1990, 5
      %v1993 = vsel %vm990, %v1988, %v1992
      %v1995 = vshrl.u32 %v1799, 16
      %v1997 = vrot.slane %v1995, 4
      %v1998 = vshll.u32 %v1799, 16
      %v2000 = vrot.slane %v1998, 5
      %v2001 = vor.u32 %v1997, %v2000
      %v2002 = vrot.slane %v2001, 4
      %v2004 = vshll.u32 %v1800, 16
      %v2006 = vrot.slane %v2004, 5
      %v2007 = vsel %vm990, %v2002, %v2006
      %v2008 = vshrl.u32 %v1800, 16
      %v2010 = vrot.slane %v2008, 4
      %v2011 = vor.u32 %v2010, %v2006
      %v2012 = vrot.slane %v2011, 4
      %v2014 = vshll.u32 %v1801, 16
      %v2016 = vrot.slane %v2014, 5
      %v2017 = vsel %vm990, %v2012, %v2016
      %v2019 = vshrl.u32 %v1802, 16
      %v2021 = vrot.slane %v2019, 4
      %v2022 = vshll.u32 %v1802, 16
      %v2024 = vrot.slane %v2022, 5
      %v2025 = vor.u32 %v2021, %v2024
      %v2026 = vrot.slane %v2025, 4
      %v2028 = vshll.u32 %v1803, 16
      %v2030 = vrot.slane %v2028, 5
      %v2031 = vsel %vm990, %v2026, %v2030
      %v2032 = vshrl.u32 %v1803, 16
      %v2034 = vrot.slane %v2032, 4
      %v2035 = vor.u32 %v2034, %v2030
      %v2036 = vrot.slane %v2035, 4
      %v2038 = vshll.u32 %v1804, 16
      %v2040 = vrot.slane %v2038, 5
      %v2041 = vsel %vm990, %v2036, %v2040
      %v2043 = vshrl.u32 %v1805, 16
      %v2045 = vrot.slane %v2043, 4
      %v2046 = vshll.u32 %v1805, 16
      %v2048 = vrot.slane %v2046, 5
      %v2049 = vor.u32 %v2045, %v2048
      %v2050 = vrot.slane %v2049, 4
      %v2052 = vshll.u32 %v1806, 16
      %v2054 = vrot.slane %v2052, 5
      %v2055 = vsel %vm990, %v2050, %v2054
      %v2056 = vshrl.u32 %v1806, 16
      %v2058 = vrot.slane %v2056, 4
      %v2059 = vor.u32 %v2058, %v2054
      %v2060 = vrot.slane %v2059, 4
      %v2062 = vshll.u32 %v1807, 16
      %v2064 = vrot.slane %v2062, 5
      %v2065 = vsel %vm990, %v2060, %v2064
      %v2067 = vshrl.u32 %v1808, 16
      %v2069 = vrot.slane %v2067, 4
      %v2070 = vshll.u32 %v1808, 16
      %v2072 = vrot.slane %v2070, 5
      %v2073 = vor.u32 %v2069, %v2072
      %v2074 = vrot.slane %v2073, 4
      %v2076 = vshll.u32 %v1809, 16
      %v2078 = vrot.slane %v2076, 5
      %v2079 = vsel %vm990, %v2074, %v2078
      %v2080 = vshrl.u32 %v1809, 16
      %v2082 = vrot.slane %v2080, 4
      %v2083 = vor.u32 %v2082, %v2078
      %v2084 = vrot.slane %v2083, 4
      %v2086 = vshll.u32 %v1810, 16
      %v2088 = vrot.slane %v2086, 5
      %v2089 = vsel %vm990, %v2084, %v2088
      %v2091 = vshrl.u32 %v1811, 16
      %v2093 = vrot.slane %v2091, 4
      %v2094 = vshll.u32 %v1811, 16
      %v2096 = vrot.slane %v2094, 5
      %v2097 = vor.u32 %v2093, %v2096
      %v2098 = vrot.slane %v2097, 4
      %v2100 = vshll.u32 %v1812, 16
      %v2102 = vrot.slane %v2100, 5
      %v2103 = vsel %vm990, %v2098, %v2102
      %v2104 = vshrl.u32 %v1812, 16
      %v2106 = vrot.slane %v2104, 4
      %v2107 = vor.u32 %v2106, %v2102
      %v2108 = vrot.slane %v2107, 4
      %v2110 = vshll.u32 %v1813, 16
      %v2112 = vrot.slane %v2110, 5
      %v2113 = vsel %vm990, %v2108, %v2112
      %v2115 = vshrl.u32 %v1814, 16
      %v2117 = vrot.slane %v2115, 4
      %v2118 = vshll.u32 %v1814, 16
      %v2120 = vrot.slane %v2118, 5
      %v2121 = vor.u32 %v2117, %v2120
      %v2122 = vrot.slane %v2121, 4
      %v2124 = vshll.u32 %v1815, 16
      %v2126 = vrot.slane %v2124, 5
      %v2127 = vsel %vm990, %v2122, %v2126
      %v2128 = vshrl.u32 %v1815, 16
      %v2130 = vrot.slane %v2128, 4
      %v2131 = vor.u32 %v2130, %v2126
      %v2132 = vrot.slane %v2131, 4
      %v2134 = vshll.u32 %v1816, 16
      %v2136 = vrot.slane %v2134, 5
      %v2137 = vsel %vm990, %v2132, %v2136
      %v2139 = vshrl.u32 %v1817, 16
      %v2141 = vrot.slane %v2139, 4
      %v2142 = vshll.u32 %v1817, 16
      %v2144 = vrot.slane %v2142, 5
      %v2145 = vor.u32 %v2141, %v2144
      %v2146 = vrot.slane %v2145, 4
      %v2148 = vshll.u32 %v1818, 16
      %v2150 = vrot.slane %v2148, 5
      %v2151 = vsel %vm990, %v2146, %v2150
      %v2152 = vshrl.u32 %v1818, 16
      %v2154 = vrot.slane %v2152, 4
      %v2155 = vor.u32 %v2154, %v2150
      %v2156 = vrot.slane %v2155, 4
      %v2158 = vshll.u32 %v1819, 16
      %v2160 = vrot.slane %v2158, 5
      %v2161 = vsel %vm990, %v2156, %v2160
      %v2163 = vshrl.u32 %v1820, 16
      %v2165 = vrot.slane %v2163, 4
      %v2166 = vshll.u32 %v1820, 16
      %v2168 = vrot.slane %v2166, 5
      %v2169 = vor.u32 %v2165, %v2168
      %v2170 = vrot.slane %v2169, 4
      %v2172 = vshll.u32 %v1821, 16
      %v2174 = vrot.slane %v2172, 5
      %v2175 = vsel %vm990, %v2170, %v2174
      %v2176 = vshrl.u32 %v1821, 16
      %v2178 = vrot.slane %v2176, 4
      %v2179 = vor.u32 %v2178, %v2174
      %v2180 = vrot.slane %v2179, 4
      %v2182 = vshll.u32 %v1822, 16
      %v2184 = vrot.slane %v2182, 5
      %v2185 = vsel %vm990, %v2180, %v2184
      %v2187 = vshrl.u32 %v1823, 16
      %v2189 = vrot.slane %v2187, 4
      %v2190 = vshll.u32 %v1823, 16
      %v2192 = vrot.slane %v2190, 5
      %v2193 = vor.u32 %v2189, %v2192
      %v2194 = vrot.slane %v2193, 4
      %v2196 = vshll.u32 %v1824, 16
      %v2198 = vrot.slane %v2196, 5
      %v2199 = vsel %vm990, %v2194, %v2198
      %v2200 = vshrl.u32 %v1824, 16
      %v2202 = vrot.slane %v2200, 4
      %v2203 = vor.u32 %v2202, %v2198
      %v2204 = vrot.slane %v2203, 4
      %v2206 = vshll.u32 %v1825, 16
      %v2208 = vrot.slane %v2206, 5
      %v2209 = vsel %vm990, %v2204, %v2208
      %2242 = vst [vmem:[#allocation3 + $0x10] sm:$0xf] %v1839
      %2243 = vst [vmem:[#allocation3 + $0x34] sm:$0xf] %v1849
      %2244 = vst [vmem:[#allocation3 + $0x58] sm:$0xf] %v1863
      %2245 = vst [vmem:[#allocation3 + $0x7c] sm:$0xf] %v1873
      %2246 = vst [vmem:[#allocation3 + $0xa0] sm:$0xf] %v1887
      %2247 = vst [vmem:[#allocation3 + $0xc4] sm:$0xf] %v1897
      %2248 = vst [vmem:[#allocation3 + $0xe8] sm:$0xf] %v1911
      %2249 = vst [vmem:[#allocation3 + $0x10c] sm:$0xf] %v1921
      %2250 = vst [vmem:[#allocation3 + $0x130] sm:$0xf] %v1935
      %2251 = vst [vmem:[#allocation3 + $0x154] sm:$0xf] %v1945
      %2252 = vst [vmem:[#allocation3 + $0x178] sm:$0xf] %v1959
      %2253 = vst [vmem:[#allocation3 + $0x19c] sm:$0xf] %v1969
      %2254 = vst [vmem:[#allocation3 + $0x1c0] sm:$0xf] %v1983
      %2255 = vst [vmem:[#allocation3 + $0x1e4] sm:$0xf] %v1993
      %2256 = vst [vmem:[#allocation3 + $0x208] sm:$0xf] %v2007
      %2257 = vst [vmem:[#allocation3 + $0x22c] sm:$0xf] %v2017
      %2258 = vst [vmem:[#allocation3 + $0x250] sm:$0xf] %v2031
      %2259 = vst [vmem:[#allocation3 + $0x274] sm:$0xf] %v2041
      %2260 = vst [vmem:[#allocation3 + $0x298] sm:$0xf] %v2055
      %2261 = vst [vmem:[#allocation3 + $0x2bc] sm:$0xf] %v2065
      %2262 = vst [vmem:[#allocation3 + $0x2e0] sm:$0xf] %v2079
      %2263 = vst [vmem:[#allocation3 + $0x304] sm:$0xf] %v2089
      %2264 = vst [vmem:[#allocation3 + $0x328] sm:$0xf] %v2103
      %2265 = vst [vmem:[#allocation3 + $0x34c] sm:$0xf] %v2113
      %2266 = vst [vmem:[#allocation3 + $0x370] sm:$0xf] %v2127
      %2267 = vst [vmem:[#allocation3 + $0x394] sm:$0xf] %v2137
      %2268 = vst [vmem:[#allocation3 + $0x3b8] sm:$0xf] %v2151
      %2269 = vst [vmem:[#allocation3 + $0x3dc] sm:$0xf] %v2161
      %2270 = vst [vmem:[#allocation3 + $0x400] sm:$0xf] %v2175
      %2271 = vst [vmem:[#allocation3 + $0x424] sm:$0xf] %v2185
      %2272 = vst [vmem:[#allocation3 + $0x448] sm:$0xf] %v2199
      %2273 = vst [vmem:[#allocation3 + $0x46c] sm:$0xf] %v2209
      %v2274 = vld [vmem:[%s683] sm:$0xe]
      %v2275 = vld [vmem:[%s683 + $0x4] sm:$0xf]
      %v2276 = vld [vmem:[%s683 + $0x8] sm:$0x1]
      %v2277 = vld [vmem:[%s683 + $0xc] sm:$0xe]
      %v2278 = vld [vmem:[%s683 + $0x10] sm:$0xf]
      %v2279 = vld [vmem:[%s683 + $0x14] sm:$0x1]
      %v2280 = vld [vmem:[%s683 + $0x18] sm:$0xe]
      %v2281 = vld [vmem:[%s683 + $0x1c] sm:$0xf]
      %v2282 = vld [vmem:[%s683 + $0x20] sm:$0x1]
      %v2283 = vld [vmem:[%s683 + $0x24] sm:$0xe]
      %v2284 = vld [vmem:[%s683 + $0x28] sm:$0xf]
      %v2285 = vld [vmem:[%s683 + $0x2c] sm:$0x1]
      %v2286 = vld [vmem:[%s683 + $0x30] sm:$0xe]
      %v2287 = vld [vmem:[%s683 + $0x34] sm:$0xf]
      %v2288 = vld [vmem:[%s683 + $0x38] sm:$0x1]
      %v2289 = vld [vmem:[%s683 + $0x3c] sm:$0xe]
      %v2290 = vld [vmem:[%s683 + $0x40] sm:$0xf]
      %v2291 = vld [vmem:[%s683 + $0x44] sm:$0x1]
      %v2292 = vld [vmem:[%s683 + $0x48] sm:$0xe]
      %v2293 = vld [vmem:[%s683 + $0x4c] sm:$0xf]
      %v2294 = vld [vmem:[%s683 + $0x50] sm:$0x1]
      %v2295 = vld [vmem:[%s683 + $0x54] sm:$0xe]
      %v2296 = vld [vmem:[%s683 + $0x58] sm:$0xf]
      %v2297 = vld [vmem:[%s683 + $0x5c] sm:$0x1]
      %v2298 = vld [vmem:[%s683 + $0x60] sm:$0xe]
      %v2299 = vld [vmem:[%s683 + $0x64] sm:$0xf]
      %v2300 = vld [vmem:[%s683 + $0x68] sm:$0x1]
      %v2301 = vld [vmem:[%s683 + $0x6c] sm:$0xe]
      %v2302 = vld [vmem:[%s683 + $0x70] sm:$0xf]
      %v2303 = vld [vmem:[%s683 + $0x74] sm:$0x1]
      %v2304 = vld [vmem:[%s683 + $0x78] sm:$0xe]
      %v2305 = vld [vmem:[%s683 + $0x7c] sm:$0xf]
      %v2306 = vld [vmem:[%s683 + $0x80] sm:$0x1]
      %v2307 = vld [vmem:[%s683 + $0x84] sm:$0xe]
      %v2308 = vld [vmem:[%s683 + $0x88] sm:$0xf]
      %v2309 = vld [vmem:[%s683 + $0x8c] sm:$0x1]
      %v2310 = vld [vmem:[%s683 + $0x90] sm:$0xe]
      %v2311 = vld [vmem:[%s683 + $0x94] sm:$0xf]
      %v2312 = vld [vmem:[%s683 + $0x98] sm:$0x1]
      %v2313 = vld [vmem:[%s683 + $0x9c] sm:$0xe]
      %v2314 = vld [vmem:[%s683 + $0xa0] sm:$0xf]
      %v2315 = vld [vmem:[%s683 + $0xa4] sm:$0x1]
      %v2316 = vld [vmem:[%s683 + $0xa8] sm:$0xe]
      %v2317 = vld [vmem:[%s683 + $0xac] sm:$0xf]
      %v2318 = vld [vmem:[%s683 + $0xb0] sm:$0x1]
      %v2319 = vld [vmem:[%s683 + $0xb4] sm:$0xe]
      %v2320 = vld [vmem:[%s683 + $0xb8] sm:$0xf]
      %v2321 = vld [vmem:[%s683 + $0xbc] sm:$0x1]
      %v2370 = vrot.slane %v2274, 5
      %v2371 = vrot.slane %v2370, 4
      %v2372 = vrot.slane %v2275, 5
      %v2373 = vsel %vm1537, %v2371, %v2372
      %v2374 = vrot.slane %v2372, 4
      %v2375 = vrot.slane %v2276, 5
      %v2376 = vsel %vm1537, %v2374, %v2375
      %v2377 = vrot.slane %v2277, 5
      %v2378 = vrot.slane %v2377, 4
      %v2379 = vrot.slane %v2278, 5
      %v2380 = vsel %vm1537, %v2378, %v2379
      %v2381 = vrot.slane %v2379, 4
      %v2382 = vrot.slane %v2279, 5
      %v2383 = vsel %vm1537, %v2381, %v2382
      %v2384 = vrot.slane %v2280, 5
      %v2385 = vrot.slane %v2384, 4
      %v2386 = vrot.slane %v2281, 5
      %v2387 = vsel %vm1537, %v2385, %v2386
      %v2388 = vrot.slane %v2386, 4
      %v2389 = vrot.slane %v2282, 5
      %v2390 = vsel %vm1537, %v2388, %v2389
      %v2391 = vrot.slane %v2283, 5
      %v2392 = vrot.slane %v2391, 4
      %v2393 = vrot.slane %v2284, 5
      %v2394 = vsel %vm1537, %v2392, %v2393
      %v2395 = vrot.slane %v2393, 4
      %v2396 = vrot.slane %v2285, 5
      %v2397 = vsel %vm1537, %v2395, %v2396
      %v2398 = vrot.slane %v2286, 5
      %v2399 = vrot.slane %v2398, 4
      %v2400 = vrot.slane %v2287, 5
      %v2401 = vsel %vm1537, %v2399, %v2400
      %v2402 = vrot.slane %v2400, 4
      %v2403 = vrot.slane %v2288, 5
      %v2404 = vsel %vm1537, %v2402, %v2403
      %v2405 = vrot.slane %v2289, 5
      %v2406 = vrot.slane %v2405, 4
      %v2407 = vrot.slane %v2290, 5
      %v2408 = vsel %vm1537, %v2406, %v2407
      %v2409 = vrot.slane %v2407, 4
      %v2410 = vrot.slane %v2291, 5
      %v2411 = vsel %vm1537, %v2409, %v2410
      %v2412 = vrot.slane %v2292, 5
      %v2413 = vrot.slane %v2412, 4
      %v2414 = vrot.slane %v2293, 5
      %v2415 = vsel %vm1537, %v2413, %v2414
      %v2416 = vrot.slane %v2414, 4
      %v2417 = vrot.slane %v2294, 5
      %v2418 = vsel %vm1537, %v2416, %v2417
      %v2419 = vrot.slane %v2295, 5
      %v2420 = vrot.slane %v2419, 4
      %v2421 = vrot.slane %v2296, 5
      %v2422 = vsel %vm1537, %v2420, %v2421
      %v2423 = vrot.slane %v2421, 4
      %v2424 = vrot.slane %v2297, 5
      %v2425 = vsel %vm1537, %v2423, %v2424
      %v2426 = vrot.slane %v2298, 5
      %v2427 = vrot.slane %v2426, 4
      %v2428 = vrot.slane %v2299, 5
      %v2429 = vsel %vm1537, %v2427, %v2428
      %v2430 = vrot.slane %v2428, 4
      %v2431 = vrot.slane %v2300, 5
      %v2432 = vsel %vm1537, %v2430, %v2431
      %v2433 = vrot.slane %v2301, 5
      %v2434 = vrot.slane %v2433, 4
      %v2435 = vrot.slane %v2302, 5
      %v2436 = vsel %vm1537, %v2434, %v2435
      %v2437 = vrot.slane %v2435, 4
      %v2438 = vrot.slane %v2303, 5
      %v2439 = vsel %vm1537, %v2437, %v2438
      %v2440 = vrot.slane %v2304, 5
      %v2441 = vrot.slane %v2440, 4
      %v2442 = vrot.slane %v2305, 5
      %v2443 = vsel %vm1537, %v2441, %v2442
      %v2444 = vrot.slane %v2442, 4
      %v2445 = vrot.slane %v2306, 5
      %v2446 = vsel %vm1537, %v2444, %v2445
      %v2447 = vrot.slane %v2307, 5
      %v2448 = vrot.slane %v2447, 4
      %v2449 = vrot.slane %v2308, 5
      %v2450 = vsel %vm1537, %v2448, %v2449
      %v2451 = vrot.slane %v2449, 4
      %v2452 = vrot.slane %v2309, 5
      %v2453 = vsel %vm1537, %v2451, %v2452
      %v2454 = vrot.slane %v2310, 5
      %v2455 = vrot.slane %v2454, 4
      %v2456 = vrot.slane %v2311, 5
      %v2457 = vsel %vm1537, %v2455, %v2456
      %v2458 = vrot.slane %v2456, 4
      %v2459 = vrot.slane %v2312, 5
      %v2460 = vsel %vm1537, %v2458, %v2459
      %v2461 = vrot.slane %v2313, 5
      %v2462 = vrot.slane %v2461, 4
      %v2463 = vrot.slane %v2314, 5
      %v2464 = vsel %vm1537, %v2462, %v2463
      %v2465 = vrot.slane %v2463, 4
      %v2466 = vrot.slane %v2315, 5
      %v2467 = vsel %vm1537, %v2465, %v2466
      %v2468 = vrot.slane %v2316, 5
      %v2469 = vrot.slane %v2468, 4
      %v2470 = vrot.slane %v2317, 5
      %v2471 = vsel %vm1537, %v2469, %v2470
      %v2472 = vrot.slane %v2470, 4
      %v2473 = vrot.slane %v2318, 5
      %v2474 = vsel %vm1537, %v2472, %v2473
      %v2475 = vrot.slane %v2319, 5
      %v2476 = vrot.slane %v2475, 4
      %v2477 = vrot.slane %v2320, 5
      %v2478 = vsel %vm1537, %v2476, %v2477
      %v2479 = vrot.slane %v2477, 4
      %v2480 = vrot.slane %v2321, 5
      %v2481 = vsel %vm1537, %v2479, %v2480
      %2514 = vst [vmem:[#allocation3 + $0x14] sm:$0xf] %v2373
      %2515 = vst [vmem:[#allocation3 + $0x38] sm:$0xf] %v2376
      %2516 = vst [vmem:[#allocation3 + $0x5c] sm:$0xf] %v2380
      %2517 = vst [vmem:[#allocation3 + $0x80] sm:$0xf] %v2383
      %2518 = vst [vmem:[#allocation3 + $0xa4] sm:$0xf] %v2387
      %2519 = vst [vmem:[#allocation3 + $0xc8] sm:$0xf] %v2390
      %2520 = vst [vmem:[#allocation3 + $0xec] sm:$0xf] %v2394
      %2521 = vst [vmem:[#allocation3 + $0x110] sm:$0xf] %v2397
      %2522 = vst [vmem:[#allocation3 + $0x134] sm:$0xf] %v2401
      %2523 = vst [vmem:[#allocation3 + $0x158] sm:$0xf] %v2404
      %2524 = vst [vmem:[#allocation3 + $0x17c] sm:$0xf] %v2408
      %2525 = vst [vmem:[#allocation3 + $0x1a0] sm:$0xf] %v2411
      %2526 = vst [vmem:[#allocation3 + $0x1c4] sm:$0xf] %v2415
      %2527 = vst [vmem:[#allocation3 + $0x1e8] sm:$0xf] %v2418
      %2528 = vst [vmem:[#allocation3 + $0x20c] sm:$0xf] %v2422
      %2529 = vst [vmem:[#allocation3 + $0x230] sm:$0xf] %v2425
      %2530 = vst [vmem:[#allocation3 + $0x254] sm:$0xf] %v2429
      %2531 = vst [vmem:[#allocation3 + $0x278] sm:$0xf] %v2432
      %2532 = vst [vmem:[#allocation3 + $0x29c] sm:$0xf] %v2436
      %2533 = vst [vmem:[#allocation3 + $0x2c0] sm:$0xf] %v2439
      %2534 = vst [vmem:[#allocation3 + $0x2e4] sm:$0xf] %v2443
      %2535 = vst [vmem:[#allocation3 + $0x308] sm:$0xf] %v2446
      %2536 = vst [vmem:[#allocation3 + $0x32c] sm:$0xf] %v2450
      %2537 = vst [vmem:[#allocation3 + $0x350] sm:$0xf] %v2453
      %2538 = vst [vmem:[#allocation3 + $0x374] sm:$0xf] %v2457
      %2539 = vst [vmem:[#allocation3 + $0x398] sm:$0xf] %v2460
      %2540 = vst [vmem:[#allocation3 + $0x3bc] sm:$0xf] %v2464
      %2541 = vst [vmem:[#allocation3 + $0x3e0] sm:$0xf] %v2467
      %2542 = vst [vmem:[#allocation3 + $0x404] sm:$0xf] %v2471
      %2543 = vst [vmem:[#allocation3 + $0x428] sm:$0xf] %v2474
      %2544 = vst [vmem:[#allocation3 + $0x44c] sm:$0xf] %v2478
      %2545 = vst [vmem:[#allocation3 + $0x470] sm:$0xf] %v2481
      %s2546 = scalar_lea.vmem [#allocation2], 24
      %v2547 = vld [vmem:[%s2546] sm:$0xf]
      %v2548 = vld [vmem:[%s2546 + $0x4] sm:$0xf]
      %v2549 = vld [vmem:[%s2546 + $0xc] sm:$0xf]
      %v2550 = vld [vmem:[%s2546 + $0x10] sm:$0xf]
      %v2551 = vld [vmem:[%s2546 + $0x18] sm:$0xf]
      %v2552 = vld [vmem:[%s2546 + $0x1c] sm:$0xf]
      %v2553 = vld [vmem:[%s2546 + $0x24] sm:$0xf]
      %v2554 = vld [vmem:[%s2546 + $0x28] sm:$0xf]
      %v2555 = vld [vmem:[%s2546 + $0x30] sm:$0xf]
      %v2556 = vld [vmem:[%s2546 + $0x34] sm:$0xf]
      %v2557 = vld [vmem:[%s2546 + $0x3c] sm:$0xf]
      %v2558 = vld [vmem:[%s2546 + $0x40] sm:$0xf]
      %v2559 = vld [vmem:[%s2546 + $0x48] sm:$0xf]
      %v2560 = vld [vmem:[%s2546 + $0x4c] sm:$0xf]
      %v2561 = vld [vmem:[%s2546 + $0x54] sm:$0xf]
      %v2562 = vld [vmem:[%s2546 + $0x58] sm:$0xf]
      %v2563 = vld [vmem:[%s2546 + $0x60] sm:$0xf]
      %v2564 = vld [vmem:[%s2546 + $0x64] sm:$0xf]
      %v2565 = vld [vmem:[%s2546 + $0x6c] sm:$0xf]
      %v2566 = vld [vmem:[%s2546 + $0x70] sm:$0xf]
      %v2567 = vld [vmem:[%s2546 + $0x78] sm:$0xf]
      %v2568 = vld [vmem:[%s2546 + $0x7c] sm:$0xf]
      %v2569 = vld [vmem:[%s2546 + $0x84] sm:$0xf]
      %v2570 = vld [vmem:[%s2546 + $0x88] sm:$0xf]
      %v2571 = vld [vmem:[%s2546 + $0x90] sm:$0xf]
      %v2572 = vld [vmem:[%s2546 + $0x94] sm:$0xf]
      %v2573 = vld [vmem:[%s2546 + $0x9c] sm:$0xf]
      %v2574 = vld [vmem:[%s2546 + $0xa0] sm:$0xf]
      %v2575 = vld [vmem:[%s2546 + $0xa8] sm:$0xf]
      %v2576 = vld [vmem:[%s2546 + $0xac] sm:$0xf]
      %v2577 = vld [vmem:[%s2546 + $0xb4] sm:$0xf]
      %v2578 = vld [vmem:[%s2546 + $0xb8] sm:$0xf]
      %2579 = vst [vmem:[#allocation3 + $0x18] sm:$0xf] %v2547
      %2580 = vst [vmem:[#allocation3 + $0x3c] sm:$0xf] %v2548
      %2581 = vst [vmem:[#allocation3 + $0x60] sm:$0xf] %v2549
      %2582 = vst [vmem:[#allocation3 + $0x84] sm:$0xf] %v2550
      %2583 = vst [vmem:[#allocation3 + $0xa8] sm:$0xf] %v2551
      %2584 = vst [vmem:[#allocation3 + $0xcc] sm:$0xf] %v2552
      %2585 = vst [vmem:[#allocation3 + $0xf0] sm:$0xf] %v2553
      %2586 = vst [vmem:[#allocation3 + $0x114] sm:$0xf] %v2554
      %2587 = vst [vmem:[#allocation3 + $0x138] sm:$0xf] %v2555
      %2588 = vst [vmem:[#allocation3 + $0x15c] sm:$0xf] %v2556
      %2589 = vst [vmem:[#allocation3 + $0x180] sm:$0xf] %v2557
      %2590 = vst [vmem:[#allocation3 + $0x1a4] sm:$0xf] %v2558
      %2591 = vst [vmem:[#allocation3 + $0x1c8] sm:$0xf] %v2559
      %2592 = vst [vmem:[#allocation3 + $0x1ec] sm:$0xf] %v2560
      %2593 = vst [vmem:[#allocation3 + $0x210] sm:$0xf] %v2561
      %2594 = vst [vmem:[#allocation3 + $0x234] sm:$0xf] %v2562
      %2595 = vst [vmem:[#allocation3 + $0x258] sm:$0xf] %v2563
      %2596 = vst [vmem:[#allocation3 + $0x27c] sm:$0xf] %v2564
      %2597 = vst [vmem:[#allocation3 + $0x2a0] sm:$0xf] %v2565
      %2598 = vst [vmem:[#allocation3 + $0x2c4] sm:$0xf] %v2566
      %2599 = vst [vmem:[#allocation3 + $0x2e8] sm:$0xf] %v2567
      %2600 = vst [vmem:[#allocation3 + $0x30c] sm:$0xf] %v2568
      %2601 = vst [vmem:[#allocation3 + $0x330] sm:$0xf] %v2569
      %2602 = vst [vmem:[#allocation3 + $0x354] sm:$0xf] %v2570
      %2603 = vst [vmem:[#allocation3 + $0x378] sm:$0xf] %v2571
      %2604 = vst [vmem:[#allocation3 + $0x39c] sm:$0xf] %v2572
      %2605 = vst [vmem:[#allocation3 + $0x3c0] sm:$0xf] %v2573
      %2606 = vst [vmem:[#allocation3 + $0x3e4] sm:$0xf] %v2574
      %2607 = vst [vmem:[#allocation3 + $0x408] sm:$0xf] %v2575
      %2608 = vst [vmem:[#allocation3 + $0x42c] sm:$0xf] %v2576
      %2609 = vst [vmem:[#allocation3 + $0x450] sm:$0xf] %v2577
      %2610 = vst [vmem:[#allocation3 + $0x474] sm:$0xf] %v2578
      %v2611 = vld [vmem:[%s2546] sm:$0xf]
      %v2612 = vld [vmem:[%s2546 + $0x4] sm:$0xf]
      %v2613 = vld [vmem:[%s2546 + $0x8] sm:$0x1]
      %v2614 = vld [vmem:[%s2546 + $0xc] sm:$0xf]
      %v2615 = vld [vmem:[%s2546 + $0x10] sm:$0xf]
      %v2616 = vld [vmem:[%s2546 + $0x14] sm:$0x1]
      %v2617 = vld [vmem:[%s2546 + $0x18] sm:$0xf]
      %v2618 = vld [vmem:[%s2546 + $0x1c] sm:$0xf]
      %v2619 = vld [vmem:[%s2546 + $0x20] sm:$0x1]
      %v2620 = vld [vmem:[%s2546 + $0x24] sm:$0xf]
      %v2621 = vld [vmem:[%s2546 + $0x28] sm:$0xf]
      %v2622 = vld [vmem:[%s2546 + $0x2c] sm:$0x1]
      %v2623 = vld [vmem:[%s2546 + $0x30] sm:$0xf]
      %v2624 = vld [vmem:[%s2546 + $0x34] sm:$0xf]
      %v2625 = vld [vmem:[%s2546 + $0x38] sm:$0x1]
      %v2626 = vld [vmem:[%s2546 + $0x3c] sm:$0xf]
      %v2627 = vld [vmem:[%s2546 + $0x40] sm:$0xf]
      %v2628 = vld [vmem:[%s2546 + $0x44] sm:$0x1]
      %v2629 = vld [vmem:[%s2546 + $0x48] sm:$0xf]
      %v2630 = vld [vmem:[%s2546 + $0x4c] sm:$0xf]
      %v2631 = vld [vmem:[%s2546 + $0x50] sm:$0x1]
      %v2632 = vld [vmem:[%s2546 + $0x54] sm:$0xf]
      %v2633 = vld [vmem:[%s2546 + $0x58] sm:$0xf]
      %v2634 = vld [vmem:[%s2546 + $0x5c] sm:$0x1]
      %v2635 = vld [vmem:[%s2546 + $0x60] sm:$0xf]
      %v2636 = vld [vmem:[%s2546 + $0x64] sm:$0xf]
      %v2637 = vld [vmem:[%s2546 + $0x68] sm:$0x1]
      %v2638 = vld [vmem:[%s2546 + $0x6c] sm:$0xf]
      %v2639 = vld [vmem:[%s2546 + $0x70] sm:$0xf]
      %v2640 = vld [vmem:[%s2546 + $0x74] sm:$0x1]
      %v2641 = vld [vmem:[%s2546 + $0x78] sm:$0xf]
      %v2642 = vld [vmem:[%s2546 + $0x7c] sm:$0xf]
      %v2643 = vld [vmem:[%s2546 + $0x80] sm:$0x1]
      %v2644 = vld [vmem:[%s2546 + $0x84] sm:$0xf]
      %v2645 = vld [vmem:[%s2546 + $0x88] sm:$0xf]
      %v2646 = vld [vmem:[%s2546 + $0x8c] sm:$0x1]
      %v2647 = vld [vmem:[%s2546 + $0x90] sm:$0xf]
      %v2648 = vld [vmem:[%s2546 + $0x94] sm:$0xf]
      %v2649 = vld [vmem:[%s2546 + $0x98] sm:$0x1]
      %v2650 = vld [vmem:[%s2546 + $0x9c] sm:$0xf]
      %v2651 = vld [vmem:[%s2546 + $0xa0] sm:$0xf]
      %v2652 = vld [vmem:[%s2546 + $0xa4] sm:$0x1]
      %v2653 = vld [vmem:[%s2546 + $0xa8] sm:$0xf]
      %v2654 = vld [vmem:[%s2546 + $0xac] sm:$0xf]
      %v2655 = vld [vmem:[%s2546 + $0xb0] sm:$0x1]
      %v2656 = vld [vmem:[%s2546 + $0xb4] sm:$0xf]
      %v2657 = vld [vmem:[%s2546 + $0xb8] sm:$0xf]
      %v2658 = vld [vmem:[%s2546 + $0xbc] sm:$0x1]
      %v2660 = vshrl.u32 %v2611, 16
      %v2662 = vrot.slane %v2660, 4
      %v2663 = vshll.u32 %v2611, 16
      %v2665 = vrot.slane %v2663, 5
      %v2666 = vor.u32 %v2662, %v2665
      %v2667 = vrot.slane %v2666, 4
      %v2669 = vshll.u32 %v2612, 16
      %v2671 = vrot.slane %v2669, 5
      %v2672 = vsel %vm990, %v2667, %v2671
      %v2673 = vshrl.u32 %v2612, 16
      %v2675 = vrot.slane %v2673, 4
      %v2676 = vor.u32 %v2675, %v2671
      %v2677 = vrot.slane %v2676, 4
      %v2679 = vshll.u32 %v2613, 16
      %v2681 = vrot.slane %v2679, 5
      %v2682 = vsel %vm990, %v2677, %v2681
      %v2684 = vshrl.u32 %v2614, 16
      %v2686 = vrot.slane %v2684, 4
      %v2687 = vshll.u32 %v2614, 16
      %v2689 = vrot.slane %v2687, 5
      %v2690 = vor.u32 %v2686, %v2689
      %v2691 = vrot.slane %v2690, 4
      %v2693 = vshll.u32 %v2615, 16
      %v2695 = vrot.slane %v2693, 5
      %v2696 = vsel %vm990, %v2691, %v2695
      %v2697 = vshrl.u32 %v2615, 16
      %v2699 = vrot.slane %v2697, 4
      %v2700 = vor.u32 %v2699, %v2695
      %v2701 = vrot.slane %v2700, 4
      %v2703 = vshll.u32 %v2616, 16
      %v2705 = vrot.slane %v2703, 5
      %v2706 = vsel %vm990, %v2701, %v2705
      %v2708 = vshrl.u32 %v2617, 16
      %v2710 = vrot.slane %v2708, 4
      %v2711 = vshll.u32 %v2617, 16
      %v2713 = vrot.slane %v2711, 5
      %v2714 = vor.u32 %v2710, %v2713
      %v2715 = vrot.slane %v2714, 4
      %v2717 = vshll.u32 %v2618, 16
      %v2719 = vrot.slane %v2717, 5
      %v2720 = vsel %vm990, %v2715, %v2719
      %v2721 = vshrl.u32 %v2618, 16
      %v2723 = vrot.slane %v2721, 4
      %v2724 = vor.u32 %v2723, %v2719
      %v2725 = vrot.slane %v2724, 4
      %v2727 = vshll.u32 %v2619, 16
      %v2729 = vrot.slane %v2727, 5
      %v2730 = vsel %vm990, %v2725, %v2729
      %v2732 = vshrl.u32 %v2620, 16
      %v2734 = vrot.slane %v2732, 4
      %v2735 = vshll.u32 %v2620, 16
      %v2737 = vrot.slane %v2735, 5
      %v2738 = vor.u32 %v2734, %v2737
      %v2739 = vrot.slane %v2738, 4
      %v2741 = vshll.u32 %v2621, 16
      %v2743 = vrot.slane %v2741, 5
      %v2744 = vsel %vm990, %v2739, %v2743
      %v2745 = vshrl.u32 %v2621, 16
      %v2747 = vrot.slane %v2745, 4
      %v2748 = vor.u32 %v2747, %v2743
      %v2749 = vrot.slane %v2748, 4
      %v2751 = vshll.u32 %v2622, 16
      %v2753 = vrot.slane %v2751, 5
      %v2754 = vsel %vm990, %v2749, %v2753
      %v2756 = vshrl.u32 %v2623, 16
      %v2758 = vrot.slane %v2756, 4
      %v2759 = vshll.u32 %v2623, 16
      %v2761 = vrot.slane %v2759, 5
      %v2762 = vor.u32 %v2758, %v2761
      %v2763 = vrot.slane %v2762, 4
      %v2765 = vshll.u32 %v2624, 16
      %v2767 = vrot.slane %v2765, 5
      %v2768 = vsel %vm990, %v2763, %v2767
      %v2769 = vshrl.u32 %v2624, 16
      %v2771 = vrot.slane %v2769, 4
      %v2772 = vor.u32 %v2771, %v2767
      %v2773 = vrot.slane %v2772, 4
      %v2775 = vshll.u32 %v2625, 16
      %v2777 = vrot.slane %v2775, 5
      %v2778 = vsel %vm990, %v2773, %v2777
      %v2780 = vshrl.u32 %v2626, 16
      %v2782 = vrot.slane %v2780, 4
      %v2783 = vshll.u32 %v2626, 16
      %v2785 = vrot.slane %v2783, 5
      %v2786 = vor.u32 %v2782, %v2785
      %v2787 = vrot.slane %v2786, 4
      %v2789 = vshll.u32 %v2627, 16
      %v2791 = vrot.slane %v2789, 5
      %v2792 = vsel %vm990, %v2787, %v2791
      %v2793 = vshrl.u32 %v2627, 16
      %v2795 = vrot.slane %v2793, 4
      %v2796 = vor.u32 %v2795, %v2791
      %v2797 = vrot.slane %v2796, 4
      %v2799 = vshll.u32 %v2628, 16
      %v2801 = vrot.slane %v2799, 5
      %v2802 = vsel %vm990, %v2797, %v2801
      %v2804 = vshrl.u32 %v2629, 16
      %v2806 = vrot.slane %v2804, 4
      %v2807 = vshll.u32 %v2629, 16
      %v2809 = vrot.slane %v2807, 5
      %v2810 = vor.u32 %v2806, %v2809
      %v2811 = vrot.slane %v2810, 4
      %v2813 = vshll.u32 %v2630, 16
      %v2815 = vrot.slane %v2813, 5
      %v2816 = vsel %vm990, %v2811, %v2815
      %v2817 = vshrl.u32 %v2630, 16
      %v2819 = vrot.slane %v2817, 4
      %v2820 = vor.u32 %v2819, %v2815
      %v2821 = vrot.slane %v2820, 4
      %v2823 = vshll.u32 %v2631, 16
      %v2825 = vrot.slane %v2823, 5
      %v2826 = vsel %vm990, %v2821, %v2825
      %v2828 = vshrl.u32 %v2632, 16
      %v2830 = vrot.slane %v2828, 4
      %v2831 = vshll.u32 %v2632, 16
      %v2833 = vrot.slane %v2831, 5
      %v2834 = vor.u32 %v2830, %v2833
      %v2835 = vrot.slane %v2834, 4
      %v2837 = vshll.u32 %v2633, 16
      %v2839 = vrot.slane %v2837, 5
      %v2840 = vsel %vm990, %v2835, %v2839
      %v2841 = vshrl.u32 %v2633, 16
      %v2843 = vrot.slane %v2841, 4
      %v2844 = vor.u32 %v2843, %v2839
      %v2845 = vrot.slane %v2844, 4
      %v2847 = vshll.u32 %v2634, 16
      %v2849 = vrot.slane %v2847, 5
      %v2850 = vsel %vm990, %v2845, %v2849
      %v2852 = vshrl.u32 %v2635, 16
      %v2854 = vrot.slane %v2852, 4
      %v2855 = vshll.u32 %v2635, 16
      %v2857 = vrot.slane %v2855, 5
      %v2858 = vor.u32 %v2854, %v2857
      %v2859 = vrot.slane %v2858, 4
      %v2861 = vshll.u32 %v2636, 16
      %v2863 = vrot.slane %v2861, 5
      %v2864 = vsel %vm990, %v2859, %v2863
      %v2865 = vshrl.u32 %v2636, 16
      %v2867 = vrot.slane %v2865, 4
      %v2868 = vor.u32 %v2867, %v2863
      %v2869 = vrot.slane %v2868, 4
      %v2871 = vshll.u32 %v2637, 16
      %v2873 = vrot.slane %v2871, 5
      %v2874 = vsel %vm990, %v2869, %v2873
      %v2876 = vshrl.u32 %v2638, 16
      %v2878 = vrot.slane %v2876, 4
      %v2879 = vshll.u32 %v2638, 16
      %v2881 = vrot.slane %v2879, 5
      %v2882 = vor.u32 %v2878, %v2881
      %v2883 = vrot.slane %v2882, 4
      %v2885 = vshll.u32 %v2639, 16
      %v2887 = vrot.slane %v2885, 5
      %v2888 = vsel %vm990, %v2883, %v2887
      %v2889 = vshrl.u32 %v2639, 16
      %v2891 = vrot.slane %v2889, 4
      %v2892 = vor.u32 %v2891, %v2887
      %v2893 = vrot.slane %v2892, 4
      %v2895 = vshll.u32 %v2640, 16
      %v2897 = vrot.slane %v2895, 5
      %v2898 = vsel %vm990, %v2893, %v2897
      %v2900 = vshrl.u32 %v2641, 16
      %v2902 = vrot.slane %v2900, 4
      %v2903 = vshll.u32 %v2641, 16
      %v2905 = vrot.slane %v2903, 5
      %v2906 = vor.u32 %v2902, %v2905
      %v2907 = vrot.slane %v2906, 4
      %v2909 = vshll.u32 %v2642, 16
      %v2911 = vrot.slane %v2909, 5
      %v2912 = vsel %vm990, %v2907, %v2911
      %v2913 = vshrl.u32 %v2642, 16
      %v2915 = vrot.slane %v2913, 4
      %v2916 = vor.u32 %v2915, %v2911
      %v2917 = vrot.slane %v2916, 4
      %v2919 = vshll.u32 %v2643, 16
      %v2921 = vrot.slane %v2919, 5
      %v2922 = vsel %vm990, %v2917, %v2921
      %v2924 = vshrl.u32 %v2644, 16
      %v2926 = vrot.slane %v2924, 4
      %v2927 = vshll.u32 %v2644, 16
      %v2929 = vrot.slane %v2927, 5
      %v2930 = vor.u32 %v2926, %v2929
      %v2931 = vrot.slane %v2930, 4
      %v2933 = vshll.u32 %v2645, 16
      %v2935 = vrot.slane %v2933, 5
      %v2936 = vsel %vm990, %v2931, %v2935
      %v2937 = vshrl.u32 %v2645, 16
      %v2939 = vrot.slane %v2937, 4
      %v2940 = vor.u32 %v2939, %v2935
      %v2941 = vrot.slane %v2940, 4
      %v2943 = vshll.u32 %v2646, 16
      %v2945 = vrot.slane %v2943, 5
      %v2946 = vsel %vm990, %v2941, %v2945
      %v2948 = vshrl.u32 %v2647, 16
      %v2950 = vrot.slane %v2948, 4
      %v2951 = vshll.u32 %v2647, 16
      %v2953 = vrot.slane %v2951, 5
      %v2954 = vor.u32 %v2950, %v2953
      %v2955 = vrot.slane %v2954, 4
      %v2957 = vshll.u32 %v2648, 16
      %v2959 = vrot.slane %v2957, 5
      %v2960 = vsel %vm990, %v2955, %v2959
      %v2961 = vshrl.u32 %v2648, 16
      %v2963 = vrot.slane %v2961, 4
      %v2964 = vor.u32 %v2963, %v2959
      %v2965 = vrot.slane %v2964, 4
      %v2967 = vshll.u32 %v2649, 16
      %v2969 = vrot.slane %v2967, 5
      %v2970 = vsel %vm990, %v2965, %v2969
      %v2972 = vshrl.u32 %v2650, 16
      %v2974 = vrot.slane %v2972, 4
      %v2975 = vshll.u32 %v2650, 16
      %v2977 = vrot.slane %v2975, 5
      %v2978 = vor.u32 %v2974, %v2977
      %v2979 = vrot.slane %v2978, 4
      %v2981 = vshll.u32 %v2651, 16
      %v2983 = vrot.slane %v2981, 5
      %v2984 = vsel %vm990, %v2979, %v2983
      %v2985 = vshrl.u32 %v2651, 16
      %v2987 = vrot.slane %v2985, 4
      %v2988 = vor.u32 %v2987, %v2983
      %v2989 = vrot.slane %v2988, 4
      %v2991 = vshll.u32 %v2652, 16
      %v2993 = vrot.slane %v2991, 5
      %v2994 = vsel %vm990, %v2989, %v2993
      %v2996 = vshrl.u32 %v2653, 16
      %v2998 = vrot.slane %v2996, 4
      %v2999 = vshll.u32 %v2653, 16
      %v3001 = vrot.slane %v2999, 5
      %v3002 = vor.u32 %v2998, %v3001
      %v3003 = vrot.slane %v3002, 4
      %v3005 = vshll.u32 %v2654, 16
      %v3007 = vrot.slane %v3005, 5
      %v3008 = vsel %vm990, %v3003, %v3007
      %v3009 = vshrl.u32 %v2654, 16
      %v3011 = vrot.slane %v3009, 4
      %v3012 = vor.u32 %v3011, %v3007
      %v3013 = vrot.slane %v3012, 4
      %v3015 = vshll.u32 %v2655, 16
      %v3017 = vrot.slane %v3015, 5
      %v3018 = vsel %vm990, %v3013, %v3017
      %v3020 = vshrl.u32 %v2656, 16
      %v3022 = vrot.slane %v3020, 4
      %v3023 = vshll.u32 %v2656, 16
      %v3025 = vrot.slane %v3023, 5
      %v3026 = vor.u32 %v3022, %v3025
      %v3027 = vrot.slane %v3026, 4
      %v3029 = vshll.u32 %v2657, 16
      %v3031 = vrot.slane %v3029, 5
      %v3032 = vsel %vm990, %v3027, %v3031
      %v3033 = vshrl.u32 %v2657, 16
      %v3035 = vrot.slane %v3033, 4
      %v3036 = vor.u32 %v3035, %v3031
      %v3037 = vrot.slane %v3036, 4
      %v3039 = vshll.u32 %v2658, 16
      %v3041 = vrot.slane %v3039, 5
      %v3042 = vsel %vm990, %v3037, %v3041
      %3075 = vst [vmem:[#allocation3 + $0x1c] sm:$0xf] %v2672
      %3076 = vst [vmem:[#allocation3 + $0x40] sm:$0xf] %v2682
      %3077 = vst [vmem:[#allocation3 + $0x64] sm:$0xf] %v2696
      %3078 = vst [vmem:[#allocation3 + $0x88] sm:$0xf] %v2706
      %3079 = vst [vmem:[#allocation3 + $0xac] sm:$0xf] %v2720
      %3080 = vst [vmem:[#allocation3 + $0xd0] sm:$0xf] %v2730
      %3081 = vst [vmem:[#allocation3 + $0xf4] sm:$0xf] %v2744
      %3082 = vst [vmem:[#allocation3 + $0x118] sm:$0xf] %v2754
      %3083 = vst [vmem:[#allocation3 + $0x13c] sm:$0xf] %v2768
      %3084 = vst [vmem:[#allocation3 + $0x160] sm:$0xf] %v2778
      %3085 = vst [vmem:[#allocation3 + $0x184] sm:$0xf] %v2792
      %3086 = vst [vmem:[#allocation3 + $0x1a8] sm:$0xf] %v2802
      %3087 = vst [vmem:[#allocation3 + $0x1cc] sm:$0xf] %v2816
      %3088 = vst [vmem:[#allocation3 + $0x1f0] sm:$0xf] %v2826
      %3089 = vst [vmem:[#allocation3 + $0x214] sm:$0xf] %v2840
      %3090 = vst [vmem:[#allocation3 + $0x238] sm:$0xf] %v2850
      %3091 = vst [vmem:[#allocation3 + $0x25c] sm:$0xf] %v2864
      %3092 = vst [vmem:[#allocation3 + $0x280] sm:$0xf] %v2874
      %3093 = vst [vmem:[#allocation3 + $0x2a4] sm:$0xf] %v2888
      %3094 = vst [vmem:[#allocation3 + $0x2c8] sm:$0xf] %v2898
      %3095 = vst [vmem:[#allocation3 + $0x2ec] sm:$0xf] %v2912
      %3096 = vst [vmem:[#allocation3 + $0x310] sm:$0xf] %v2922
      %3097 = vst [vmem:[#allocation3 + $0x334] sm:$0xf] %v2936
      %3098 = vst [vmem:[#allocation3 + $0x358] sm:$0xf] %v2946
      %3099 = vst [vmem:[#allocation3 + $0x37c] sm:$0xf] %v2960
      %3100 = vst [vmem:[#allocation3 + $0x3a0] sm:$0xf] %v2970
      %3101 = vst [vmem:[#allocation3 + $0x3c4] sm:$0xf] %v2984
      %3102 = vst [vmem:[#allocation3 + $0x3e8] sm:$0xf] %v2994
      %3103 = vst [vmem:[#allocation3 + $0x40c] sm:$0xf] %v3008
      %3104 = vst [vmem:[#allocation3 + $0x430] sm:$0xf] %v3018
      %3105 = vst [vmem:[#allocation3 + $0x454] sm:$0xf] %v3032
      %3106 = vst [vmem:[#allocation3 + $0x478] sm:$0xf] %v3042
      %v3107 = vld [vmem:[%s2546] sm:$0xe]
      %v3108 = vld [vmem:[%s2546 + $0x4] sm:$0xf]
      %v3109 = vld [vmem:[%s2546 + $0x8] sm:$0x1]
      %v3110 = vld [vmem:[%s2546 + $0xc] sm:$0xe]
      %v3111 = vld [vmem:[%s2546 + $0x10] sm:$0xf]
      %v3112 = vld [vmem:[%s2546 + $0x14] sm:$0x1]
      %v3113 = vld [vmem:[%s2546 + $0x18] sm:$0xe]
      %v3114 = vld [vmem:[%s2546 + $0x1c] sm:$0xf]
      %v3115 = vld [vmem:[%s2546 + $0x20] sm:$0x1]
      %v3116 = vld [vmem:[%s2546 + $0x24] sm:$0xe]
      %v3117 = vld [vmem:[%s2546 + $0x28] sm:$0xf]
      %v3118 = vld [vmem:[%s2546 + $0x2c] sm:$0x1]
      %v3119 = vld [vmem:[%s2546 + $0x30] sm:$0xe]
      %v3120 = vld [vmem:[%s2546 + $0x34] sm:$0xf]
      %v3121 = vld [vmem:[%s2546 + $0x38] sm:$0x1]
      %v3122 = vld [vmem:[%s2546 + $0x3c] sm:$0xe]
      %v3123 = vld [vmem:[%s2546 + $0x40] sm:$0xf]
      %v3124 = vld [vmem:[%s2546 + $0x44] sm:$0x1]
      %v3125 = vld [vmem:[%s2546 + $0x48] sm:$0xe]
      %v3126 = vld [vmem:[%s2546 + $0x4c] sm:$0xf]
      %v3127 = vld [vmem:[%s2546 + $0x50] sm:$0x1]
      %v3128 = vld [vmem:[%s2546 + $0x54] sm:$0xe]
      %v3129 = vld [vmem:[%s2546 + $0x58] sm:$0xf]
      %v3130 = vld [vmem:[%s2546 + $0x5c] sm:$0x1]
      %v3131 = vld [vmem:[%s2546 + $0x60] sm:$0xe]
      %v3132 = vld [vmem:[%s2546 + $0x64] sm:$0xf]
      %v3133 = vld [vmem:[%s2546 + $0x68] sm:$0x1]
      %v3134 = vld [vmem:[%s2546 + $0x6c] sm:$0xe]
      %v3135 = vld [vmem:[%s2546 + $0x70] sm:$0xf]
      %v3136 = vld [vmem:[%s2546 + $0x74] sm:$0x1]
      %v3137 = vld [vmem:[%s2546 + $0x78] sm:$0xe]
      %v3138 = vld [vmem:[%s2546 + $0x7c] sm:$0xf]
      %v3139 = vld [vmem:[%s2546 + $0x80] sm:$0x1]
      %v3140 = vld [vmem:[%s2546 + $0x84] sm:$0xe]
      %v3141 = vld [vmem:[%s2546 + $0x88] sm:$0xf]
      %v3142 = vld [vmem:[%s2546 + $0x8c] sm:$0x1]
      %v3143 = vld [vmem:[%s2546 + $0x90] sm:$0xe]
      %v3144 = vld [vmem:[%s2546 + $0x94] sm:$0xf]
      %v3145 = vld [vmem:[%s2546 + $0x98] sm:$0x1]
      %v3146 = vld [vmem:[%s2546 + $0x9c] sm:$0xe]
      %v3147 = vld [vmem:[%s2546 + $0xa0] sm:$0xf]
      %v3148 = vld [vmem:[%s2546 + $0xa4] sm:$0x1]
      %v3149 = vld [vmem:[%s2546 + $0xa8] sm:$0xe]
      %v3150 = vld [vmem:[%s2546 + $0xac] sm:$0xf]
      %v3151 = vld [vmem:[%s2546 + $0xb0] sm:$0x1]
      %v3152 = vld [vmem:[%s2546 + $0xb4] sm:$0xe]
      %v3153 = vld [vmem:[%s2546 + $0xb8] sm:$0xf]
      %v3154 = vld [vmem:[%s2546 + $0xbc] sm:$0x1]
      %v3203 = vrot.slane %v3107, 5
      %v3204 = vrot.slane %v3203, 4
      %v3205 = vrot.slane %v3108, 5
      %v3206 = vsel %vm1537, %v3204, %v3205
      %v3207 = vrot.slane %v3205, 4
      %v3208 = vrot.slane %v3109, 5
      %v3209 = vsel %vm1537, %v3207, %v3208
      %v3210 = vrot.slane %v3110, 5
      %v3211 = vrot.slane %v3210, 4
      %v3212 = vrot.slane %v3111, 5
      %v3213 = vsel %vm1537, %v3211, %v3212
      %v3214 = vrot.slane %v3212, 4
      %v3215 = vrot.slane %v3112, 5
      %v3216 = vsel %vm1537, %v3214, %v3215
      %v3217 = vrot.slane %v3113, 5
      %v3218 = vrot.slane %v3217, 4
      %v3219 = vrot.slane %v3114, 5
      %v3220 = vsel %vm1537, %v3218, %v3219
      %v3221 = vrot.slane %v3219, 4
      %v3222 = vrot.slane %v3115, 5
      %v3223 = vsel %vm1537, %v3221, %v3222
      %v3224 = vrot.slane %v3116, 5
      %v3225 = vrot.slane %v3224, 4
      %v3226 = vrot.slane %v3117, 5
      %v3227 = vsel %vm1537, %v3225, %v3226
      %v3228 = vrot.slane %v3226, 4
      %v3229 = vrot.slane %v3118, 5
      %v3230 = vsel %vm1537, %v3228, %v3229
      %v3231 = vrot.slane %v3119, 5
      %v3232 = vrot.slane %v3231, 4
      %v3233 = vrot.slane %v3120, 5
      %v3234 = vsel %vm1537, %v3232, %v3233
      %v3235 = vrot.slane %v3233, 4
      %v3236 = vrot.slane %v3121, 5
      %v3237 = vsel %vm1537, %v3235, %v3236
      %v3238 = vrot.slane %v3122, 5
      %v3239 = vrot.slane %v3238, 4
      %v3240 = vrot.slane %v3123, 5
      %v3241 = vsel %vm1537, %v3239, %v3240
      %v3242 = vrot.slane %v3240, 4
      %v3243 = vrot.slane %v3124, 5
      %v3244 = vsel %vm1537, %v3242, %v3243
      %v3245 = vrot.slane %v3125, 5
      %v3246 = vrot.slane %v3245, 4
      %v3247 = vrot.slane %v3126, 5
      %v3248 = vsel %vm1537, %v3246, %v3247
      %v3249 = vrot.slane %v3247, 4
      %v3250 = vrot.slane %v3127, 5
      %v3251 = vsel %vm1537, %v3249, %v3250
      %v3252 = vrot.slane %v3128, 5
      %v3253 = vrot.slane %v3252, 4
      %v3254 = vrot.slane %v3129, 5
      %v3255 = vsel %vm1537, %v3253, %v3254
      %v3256 = vrot.slane %v3254, 4
      %v3257 = vrot.slane %v3130, 5
      %v3258 = vsel %vm1537, %v3256, %v3257
      %v3259 = vrot.slane %v3131, 5
      %v3260 = vrot.slane %v3259, 4
      %v3261 = vrot.slane %v3132, 5
      %v3262 = vsel %vm1537, %v3260, %v3261
      %v3263 = vrot.slane %v3261, 4
      %v3264 = vrot.slane %v3133, 5
      %v3265 = vsel %vm1537, %v3263, %v3264
      %v3266 = vrot.slane %v3134, 5
      %v3267 = vrot.slane %v3266, 4
      %v3268 = vrot.slane %v3135, 5
      %v3269 = vsel %vm1537, %v3267, %v3268
      %v3270 = vrot.slane %v3268, 4
      %v3271 = vrot.slane %v3136, 5
      %v3272 = vsel %vm1537, %v3270, %v3271
      %v3273 = vrot.slane %v3137, 5
      %v3274 = vrot.slane %v3273, 4
      %v3275 = vrot.slane %v3138, 5
      %v3276 = vsel %vm1537, %v3274, %v3275
      %v3277 = vrot.slane %v3275, 4
      %v3278 = vrot.slane %v3139, 5
      %v3279 = vsel %vm1537, %v3277, %v3278
      %v3280 = vrot.slane %v3140, 5
      %v3281 = vrot.slane %v3280, 4
      %v3282 = vrot.slane %v3141, 5
      %v3283 = vsel %vm1537, %v3281, %v3282
      %v3284 = vrot.slane %v3282, 4
      %v3285 = vrot.slane %v3142, 5
      %v3286 = vsel %vm1537, %v3284, %v3285
      %v3287 = vrot.slane %v3143, 5
      %v3288 = vrot.slane %v3287, 4
      %v3289 = vrot.slane %v3144, 5
      %v3290 = vsel %vm1537, %v3288, %v3289
      %v3291 = vrot.slane %v3289, 4
      %v3292 = vrot.slane %v3145, 5
      %v3293 = vsel %vm1537, %v3291, %v3292
      %v3294 = vrot.slane %v3146, 5
      %v3295 = vrot.slane %v3294, 4
      %v3296 = vrot.slane %v3147, 5
      %v3297 = vsel %vm1537, %v3295, %v3296
      %v3298 = vrot.slane %v3296, 4
      %v3299 = vrot.slane %v3148, 5
      %v3300 = vsel %vm1537, %v3298, %v3299
      %v3301 = vrot.slane %v3149, 5
      %v3302 = vrot.slane %v3301, 4
      %v3303 = vrot.slane %v3150, 5
      %v3304 = vsel %vm1537, %v3302, %v3303
      %v3305 = vrot.slane %v3303, 4
      %v3306 = vrot.slane %v3151, 5
      %v3307 = vsel %vm1537, %v3305, %v3306
      %v3308 = vrot.slane %v3152, 5
      %v3309 = vrot.slane %v3308, 4
      %v3310 = vrot.slane %v3153, 5
      %v3311 = vsel %vm1537, %v3309, %v3310
      %v3312 = vrot.slane %v3310, 4
      %v3313 = vrot.slane %v3154, 5
      %v3314 = vsel %vm1537, %v3312, %v3313
      %3347 = vst [vmem:[#allocation3 + $0x20] sm:$0xf] %v3206
      %3348 = vst [vmem:[#allocation3 + $0x44] sm:$0xf] %v3209
      %3349 = vst [vmem:[#allocation3 + $0x68] sm:$0xf] %v3213
      %3350 = vst [vmem:[#allocation3 + $0x8c] sm:$0xf] %v3216
      %3351 = vst [vmem:[#allocation3 + $0xb0] sm:$0xf] %v3220
      %3352 = vst [vmem:[#allocation3 + $0xd4] sm:$0xf] %v3223
      %3353 = vst [vmem:[#allocation3 + $0xf8] sm:$0xf] %v3227
      %3354 = vst [vmem:[#allocation3 + $0x11c] sm:$0xf] %v3230
      %3355 = vst [vmem:[#allocation3 + $0x140] sm:$0xf] %v3234
      %3356 = vst [vmem:[#allocation3 + $0x164] sm:$0xf] %v3237
      %3357 = vst [vmem:[#allocation3 + $0x188] sm:$0xf] %v3241
      %3358 = vst [vmem:[#allocation3 + $0x1ac] sm:$0xf] %v3244
      %3359 = vst [vmem:[#allocation3 + $0x1d0] sm:$0xf] %v3248
      %3360 = vst [vmem:[#allocation3 + $0x1f4] sm:$0xf] %v3251
      %3361 = vst [vmem:[#allocation3 + $0x218] sm:$0xf] %v3255
      %3362 = vst [vmem:[#allocation3 + $0x23c] sm:$0xf] %v3258
      %3363 = vst [vmem:[#allocation3 + $0x260] sm:$0xf] %v3262
      %3364 = vst [vmem:[#allocation3 + $0x284] sm:$0xf] %v3265
      %3365 = vst [vmem:[#allocation3 + $0x2a8] sm:$0xf] %v3269
      %3366 = vst [vmem:[#allocation3 + $0x2cc] sm:$0xf] %v3272
      %3367 = vst [vmem:[#allocation3 + $0x2f0] sm:$0xf] %v3276
      %3368 = vst [vmem:[#allocation3 + $0x314] sm:$0xf] %v3279
      %3369 = vst [vmem:[#allocation3 + $0x338] sm:$0xf] %v3283
      %3370 = vst [vmem:[#allocation3 + $0x35c] sm:$0xf] %v3286
      %3371 = vst [vmem:[#allocation3 + $0x380] sm:$0xf] %v3290
      %3372 = vst [vmem:[#allocation3 + $0x3a4] sm:$0xf] %v3293
      %3373 = vst [vmem:[#allocation3 + $0x3c8] sm:$0xf] %v3297
      %3374 = vst [vmem:[#allocation3 + $0x3ec] sm:$0xf] %v3300
      %3375 = vst [vmem:[#allocation3 + $0x410] sm:$0xf] %v3304
      %3376 = vst [vmem:[#allocation3 + $0x434] sm:$0xf] %v3307
      %3377 = vst [vmem:[#allocation3 + $0x458] sm:$0xf] %v3311
      %3378 = vst [vmem:[#allocation3 + $0x47c] sm:$0xf] %v3314
      %v3379 = vld [vmem:[#allocation3] sm:$0xff]
      %v3380 = vld [vmem:[#allocation3 + $0x8] sm:$0xff]
      %v3381 = vld [vmem:[#allocation3 + $0x10] sm:$0xff]
      %v3382 = vld [vmem:[#allocation3 + $0x18] sm:$0xff]
      %v3383 = vld [vmem:[#allocation3 + $0x20] sm:$0xf]
      %v3384 = vld [vmem:[#allocation3 + $0x24] sm:$0xff]
      %v3385 = vld [vmem:[#allocation3 + $0x2c] sm:$0xff]
      %v3386 = vld [vmem:[#allocation3 + $0x34] sm:$0xff]
      %v3387 = vld [vmem:[#allocation3 + $0x3c] sm:$0xff]
      %v3388 = vld [vmem:[#allocation3 + $0x44] sm:$0xf]
      %v3389 = vld [vmem:[#allocation3 + $0x48] sm:$0xff]
      %v3390 = vld [vmem:[#allocation3 + $0x50] sm:$0xff]
      %v3391 = vld [vmem:[#allocation3 + $0x58] sm:$0xff]
      %v3392 = vld [vmem:[#allocation3 + $0x60] sm:$0xff]
      %v3393 = vld [vmem:[#allocation3 + $0x68] sm:$0xf]
      %v3394 = vld [vmem:[#allocation3 + $0x6c] sm:$0xff]
      %v3395 = vld [vmem:[#allocation3 + $0x74] sm:$0xff]
      %v3396 = vld [vmem:[#allocation3 + $0x7c] sm:$0xff]
      %v3397 = vld [vmem:[#allocation3 + $0x84] sm:$0xff]
      %v3398 = vld [vmem:[#allocation3 + $0x8c] sm:$0xf]
      %v3399 = vld [vmem:[#allocation3 + $0x90] sm:$0xff]
      %v3400 = vld [vmem:[#allocation3 + $0x98] sm:$0xff]
      %v3401 = vld [vmem:[#allocation3 + $0xa0] sm:$0xff]
      %v3402 = vld [vmem:[#allocation3 + $0xa8] sm:$0xff]
      %v3403 = vld [vmem:[#allocation3 + $0xb0] sm:$0xf]
      %v3404 = vld [vmem:[#allocation3 + $0xb4] sm:$0xff]
      %v3405 = vld [vmem:[#allocation3 + $0xbc] sm:$0xff]
      %v3406 = vld [vmem:[#allocation3 + $0xc4] sm:$0xff]
      %v3407 = vld [vmem:[#allocation3 + $0xcc] sm:$0xff]
      %v3408 = vld [vmem:[#allocation3 + $0xd4] sm:$0xf]
      %v3409 = vld [vmem:[#allocation3 + $0xd8] sm:$0xff]
      %v3410 = vld [vmem:[#allocation3 + $0xe0] sm:$0xff]
      %v3411 = vld [vmem:[#allocation3 + $0xe8] sm:$0xff]
      %v3412 = vld [vmem:[#allocation3 + $0xf0] sm:$0xff]
      %v3413 = vld [vmem:[#allocation3 + $0xf8] sm:$0xf]
      %v3414 = vld [vmem:[#allocation3 + $0xfc] sm:$0xff]
      %v3415 = vld [vmem:[#allocation3 + $0x104] sm:$0xff]
      %v3416 = vld [vmem:[#allocation3 + $0x10c] sm:$0xff]
      %v3417 = vld [vmem:[#allocation3 + $0x114] sm:$0xff]
      %v3418 = vld [vmem:[#allocation3 + $0x11c] sm:$0xf]
      %v3419 = vld [vmem:[#allocation3 + $0x120] sm:$0xff]
      %v3420 = vld [vmem:[#allocation3 + $0x128] sm:$0xff]
      %v3421 = vld [vmem:[#allocation3 + $0x130] sm:$0xff]
      %v3422 = vld [vmem:[#allocation3 + $0x138] sm:$0xff]
      %v3423 = vld [vmem:[#allocation3 + $0x140] sm:$0xf]
      %v3424 = vld [vmem:[#allocation3 + $0x144] sm:$0xff]
      %v3425 = vld [vmem:[#allocation3 + $0x14c] sm:$0xff]
      %v3426 = vld [vmem:[#allocation3 + $0x154] sm:$0xff]
      %v3427 = vld [vmem:[#allocation3 + $0x15c] sm:$0xff]
      %v3428 = vld [vmem:[#allocation3 + $0x164] sm:$0xf]
      %v3429 = vld [vmem:[#allocation3 + $0x168] sm:$0xff]
      %v3430 = vld [vmem:[#allocation3 + $0x170] sm:$0xff]
      %v3431 = vld [vmem:[#allocation3 + $0x178] sm:$0xff]
      %v3432 = vld [vmem:[#allocation3 + $0x180] sm:$0xff]
      %v3433 = vld [vmem:[#allocation3 + $0x188] sm:$0xf]
      %v3434 = vld [vmem:[#allocation3 + $0x18c] sm:$0xff]
      %v3435 = vld [vmem:[#allocation3 + $0x194] sm:$0xff]
      %v3436 = vld [vmem:[#allocation3 + $0x19c] sm:$0xff]
      %v3437 = vld [vmem:[#allocation3 + $0x1a4] sm:$0xff]
      %v3438 = vld [vmem:[#allocation3 + $0x1ac] sm:$0xf]
      %v3439 = vld [vmem:[#allocation3 + $0x1b0] sm:$0xff]
      %v3440 = vld [vmem:[#allocation3 + $0x1b8] sm:$0xff]
      %v3441 = vld [vmem:[#allocation3 + $0x1c0] sm:$0xff]
      %v3442 = vld [vmem:[#allocation3 + $0x1c8] sm:$0xff]
      %v3443 = vld [vmem:[#allocation3 + $0x1d0] sm:$0xf]
      %v3444 = vld [vmem:[#allocation3 + $0x1d4] sm:$0xff]
      %v3445 = vld [vmem:[#allocation3 + $0x1dc] sm:$0xff]
      %v3446 = vld [vmem:[#allocation3 + $0x1e4] sm:$0xff]
      %v3447 = vld [vmem:[#allocation3 + $0x1ec] sm:$0xff]
      %v3448 = vld [vmem:[#allocation3 + $0x1f4] sm:$0xf]
      %v3449 = vld [vmem:[#allocation3 + $0x1f8] sm:$0xff]
      %v3450 = vld [vmem:[#allocation3 + $0x200] sm:$0xff]
      %v3451 = vld [vmem:[#allocation3 + $0x208] sm:$0xff]
      %v3452 = vld [vmem:[#allocation3 + $0x210] sm:$0xff]
      %v3453 = vld [vmem:[#allocation3 + $0x218] sm:$0xf]
      %v3454 = vld [vmem:[#allocation3 + $0x21c] sm:$0xff]
      %v3455 = vld [vmem:[#allocation3 + $0x224] sm:$0xff]
      %v3456 = vld [vmem:[#allocation3 + $0x22c] sm:$0xff]
      %v3457 = vld [vmem:[#allocation3 + $0x234] sm:$0xff]
      %v3458 = vld [vmem:[#allocation3 + $0x23c] sm:$0xf]
      %v3459 = vld [vmem:[#allocation3 + $0x240] sm:$0xff]
      %v3460 = vld [vmem:[#allocation3 + $0x248] sm:$0xff]
      %v3461 = vld [vmem:[#allocation3 + $0x250] sm:$0xff]
      %v3462 = vld [vmem:[#allocation3 + $0x258] sm:$0xff]
      %v3463 = vld [vmem:[#allocation3 + $0x260] sm:$0xf]
      %v3464 = vld [vmem:[#allocation3 + $0x264] sm:$0xff]
      %v3465 = vld [vmem:[#allocation3 + $0x26c] sm:$0xff]
      %v3466 = vld [vmem:[#allocation3 + $0x274] sm:$0xff]
      %v3467 = vld [vmem:[#allocation3 + $0x27c] sm:$0xff]
      %v3468 = vld [vmem:[#allocation3 + $0x284] sm:$0xf]
      %v3469 = vld [vmem:[#allocation3 + $0x288] sm:$0xff]
      %v3470 = vld [vmem:[#allocation3 + $0x290] sm:$0xff]
      %v3471 = vld [vmem:[#allocation3 + $0x298] sm:$0xff]
      %v3472 = vld [vmem:[#allocation3 + $0x2a0] sm:$0xff]
      %v3473 = vld [vmem:[#allocation3 + $0x2a8] sm:$0xf]
      %v3474 = vld [vmem:[#allocation3 + $0x2ac] sm:$0xff]
      %v3475 = vld [vmem:[#allocation3 + $0x2b4] sm:$0xff]
      %v3476 = vld [vmem:[#allocation3 + $0x2bc] sm:$0xff]
      %v3477 = vld [vmem:[#allocation3 + $0x2c4] sm:$0xff]
      %v3478 = vld [vmem:[#allocation3 + $0x2cc] sm:$0xf]
      %v3479 = vld [vmem:[#allocation3 + $0x2d0] sm:$0xff]
      %v3480 = vld [vmem:[#allocation3 + $0x2d8] sm:$0xff]
      %v3481 = vld [vmem:[#allocation3 + $0x2e0] sm:$0xff]
      %v3482 = vld [vmem:[#allocation3 + $0x2e8] sm:$0xff]
      %v3483 = vld [vmem:[#allocation3 + $0x2f0] sm:$0xf]
      %v3484 = vld [vmem:[#allocation3 + $0x2f4] sm:$0xff]
      %v3485 = vld [vmem:[#allocation3 + $0x2fc] sm:$0xff]
      %v3486 = vld [vmem:[#allocation3 + $0x304] sm:$0xff]
      %v3487 = vld [vmem:[#allocation3 + $0x30c] sm:$0xff]
      %v3488 = vld [vmem:[#allocation3 + $0x314] sm:$0xf]
      %v3489 = vld [vmem:[#allocation3 + $0x318] sm:$0xff]
      %v3490 = vld [vmem:[#allocation3 + $0x320] sm:$0xff]
      %v3491 = vld [vmem:[#allocation3 + $0x328] sm:$0xff]
      %v3492 = vld [vmem:[#allocation3 + $0x330] sm:$0xff]
      %v3493 = vld [vmem:[#allocation3 + $0x338] sm:$0xf]
      %v3494 = vld [vmem:[#allocation3 + $0x33c] sm:$0xff]
      %v3495 = vld [vmem:[#allocation3 + $0x344] sm:$0xff]
      %v3496 = vld [vmem:[#allocation3 + $0x34c] sm:$0xff]
      %v3497 = vld [vmem:[#allocation3 + $0x354] sm:$0xff]
      %v3498 = vld [vmem:[#allocation3 + $0x35c] sm:$0xf]
      %v3499 = vld [vmem:[#allocation3 + $0x360] sm:$0xff]
      %v3500 = vld [vmem:[#allocation3 + $0x368] sm:$0xff]
      %v3501 = vld [vmem:[#allocation3 + $0x370] sm:$0xff]
      %v3502 = vld [vmem:[#allocation3 + $0x378] sm:$0xff]
      %v3503 = vld [vmem:[#allocation3 + $0x380] sm:$0xf]
      %v3504 = vld [vmem:[#allocation3 + $0x384] sm:$0xff]
      %v3505 = vld [vmem:[#allocation3 + $0x38c] sm:$0xff]
      %v3506 = vld [vmem:[#allocation3 + $0x394] sm:$0xff]
      %v3507 = vld [vmem:[#allocation3 + $0x39c] sm:$0xff]
      %v3508 = vld [vmem:[#allocation3 + $0x3a4] sm:$0xf]
      %v3509 = vld [vmem:[#allocation3 + $0x3a8] sm:$0xff]
      %v3510 = vld [vmem:[#allocation3 + $0x3b0] sm:$0xff]
      %v3511 = vld [vmem:[#allocation3 + $0x3b8] sm:$0xff]
      %v3512 = vld [vmem:[#allocation3 + $0x3c0] sm:$0xff]
      %v3513 = vld [vmem:[#allocation3 + $0x3c8] sm:$0xf]
      %v3514 = vld [vmem:[#allocation3 + $0x3cc] sm:$0xff]
      %v3515 = vld [vmem:[#allocation3 + $0x3d4] sm:$0xff]
      %v3516 = vld [vmem:[#allocation3 + $0x3dc] sm:$0xff]
      %v3517 = vld [vmem:[#allocation3 + $0x3e4] sm:$0xff]
      %v3518 = vld [vmem:[#allocation3 + $0x3ec] sm:$0xf]
      %v3519 = vld [vmem:[#allocation3 + $0x3f0] sm:$0xff]
      %v3520 = vld [vmem:[#allocation3 + $0x3f8] sm:$0xff]
      %v3521 = vld [vmem:[#allocation3 + $0x400] sm:$0xff]
      %v3522 = vld [vmem:[#allocation3 + $0x408] sm:$0xff]
      %v3523 = vld [vmem:[#allocation3 + $0x410] sm:$0xf]
      %v3524 = vld [vmem:[#allocation3 + $0x414] sm:$0xff]
      %v3525 = vld [vmem:[#allocation3 + $0x41c] sm:$0xff]
      %v3526 = vld [vmem:[#allocation3 + $0x424] sm:$0xff]
      %v3527 = vld [vmem:[#allocation3 + $0x42c] sm:$0xff]
      %v3528 = vld [vmem:[#allocation3 + $0x434] sm:$0xf]
      %v3529 = vld [vmem:[#allocation3 + $0x438] sm:$0xff]
      %v3530 = vld [vmem:[#allocation3 + $0x440] sm:$0xff]
      %v3531 = vld [vmem:[#allocation3 + $0x448] sm:$0xff]
      %v3532 = vld [vmem:[#allocation3 + $0x450] sm:$0xff]
      %v3533 = vld [vmem:[#allocation3 + $0x458] sm:$0xf]
      %v3534 = vld [vmem:[#allocation3 + $0x45c] sm:$0xff]
      %v3535 = vld [vmem:[#allocation3 + $0x464] sm:$0xff]
      %v3536 = vld [vmem:[#allocation3 + $0x46c] sm:$0xff]
      %v3537 = vld [vmem:[#allocation3 + $0x474] sm:$0xff]
      %v3538 = vld [vmem:[#allocation3 + $0x47c] sm:$0xf]
      %v3539 = vld [vmem:[%s3] sm:$0xf]
      %v3540 = vld [vmem:[%s3 + $0x4] sm:$0xf]
      %v3541 = vld [vmem:[%s3 + $0x8] sm:$0xf]
      %v3542 = vld [vmem:[%s3 + $0xc] sm:$0xf]
      %v3543 = vld [vmem:[%s3 + $0x10] sm:$0xf]
      %v3544 = vld [vmem:[%s3 + $0x14] sm:$0xf]
      %v3545 = vld [vmem:[%s3 + $0x18] sm:$0xf]
      %v3546 = vld [vmem:[%s3 + $0x1c] sm:$0xf]
      %v3547 = vld [vmem:[%s3 + $0x20] sm:$0xf]
      %v3548 = vld [vmem:[%s3 + $0x24] sm:$0xf]
      %v3549 = vld [vmem:[%s3 + $0x28] sm:$0xf]
      %v3550 = vld [vmem:[%s3 + $0x2c] sm:$0xf]
      %v3551 = vld [vmem:[%s3 + $0x30] sm:$0xf]
      %v3552 = vld [vmem:[%s3 + $0x34] sm:$0xf]
      %v3553 = vld [vmem:[%s3 + $0x38] sm:$0xf]
      %v3554 = vld [vmem:[%s3 + $0x3c] sm:$0xf]
      %v3555 = vld [vmem:[%s3 + $0x40] sm:$0xf]
      %v3556 = vld [vmem:[%s3 + $0x44] sm:$0xf]
      %v3557 = vld [vmem:[%s3 + $0x48] sm:$0xf]
      %v3558 = vld [vmem:[%s3 + $0x4c] sm:$0xf]
      %v3559 = vld [vmem:[%s3 + $0x50] sm:$0xf]
      %v3560 = vld [vmem:[%s3 + $0x54] sm:$0xf]
      %v3561 = vld [vmem:[%s3 + $0x58] sm:$0xf]
      %v3562 = vld [vmem:[%s3 + $0x5c] sm:$0xf]
      %v3563 = vld [vmem:[%s3 + $0x60] sm:$0xf]
      %v3564 = vld [vmem:[%s3 + $0x64] sm:$0xf]
      %v3565 = vld [vmem:[%s3 + $0x68] sm:$0xf]
      %v3566 = vld [vmem:[%s3 + $0x6c] sm:$0xf]
      %v3567 = vld [vmem:[%s3 + $0x70] sm:$0xf]
      %v3568 = vld [vmem:[%s3 + $0x74] sm:$0xf]
      %v3569 = vld [vmem:[%s3 + $0x78] sm:$0xf]
      %v3570 = vld [vmem:[%s3 + $0x7c] sm:$0xf]
      %v3571 = vld [vmem:[%s3 + $0x80] sm:$0xf]
      %v3572 = vld [vmem:[%s3 + $0x84] sm:$0xf]
      %v3573 = vld [vmem:[%s3 + $0x88] sm:$0xf]
      %v3574 = vld [vmem:[%s3 + $0x8c] sm:$0xf]
      %v3575 = vld [vmem:[%s3 + $0x90] sm:$0xf]
      %v3576 = vld [vmem:[%s3 + $0x94] sm:$0xf]
      %v3577 = vld [vmem:[%s3 + $0x98] sm:$0xf]
      %v3578 = vld [vmem:[%s3 + $0x9c] sm:$0xf]
      %v3579 = vld [vmem:[%s3 + $0xa0] sm:$0xf]
      %v3580 = vld [vmem:[%s3 + $0xa4] sm:$0xf]
      %v3581 = vld [vmem:[%s3 + $0xa8] sm:$0xf]
      %v3582 = vld [vmem:[%s3 + $0xac] sm:$0xf]
      %v3583 = vld [vmem:[%s3 + $0xb0] sm:$0xf]
      %v3584 = vld [vmem:[%s3 + $0xb4] sm:$0xf]
      %v3585 = vld [vmem:[%s3 + $0xb8] sm:$0xf]
      %v3586 = vld [vmem:[%s3 + $0xbc] sm:$0xf]
      %v3587 = vld [vmem:[%s3 + $0xc0] sm:$0xf]
      %v3588 = vld [vmem:[%s3 + $0xc4] sm:$0xf]
      %v3589 = vld [vmem:[%s3 + $0xc8] sm:$0xf]
      %v3590 = vld [vmem:[%s3 + $0xcc] sm:$0xf]
      %v3591 = vld [vmem:[%s3 + $0xd0] sm:$0xf]
      %v3592 = vld [vmem:[%s3 + $0xd4] sm:$0xf]
      %v3593 = vld [vmem:[%s3 + $0xd8] sm:$0xf]
      %v3594 = vld [vmem:[%s3 + $0xdc] sm:$0xf]
      %v3595 = vld [vmem:[%s3 + $0xe0] sm:$0xf]
      %v3596 = vld [vmem:[%s3 + $0xe4] sm:$0xf]
      %v3597 = vld [vmem:[%s3 + $0xe8] sm:$0xf]
      %v3598 = vld [vmem:[%s3 + $0xec] sm:$0xf]
      %v3599 = vld [vmem:[%s3 + $0xf0] sm:$0xf]
      %v3600 = vld [vmem:[%s3 + $0xf4] sm:$0xf]
      %v3601 = vld [vmem:[%s3 + $0xf8] sm:$0xf]
      %v3602 = vld [vmem:[%s3 + $0xfc] sm:$0xf]
      %v3603 = vld [vmem:[%s3 + $0x100] sm:$0xf]
      %v3604 = vld [vmem:[%s3 + $0x104] sm:$0xf]
      %v3605 = vld [vmem:[%s3 + $0x108] sm:$0xf]
      %v3606 = vld [vmem:[%s3 + $0x10c] sm:$0xf]
      %v3607 = vld [vmem:[%s3 + $0x110] sm:$0xf]
      %v3608 = vld [vmem:[%s3 + $0x114] sm:$0xf]
      %v3609 = vld [vmem:[%s3 + $0x118] sm:$0xf]
      %v3610 = vld [vmem:[%s3 + $0x11c] sm:$0xf]
      %v3611 = vld [vmem:[%s3 + $0x120] sm:$0xf]
      %v3612 = vld [vmem:[%s3 + $0x124] sm:$0xf]
      %v3613 = vld [vmem:[%s3 + $0x128] sm:$0xf]
      %v3614 = vld [vmem:[%s3 + $0x12c] sm:$0xf]
      %v3615 = vld [vmem:[%s3 + $0x130] sm:$0xf]
      %v3616 = vld [vmem:[%s3 + $0x134] sm:$0xf]
      %v3617 = vld [vmem:[%s3 + $0x138] sm:$0xf]
      %v3618 = vld [vmem:[%s3 + $0x13c] sm:$0xf]
      %v3619 = vld [vmem:[%s3 + $0x140] sm:$0xf]
      %v3620 = vld [vmem:[%s3 + $0x144] sm:$0xf]
      %v3621 = vld [vmem:[%s3 + $0x148] sm:$0xf]
      %v3622 = vld [vmem:[%s3 + $0x14c] sm:$0xf]
      %v3623 = vld [vmem:[%s3 + $0x150] sm:$0xf]
      %v3624 = vld [vmem:[%s3 + $0x154] sm:$0xf]
      %v3625 = vld [vmem:[%s3 + $0x158] sm:$0xf]
      %v3626 = vld [vmem:[%s3 + $0x15c] sm:$0xf]
      %v3627 = vld [vmem:[%s3 + $0x160] sm:$0xf]
      %v3628 = vld [vmem:[%s3 + $0x164] sm:$0xf]
      %v3629 = vld [vmem:[%s3 + $0x168] sm:$0xf]
      %v3630 = vld [vmem:[%s3 + $0x16c] sm:$0xf]
      %v3631 = vld [vmem:[%s3 + $0x170] sm:$0xf]
      %v3632 = vld [vmem:[%s3 + $0x174] sm:$0xf]
      %v3633 = vld [vmem:[%s3 + $0x178] sm:$0xf]
      %v3634 = vld [vmem:[%s3 + $0x17c] sm:$0xf]
      %v3635 = vld [vmem:[%s3 + $0x180] sm:$0xf]
      %v3636 = vld [vmem:[%s3 + $0x184] sm:$0xf]
      %v3637 = vld [vmem:[%s3 + $0x188] sm:$0xf]
      %v3638 = vld [vmem:[%s3 + $0x18c] sm:$0xf]
      %v3639 = vld [vmem:[%s3 + $0x190] sm:$0xf]
      %v3640 = vld [vmem:[%s3 + $0x194] sm:$0xf]
      %v3641 = vld [vmem:[%s3 + $0x198] sm:$0xf]
      %v3642 = vld [vmem:[%s3 + $0x19c] sm:$0xf]
      %v3643 = vld [vmem:[%s3 + $0x1a0] sm:$0xf]
      %v3644 = vld [vmem:[%s3 + $0x1a4] sm:$0xf]
      %v3645 = vld [vmem:[%s3 + $0x1a8] sm:$0xf]
      %v3646 = vld [vmem:[%s3 + $0x1ac] sm:$0xf]
      %v3647 = vld [vmem:[%s3 + $0x1b0] sm:$0xf]
      %v3648 = vld [vmem:[%s3 + $0x1b4] sm:$0xf]
      %v3649 = vld [vmem:[%s3 + $0x1b8] sm:$0xf]
      %v3650 = vld [vmem:[%s3 + $0x1bc] sm:$0xf]
      %v3651 = vld [vmem:[%s3 + $0x1c0] sm:$0xf]
      %v3652 = vld [vmem:[%s3 + $0x1c4] sm:$0xf]
      %v3653 = vld [vmem:[%s3 + $0x1c8] sm:$0xf]
      %v3654 = vld [vmem:[%s3 + $0x1cc] sm:$0xf]
      %v3655 = vld [vmem:[%s3 + $0x1d0] sm:$0xf]
      %v3656 = vld [vmem:[%s3 + $0x1d4] sm:$0xf]
      %v3657 = vld [vmem:[%s3 + $0x1d8] sm:$0xf]
      %v3658 = vld [vmem:[%s3 + $0x1dc] sm:$0xf]
      %v3659 = vld [vmem:[%s3 + $0x1e0] sm:$0xf]
      %v3660 = vld [vmem:[%s3 + $0x1e4] sm:$0xf]
      %v3661 = vld [vmem:[%s3 + $0x1e8] sm:$0xf]
      %v3662 = vld [vmem:[%s3 + $0x1ec] sm:$0xf]
      %v3663 = vld [vmem:[%s3 + $0x1f0] sm:$0xf]
      %v3664 = vld [vmem:[%s3 + $0x1f4] sm:$0xf]
      %v3665 = vld [vmem:[%s3 + $0x1f8] sm:$0xf]
      %v3666 = vld [vmem:[%s3 + $0x1fc] sm:$0xf]
      %v3667 = vld [vmem:[%s3 + $0x200] sm:$0xf]
      %v3668 = vld [vmem:[%s3 + $0x204] sm:$0xf]
      %v3669 = vld [vmem:[%s3 + $0x208] sm:$0xf]
      %v3670 = vld [vmem:[%s3 + $0x20c] sm:$0xf]
      %v3671 = vld [vmem:[%s3 + $0x210] sm:$0xf]
      %v3672 = vld [vmem:[%s3 + $0x214] sm:$0xf]
      %v3673 = vld [vmem:[%s3 + $0x218] sm:$0xf]
      %v3674 = vld [vmem:[%s3 + $0x21c] sm:$0xf]
      %v3675 = vld [vmem:[%s3 + $0x220] sm:$0xf]
      %v3676 = vld [vmem:[%s3 + $0x224] sm:$0xf]
      %v3677 = vld [vmem:[%s3 + $0x228] sm:$0xf]
      %v3678 = vld [vmem:[%s3 + $0x22c] sm:$0xf]
      %v3679 = vld [vmem:[%s3 + $0x230] sm:$0xf]
      %v3680 = vld [vmem:[%s3 + $0x234] sm:$0xf]
      %v3681 = vld [vmem:[%s3 + $0x238] sm:$0xf]
      %v3682 = vld [vmem:[%s3 + $0x23c] sm:$0xf]
      %v3843 = vunpack.c.l.b16 %v3379
      %v3844 = vunpack.c.h.b16 %v3379
      %v3845 = vunpack.c.l.b16 %v3380
      %v3846 = vunpack.c.h.b16 %v3380
      %v3847 = vunpack.c.l.b16 %v3381
      %v3848 = vunpack.c.h.b16 %v3381
      %v3849 = vunpack.c.l.b16 %v3382
      %v3850 = vunpack.c.h.b16 %v3382
      %v3851 = vunpack.c.l.b16 %v3383
      %v3852 = vunpack.c.l.b16 %v3384
      %v3853 = vunpack.c.h.b16 %v3384
      %v3854 = vunpack.c.l.b16 %v3385
      %v3855 = vunpack.c.h.b16 %v3385
      %v3856 = vunpack.c.l.b16 %v3386
      %v3857 = vunpack.c.h.b16 %v3386
      %v3858 = vunpack.c.l.b16 %v3387
      %v3859 = vunpack.c.h.b16 %v3387
      %v3860 = vunpack.c.l.b16 %v3388
      %v3861 = vunpack.c.l.b16 %v3389
      %v3862 = vunpack.c.h.b16 %v3389
      %v3863 = vunpack.c.l.b16 %v3390
      %v3864 = vunpack.c.h.b16 %v3390
      %v3865 = vunpack.c.l.b16 %v3391
      %v3866 = vunpack.c.h.b16 %v3391
      %v3867 = vunpack.c.l.b16 %v3392
      %v3868 = vunpack.c.h.b16 %v3392
      %v3869 = vunpack.c.l.b16 %v3393
      %v3870 = vunpack.c.l.b16 %v3394
      %v3871 = vunpack.c.h.b16 %v3394
      %v3872 = vunpack.c.l.b16 %v3395
      %v3873 = vunpack.c.h.b16 %v3395
      %v3874 = vunpack.c.l.b16 %v3396
      %v3875 = vunpack.c.h.b16 %v3396
      %v3876 = vunpack.c.l.b16 %v3397
      %v3877 = vunpack.c.h.b16 %v3397
      %v3878 = vunpack.c.l.b16 %v3398
      %v3879 = vunpack.c.l.b16 %v3399
      %v3880 = vunpack.c.h.b16 %v3399
      %v3881 = vunpack.c.l.b16 %v3400
      %v3882 = vunpack.c.h.b16 %v3400
      %v3883 = vunpack.c.l.b16 %v3401
      %v3884 = vunpack.c.h.b16 %v3401
      %v3885 = vunpack.c.l.b16 %v3402
      %v3886 = vunpack.c.h.b16 %v3402
      %v3887 = vunpack.c.l.b16 %v3403
      %v3888 = vunpack.c.l.b16 %v3404
      %v3889 = vunpack.c.h.b16 %v3404
      %v3890 = vunpack.c.l.b16 %v3405
      %v3891 = vunpack.c.h.b16 %v3405
      %v3892 = vunpack.c.l.b16 %v3406
      %v3893 = vunpack.c.h.b16 %v3406
      %v3894 = vunpack.c.l.b16 %v3407
      %v3895 = vunpack.c.h.b16 %v3407
      %v3896 = vunpack.c.l.b16 %v3408
      %v3897 = vunpack.c.l.b16 %v3409
      %v3898 = vunpack.c.h.b16 %v3409
      %v3899 = vunpack.c.l.b16 %v3410
      %v3900 = vunpack.c.h.b16 %v3410
      %v3901 = vunpack.c.l.b16 %v3411
      %v3902 = vunpack.c.h.b16 %v3411
      %v3903 = vunpack.c.l.b16 %v3412
      %v3904 = vunpack.c.h.b16 %v3412
      %v3905 = vunpack.c.l.b16 %v3413
      %v3906 = vunpack.c.l.b16 %v3414
      %v3907 = vunpack.c.h.b16 %v3414
      %v3908 = vunpack.c.l.b16 %v3415
      %v3909 = vunpack.c.h.b16 %v3415
      %v3910 = vunpack.c.l.b16 %v3416
      %v3911 = vunpack.c.h.b16 %v3416
      %v3912 = vunpack.c.l.b16 %v3417
      %v3913 = vunpack.c.h.b16 %v3417
      %v3914 = vunpack.c.l.b16 %v3418
      %v3915 = vunpack.c.l.b16 %v3419
      %v3916 = vunpack.c.h.b16 %v3419
      %v3917 = vunpack.c.l.b16 %v3420
      %v3918 = vunpack.c.h.b16 %v3420
      %v3919 = vunpack.c.l.b16 %v3421
      %v3920 = vunpack.c.h.b16 %v3421
      %v3921 = vunpack.c.l.b16 %v3422
      %v3922 = vunpack.c.h.b16 %v3422
      %v3923 = vunpack.c.l.b16 %v3423
      %v3924 = vunpack.c.l.b16 %v3424
      %v3925 = vunpack.c.h.b16 %v3424
      %v3926 = vunpack.c.l.b16 %v3425
      %v3927 = vunpack.c.h.b16 %v3425
      %v3928 = vunpack.c.l.b16 %v3426
      %v3929 = vunpack.c.h.b16 %v3426
      %v3930 = vunpack.c.l.b16 %v3427
      %v3931 = vunpack.c.h.b16 %v3427
      %v3932 = vunpack.c.l.b16 %v3428
      %v3933 = vunpack.c.l.b16 %v3429
      %v3934 = vunpack.c.h.b16 %v3429
      %v3935 = vunpack.c.l.b16 %v3430
      %v3936 = vunpack.c.h.b16 %v3430
      %v3937 = vunpack.c.l.b16 %v3431
      %v3938 = vunpack.c.h.b16 %v3431
      %v3939 = vunpack.c.l.b16 %v3432
      %v3940 = vunpack.c.h.b16 %v3432
      %v3941 = vunpack.c.l.b16 %v3433
      %v3942 = vunpack.c.l.b16 %v3434
      %v3943 = vunpack.c.h.b16 %v3434
      %v3944 = vunpack.c.l.b16 %v3435
      %v3945 = vunpack.c.h.b16 %v3435
      %v3946 = vunpack.c.l.b16 %v3436
      %v3947 = vunpack.c.h.b16 %v3436
      %v3948 = vunpack.c.l.b16 %v3437
      %v3949 = vunpack.c.h.b16 %v3437
      %v3950 = vunpack.c.l.b16 %v3438
      %v3951 = vunpack.c.l.b16 %v3439
      %v3952 = vunpack.c.h.b16 %v3439
      %v3953 = vunpack.c.l.b16 %v3440
      %v3954 = vunpack.c.h.b16 %v3440
      %v3955 = vunpack.c.l.b16 %v3441
      %v3956 = vunpack.c.h.b16 %v3441
      %v3957 = vunpack.c.l.b16 %v3442
      %v3958 = vunpack.c.h.b16 %v3442
      %v3959 = vunpack.c.l.b16 %v3443
      %v3960 = vunpack.c.l.b16 %v3444
      %v3961 = vunpack.c.h.b16 %v3444
      %v3962 = vunpack.c.l.b16 %v3445
      %v3963 = vunpack.c.h.b16 %v3445
      %v3964 = vunpack.c.l.b16 %v3446
      %v3965 = vunpack.c.h.b16 %v3446
      %v3966 = vunpack.c.l.b16 %v3447
      %v3967 = vunpack.c.h.b16 %v3447
      %v3968 = vunpack.c.l.b16 %v3448
      %v3969 = vunpack.c.l.b16 %v3449
      %v3970 = vunpack.c.h.b16 %v3449
      %v3971 = vunpack.c.l.b16 %v3450
      %v3972 = vunpack.c.h.b16 %v3450
      %v3973 = vunpack.c.l.b16 %v3451
      %v3974 = vunpack.c.h.b16 %v3451
      %v3975 = vunpack.c.l.b16 %v3452
      %v3976 = vunpack.c.h.b16 %v3452
      %v3977 = vunpack.c.l.b16 %v3453
      %v3978 = vunpack.c.l.b16 %v3454
      %v3979 = vunpack.c.h.b16 %v3454
      %v3980 = vunpack.c.l.b16 %v3455
      %v3981 = vunpack.c.h.b16 %v3455
      %v3982 = vunpack.c.l.b16 %v3456
      %v3983 = vunpack.c.h.b16 %v3456
      %v3984 = vunpack.c.l.b16 %v3457
      %v3985 = vunpack.c.h.b16 %v3457
      %v3986 = vunpack.c.l.b16 %v3458
      %v3987 = vunpack.c.l.b16 %v3459
      %v3988 = vunpack.c.h.b16 %v3459
      %v3989 = vunpack.c.l.b16 %v3460
      %v3990 = vunpack.c.h.b16 %v3460
      %v3991 = vunpack.c.l.b16 %v3461
      %v3992 = vunpack.c.h.b16 %v3461
      %v3993 = vunpack.c.l.b16 %v3462
      %v3994 = vunpack.c.h.b16 %v3462
      %v3995 = vunpack.c.l.b16 %v3463
      %v3996 = vunpack.c.l.b16 %v3464
      %v3997 = vunpack.c.h.b16 %v3464
      %v3998 = vunpack.c.l.b16 %v3465
      %v3999 = vunpack.c.h.b16 %v3465
      %v4000 = vunpack.c.l.b16 %v3466
      %v4001 = vunpack.c.h.b16 %v3466
      %v4002 = vunpack.c.l.b16 %v3467
      %v4003 = vunpack.c.h.b16 %v3467
      %v4004 = vunpack.c.l.b16 %v3468
      %v4005 = vunpack.c.l.b16 %v3469
      %v4006 = vunpack.c.h.b16 %v3469
      %v4007 = vunpack.c.l.b16 %v3470
      %v4008 = vunpack.c.h.b16 %v3470
      %v4009 = vunpack.c.l.b16 %v3471
      %v4010 = vunpack.c.h.b16 %v3471
      %v4011 = vunpack.c.l.b16 %v3472
      %v4012 = vunpack.c.h.b16 %v3472
      %v4013 = vunpack.c.l.b16 %v3473
      %v4014 = vunpack.c.l.b16 %v3474
      %v4015 = vunpack.c.h.b16 %v3474
      %v4016 = vunpack.c.l.b16 %v3475
      %v4017 = vunpack.c.h.b16 %v3475
      %v4018 = vunpack.c.l.b16 %v3476
      %v4019 = vunpack.c.h.b16 %v3476
      %v4020 = vunpack.c.l.b16 %v3477
      %v4021 = vunpack.c.h.b16 %v3477
      %v4022 = vunpack.c.l.b16 %v3478
      %v4023 = vunpack.c.l.b16 %v3479
      %v4024 = vunpack.c.h.b16 %v3479
      %v4025 = vunpack.c.l.b16 %v3480
      %v4026 = vunpack.c.h.b16 %v3480
      %v4027 = vunpack.c.l.b16 %v3481
      %v4028 = vunpack.c.h.b16 %v3481
      %v4029 = vunpack.c.l.b16 %v3482
      %v4030 = vunpack.c.h.b16 %v3482
      %v4031 = vunpack.c.l.b16 %v3483
      %v4032 = vunpack.c.l.b16 %v3484
      %v4033 = vunpack.c.h.b16 %v3484
      %v4034 = vunpack.c.l.b16 %v3485
      %v4035 = vunpack.c.h.b16 %v3485
      %v4036 = vunpack.c.l.b16 %v3486
      %v4037 = vunpack.c.h.b16 %v3486
      %v4038 = vunpack.c.l.b16 %v3487
      %v4039 = vunpack.c.h.b16 %v3487
      %v4040 = vunpack.c.l.b16 %v3488
      %v4041 = vunpack.c.l.b16 %v3489
      %v4042 = vunpack.c.h.b16 %v3489
      %v4043 = vunpack.c.l.b16 %v3490
      %v4044 = vunpack.c.h.b16 %v3490
      %v4045 = vunpack.c.l.b16 %v3491
      %v4046 = vunpack.c.h.b16 %v3491
      %v4047 = vunpack.c.l.b16 %v3492
      %v4048 = vunpack.c.h.b16 %v3492
      %v4049 = vunpack.c.l.b16 %v3493
      %v4050 = vunpack.c.l.b16 %v3494
      %v4051 = vunpack.c.h.b16 %v3494
      %v4052 = vunpack.c.l.b16 %v3495
      %v4053 = vunpack.c.h.b16 %v3495
      %v4054 = vunpack.c.l.b16 %v3496
      %v4055 = vunpack.c.h.b16 %v3496
      %v4056 = vunpack.c.l.b16 %v3497
      %v4057 = vunpack.c.h.b16 %v3497
      %v4058 = vunpack.c.l.b16 %v3498
      %v4059 = vunpack.c.l.b16 %v3499
      %v4060 = vunpack.c.h.b16 %v3499
      %v4061 = vunpack.c.l.b16 %v3500
      %v4062 = vunpack.c.h.b16 %v3500
      %v4063 = vunpack.c.l.b16 %v3501
      %v4064 = vunpack.c.h.b16 %v3501
      %v4065 = vunpack.c.l.b16 %v3502
      %v4066 = vunpack.c.h.b16 %v3502
      %v4067 = vunpack.c.l.b16 %v3503
      %v4068 = vunpack.c.l.b16 %v3504
      %v4069 = vunpack.c.h.b16 %v3504
      %v4070 = vunpack.c.l.b16 %v3505
      %v4071 = vunpack.c.h.b16 %v3505
      %v4072 = vunpack.c.l.b16 %v3506
      %v4073 = vunpack.c.h.b16 %v3506
      %v4074 = vunpack.c.l.b16 %v3507
      %v4075 = vunpack.c.h.b16 %v3507
      %v4076 = vunpack.c.l.b16 %v3508
      %v4077 = vunpack.c.l.b16 %v3509
      %v4078 = vunpack.c.h.b16 %v3509
      %v4079 = vunpack.c.l.b16 %v3510
      %v4080 = vunpack.c.h.b16 %v3510
      %v4081 = vunpack.c.l.b16 %v3511
      %v4082 = vunpack.c.h.b16 %v3511
      %v4083 = vunpack.c.l.b16 %v3512
      %v4084 = vunpack.c.h.b16 %v3512
      %v4085 = vunpack.c.l.b16 %v3513
      %v4086 = vunpack.c.l.b16 %v3514
      %v4087 = vunpack.c.h.b16 %v3514
      %v4088 = vunpack.c.l.b16 %v3515
      %v4089 = vunpack.c.h.b16 %v3515
      %v4090 = vunpack.c.l.b16 %v3516
      %v4091 = vunpack.c.h.b16 %v3516
      %v4092 = vunpack.c.l.b16 %v3517
      %v4093 = vunpack.c.h.b16 %v3517
      %v4094 = vunpack.c.l.b16 %v3518
      %v4095 = vunpack.c.l.b16 %v3519
      %v4096 = vunpack.c.h.b16 %v3519
      %v4097 = vunpack.c.l.b16 %v3520
      %v4098 = vunpack.c.h.b16 %v3520
      %v4099 = vunpack.c.l.b16 %v3521
      %v4100 = vunpack.c.h.b16 %v3521
      %v4101 = vunpack.c.l.b16 %v3522
      %v4102 = vunpack.c.h.b16 %v3522
      %v4103 = vunpack.c.l.b16 %v3523
      %v4104 = vunpack.c.l.b16 %v3524
      %v4105 = vunpack.c.h.b16 %v3524
      %v4106 = vunpack.c.l.b16 %v3525
      %v4107 = vunpack.c.h.b16 %v3525
      %v4108 = vunpack.c.l.b16 %v3526
      %v4109 = vunpack.c.h.b16 %v3526
      %v4110 = vunpack.c.l.b16 %v3527
      %v4111 = vunpack.c.h.b16 %v3527
      %v4112 = vunpack.c.l.b16 %v3528
      %v4113 = vunpack.c.l.b16 %v3529
      %v4114 = vunpack.c.h.b16 %v3529
      %v4115 = vunpack.c.l.b16 %v3530
      %v4116 = vunpack.c.h.b16 %v3530
      %v4117 = vunpack.c.l.b16 %v3531
      %v4118 = vunpack.c.h.b16 %v3531
      %v4119 = vunpack.c.l.b16 %v3532
      %v4120 = vunpack.c.h.b16 %v3532
      %v4121 = vunpack.c.l.b16 %v3533
      %v4122 = vunpack.c.l.b16 %v3534
      %v4123 = vunpack.c.h.b16 %v3534
      %v4124 = vunpack.c.l.b16 %v3535
      %v4125 = vunpack.c.h.b16 %v3535
      %v4126 = vunpack.c.l.b16 %v3536
      %v4127 = vunpack.c.h.b16 %v3536
      %v4128 = vunpack.c.l.b16 %v3537
      %v4129 = vunpack.c.h.b16 %v3537
      %v4130 = vunpack.c.l.b16 %v3538
      %v4131 = vpack.c.b16 %v3852, %v3843
      %v4132 = vpack.c.b16 %v3853, %v3844
      %v4133 = vpack.c.b16 %v3854, %v3845
      %v4134 = vpack.c.b16 %v3855, %v3846
      %v4135 = vpack.c.b16 %v3856, %v3847
      %v4136 = vpack.c.b16 %v3857, %v3848
      %v4137 = vpack.c.b16 %v3858, %v3849
      %v4138 = vpack.c.b16 %v3859, %v3850
      %v4139 = vpack.c.b16 %v3860, %v3851
      %v4140 = vpack.c.b16 %v3870, %v3861
      %v4141 = vpack.c.b16 %v3871, %v3862
      %v4142 = vpack.c.b16 %v3872, %v3863
      %v4143 = vpack.c.b16 %v3873, %v3864
      %v4144 = vpack.c.b16 %v3874, %v3865
      %v4145 = vpack.c.b16 %v3875, %v3866
      %v4146 = vpack.c.b16 %v3876, %v3867
      %v4147 = vpack.c.b16 %v3877, %v3868
      %v4148 = vpack.c.b16 %v3878, %v3869
      %v4149 = vpack.c.b16 %v3888, %v3879
      %v4150 = vpack.c.b16 %v3889, %v3880
      %v4151 = vpack.c.b16 %v3890, %v3881
      %v4152 = vpack.c.b16 %v3891, %v3882
      %v4153 = vpack.c.b16 %v3892, %v3883
      %v4154 = vpack.c.b16 %v3893, %v3884
      %v4155 = vpack.c.b16 %v3894, %v3885
      %v4156 = vpack.c.b16 %v3895, %v3886
      %v4157 = vpack.c.b16 %v3896, %v3887
      %v4158 = vpack.c.b16 %v3906, %v3897
      %v4159 = vpack.c.b16 %v3907, %v3898
      %v4160 = vpack.c.b16 %v3908, %v3899
      %v4161 = vpack.c.b16 %v3909, %v3900
      %v4162 = vpack.c.b16 %v3910, %v3901
      %v4163 = vpack.c.b16 %v3911, %v3902
      %v4164 = vpack.c.b16 %v3912, %v3903
      %v4165 = vpack.c.b16 %v3913, %v3904
      %v4166 = vpack.c.b16 %v3914, %v3905
      %v4167 = vpack.c.b16 %v3924, %v3915
      %v4168 = vpack.c.b16 %v3925, %v3916
      %v4169 = vpack.c.b16 %v3926, %v3917
      %v4170 = vpack.c.b16 %v3927, %v3918
      %v4171 = vpack.c.b16 %v3928, %v3919
      %v4172 = vpack.c.b16 %v3929, %v3920
      %v4173 = vpack.c.b16 %v3930, %v3921
      %v4174 = vpack.c.b16 %v3931, %v3922
      %v4175 = vpack.c.b16 %v3932, %v3923
      %v4176 = vpack.c.b16 %v3942, %v3933
      %v4177 = vpack.c.b16 %v3943, %v3934
      %v4178 = vpack.c.b16 %v3944, %v3935
      %v4179 = vpack.c.b16 %v3945, %v3936
      %v4180 = vpack.c.b16 %v3946, %v3937
      %v4181 = vpack.c.b16 %v3947, %v3938
      %v4182 = vpack.c.b16 %v3948, %v3939
      %v4183 = vpack.c.b16 %v3949, %v3940
      %v4184 = vpack.c.b16 %v3950, %v3941
      %v4185 = vpack.c.b16 %v3960, %v3951
      %v4186 = vpack.c.b16 %v3961, %v3952
      %v4187 = vpack.c.b16 %v3962, %v3953
      %v4188 = vpack.c.b16 %v3963, %v3954
      %v4189 = vpack.c.b16 %v3964, %v3955
      %v4190 = vpack.c.b16 %v3965, %v3956
      %v4191 = vpack.c.b16 %v3966, %v3957
      %v4192 = vpack.c.b16 %v3967, %v3958
      %v4193 = vpack.c.b16 %v3968, %v3959
      %v4194 = vpack.c.b16 %v3978, %v3969
      %v4195 = vpack.c.b16 %v3979, %v3970
      %v4196 = vpack.c.b16 %v3980, %v3971
      %v4197 = vpack.c.b16 %v3981, %v3972
      %v4198 = vpack.c.b16 %v3982, %v3973
      %v4199 = vpack.c.b16 %v3983, %v3974
      %v4200 = vpack.c.b16 %v3984, %v3975
      %v4201 = vpack.c.b16 %v3985, %v3976
      %v4202 = vpack.c.b16 %v3986, %v3977
      %v4203 = vpack.c.b16 %v3996, %v3987
      %v4204 = vpack.c.b16 %v3997, %v3988
      %v4205 = vpack.c.b16 %v3998, %v3989
      %v4206 = vpack.c.b16 %v3999, %v3990
      %v4207 = vpack.c.b16 %v4000, %v3991
      %v4208 = vpack.c.b16 %v4001, %v3992
      %v4209 = vpack.c.b16 %v4002, %v3993
      %v4210 = vpack.c.b16 %v4003, %v3994
      %v4211 = vpack.c.b16 %v4004, %v3995
      %v4212 = vpack.c.b16 %v4014, %v4005
      %v4213 = vpack.c.b16 %v4015, %v4006
      %v4214 = vpack.c.b16 %v4016, %v4007
      %v4215 = vpack.c.b16 %v4017, %v4008
      %v4216 = vpack.c.b16 %v4018, %v4009
      %v4217 = vpack.c.b16 %v4019, %v4010
      %v4218 = vpack.c.b16 %v4020, %v4011
      %v4219 = vpack.c.b16 %v4021, %v4012
      %v4220 = vpack.c.b16 %v4022, %v4013
      %v4221 = vpack.c.b16 %v4032, %v4023
      %v4222 = vpack.c.b16 %v4033, %v4024
      %v4223 = vpack.c.b16 %v4034, %v4025
      %v4224 = vpack.c.b16 %v4035, %v4026
      %v4225 = vpack.c.b16 %v4036, %v4027
      %v4226 = vpack.c.b16 %v4037, %v4028
      %v4227 = vpack.c.b16 %v4038, %v4029
      %v4228 = vpack.c.b16 %v4039, %v4030
      %v4229 = vpack.c.b16 %v4040, %v4031
      %v4230 = vpack.c.b16 %v4050, %v4041
      %v4231 = vpack.c.b16 %v4051, %v4042
      %v4232 = vpack.c.b16 %v4052, %v4043
      %v4233 = vpack.c.b16 %v4053, %v4044
      %v4234 = vpack.c.b16 %v4054, %v4045
      %v4235 = vpack.c.b16 %v4055, %v4046
      %v4236 = vpack.c.b16 %v4056, %v4047
      %v4237 = vpack.c.b16 %v4057, %v4048
      %v4238 = vpack.c.b16 %v4058, %v4049
      %v4239 = vpack.c.b16 %v4068, %v4059
      %v4240 = vpack.c.b16 %v4069, %v4060
      %v4241 = vpack.c.b16 %v4070, %v4061
      %v4242 = vpack.c.b16 %v4071, %v4062
      %v4243 = vpack.c.b16 %v4072, %v4063
      %v4244 = vpack.c.b16 %v4073, %v4064
      %v4245 = vpack.c.b16 %v4074, %v4065
      %v4246 = vpack.c.b16 %v4075, %v4066
      %v4247 = vpack.c.b16 %v4076, %v4067
      %v4248 = vpack.c.b16 %v4086, %v4077
      %v4249 = vpack.c.b16 %v4087, %v4078
      %v4250 = vpack.c.b16 %v4088, %v4079
      %v4251 = vpack.c.b16 %v4089, %v4080
      %v4252 = vpack.c.b16 %v4090, %v4081
      %v4253 = vpack.c.b16 %v4091, %v4082
      %v4254 = vpack.c.b16 %v4092, %v4083
      %v4255 = vpack.c.b16 %v4093, %v4084
      %v4256 = vpack.c.b16 %v4094, %v4085
      %v4257 = vpack.c.b16 %v4104, %v4095
      %v4258 = vpack.c.b16 %v4105, %v4096
      %v4259 = vpack.c.b16 %v4106, %v4097
      %v4260 = vpack.c.b16 %v4107, %v4098
      %v4261 = vpack.c.b16 %v4108, %v4099
      %v4262 = vpack.c.b16 %v4109, %v4100
      %v4263 = vpack.c.b16 %v4110, %v4101
      %v4264 = vpack.c.b16 %v4111, %v4102
      %v4265 = vpack.c.b16 %v4112, %v4103
      %v4266 = vpack.c.b16 %v4122, %v4113
      %v4267 = vpack.c.b16 %v4123, %v4114
      %v4268 = vpack.c.b16 %v4124, %v4115
      %v4269 = vpack.c.b16 %v4125, %v4116
      %v4270 = vpack.c.b16 %v4126, %v4117
      %v4271 = vpack.c.b16 %v4127, %v4118
      %v4272 = vpack.c.b16 %v4128, %v4119
      %v4273 = vpack.c.b16 %v4129, %v4120
      %v4274 = vpack.c.b16 %v4130, %v4121
      %v4563 = vunpack.c.l.b16 %v3539
      %v4564 = vunpack.c.l.b16 %v3540
      %v4565 = vunpack.c.l.b16 %v3541
      %v4566 = vunpack.c.l.b16 %v3542
      %v4567 = vunpack.c.l.b16 %v3543
      %v4568 = vunpack.c.l.b16 %v3544
      %v4569 = vunpack.c.l.b16 %v3545
      %v4570 = vunpack.c.l.b16 %v3546
      %v4571 = vunpack.c.l.b16 %v3547
      %v4572 = vunpack.c.l.b16 %v3548
      %v4573 = vunpack.c.l.b16 %v3549
      %v4574 = vunpack.c.l.b16 %v3550
      %v4575 = vunpack.c.l.b16 %v3551
      %v4576 = vunpack.c.l.b16 %v3552
      %v4577 = vunpack.c.l.b16 %v3553
      %v4578 = vunpack.c.l.b16 %v3554
      %v4579 = vunpack.c.l.b16 %v3555
      %v4580 = vunpack.c.l.b16 %v3556
      %v4581 = vunpack.c.l.b16 %v3557
      %v4582 = vunpack.c.l.b16 %v3558
      %v4583 = vunpack.c.l.b16 %v3559
      %v4584 = vunpack.c.l.b16 %v3560
      %v4585 = vunpack.c.l.b16 %v3561
      %v4586 = vunpack.c.l.b16 %v3562
      %v4587 = vunpack.c.l.b16 %v3563
      %v4588 = vunpack.c.l.b16 %v3564
      %v4589 = vunpack.c.l.b16 %v3565
      %v4590 = vunpack.c.l.b16 %v3566
      %v4591 = vunpack.c.l.b16 %v3567
      %v4592 = vunpack.c.l.b16 %v3568
      %v4593 = vunpack.c.l.b16 %v3569
      %v4594 = vunpack.c.l.b16 %v3570
      %v4595 = vunpack.c.l.b16 %v3571
      %v4596 = vunpack.c.l.b16 %v3572
      %v4597 = vunpack.c.l.b16 %v3573
      %v4598 = vunpack.c.l.b16 %v3574
      %v4599 = vunpack.c.l.b16 %v3575
      %v4600 = vunpack.c.l.b16 %v3576
      %v4601 = vunpack.c.l.b16 %v3577
      %v4602 = vunpack.c.l.b16 %v3578
      %v4603 = vunpack.c.l.b16 %v3579
      %v4604 = vunpack.c.l.b16 %v3580
      %v4605 = vunpack.c.l.b16 %v3581
      %v4606 = vunpack.c.l.b16 %v3582
      %v4607 = vunpack.c.l.b16 %v3583
      %v4608 = vunpack.c.l.b16 %v3584
      %v4609 = vunpack.c.l.b16 %v3585
      %v4610 = vunpack.c.l.b16 %v3586
      %v4611 = vunpack.c.l.b16 %v3587
      %v4612 = vunpack.c.l.b16 %v3588
      %v4613 = vunpack.c.l.b16 %v3589
      %v4614 = vunpack.c.l.b16 %v3590
      %v4615 = vunpack.c.l.b16 %v3591
      %v4616 = vunpack.c.l.b16 %v3592
      %v4617 = vunpack.c.l.b16 %v3593
      %v4618 = vunpack.c.l.b16 %v3594
      %v4619 = vunpack.c.l.b16 %v3595
      %v4620 = vunpack.c.l.b16 %v3596
      %v4621 = vunpack.c.l.b16 %v3597
      %v4622 = vunpack.c.l.b16 %v3598
      %v4623 = vunpack.c.l.b16 %v3599
      %v4624 = vunpack.c.l.b16 %v3600
      %v4625 = vunpack.c.l.b16 %v3601
      %v4626 = vunpack.c.l.b16 %v3602
      %v4627 = vunpack.c.l.b16 %v3603
      %v4628 = vunpack.c.l.b16 %v3604
      %v4629 = vunpack.c.l.b16 %v3605
      %v4630 = vunpack.c.l.b16 %v3606
      %v4631 = vunpack.c.l.b16 %v3607
      %v4632 = vunpack.c.l.b16 %v3608
      %v4633 = vunpack.c.l.b16 %v3609
      %v4634 = vunpack.c.l.b16 %v3610
      %v4635 = vunpack.c.l.b16 %v3611
      %v4636 = vunpack.c.l.b16 %v3612
      %v4637 = vunpack.c.l.b16 %v3613
      %v4638 = vunpack.c.l.b16 %v3614
      %v4639 = vunpack.c.l.b16 %v3615
      %v4640 = vunpack.c.l.b16 %v3616
      %v4641 = vunpack.c.l.b16 %v3617
      %v4642 = vunpack.c.l.b16 %v3618
      %v4643 = vunpack.c.l.b16 %v3619
      %v4644 = vunpack.c.l.b16 %v3620
      %v4645 = vunpack.c.l.b16 %v3621
      %v4646 = vunpack.c.l.b16 %v3622
      %v4647 = vunpack.c.l.b16 %v3623
      %v4648 = vunpack.c.l.b16 %v3624
      %v4649 = vunpack.c.l.b16 %v3625
      %v4650 = vunpack.c.l.b16 %v3626
      %v4651 = vunpack.c.l.b16 %v3627
      %v4652 = vunpack.c.l.b16 %v3628
      %v4653 = vunpack.c.l.b16 %v3629
      %v4654 = vunpack.c.l.b16 %v3630
      %v4655 = vunpack.c.l.b16 %v3631
      %v4656 = vunpack.c.l.b16 %v3632
      %v4657 = vunpack.c.l.b16 %v3633
      %v4658 = vunpack.c.l.b16 %v3634
      %v4659 = vunpack.c.l.b16 %v3635
      %v4660 = vunpack.c.l.b16 %v3636
      %v4661 = vunpack.c.l.b16 %v3637
      %v4662 = vunpack.c.l.b16 %v3638
      %v4663 = vunpack.c.l.b16 %v3639
      %v4664 = vunpack.c.l.b16 %v3640
      %v4665 = vunpack.c.l.b16 %v3641
      %v4666 = vunpack.c.l.b16 %v3642
      %v4667 = vunpack.c.l.b16 %v3643
      %v4668 = vunpack.c.l.b16 %v3644
      %v4669 = vunpack.c.l.b16 %v3645
      %v4670 = vunpack.c.l.b16 %v3646
      %v4671 = vunpack.c.l.b16 %v3647
      %v4672 = vunpack.c.l.b16 %v3648
      %v4673 = vunpack.c.l.b16 %v3649
      %v4674 = vunpack.c.l.b16 %v3650
      %v4675 = vunpack.c.l.b16 %v3651
      %v4676 = vunpack.c.l.b16 %v3652
      %v4677 = vunpack.c.l.b16 %v3653
      %v4678 = vunpack.c.l.b16 %v3654
      %v4679 = vunpack.c.l.b16 %v3655
      %v4680 = vunpack.c.l.b16 %v3656
      %v4681 = vunpack.c.l.b16 %v3657
      %v4682 = vunpack.c.l.b16 %v3658
      %v4683 = vunpack.c.l.b16 %v3659
      %v4684 = vunpack.c.l.b16 %v3660
      %v4685 = vunpack.c.l.b16 %v3661
      %v4686 = vunpack.c.l.b16 %v3662
      %v4687 = vunpack.c.l.b16 %v3663
      %v4688 = vunpack.c.l.b16 %v3664
      %v4689 = vunpack.c.l.b16 %v3665
      %v4690 = vunpack.c.l.b16 %v3666
      %v4691 = vunpack.c.l.b16 %v3667
      %v4692 = vunpack.c.l.b16 %v3668
      %v4693 = vunpack.c.l.b16 %v3669
      %v4694 = vunpack.c.l.b16 %v3670
      %v4695 = vunpack.c.l.b16 %v3671
      %v4696 = vunpack.c.l.b16 %v3672
      %v4697 = vunpack.c.l.b16 %v3673
      %v4698 = vunpack.c.l.b16 %v3674
      %v4699 = vunpack.c.l.b16 %v3675
      %v4700 = vunpack.c.l.b16 %v3676
      %v4701 = vunpack.c.l.b16 %v3677
      %v4702 = vunpack.c.l.b16 %v3678
      %v4703 = vunpack.c.l.b16 %v3679
      %v4704 = vunpack.c.l.b16 %v3680
      %v4705 = vunpack.c.l.b16 %v3681
      %v4706 = vunpack.c.l.b16 %v3682
      %v4707 = vpack.c.b16 %v4564, %v4563
      %v4708 = vpack.c.b16 %v4566, %v4565
      %v4709 = vpack.c.b16 %v4568, %v4567
      %v4710 = vpack.c.b16 %v4570, %v4569
      %v4711 = vpack.c.b16 %v4572, %v4571
      %v4712 = vpack.c.b16 %v4574, %v4573
      %v4713 = vpack.c.b16 %v4576, %v4575
      %v4714 = vpack.c.b16 %v4578, %v4577
      %v4715 = vpack.c.b16 %v4580, %v4579
      %v4716 = vpack.c.b16 %v4582, %v4581
      %v4717 = vpack.c.b16 %v4584, %v4583
      %v4718 = vpack.c.b16 %v4586, %v4585
      %v4719 = vpack.c.b16 %v4588, %v4587
      %v4720 = vpack.c.b16 %v4590, %v4589
      %v4721 = vpack.c.b16 %v4592, %v4591
      %v4722 = vpack.c.b16 %v4594, %v4593
      %v4723 = vpack.c.b16 %v4596, %v4595
      %v4724 = vpack.c.b16 %v4598, %v4597
      %v4725 = vpack.c.b16 %v4600, %v4599
      %v4726 = vpack.c.b16 %v4602, %v4601
      %v4727 = vpack.c.b16 %v4604, %v4603
      %v4728 = vpack.c.b16 %v4606, %v4605
      %v4729 = vpack.c.b16 %v4608, %v4607
      %v4730 = vpack.c.b16 %v4610, %v4609
      %v4731 = vpack.c.b16 %v4612, %v4611
      %v4732 = vpack.c.b16 %v4614, %v4613
      %v4733 = vpack.c.b16 %v4616, %v4615
      %v4734 = vpack.c.b16 %v4618, %v4617
      %v4735 = vpack.c.b16 %v4620, %v4619
      %v4736 = vpack.c.b16 %v4622, %v4621
      %v4737 = vpack.c.b16 %v4624, %v4623
      %v4738 = vpack.c.b16 %v4626, %v4625
      %v4739 = vpack.c.b16 %v4628, %v4627
      %v4740 = vpack.c.b16 %v4630, %v4629
      %v4741 = vpack.c.b16 %v4632, %v4631
      %v4742 = vpack.c.b16 %v4634, %v4633
      %v4743 = vpack.c.b16 %v4636, %v4635
      %v4744 = vpack.c.b16 %v4638, %v4637
      %v4745 = vpack.c.b16 %v4640, %v4639
      %v4746 = vpack.c.b16 %v4642, %v4641
      %v4747 = vpack.c.b16 %v4644, %v4643
      %v4748 = vpack.c.b16 %v4646, %v4645
      %v4749 = vpack.c.b16 %v4648, %v4647
      %v4750 = vpack.c.b16 %v4650, %v4649
      %v4751 = vpack.c.b16 %v4652, %v4651
      %v4752 = vpack.c.b16 %v4654, %v4653
      %v4753 = vpack.c.b16 %v4656, %v4655
      %v4754 = vpack.c.b16 %v4658, %v4657
      %v4755 = vpack.c.b16 %v4660, %v4659
      %v4756 = vpack.c.b16 %v4662, %v4661
      %v4757 = vpack.c.b16 %v4664, %v4663
      %v4758 = vpack.c.b16 %v4666, %v4665
      %v4759 = vpack.c.b16 %v4668, %v4667
      %v4760 = vpack.c.b16 %v4670, %v4669
      %v4761 = vpack.c.b16 %v4672, %v4671
      %v4762 = vpack.c.b16 %v4674, %v4673
      %v4763 = vpack.c.b16 %v4676, %v4675
      %v4764 = vpack.c.b16 %v4678, %v4677
      %v4765 = vpack.c.b16 %v4680, %v4679
      %v4766 = vpack.c.b16 %v4682, %v4681
      %v4767 = vpack.c.b16 %v4684, %v4683
      %v4768 = vpack.c.b16 %v4686, %v4685
      %v4769 = vpack.c.b16 %v4688, %v4687
      %v4770 = vpack.c.b16 %v4690, %v4689
      %v4771 = vpack.c.b16 %v4692, %v4691
      %v4772 = vpack.c.b16 %v4694, %v4693
      %v4773 = vpack.c.b16 %v4696, %v4695
      %v4774 = vpack.c.b16 %v4698, %v4697
      %v4775 = vpack.c.b16 %v4700, %v4699
      %v4776 = vpack.c.b16 %v4702, %v4701
      %v4777 = vpack.c.b16 %v4704, %v4703
      %v4778 = vpack.c.b16 %v4706, %v4705
      %4851 = vmatprep.subr.bf16.mxu0 0
      %4852 = vmatpush1.bf16.msra.mxu0 %v4714
      %4853 = vmatprep.subr.bf16.mxu0 0
      %4854 = vmatpush1.bf16.msra.mxu0 %v4713
      %4855 = vmatprep.subr.bf16.mxu0 0
      %4856 = vmatpush1.bf16.msra.mxu0 %v4712
      %4857 = vmatprep.subr.bf16.mxu0 0
      %4858 = vmatpush1.bf16.msra.mxu0 %v4711
      %4859 = vmatprep.subr.bf16.mxu0 0
      %4860 = vmatpush1.bf16.msra.mxu0 %v4710
      %4861 = vmatprep.subr.bf16.mxu0 0
      %4862 = vmatpush1.bf16.msra.mxu0 %v4709
      %4863 = vmatprep.subr.bf16.mxu0 0
      %4864 = vmatpush1.bf16.msra.mxu0 %v4708
      %4865 = vmatprep.subr.bf16.mxu0 0
      %4866 = vmatpush1.bf16.msra.mxu0 %v4707
      %4867 = vmatprep.subr.bf16.mxu0 0
      %4868 = vmatpush2.bf16.msra.mxu0 %v4722
      %4869 = vmatprep.subr.bf16.mxu0 0
      %4870 = vmatpush2.bf16.msra.mxu0 %v4721
      %4871 = vmatprep.subr.bf16.mxu0 0
      %4872 = vmatpush2.bf16.msra.mxu0 %v4720
      %4873 = vmatprep.subr.bf16.mxu0 0
      %4874 = vmatpush2.bf16.msra.mxu0 %v4719
      %4875 = vmatprep.subr.bf16.mxu0 0
      %4876 = vmatpush2.bf16.msra.mxu0 %v4718
      %4877 = vmatprep.subr.bf16.mxu0 0
      %4878 = vmatpush2.bf16.msra.mxu0 %v4717
      %4879 = vmatprep.subr.bf16.mxu0 0
      %4880 = vmatpush2.bf16.msra.mxu0 %v4716
      %4881 = vmatprep.subr.bf16.mxu0 0
      %4882 = vmatpush2.bf16.msra.mxu0 %v4715
      %4883 = vmatprep.mubr.bf16.mxu0 %v4132
      %4884 = vmatmul.mubr.bf16.gmra.mxu0 %v4131
      %v4885 = vpop.f32.mrf.mxu0
      %v4886 = vadd.f32 0.0, %v4885
      %v4887 = vpop.f32.mrf.mxu0
      %v4888 = vpop.f32.mrf.mxu0
      %v4889 = vadd.f32 0.0, %v4888
      %v4890 = vpop.f32.mrf.mxu0
      %4891 = vmatprep.mubr.bf16.mxu0 %v4141
      %4892 = vmatmul.mubr.bf16.gmra.mxu0 %v4140
      %v4893 = vpop.f32.mrf.mxu0
      %v4894 = vadd.f32 0.0, %v4893
      %v4895 = vpop.f32.mrf.mxu0
      %v4896 = vpop.f32.mrf.mxu0
      %v4897 = vadd.f32 0.0, %v4896
      %v4898 = vpop.f32.mrf.mxu0
      %4899 = vmatprep.mubr.bf16.mxu0 %v4150
      %4900 = vmatmul.mubr.bf16.gmra.mxu0 %v4149
      %v4901 = vpop.f32.mrf.mxu0
      %v4902 = vadd.f32 0.0, %v4901
      %v4903 = vpop.f32.mrf.mxu0
      %v4904 = vpop.f32.mrf.mxu0
      %v4905 = vadd.f32 0.0, %v4904
      %v4906 = vpop.f32.mrf.mxu0
      %4907 = vmatprep.mubr.bf16.mxu0 %v4159
      %4908 = vmatmul.mubr.bf16.gmra.mxu0 %v4158
      %v4909 = vpop.f32.mrf.mxu0
      %v4910 = vadd.f32 0.0, %v4909
      %v4911 = vpop.f32.mrf.mxu0
      %v4912 = vpop.f32.mrf.mxu0
      %v4913 = vadd.f32 0.0, %v4912
      %v4914 = vpop.f32.mrf.mxu0
      %4915 = vmatprep.mubr.bf16.mxu0 %v4168
      %4916 = vmatmul.mubr.bf16.gmra.mxu0 %v4167
      %v4917 = vpop.f32.mrf.mxu0
      %v4918 = vadd.f32 0.0, %v4917
      %v4919 = vpop.f32.mrf.mxu0
      %v4920 = vpop.f32.mrf.mxu0
      %v4921 = vadd.f32 0.0, %v4920
      %v4922 = vpop.f32.mrf.mxu0
      %4923 = vmatprep.mubr.bf16.mxu0 %v4177
      %4924 = vmatmul.mubr.bf16.gmra.mxu0 %v4176
      %v4925 = vpop.f32.mrf.mxu0
      %v4926 = vadd.f32 0.0, %v4925
      %v4927 = vpop.f32.mrf.mxu0
      %v4928 = vpop.f32.mrf.mxu0
      %v4929 = vadd.f32 0.0, %v4928
      %v4930 = vpop.f32.mrf.mxu0
      %4931 = vmatprep.mubr.bf16.mxu0 %v4186
      %4932 = vmatmul.mubr.bf16.gmra.mxu0 %v4185
      %v4933 = vpop.f32.mrf.mxu0
      %v4934 = vadd.f32 0.0, %v4933
      %v4935 = vpop.f32.mrf.mxu0
      %v4936 = vpop.f32.mrf.mxu0
      %v4937 = vadd.f32 0.0, %v4936
      %v4938 = vpop.f32.mrf.mxu0
      %4939 = vmatprep.mubr.bf16.mxu0 %v4195
      %4940 = vmatmul.mubr.bf16.gmra.mxu0 %v4194
      %v4941 = vpop.f32.mrf.mxu0
      %v4942 = vadd.f32 0.0, %v4941
      %v4943 = vpop.f32.mrf.mxu0
      %v4944 = vpop.f32.mrf.mxu0
      %v4945 = vadd.f32 0.0, %v4944
      %v4946 = vpop.f32.mrf.mxu0
      %4947 = vmatprep.mubr.bf16.mxu0 %v4204
      %4948 = vmatmul.mubr.bf16.gmra.mxu0 %v4203
      %v4949 = vpop.f32.mrf.mxu0
      %v4950 = vadd.f32 0.0, %v4949
      %v4951 = vpop.f32.mrf.mxu0
      %v4952 = vpop.f32.mrf.mxu0
      %v4953 = vadd.f32 0.0, %v4952
      %v4954 = vpop.f32.mrf.mxu0
      %4955 = vmatprep.mubr.bf16.mxu0 %v4213
      %4956 = vmatmul.mubr.bf16.gmra.mxu0 %v4212
      %v4957 = vpop.f32.mrf.mxu0
      %v4958 = vadd.f32 0.0, %v4957
      %v4959 = vpop.f32.mrf.mxu0
      %v4960 = vpop.f32.mrf.mxu0
      %v4961 = vadd.f32 0.0, %v4960
      %v4962 = vpop.f32.mrf.mxu0
      %4963 = vmatprep.mubr.bf16.mxu0 %v4222
      %4964 = vmatmul.mubr.bf16.gmra.mxu0 %v4221
      %v4965 = vpop.f32.mrf.mxu0
      %v4966 = vadd.f32 0.0, %v4965
      %v4967 = vpop.f32.mrf.mxu0
      %v4968 = vpop.f32.mrf.mxu0
      %v4969 = vadd.f32 0.0, %v4968
      %v4970 = vpop.f32.mrf.mxu0
      %4971 = vmatprep.mubr.bf16.mxu0 %v4231
      %4972 = vmatmul.mubr.bf16.gmra.mxu0 %v4230
      %v4973 = vpop.f32.mrf.mxu0
      %v4974 = vadd.f32 0.0, %v4973
      %v4975 = vpop.f32.mrf.mxu0
      %v4976 = vpop.f32.mrf.mxu0
      %v4977 = vadd.f32 0.0, %v4976
      %v4978 = vpop.f32.mrf.mxu0
      %4979 = vmatprep.mubr.bf16.mxu0 %v4240
      %4980 = vmatmul.mubr.bf16.gmra.mxu0 %v4239
      %v4981 = vpop.f32.mrf.mxu0
      %v4982 = vadd.f32 0.0, %v4981
      %v4983 = vpop.f32.mrf.mxu0
      %v4984 = vpop.f32.mrf.mxu0
      %v4985 = vadd.f32 0.0, %v4984
      %v4986 = vpop.f32.mrf.mxu0
      %4987 = vmatprep.mubr.bf16.mxu0 %v4249
      %4988 = vmatmul.mubr.bf16.gmra.mxu0 %v4248
      %v4989 = vpop.f32.mrf.mxu0
      %v4990 = vadd.f32 0.0, %v4989
      %v4991 = vpop.f32.mrf.mxu0
      %v4992 = vpop.f32.mrf.mxu0
      %v4993 = vadd.f32 0.0, %v4992
      %v4994 = vpop.f32.mrf.mxu0
      %4995 = vmatprep.mubr.bf16.mxu0 %v4258
      %4996 = vmatmul.mubr.bf16.gmra.mxu0 %v4257
      %v4997 = vpop.f32.mrf.mxu0
      %v4998 = vadd.f32 0.0, %v4997
      %v4999 = vpop.f32.mrf.mxu0
      %v5000 = vpop.f32.mrf.mxu0
      %v5001 = vadd.f32 0.0, %v5000
      %v5002 = vpop.f32.mrf.mxu0
      %5003 = vmatprep.mubr.bf16.mxu0 %v4267
      %5004 = vmatmul.mubr.bf16.gmra.mxu0 %v4266
      %v5005 = vpop.f32.mrf.mxu0
      %v5006 = vadd.f32 0.0, %v5005
      %v5007 = vpop.f32.mrf.mxu0
      %v5008 = vpop.f32.mrf.mxu0
      %v5009 = vadd.f32 0.0, %v5008
      %v5010 = vpop.f32.mrf.mxu0
      %5011 = vdwg.mxu0
      %5012 = vmatprep.subr.bf16.mxu0 0
      %5013 = vmatpush1.bf16.msra.mxu0 %v4730
      %5014 = vmatprep.subr.bf16.mxu0 0
      %5015 = vmatpush1.bf16.msra.mxu0 %v4729
      %5016 = vmatprep.subr.bf16.mxu0 0
      %5017 = vmatpush1.bf16.msra.mxu0 %v4728
      %5018 = vmatprep.subr.bf16.mxu0 0
      %5019 = vmatpush1.bf16.msra.mxu0 %v4727
      %5020 = vmatprep.subr.bf16.mxu0 0
      %5021 = vmatpush1.bf16.msra.mxu0 %v4726
      %5022 = vmatprep.subr.bf16.mxu0 0
      %5023 = vmatpush1.bf16.msra.mxu0 %v4725
      %5024 = vmatprep.subr.bf16.mxu0 0
      %5025 = vmatpush1.bf16.msra.mxu0 %v4724
      %5026 = vmatprep.subr.bf16.mxu0 0
      %5027 = vmatpush1.bf16.msra.mxu0 %v4723
      %5028 = vmatprep.subr.bf16.mxu0 0
      %5029 = vmatpush2.bf16.msra.mxu0 %v4738
      %5030 = vmatprep.subr.bf16.mxu0 0
      %5031 = vmatpush2.bf16.msra.mxu0 %v4737
      %5032 = vmatprep.subr.bf16.mxu0 0
      %5033 = vmatpush2.bf16.msra.mxu0 %v4736
      %5034 = vmatprep.subr.bf16.mxu0 0
      %5035 = vmatpush2.bf16.msra.mxu0 %v4735
      %5036 = vmatprep.subr.bf16.mxu0 0
      %5037 = vmatpush2.bf16.msra.mxu0 %v4734
      %5038 = vmatprep.subr.bf16.mxu0 0
      %5039 = vmatpush2.bf16.msra.mxu0 %v4733
      %5040 = vmatprep.subr.bf16.mxu0 0
      %5041 = vmatpush2.bf16.msra.mxu0 %v4732
      %5042 = vmatprep.subr.bf16.mxu0 0
      %5043 = vmatpush2.bf16.msra.mxu0 %v4731
      %5044 = vmatprep.mubr.bf16.mxu0 %v4134
      %5045 = vmatmul.mubr.bf16.gmra.mxu0 %v4133
      %v5046 = vpop.f32.mrf.mxu0
      %v5047 = vadd.f32 %v4886, %v5046
      %v5048 = vpop.f32.mrf.mxu0
      %v5049 = vpop.f32.mrf.mxu0
      %v5050 = vadd.f32 %v4889, %v5049
      %v5051 = vpop.f32.mrf.mxu0
      %5052 = vmatprep.mubr.bf16.mxu0 %v4143
      %5053 = vmatmul.mubr.bf16.gmra.mxu0 %v4142
      %v5054 = vpop.f32.mrf.mxu0
      %v5055 = vadd.f32 %v4894, %v5054
      %v5056 = vpop.f32.mrf.mxu0
      %v5057 = vpop.f32.mrf.mxu0
      %v5058 = vadd.f32 %v4897, %v5057
      %v5059 = vpop.f32.mrf.mxu0
      %5060 = vmatprep.mubr.bf16.mxu0 %v4152
      %5061 = vmatmul.mubr.bf16.gmra.mxu0 %v4151
      %v5062 = vpop.f32.mrf.mxu0
      %v5063 = vadd.f32 %v4902, %v5062
      %v5064 = vpop.f32.mrf.mxu0
      %v5065 = vpop.f32.mrf.mxu0
      %v5066 = vadd.f32 %v4905, %v5065
      %v5067 = vpop.f32.mrf.mxu0
      %5068 = vmatprep.mubr.bf16.mxu0 %v4161
      %5069 = vmatmul.mubr.bf16.gmra.mxu0 %v4160
      %v5070 = vpop.f32.mrf.mxu0
      %v5071 = vadd.f32 %v4910, %v5070
      %v5072 = vpop.f32.mrf.mxu0
      %v5073 = vpop.f32.mrf.mxu0
      %v5074 = vadd.f32 %v4913, %v5073
      %v5075 = vpop.f32.mrf.mxu0
      %5076 = vmatprep.mubr.bf16.mxu0 %v4170
      %5077 = vmatmul.mubr.bf16.gmra.mxu0 %v4169
      %v5078 = vpop.f32.mrf.mxu0
      %v5079 = vadd.f32 %v4918, %v5078
      %v5080 = vpop.f32.mrf.mxu0
      %v5081 = vpop.f32.mrf.mxu0
      %v5082 = vadd.f32 %v4921, %v5081
      %v5083 = vpop.f32.mrf.mxu0
      %5084 = vmatprep.mubr.bf16.mxu0 %v4179
      %5085 = vmatmul.mubr.bf16.gmra.mxu0 %v4178
      %v5086 = vpop.f32.mrf.mxu0
      %v5087 = vadd.f32 %v4926, %v5086
      %v5088 = vpop.f32.mrf.mxu0
      %v5089 = vpop.f32.mrf.mxu0
      %v5090 = vadd.f32 %v4929, %v5089
      %v5091 = vpop.f32.mrf.mxu0
      %5092 = vmatprep.mubr.bf16.mxu0 %v4188
      %5093 = vmatmul.mubr.bf16.gmra.mxu0 %v4187
      %v5094 = vpop.f32.mrf.mxu0
      %v5095 = vadd.f32 %v4934, %v5094
      %v5096 = vpop.f32.mrf.mxu0
      %v5097 = vpop.f32.mrf.mxu0
      %v5098 = vadd.f32 %v4937, %v5097
      %v5099 = vpop.f32.mrf.mxu0
      %5100 = vmatprep.mubr.bf16.mxu0 %v4197
      %5101 = vmatmul.mubr.bf16.gmra.mxu0 %v4196
      %v5102 = vpop.f32.mrf.mxu0
      %v5103 = vadd.f32 %v4942, %v5102
      %v5104 = vpop.f32.mrf.mxu0
      %v5105 = vpop.f32.mrf.mxu0
      %v5106 = vadd.f32 %v4945, %v5105
      %v5107 = vpop.f32.mrf.mxu0
      %5108 = vmatprep.mubr.bf16.mxu0 %v4206
      %5109 = vmatmul.mubr.bf16.gmra.mxu0 %v4205
      %v5110 = vpop.f32.mrf.mxu0
      %v5111 = vadd.f32 %v4950, %v5110
      %v5112 = vpop.f32.mrf.mxu0
      %v5113 = vpop.f32.mrf.mxu0
      %v5114 = vadd.f32 %v4953, %v5113
      %v5115 = vpop.f32.mrf.mxu0
      %5116 = vmatprep.mubr.bf16.mxu0 %v4215
      %5117 = vmatmul.mubr.bf16.gmra.mxu0 %v4214
      %v5118 = vpop.f32.mrf.mxu0
      %v5119 = vadd.f32 %v4958, %v5118
      %v5120 = vpop.f32.mrf.mxu0
      %v5121 = vpop.f32.mrf.mxu0
      %v5122 = vadd.f32 %v4961, %v5121
      %v5123 = vpop.f32.mrf.mxu0
      %5124 = vmatprep.mubr.bf16.mxu0 %v4224
      %5125 = vmatmul.mubr.bf16.gmra.mxu0 %v4223
      %v5126 = vpop.f32.mrf.mxu0
      %v5127 = vadd.f32 %v4966, %v5126
      %v5128 = vpop.f32.mrf.mxu0
      %v5129 = vpop.f32.mrf.mxu0
      %v5130 = vadd.f32 %v4969, %v5129
      %v5131 = vpop.f32.mrf.mxu0
      %5132 = vmatprep.mubr.bf16.mxu0 %v4233
      %5133 = vmatmul.mubr.bf16.gmra.mxu0 %v4232
      %v5134 = vpop.f32.mrf.mxu0
      %v5135 = vadd.f32 %v4974, %v5134
      %v5136 = vpop.f32.mrf.mxu0
      %v5137 = vpop.f32.mrf.mxu0
      %v5138 = vadd.f32 %v4977, %v5137
      %v5139 = vpop.f32.mrf.mxu0
      %5140 = vmatprep.mubr.bf16.mxu0 %v4242
      %5141 = vmatmul.mubr.bf16.gmra.mxu0 %v4241
      %v5142 = vpop.f32.mrf.mxu0
      %v5143 = vadd.f32 %v4982, %v5142
      %v5144 = vpop.f32.mrf.mxu0
      %v5145 = vpop.f32.mrf.mxu0
      %v5146 = vadd.f32 %v4985, %v5145
      %v5147 = vpop.f32.mrf.mxu0
      %5148 = vmatprep.mubr.bf16.mxu0 %v4251
      %5149 = vmatmul.mubr.bf16.gmra.mxu0 %v4250
      %v5150 = vpop.f32.mrf.mxu0
      %v5151 = vadd.f32 %v4990, %v5150
      %v5152 = vpop.f32.mrf.mxu0
      %v5153 = vpop.f32.mrf.mxu0
      %v5154 = vadd.f32 %v4993, %v5153
      %v5155 = vpop.f32.mrf.mxu0
      %5156 = vmatprep.mubr.bf16.mxu0 %v4260
      %5157 = vmatmul.mubr.bf16.gmra.mxu0 %v4259
      %v5158 = vpop.f32.mrf.mxu0
      %v5159 = vadd.f32 %v4998, %v5158
      %v5160 = vpop.f32.mrf.mxu0
      %v5161 = vpop.f32.mrf.mxu0
      %v5162 = vadd.f32 %v5001, %v5161
      %v5163 = vpop.f32.mrf.mxu0
      %5164 = vmatprep.mubr.bf16.mxu0 %v4269
      %5165 = vmatmul.mubr.bf16.gmra.mxu0 %v4268
      %v5166 = vpop.f32.mrf.mxu0
      %v5167 = vadd.f32 %v5006, %v5166
      %v5168 = vpop.f32.mrf.mxu0
      %v5169 = vpop.f32.mrf.mxu0
      %v5170 = vadd.f32 %v5009, %v5169
      %v5171 = vpop.f32.mrf.mxu0
      %5172 = vdwg.mxu0
      %5173 = vmatprep.subr.bf16.mxu0 0
      %5174 = vmatpush1.bf16.msra.mxu0 %v4746
      %5175 = vmatprep.subr.bf16.mxu0 0
      %5176 = vmatpush1.bf16.msra.mxu0 %v4745
      %5177 = vmatprep.subr.bf16.mxu0 0
      %5178 = vmatpush1.bf16.msra.mxu0 %v4744
      %5179 = vmatprep.subr.bf16.mxu0 0
      %5180 = vmatpush1.bf16.msra.mxu0 %v4743
      %5181 = vmatprep.subr.bf16.mxu0 0
      %5182 = vmatpush1.bf16.msra.mxu0 %v4742
      %5183 = vmatprep.subr.bf16.mxu0 0
      %5184 = vmatpush1.bf16.msra.mxu0 %v4741
      %5185 = vmatprep.subr.bf16.mxu0 0
      %5186 = vmatpush1.bf16.msra.mxu0 %v4740
      %5187 = vmatprep.subr.bf16.mxu0 0
      %5188 = vmatpush1.bf16.msra.mxu0 %v4739
      %5189 = vmatprep.subr.bf16.mxu0 0
      %5190 = vmatpush2.bf16.msra.mxu0 %v4754
      %5191 = vmatprep.subr.bf16.mxu0 0
      %5192 = vmatpush2.bf16.msra.mxu0 %v4753
      %5193 = vmatprep.subr.bf16.mxu0 0
      %5194 = vmatpush2.bf16.msra.mxu0 %v4752
      %5195 = vmatprep.subr.bf16.mxu0 0
      %5196 = vmatpush2.bf16.msra.mxu0 %v4751
      %5197 = vmatprep.subr.bf16.mxu0 0
      %5198 = vmatpush2.bf16.msra.mxu0 %v4750
      %5199 = vmatprep.subr.bf16.mxu0 0
      %5200 = vmatpush2.bf16.msra.mxu0 %v4749
      %5201 = vmatprep.subr.bf16.mxu0 0
      %5202 = vmatpush2.bf16.msra.mxu0 %v4748
      %5203 = vmatprep.subr.bf16.mxu0 0
      %5204 = vmatpush2.bf16.msra.mxu0 %v4747
      %5205 = vmatprep.mubr.bf16.mxu0 %v4136
      %5206 = vmatmul.mubr.bf16.gmra.mxu0 %v4135
      %v5207 = vpop.f32.mrf.mxu0
      %v5208 = vadd.f32 %v5047, %v5207
      %v5209 = vpop.f32.mrf.mxu0
      %v5210 = vpop.f32.mrf.mxu0
      %v5211 = vadd.f32 %v5050, %v5210
      %v5212 = vpop.f32.mrf.mxu0
      %5213 = vmatprep.mubr.bf16.mxu0 %v4145
      %5214 = vmatmul.mubr.bf16.gmra.mxu0 %v4144
      %v5215 = vpop.f32.mrf.mxu0
      %v5216 = vadd.f32 %v5055, %v5215
      %v5217 = vpop.f32.mrf.mxu0
      %v5218 = vpop.f32.mrf.mxu0
      %v5219 = vadd.f32 %v5058, %v5218
      %v5220 = vpop.f32.mrf.mxu0
      %5221 = vmatprep.mubr.bf16.mxu0 %v4154
      %5222 = vmatmul.mubr.bf16.gmra.mxu0 %v4153
      %v5223 = vpop.f32.mrf.mxu0
      %v5224 = vadd.f32 %v5063, %v5223
      %v5225 = vpop.f32.mrf.mxu0
      %v5226 = vpop.f32.mrf.mxu0
      %v5227 = vadd.f32 %v5066, %v5226
      %v5228 = vpop.f32.mrf.mxu0
      %5229 = vmatprep.mubr.bf16.mxu0 %v4163
      %5230 = vmatmul.mubr.bf16.gmra.mxu0 %v4162
      %v5231 = vpop.f32.mrf.mxu0
      %v5232 = vadd.f32 %v5071, %v5231
      %v5233 = vpop.f32.mrf.mxu0
      %v5234 = vpop.f32.mrf.mxu0
      %v5235 = vadd.f32 %v5074, %v5234
      %v5236 = vpop.f32.mrf.mxu0
      %5237 = vmatprep.mubr.bf16.mxu0 %v4172
      %5238 = vmatmul.mubr.bf16.gmra.mxu0 %v4171
      %v5239 = vpop.f32.mrf.mxu0
      %v5240 = vadd.f32 %v5079, %v5239
      %v5241 = vpop.f32.mrf.mxu0
      %v5242 = vpop.f32.mrf.mxu0
      %v5243 = vadd.f32 %v5082, %v5242
      %v5244 = vpop.f32.mrf.mxu0
      %5245 = vmatprep.mubr.bf16.mxu0 %v4181
      %5246 = vmatmul.mubr.bf16.gmra.mxu0 %v4180
      %v5247 = vpop.f32.mrf.mxu0
      %v5248 = vadd.f32 %v5087, %v5247
      %v5249 = vpop.f32.mrf.mxu0
      %v5250 = vpop.f32.mrf.mxu0
      %v5251 = vadd.f32 %v5090, %v5250
      %v5252 = vpop.f32.mrf.mxu0
      %5253 = vmatprep.mubr.bf16.mxu0 %v4190
      %5254 = vmatmul.mubr.bf16.gmra.mxu0 %v4189
      %v5255 = vpop.f32.mrf.mxu0
      %v5256 = vadd.f32 %v5095, %v5255
      %v5257 = vpop.f32.mrf.mxu0
      %v5258 = vpop.f32.mrf.mxu0
      %v5259 = vadd.f32 %v5098, %v5258
      %v5260 = vpop.f32.mrf.mxu0
      %5261 = vmatprep.mubr.bf16.mxu0 %v4199
      %5262 = vmatmul.mubr.bf16.gmra.mxu0 %v4198
      %v5263 = vpop.f32.mrf.mxu0
      %v5264 = vadd.f32 %v5103, %v5263
      %v5265 = vpop.f32.mrf.mxu0
      %v5266 = vpop.f32.mrf.mxu0
      %v5267 = vadd.f32 %v5106, %v5266
      %v5268 = vpop.f32.mrf.mxu0
      %5269 = vmatprep.mubr.bf16.mxu0 %v4208
      %5270 = vmatmul.mubr.bf16.gmra.mxu0 %v4207
      %v5271 = vpop.f32.mrf.mxu0
      %v5272 = vadd.f32 %v5111, %v5271
      %v5273 = vpop.f32.mrf.mxu0
      %v5274 = vpop.f32.mrf.mxu0
      %v5275 = vadd.f32 %v5114, %v5274
      %v5276 = vpop.f32.mrf.mxu0
      %5277 = vmatprep.mubr.bf16.mxu0 %v4217
      %5278 = vmatmul.mubr.bf16.gmra.mxu0 %v4216
      %v5279 = vpop.f32.mrf.mxu0
      %v5280 = vadd.f32 %v5119, %v5279
      %v5281 = vpop.f32.mrf.mxu0
      %v5282 = vpop.f32.mrf.mxu0
      %v5283 = vadd.f32 %v5122, %v5282
      %v5284 = vpop.f32.mrf.mxu0
      %5285 = vmatprep.mubr.bf16.mxu0 %v4226
      %5286 = vmatmul.mubr.bf16.gmra.mxu0 %v4225
      %v5287 = vpop.f32.mrf.mxu0
      %v5288 = vadd.f32 %v5127, %v5287
      %v5289 = vpop.f32.mrf.mxu0
      %v5290 = vpop.f32.mrf.mxu0
      %v5291 = vadd.f32 %v5130, %v5290
      %v5292 = vpop.f32.mrf.mxu0
      %5293 = vmatprep.mubr.bf16.mxu0 %v4235
      %5294 = vmatmul.mubr.bf16.gmra.mxu0 %v4234
      %v5295 = vpop.f32.mrf.mxu0
      %v5296 = vadd.f32 %v5135, %v5295
      %v5297 = vpop.f32.mrf.mxu0
      %v5298 = vpop.f32.mrf.mxu0
      %v5299 = vadd.f32 %v5138, %v5298
      %v5300 = vpop.f32.mrf.mxu0
      %5301 = vmatprep.mubr.bf16.mxu0 %v4244
      %5302 = vmatmul.mubr.bf16.gmra.mxu0 %v4243
      %v5303 = vpop.f32.mrf.mxu0
      %v5304 = vadd.f32 %v5143, %v5303
      %v5305 = vpop.f32.mrf.mxu0
      %v5306 = vpop.f32.mrf.mxu0
      %v5307 = vadd.f32 %v5146, %v5306
      %v5308 = vpop.f32.mrf.mxu0
      %5309 = vmatprep.mubr.bf16.mxu0 %v4253
      %5310 = vmatmul.mubr.bf16.gmra.mxu0 %v4252
      %v5311 = vpop.f32.mrf.mxu0
      %v5312 = vadd.f32 %v5151, %v5311
      %v5313 = vpop.f32.mrf.mxu0
      %v5314 = vpop.f32.mrf.mxu0
      %v5315 = vadd.f32 %v5154, %v5314
      %v5316 = vpop.f32.mrf.mxu0
      %5317 = vmatprep.mubr.bf16.mxu0 %v4262
      %5318 = vmatmul.mubr.bf16.gmra.mxu0 %v4261
      %v5319 = vpop.f32.mrf.mxu0
      %v5320 = vadd.f32 %v5159, %v5319
      %v5321 = vpop.f32.mrf.mxu0
      %v5322 = vpop.f32.mrf.mxu0
      %v5323 = vadd.f32 %v5162, %v5322
      %v5324 = vpop.f32.mrf.mxu0
      %5325 = vmatprep.mubr.bf16.mxu0 %v4271
      %5326 = vmatmul.mubr.bf16.gmra.mxu0 %v4270
      %v5327 = vpop.f32.mrf.mxu0
      %v5328 = vadd.f32 %v5167, %v5327
      %v5329 = vpop.f32.mrf.mxu0
      %v5330 = vpop.f32.mrf.mxu0
      %v5331 = vadd.f32 %v5170, %v5330
      %v5332 = vpop.f32.mrf.mxu0
      %5333 = vdwg.mxu0
      %5334 = vmatprep.subr.bf16.mxu0 0
      %5335 = vmatpush1.bf16.msra.mxu0 %v4762
      %5336 = vmatprep.subr.bf16.mxu0 0
      %5337 = vmatpush1.bf16.msra.mxu0 %v4761
      %5338 = vmatprep.subr.bf16.mxu0 0
      %5339 = vmatpush1.bf16.msra.mxu0 %v4760
      %5340 = vmatprep.subr.bf16.mxu0 0
      %5341 = vmatpush1.bf16.msra.mxu0 %v4759
      %5342 = vmatprep.subr.bf16.mxu0 0
      %5343 = vmatpush1.bf16.msra.mxu0 %v4758
      %5344 = vmatprep.subr.bf16.mxu0 0
      %5345 = vmatpush1.bf16.msra.mxu0 %v4757
      %5346 = vmatprep.subr.bf16.mxu0 0
      %5347 = vmatpush1.bf16.msra.mxu0 %v4756
      %5348 = vmatprep.subr.bf16.mxu0 0
      %5349 = vmatpush1.bf16.msra.mxu0 %v4755
      %5350 = vmatprep.subr.bf16.mxu0 0
      %5351 = vmatpush2.bf16.msra.mxu0 %v4770
      %5352 = vmatprep.subr.bf16.mxu0 0
      %5353 = vmatpush2.bf16.msra.mxu0 %v4769
      %5354 = vmatprep.subr.bf16.mxu0 0
      %5355 = vmatpush2.bf16.msra.mxu0 %v4768
      %5356 = vmatprep.subr.bf16.mxu0 0
      %5357 = vmatpush2.bf16.msra.mxu0 %v4767
      %5358 = vmatprep.subr.bf16.mxu0 0
      %5359 = vmatpush2.bf16.msra.mxu0 %v4766
      %5360 = vmatprep.subr.bf16.mxu0 0
      %5361 = vmatpush2.bf16.msra.mxu0 %v4765
      %5362 = vmatprep.subr.bf16.mxu0 0
      %5363 = vmatpush2.bf16.msra.mxu0 %v4764
      %5364 = vmatprep.subr.bf16.mxu0 0
      %5365 = vmatpush2.bf16.msra.mxu0 %v4763
      %5366 = vmatprep.mubr.bf16.mxu0 %v4138
      %5367 = vmatmul.mubr.bf16.gmra.mxu0 %v4137
      %v5368 = vpop.f32.mrf.mxu0
      %v5369 = vadd.f32 %v5208, %v5368
      %v5370 = vpop.f32.mrf.mxu0
      %v5371 = vpop.f32.mrf.mxu0
      %v5372 = vadd.f32 %v5211, %v5371
      %v5373 = vpop.f32.mrf.mxu0
      %5374 = vmatprep.mubr.bf16.mxu0 %v4147
      %5375 = vmatmul.mubr.bf16.gmra.mxu0 %v4146
      %v5376 = vpop.f32.mrf.mxu0
      %v5377 = vadd.f32 %v5216, %v5376
      %v5378 = vpop.f32.mrf.mxu0
      %v5379 = vpop.f32.mrf.mxu0
      %v5380 = vadd.f32 %v5219, %v5379
      %v5381 = vpop.f32.mrf.mxu0
      %5382 = vmatprep.mubr.bf16.mxu0 %v4156
      %5383 = vmatmul.mubr.bf16.gmra.mxu0 %v4155
      %v5384 = vpop.f32.mrf.mxu0
      %v5385 = vadd.f32 %v5224, %v5384
      %v5386 = vpop.f32.mrf.mxu0
      %v5387 = vpop.f32.mrf.mxu0
      %v5388 = vadd.f32 %v5227, %v5387
      %v5389 = vpop.f32.mrf.mxu0
      %5390 = vmatprep.mubr.bf16.mxu0 %v4165
      %5391 = vmatmul.mubr.bf16.gmra.mxu0 %v4164
      %v5392 = vpop.f32.mrf.mxu0
      %v5393 = vadd.f32 %v5232, %v5392
      %v5394 = vpop.f32.mrf.mxu0
      %v5395 = vpop.f32.mrf.mxu0
      %v5396 = vadd.f32 %v5235, %v5395
      %v5397 = vpop.f32.mrf.mxu0
      %5398 = vmatprep.mubr.bf16.mxu0 %v4174
      %5399 = vmatmul.mubr.bf16.gmra.mxu0 %v4173
      %v5400 = vpop.f32.mrf.mxu0
      %v5401 = vadd.f32 %v5240, %v5400
      %v5402 = vpop.f32.mrf.mxu0
      %v5403 = vpop.f32.mrf.mxu0
      %v5404 = vadd.f32 %v5243, %v5403
      %v5405 = vpop.f32.mrf.mxu0
      %5406 = vmatprep.mubr.bf16.mxu0 %v4183
      %5407 = vmatmul.mubr.bf16.gmra.mxu0 %v4182
      %v5408 = vpop.f32.mrf.mxu0
      %v5409 = vadd.f32 %v5248, %v5408
      %v5410 = vpop.f32.mrf.mxu0
      %v5411 = vpop.f32.mrf.mxu0
      %v5412 = vadd.f32 %v5251, %v5411
      %v5413 = vpop.f32.mrf.mxu0
      %5414 = vmatprep.mubr.bf16.mxu0 %v4192
      %5415 = vmatmul.mubr.bf16.gmra.mxu0 %v4191
      %v5416 = vpop.f32.mrf.mxu0
      %v5417 = vadd.f32 %v5256, %v5416
      %v5418 = vpop.f32.mrf.mxu0
      %v5419 = vpop.f32.mrf.mxu0
      %v5420 = vadd.f32 %v5259, %v5419
      %v5421 = vpop.f32.mrf.mxu0
      %5422 = vmatprep.mubr.bf16.mxu0 %v4201
      %5423 = vmatmul.mubr.bf16.gmra.mxu0 %v4200
      %v5424 = vpop.f32.mrf.mxu0
      %v5425 = vadd.f32 %v5264, %v5424
      %v5426 = vpop.f32.mrf.mxu0
      %v5427 = vpop.f32.mrf.mxu0
      %v5428 = vadd.f32 %v5267, %v5427
      %v5429 = vpop.f32.mrf.mxu0
      %5430 = vmatprep.mubr.bf16.mxu0 %v4210
      %5431 = vmatmul.mubr.bf16.gmra.mxu0 %v4209
      %v5432 = vpop.f32.mrf.mxu0
      %v5433 = vadd.f32 %v5272, %v5432
      %v5434 = vpop.f32.mrf.mxu0
      %v5435 = vpop.f32.mrf.mxu0
      %v5436 = vadd.f32 %v5275, %v5435
      %v5437 = vpop.f32.mrf.mxu0
      %5438 = vmatprep.mubr.bf16.mxu0 %v4219
      %5439 = vmatmul.mubr.bf16.gmra.mxu0 %v4218
      %v5440 = vpop.f32.mrf.mxu0
      %v5441 = vadd.f32 %v5280, %v5440
      %v5442 = vpop.f32.mrf.mxu0
      %v5443 = vpop.f32.mrf.mxu0
      %v5444 = vadd.f32 %v5283, %v5443
      %v5445 = vpop.f32.mrf.mxu0
      %5446 = vmatprep.mubr.bf16.mxu0 %v4228
      %5447 = vmatmul.mubr.bf16.gmra.mxu0 %v4227
      %v5448 = vpop.f32.mrf.mxu0
      %v5449 = vadd.f32 %v5288, %v5448
      %v5450 = vpop.f32.mrf.mxu0
      %v5451 = vpop.f32.mrf.mxu0
      %v5452 = vadd.f32 %v5291, %v5451
      %v5453 = vpop.f32.mrf.mxu0
      %5454 = vmatprep.mubr.bf16.mxu0 %v4237
      %5455 = vmatmul.mubr.bf16.gmra.mxu0 %v4236
      %v5456 = vpop.f32.mrf.mxu0
      %v5457 = vadd.f32 %v5296, %v5456
      %v5458 = vpop.f32.mrf.mxu0
      %v5459 = vpop.f32.mrf.mxu0
      %v5460 = vadd.f32 %v5299, %v5459
      %v5461 = vpop.f32.mrf.mxu0
      %5462 = vmatprep.mubr.bf16.mxu0 %v4246
      %5463 = vmatmul.mubr.bf16.gmra.mxu0 %v4245
      %v5464 = vpop.f32.mrf.mxu0
      %v5465 = vadd.f32 %v5304, %v5464
      %v5466 = vpop.f32.mrf.mxu0
      %v5467 = vpop.f32.mrf.mxu0
      %v5468 = vadd.f32 %v5307, %v5467
      %v5469 = vpop.f32.mrf.mxu0
      %5470 = vmatprep.mubr.bf16.mxu0 %v4255
      %5471 = vmatmul.mubr.bf16.gmra.mxu0 %v4254
      %v5472 = vpop.f32.mrf.mxu0
      %v5473 = vadd.f32 %v5312, %v5472
      %v5474 = vpop.f32.mrf.mxu0
      %v5475 = vpop.f32.mrf.mxu0
      %v5476 = vadd.f32 %v5315, %v5475
      %v5477 = vpop.f32.mrf.mxu0
      %5478 = vmatprep.mubr.bf16.mxu0 %v4264
      %5479 = vmatmul.mubr.bf16.gmra.mxu0 %v4263
      %v5480 = vpop.f32.mrf.mxu0
      %v5481 = vadd.f32 %v5320, %v5480
      %v5482 = vpop.f32.mrf.mxu0
      %v5483 = vpop.f32.mrf.mxu0
      %v5484 = vadd.f32 %v5323, %v5483
      %v5485 = vpop.f32.mrf.mxu0
      %5486 = vmatprep.mubr.bf16.mxu0 %v4273
      %5487 = vmatmul.mubr.bf16.gmra.mxu0 %v4272
      %v5488 = vpop.f32.mrf.mxu0
      %v5489 = vadd.f32 %v5328, %v5488
      %v5490 = vpop.f32.mrf.mxu0
      %v5491 = vpop.f32.mrf.mxu0
      %v5492 = vadd.f32 %v5331, %v5491
      %v5493 = vpop.f32.mrf.mxu0
      %5494 = vdwg.mxu0
      %5495 = vmatprep.subr.bf16.mxu0 0
      %5496 = vmatpush1.bf16.msra.mxu0 %v4778
      %5497 = vmatprep.subr.bf16.mxu0 0
      %5498 = vmatpush1.bf16.msra.mxu0 %v4777
      %5499 = vmatprep.subr.bf16.mxu0 0
      %5500 = vmatpush1.bf16.msra.mxu0 %v4776
      %5501 = vmatprep.subr.bf16.mxu0 0
      %5502 = vmatpush1.bf16.msra.mxu0 %v4775
      %5503 = vmatprep.subr.bf16.mxu0 0
      %5504 = vmatpush1.bf16.msra.mxu0 %v4774
      %5505 = vmatprep.subr.bf16.mxu0 0
      %5506 = vmatpush1.bf16.msra.mxu0 %v4773
      %5507 = vmatprep.subr.bf16.mxu0 0
      %5508 = vmatpush1.bf16.msra.mxu0 %v4772
      %5509 = vmatprep.subr.bf16.mxu0 0
      %5510 = vmatpush1.bf16.msra.mxu0 %v4771
      %5511 = vmatprep.subr.bf16.mxu0 0
      %5512 = vmatpush2.bf16.msra.mxu0 0
      %5513 = vmatprep.subr.bf16.mxu0 0
      %5514 = vmatpush2.bf16.msra.mxu0 0
      %5515 = vmatprep.subr.bf16.mxu0 0
      %5516 = vmatpush2.bf16.msra.mxu0 0
      %5517 = vmatprep.subr.bf16.mxu0 0
      %5518 = vmatpush2.bf16.msra.mxu0 0
      %5519 = vmatprep.subr.bf16.mxu0 0
      %5520 = vmatpush2.bf16.msra.mxu0 0
      %5521 = vmatprep.subr.bf16.mxu0 0
      %5522 = vmatpush2.bf16.msra.mxu0 0
      %5523 = vmatprep.subr.bf16.mxu0 0
      %5524 = vmatpush2.bf16.msra.mxu0 0
      %5525 = vmatprep.subr.bf16.mxu0 0
      %5526 = vmatpush2.bf16.msra.mxu0 0
      %5527 = vmatprep.mubr.bf16.mxu0 0
      %5528 = vmatmul.mubr.bf16.gmra.mxu0 %v4139
      %v5529 = vpop.f32.mrf.mxu0
      %v5530 = vadd.f32 %v5369, %v5529
      %v5531 = vpop.f32.mrf.mxu0
      %v5532 = vpop.f32.mrf.mxu0
      %v5533 = vadd.f32 %v5372, %v5532
      %v5534 = vpop.f32.mrf.mxu0
      %5535 = vmatprep.mubr.bf16.mxu0 0
      %5536 = vmatmul.mubr.bf16.gmra.mxu0 %v4148
      %v5537 = vpop.f32.mrf.mxu0
      %v5538 = vadd.f32 %v5377, %v5537
      %v5539 = vpop.f32.mrf.mxu0
      %v5540 = vpop.f32.mrf.mxu0
      %v5541 = vadd.f32 %v5380, %v5540
      %v5542 = vpop.f32.mrf.mxu0
      %5543 = vmatprep.mubr.bf16.mxu0 0
      %5544 = vmatmul.mubr.bf16.gmra.mxu0 %v4157
      %v5545 = vpop.f32.mrf.mxu0
      %v5546 = vadd.f32 %v5385, %v5545
      %v5547 = vpop.f32.mrf.mxu0
      %v5548 = vpop.f32.mrf.mxu0
      %v5549 = vadd.f32 %v5388, %v5548
      %v5550 = vpop.f32.mrf.mxu0
      %5551 = vmatprep.mubr.bf16.mxu0 0
      %5552 = vmatmul.mubr.bf16.gmra.mxu0 %v4166
      %v5553 = vpop.f32.mrf.mxu0
      %v5554 = vadd.f32 %v5393, %v5553
      %v5555 = vpop.f32.mrf.mxu0
      %v5556 = vpop.f32.mrf.mxu0
      %v5557 = vadd.f32 %v5396, %v5556
      %v5558 = vpop.f32.mrf.mxu0
      %5559 = vmatprep.mubr.bf16.mxu0 0
      %5560 = vmatmul.mubr.bf16.gmra.mxu0 %v4175
      %v5561 = vpop.f32.mrf.mxu0
      %v5562 = vadd.f32 %v5401, %v5561
      %v5563 = vpop.f32.mrf.mxu0
      %v5564 = vpop.f32.mrf.mxu0
      %v5565 = vadd.f32 %v5404, %v5564
      %v5566 = vpop.f32.mrf.mxu0
      %5567 = vmatprep.mubr.bf16.mxu0 0
      %5568 = vmatmul.mubr.bf16.gmra.mxu0 %v4184
      %v5569 = vpop.f32.mrf.mxu0
      %v5570 = vadd.f32 %v5409, %v5569
      %v5571 = vpop.f32.mrf.mxu0
      %v5572 = vpop.f32.mrf.mxu0
      %v5573 = vadd.f32 %v5412, %v5572
      %v5574 = vpop.f32.mrf.mxu0
      %5575 = vmatprep.mubr.bf16.mxu0 0
      %5576 = vmatmul.mubr.bf16.gmra.mxu0 %v4193
      %v5577 = vpop.f32.mrf.mxu0
      %v5578 = vadd.f32 %v5417, %v5577
      %v5579 = vpop.f32.mrf.mxu0
      %v5580 = vpop.f32.mrf.mxu0
      %v5581 = vadd.f32 %v5420, %v5580
      %v5582 = vpop.f32.mrf.mxu0
      %5583 = vmatprep.mubr.bf16.mxu0 0
      %5584 = vmatmul.mubr.bf16.gmra.mxu0 %v4202
      %v5585 = vpop.f32.mrf.mxu0
      %v5586 = vadd.f32 %v5425, %v5585
      %v5587 = vpop.f32.mrf.mxu0
      %v5588 = vpop.f32.mrf.mxu0
      %v5589 = vadd.f32 %v5428, %v5588
      %v5590 = vpop.f32.mrf.mxu0
      %5591 = vmatprep.mubr.bf16.mxu0 0
      %5592 = vmatmul.mubr.bf16.gmra.mxu0 %v4211
      %v5593 = vpop.f32.mrf.mxu0
      %v5594 = vadd.f32 %v5433, %v5593
      %v5595 = vpop.f32.mrf.mxu0
      %v5596 = vpop.f32.mrf.mxu0
      %v5597 = vadd.f32 %v5436, %v5596
      %v5598 = vpop.f32.mrf.mxu0
      %5599 = vmatprep.mubr.bf16.mxu0 0
      %5600 = vmatmul.mubr.bf16.gmra.mxu0 %v4220
      %v5601 = vpop.f32.mrf.mxu0
      %v5602 = vadd.f32 %v5441, %v5601
      %v5603 = vpop.f32.mrf.mxu0
      %v5604 = vpop.f32.mrf.mxu0
      %v5605 = vadd.f32 %v5444, %v5604
      %v5606 = vpop.f32.mrf.mxu0
      %5607 = vmatprep.mubr.bf16.mxu0 0
      %5608 = vmatmul.mubr.bf16.gmra.mxu0 %v4229
      %v5609 = vpop.f32.mrf.mxu0
      %v5610 = vadd.f32 %v5449, %v5609
      %v5611 = vpop.f32.mrf.mxu0
      %v5612 = vpop.f32.mrf.mxu0
      %v5613 = vadd.f32 %v5452, %v5612
      %v5614 = vpop.f32.mrf.mxu0
      %5615 = vmatprep.mubr.bf16.mxu0 0
      %5616 = vmatmul.mubr.bf16.gmra.mxu0 %v4238
      %v5617 = vpop.f32.mrf.mxu0
      %v5618 = vadd.f32 %v5457, %v5617
      %v5619 = vpop.f32.mrf.mxu0
      %v5620 = vpop.f32.mrf.mxu0
      %v5621 = vadd.f32 %v5460, %v5620
      %v5622 = vpop.f32.mrf.mxu0
      %5623 = vmatprep.mubr.bf16.mxu0 0
      %5624 = vmatmul.mubr.bf16.gmra.mxu0 %v4247
      %v5625 = vpop.f32.mrf.mxu0
      %v5626 = vadd.f32 %v5465, %v5625
      %v5627 = vpop.f32.mrf.mxu0
      %v5628 = vpop.f32.mrf.mxu0
      %v5629 = vadd.f32 %v5468, %v5628
      %v5630 = vpop.f32.mrf.mxu0
      %5631 = vmatprep.mubr.bf16.mxu0 0
      %5632 = vmatmul.mubr.bf16.gmra.mxu0 %v4256
      %v5633 = vpop.f32.mrf.mxu0
      %v5634 = vadd.f32 %v5473, %v5633
      %v5635 = vpop.f32.mrf.mxu0
      %v5636 = vpop.f32.mrf.mxu0
      %v5637 = vadd.f32 %v5476, %v5636
      %v5638 = vpop.f32.mrf.mxu0
      %5639 = vmatprep.mubr.bf16.mxu0 0
      %5640 = vmatmul.mubr.bf16.gmra.mxu0 %v4265
      %v5641 = vpop.f32.mrf.mxu0
      %v5642 = vadd.f32 %v5481, %v5641
      %v5643 = vpop.f32.mrf.mxu0
      %v5644 = vpop.f32.mrf.mxu0
      %v5645 = vadd.f32 %v5484, %v5644
      %v5646 = vpop.f32.mrf.mxu0
      %5647 = vmatprep.mubr.bf16.mxu0 0
      %5648 = vmatmul.mubr.bf16.gmra.mxu0 %v4274
      %v5649 = vpop.f32.mrf.mxu0
      %v5650 = vadd.f32 %v5489, %v5649
      %v5651 = vpop.f32.mrf.mxu0
      %v5652 = vpop.f32.mrf.mxu0
      %v5653 = vadd.f32 %v5492, %v5652
      %v5654 = vpop.f32.mrf.mxu0
      %5655 = vdwg.mxu0
      %v5656 = vpack.c.bf16 %v5533, %v5530
      %v5657 = vpack.c.bf16 %v5541, %v5538
      %v5658 = vpack.c.bf16 %v5549, %v5546
      %v5659 = vpack.c.bf16 %v5557, %v5554
      %v5660 = vpack.c.bf16 %v5565, %v5562
      %v5661 = vpack.c.bf16 %v5573, %v5570
      %v5662 = vpack.c.bf16 %v5581, %v5578
      %v5663 = vpack.c.bf16 %v5589, %v5586
      %v5664 = vpack.c.bf16 %v5597, %v5594
      %v5665 = vpack.c.bf16 %v5605, %v5602
      %v5666 = vpack.c.bf16 %v5613, %v5610
      %v5667 = vpack.c.bf16 %v5621, %v5618
      %v5668 = vpack.c.bf16 %v5629, %v5626
      %v5669 = vpack.c.bf16 %v5637, %v5634
      %v5670 = vpack.c.bf16 %v5645, %v5642
      %v5671 = vpack.c.bf16 %v5653, %v5650
      %v5688 = vunpack.c.l.b16 %v5656
      %v5689 = vunpack.c.h.b16 %v5656
      %v5690 = vunpack.c.l.b16 %v5657
      %v5691 = vunpack.c.h.b16 %v5657
      %v5692 = vunpack.c.l.b16 %v5658
      %v5693 = vunpack.c.h.b16 %v5658
      %v5694 = vunpack.c.l.b16 %v5659
      %v5695 = vunpack.c.h.b16 %v5659
      %v5696 = vunpack.c.l.b16 %v5660
      %v5697 = vunpack.c.h.b16 %v5660
      %v5698 = vunpack.c.l.b16 %v5661
      %v5699 = vunpack.c.h.b16 %v5661
      %v5700 = vunpack.c.l.b16 %v5662
      %v5701 = vunpack.c.h.b16 %v5662
      %v5702 = vunpack.c.l.b16 %v5663
      %v5703 = vunpack.c.h.b16 %v5663
      %v5704 = vunpack.c.l.b16 %v5664
      %v5705 = vunpack.c.h.b16 %v5664
      %v5706 = vunpack.c.l.b16 %v5665
      %v5707 = vunpack.c.h.b16 %v5665
      %v5708 = vunpack.c.l.b16 %v5666
      %v5709 = vunpack.c.h.b16 %v5666
      %v5710 = vunpack.c.l.b16 %v5667
      %v5711 = vunpack.c.h.b16 %v5667
      %v5712 = vunpack.c.l.b16 %v5668
      %v5713 = vunpack.c.h.b16 %v5668
      %v5714 = vunpack.c.l.b16 %v5669
      %v5715 = vunpack.c.h.b16 %v5669
      %v5716 = vunpack.c.l.b16 %v5670
      %v5717 = vunpack.c.h.b16 %v5670
      %v5718 = vunpack.c.l.b16 %v5671
      %v5719 = vunpack.c.h.b16 %v5671
      %v5720 = vpack.c.b16 %v5688, %v5688
      %v5721 = vpack.c.b16 %v5689, %v5689
      %v5722 = vpack.c.b16 %v5690, %v5690
      %v5723 = vpack.c.b16 %v5691, %v5691
      %v5724 = vpack.c.b16 %v5692, %v5692
      %v5725 = vpack.c.b16 %v5693, %v5693
      %v5726 = vpack.c.b16 %v5694, %v5694
      %v5727 = vpack.c.b16 %v5695, %v5695
      %v5728 = vpack.c.b16 %v5696, %v5696
      %v5729 = vpack.c.b16 %v5697, %v5697
      %v5730 = vpack.c.b16 %v5698, %v5698
      %v5731 = vpack.c.b16 %v5699, %v5699
      %v5732 = vpack.c.b16 %v5700, %v5700
      %v5733 = vpack.c.b16 %v5701, %v5701
      %v5734 = vpack.c.b16 %v5702, %v5702
      %v5735 = vpack.c.b16 %v5703, %v5703
      %v5736 = vpack.c.b16 %v5704, %v5704
      %v5737 = vpack.c.b16 %v5705, %v5705
      %v5738 = vpack.c.b16 %v5706, %v5706
      %v5739 = vpack.c.b16 %v5707, %v5707
      %v5740 = vpack.c.b16 %v5708, %v5708
      %v5741 = vpack.c.b16 %v5709, %v5709
      %v5742 = vpack.c.b16 %v5710, %v5710
      %v5743 = vpack.c.b16 %v5711, %v5711
      %v5744 = vpack.c.b16 %v5712, %v5712
      %v5745 = vpack.c.b16 %v5713, %v5713
      %v5746 = vpack.c.b16 %v5714, %v5714
      %v5747 = vpack.c.b16 %v5715, %v5715
      %v5748 = vpack.c.b16 %v5716, %v5716
      %v5749 = vpack.c.b16 %v5717, %v5717
      %v5750 = vpack.c.b16 %v5718, %v5718
      %v5751 = vpack.c.b16 %v5719, %v5719
      %5784 = vst [vmem:[%s260] sm:$0xf] %v5720
      %5785 = vst [vmem:[%s260 + $0x4] sm:$0xf] %v5721
      %5786 = vst [vmem:[%s260 + $0x8] sm:$0xf] %v5722
      %5787 = vst [vmem:[%s260 + $0xc] sm:$0xf] %v5723
      %5788 = vst [vmem:[%s260 + $0x10] sm:$0xf] %v5724
      %5789 = vst [vmem:[%s260 + $0x14] sm:$0xf] %v5725
      %5790 = vst [vmem:[%s260 + $0x18] sm:$0xf] %v5726
      %5791 = vst [vmem:[%s260 + $0x1c] sm:$0xf] %v5727
      %5792 = vst [vmem:[%s260 + $0x20] sm:$0xf] %v5728
      %5793 = vst [vmem:[%s260 + $0x24] sm:$0xf] %v5729
      %5794 = vst [vmem:[%s260 + $0x28] sm:$0xf] %v5730
      %5795 = vst [vmem:[%s260 + $0x2c] sm:$0xf] %v5731
      %5796 = vst [vmem:[%s260 + $0x30] sm:$0xf] %v5732
      %5797 = vst [vmem:[%s260 + $0x34] sm:$0xf] %v5733
      %5798 = vst [vmem:[%s260 + $0x38] sm:$0xf] %v5734
      %5799 = vst [vmem:[%s260 + $0x3c] sm:$0xf] %v5735
      %5800 = vst [vmem:[%s260 + $0x40] sm:$0xf] %v5736
      %5801 = vst [vmem:[%s260 + $0x44] sm:$0xf] %v5737
      %5802 = vst [vmem:[%s260 + $0x48] sm:$0xf] %v5738
      %5803 = vst [vmem:[%s260 + $0x4c] sm:$0xf] %v5739
      %5804 = vst [vmem:[%s260 + $0x50] sm:$0xf] %v5740
      %5805 = vst [vmem:[%s260 + $0x54] sm:$0xf] %v5741
      %5806 = vst [vmem:[%s260 + $0x58] sm:$0xf] %v5742
      %5807 = vst [vmem:[%s260 + $0x5c] sm:$0xf] %v5743
      %5808 = vst [vmem:[%s260 + $0x60] sm:$0xf] %v5744
      %5809 = vst [vmem:[%s260 + $0x64] sm:$0xf] %v5745
      %5810 = vst [vmem:[%s260 + $0x68] sm:$0xf] %v5746
      %5811 = vst [vmem:[%s260 + $0x6c] sm:$0xf] %v5747
      %5812 = vst [vmem:[%s260 + $0x70] sm:$0xf] %v5748
      %5813 = vst [vmem:[%s260 + $0x74] sm:$0xf] %v5749
      %5814 = vst [vmem:[%s260 + $0x78] sm:$0xf] %v5750
      %5815 = vst [vmem:[%s260 + $0x7c] sm:$0xf] %v5751
      %v5816 = vadd.f32 %v5530, %v5533
      %v5817 = vadd.f32 %v5816, %v5538
      %v5818 = vadd.f32 %v5817, %v5541
      %v5819 = vadd.f32 %v5818, %v5546
      %v5820 = vadd.f32 %v5819, %v5549
      %v5821 = vadd.f32 %v5820, %v5554
      %v5822 = vadd.f32 %v5821, %v5557
      %v5823 = vadd.f32 %v5822, %v5562
      %v5824 = vadd.f32 %v5823, %v5565
      %v5825 = vadd.f32 %v5824, %v5570
      %v5826 = vadd.f32 %v5825, %v5573
      %v5827 = vadd.f32 %v5826, %v5578
      %v5828 = vadd.f32 %v5827, %v5581
      %v5829 = vadd.f32 %v5828, %v5586
      %v5830 = vadd.f32 %v5829, %v5589
      %v5831 = vadd.f32 %v5830, %v5594
      %v5832 = vadd.f32 %v5831, %v5597
      %v5833 = vadd.f32 %v5832, %v5602
      %v5834 = vadd.f32 %v5833, %v5605
      %v5835 = vadd.f32 %v5834, %v5610
      %v5836 = vadd.f32 %v5835, %v5613
      %v5837 = vadd.f32 %v5836, %v5618
      %v5838 = vadd.f32 %v5837, %v5621
      %v5839 = vadd.f32 %v5838, %v5626
      %v5840 = vadd.f32 %v5839, %v5629
      %v5841 = vadd.f32 %v5840, %v5634
      %v5842 = vadd.f32 %v5841, %v5637
      %v5843 = vadd.f32 %v5842, %v5642
      %v5844 = vadd.f32 %v5843, %v5645
      %v5845 = vadd.f32 %v5844, %v5650
      %v5846 = vadd.f32 %v5845, %v5653
      %v5847 = vrot.slane %v5846, 4
      %v5848 = vadd.f32 %v5846, %v5847
      %v5849 = vrot.slane %v5848, 2
      %v5850 = vadd.f32 %v5848, %v5849
      %v5851 = vrot.slane %v5850, 1
      %v5852 = vadd.f32 %v5850, %v5851
      %v5853 = vmul.f32 %v5852, 0.00390625
      %v5854 = vsub.f32 %v5530, %v5853
      %v5855 = vsub.f32 %v5533, %v5853
      %v5856 = vsub.f32 %v5538, %v5853
      %v5857 = vsub.f32 %v5541, %v5853
      %v5858 = vsub.f32 %v5546, %v5853
      %v5859 = vsub.f32 %v5549, %v5853
      %v5860 = vsub.f32 %v5554, %v5853
      %v5861 = vsub.f32 %v5557, %v5853
      %v5862 = vsub.f32 %v5562, %v5853
      %v5863 = vsub.f32 %v5565, %v5853
      %v5864 = vsub.f32 %v5570, %v5853
      %v5865 = vsub.f32 %v5573, %v5853
      %v5866 = vsub.f32 %v5578, %v5853
      %v5867 = vsub.f32 %v5581, %v5853
      %v5868 = vsub.f32 %v5586, %v5853
      %v5869 = vsub.f32 %v5589, %v5853
      %v5870 = vsub.f32 %v5594, %v5853
      %v5871 = vsub.f32 %v5597, %v5853
      %v5872 = vsub.f32 %v5602, %v5853
      %v5873 = vsub.f32 %v5605, %v5853
      %v5874 = vsub.f32 %v5610, %v5853
      %v5875 = vsub.f32 %v5613, %v5853
      %v5876 = vsub.f32 %v5618, %v5853
      %v5877 = vsub.f32 %v5621, %v5853
      %v5878 = vsub.f32 %v5626, %v5853
      %v5879 = vsub.f32 %v5629, %v5853
      %v5880 = vsub.f32 %v5634, %v5853
      %v5881 = vsub.f32 %v5637, %v5853
      %v5882 = vsub.f32 %v5642, %v5853
      %v5883 = vsub.f32 %v5645, %v5853
      %v5884 = vsub.f32 %v5650, %v5853
      %v5885 = vsub.f32 %v5653, %v5853
      %v5886 = vmul.f32 %v5854, %v5854
      %v5887 = vmul.f32 %v5855, %v5855
      %v5888 = vmul.f32 %v5856, %v5856
      %v5889 = vmul.f32 %v5857, %v5857
      %v5890 = vmul.f32 %v5858, %v5858
      %v5891 = vmul.f32 %v5859, %v5859
      %v5892 = vmul.f32 %v5860, %v5860
      %v5893 = vmul.f32 %v5861, %v5861
      %v5894 = vmul.f32 %v5862, %v5862
      %v5895 = vmul.f32 %v5863, %v5863
      %v5896 = vmul.f32 %v5864, %v5864
      %v5897 = vmul.f32 %v5865, %v5865
      %v5898 = vmul.f32 %v5866, %v5866
      %v5899 = vmul.f32 %v5867, %v5867
      %v5900 = vmul.f32 %v5868, %v5868
      %v5901 = vmul.f32 %v5869, %v5869
      %v5902 = vmul.f32 %v5870, %v5870
      %v5903 = vmul.f32 %v5871, %v5871
      %v5904 = vmul.f32 %v5872, %v5872
      %v5905 = vmul.f32 %v5873, %v5873
      %v5906 = vmul.f32 %v5874, %v5874
      %v5907 = vmul.f32 %v5875, %v5875
      %v5908 = vmul.f32 %v5876, %v5876
      %v5909 = vmul.f32 %v5877, %v5877
      %v5910 = vmul.f32 %v5878, %v5878
      %v5911 = vmul.f32 %v5879, %v5879
      %v5912 = vmul.f32 %v5880, %v5880
      %v5913 = vmul.f32 %v5881, %v5881
      %v5914 = vmul.f32 %v5882, %v5882
      %v5915 = vmul.f32 %v5883, %v5883
      %v5916 = vmul.f32 %v5884, %v5884
      %v5917 = vmul.f32 %v5885, %v5885
      %v5918 = vadd.f32 %v5886, %v5887
      %v5919 = vadd.f32 %v5918, %v5888
      %v5920 = vadd.f32 %v5919, %v5889
      %v5921 = vadd.f32 %v5920, %v5890
      %v5922 = vadd.f32 %v5921, %v5891
      %v5923 = vadd.f32 %v5922, %v5892
      %v5924 = vadd.f32 %v5923, %v5893
      %v5925 = vadd.f32 %v5924, %v5894
      %v5926 = vadd.f32 %v5925, %v5895
      %v5927 = vadd.f32 %v5926, %v5896
      %v5928 = vadd.f32 %v5927, %v5897
      %v5929 = vadd.f32 %v5928, %v5898
      %v5930 = vadd.f32 %v5929, %v5899
      %v5931 = vadd.f32 %v5930, %v5900
      %v5932 = vadd.f32 %v5931, %v5901
      %v5933 = vadd.f32 %v5932, %v5902
      %v5934 = vadd.f32 %v5933, %v5903
      %v5935 = vadd.f32 %v5934, %v5904
      %v5936 = vadd.f32 %v5935, %v5905
      %v5937 = vadd.f32 %v5936, %v5906
      %v5938 = vadd.f32 %v5937, %v5907
      %v5939 = vadd.f32 %v5938, %v5908
      %v5940 = vadd.f32 %v5939, %v5909
      %v5941 = vadd.f32 %v5940, %v5910
      %v5942 = vadd.f32 %v5941, %v5911
      %v5943 = vadd.f32 %v5942, %v5912
      %v5944 = vadd.f32 %v5943, %v5913
      %v5945 = vadd.f32 %v5944, %v5914
      %v5946 = vadd.f32 %v5945, %v5915
      %v5947 = vadd.f32 %v5946, %v5916
      %v5948 = vadd.f32 %v5947, %v5917
      %v5949 = vrot.slane %v5948, 4
      %v5950 = vadd.f32 %v5948, %v5949
      %v5951 = vrot.slane %v5950, 2
      %v5952 = vadd.f32 %v5950, %v5951
      %v5953 = vrot.slane %v5952, 1
      %v5954 = vadd.f32 %v5952, %v5953
      %5955 = vst [vmem:[%s268] sm:$0x1] %v5852
      %5956 = vst [vmem:[%s268 + $0x1] sm:$0x1] %v5954
      %s5957 = smul.u32 16, %s22
      %p5958 = scmp.lt.s32.totalorder %s21, 1
      %s5959 = scalar_select %p5958, %s21, 1
      %p5960 = scmp.lt.s32.totalorder %s5957, 15
      %s5961 = scalar_select %p5960, %s5957, 15
      %s5962 = smul.addr %s5961, 2
      %s5963 = smul.addr %s5959, 32
      %s5964 = sadd.s32 %s5962, %s5963
      %s5965 = smul.addr %s5964, 4
      %s5966 = scalar_lea.vmem %s4, %s5965
      %p5967 = scmp.lt.s32.totalorder %s21, 1
      %s5968 = scalar_select %p5967, %s21, 1
      %p5969 = scmp.lt.s32.totalorder %s22, 0
      %s5970 = scalar_select %p5969, %s22, 0
      %s5971 = sadd.s32 %s5970, %s5968
      %s5972 = smul.addr %s5971, 2
      %s5973 = scalar_lea.vmem %s5, %s5972
      // Predicated region
      $region45: #{vgg_block.3} parent=35 // pred_check
        %p5974 = pneg %p138
      $region46: #{vgg_block.3} parent=35 // pred_check_branch
        %5976 = sbr.rel (%p5974) target = $region48
      $region47: #{vgg_block.3} parent=35 // pred_region
        %s5977 = smul.u32 16, %s22
      $region48: #{vgg_block.3} parent=35 // pred_fallthru
        _
      // Predicated region
      $region49: #{vgg_block.3} parent=35 // pred_check
        %p5978 = pneg %p166
      $region50: #{vgg_block.3} parent=35 // pred_check_branch
        %5980 = sbr.rel (%p5978) target = $region52
      $region51: #{vgg_block.3} parent=35 // pred_region
        _
      $region52: #{vgg_block.3} parent=35 // pred_fallthru
        _
    $region36: #{vgg_block.3} parent=5 // pred_fallthru
      _
    %p5981 = scmp.le.s32.totalorder 2, %s12
    // Predicated region
    $region53: #{vgg_block.3} parent=5 // pred_check
      %p5982 = pneg %p5981
    $region54: #{vgg_block.3} parent=5 // pred_check_branch
      %5984 = sbr.rel (%p5982) target = $region56
    $region55: #{vgg_block.3} parent=5 // pred_region
      %s5985 = ssub.s32 %s12, 2
      // Predicated region
      $region57: #{vgg_block.3} parent=55 // pred_check
        %p5986 = pneg %p144
      $region58: #{vgg_block.3} parent=55 // pred_check_branch
        %5988 = sbr.rel (%p5986) target = $region60
      $region59: #{vgg_block.3} parent=55 // pred_region
        %s5989 = smul.u32 16, %s24
        %p5990 = scmp.lt.s32.totalorder %s23, 1
        %s5991 = scalar_select %p5990, %s23, 1
        %p5992 = scmp.lt.s32.totalorder %s5989, 15
        %s5993 = scalar_select %p5992, %s5989, 15
        %s5994 = smul.addr %s5993, 2
        %s5995 = smul.addr %s5991, 32
        %s5996 = sadd.s32 %s5994, %s5995
        %s5997 = smul.addr %s5996, 4
        %s5998 = scalar_lea.vmem %s4, %s5997
      $region60: #{vgg_block.3} parent=55 // pred_fallthru
        _
      // Predicated region
      $region61: #{vgg_block.3} parent=55 // pred_check
        %p5999 = pneg %p172
      $region62: #{vgg_block.3} parent=55 // pred_check_branch
        %6001 = sbr.rel (%p5999) target = $region64
      $region63: #{vgg_block.3} parent=55 // pred_region
        %p6002 = scmp.lt.s32.totalorder %s23, 1
        %s6003 = scalar_select %p6002, %s23, 1
        %p6004 = scmp.lt.s32.totalorder %s24, 0
        %s6005 = scalar_select %p6004, %s24, 0
        %s6006 = sadd.s32 %s6005, %s6003
        %s6007 = smul.addr %s6006, 2
        %s6008 = scalar_lea.vmem %s5, %s6007
      $region64: #{vgg_block.3} parent=55 // pred_fallthru
        _
    $region56: #{vgg_block.3} parent=5 // pred_fallthru
      _
  $region6: #{vgg_block.3} parent=0 // loop_footer
    %s16 = sadd.s32 1, %s12
  $region7: #{vgg_block.3} parent=0 // loop_footer_branch
    %11 = sbr.rel target = $region3
  $region8: #{vgg_block.3} parent=0 // loop_exit
    _

// kernel: vgg_block.4
$region0: #{vgg_block.4}
  #allocation0 [shape = 'u32[]', space=smem, size = 0x4, offset = 0x4, fixed_abs, tag = 'smem constant byte address 0x4 - core index']
  #allocation1 [shape = 'u32[144,128]{1,0:T(1,128)}', space=vmem, size = 0x12000, scoped, tag = 'internal scratch']
  #allocation2 [shape = 'bf16[18,18,128]{2,1,0:T(8,128)(2,1)}', space=vmem, size = 0x1b000, scoped, tag = 'scratch operand']
  #allocation3 [shape = 'bf16[256,1152]{1,0:T(8,128)(2,1)}', space=vmem, size = 0x90000, scoped, tag = 'scratch operand']
  %s0 = inlined_call_operand.vmem [shape: bf16[2,16,16,128], index: 0, kind: input, shape index: {}]
  %s1 = inlined_call_operand.vmem [shape: f32[1,128], index: 1, kind: input, shape index: {}]
  %s2 = inlined_call_operand.vmem [shape: f32[1,128], index: 2, kind: input, shape index: {}]
  %s3 = inlined_call_operand.vmem [shape: bf16[1152,128], index: 3, kind: input, shape index: {}]
  %s4 = inlined_call_operand.vmem [shape: bf16[2,16,16,128], index: 4, kind: output, shape index: {0}]
  %s5 = inlined_call_operand.vmem [shape: f32[2,1,2,128], index: 5, kind: output, shape index: {1}]
  %6 = xla_tuple %s4, %s5
  %s7 = sld [smem:[#allocation0]]
  $region65: #{vgg_block.4} parent=0
    _
  %s9 = ssub.s32 1, %s7
  %s10 = scalar_select 0, %s9, %s7
  loop: start=0, step=1, limit=4
  $region2: #{vgg_block.4} parent=0 // loop_pre_header
    _
  $region3: #{vgg_block.4} parent=0 // loop_header
    %s12 = sphi 0, %s16
    %p13 = scmp.ge.s32.totalorder %s12, 4
    %s19 = sphi 0, %s31
    %s20 = sphi 0, %s27
    %s21 = sphi 0, %s19
    %s22 = sphi 0, %s20
    %s23 = sphi 0, %s21
    %s24 = sphi 0, %s22
    %s34 = sphi 0, %s36
    %s37 = sphi 0, %s34
    %s38 = sphi 0, %s37
    %s54 = sphi 0, %s38
    %s58 = sphi 0, %s58
    %s60 = sphi 0, %s58
    %s61 = sphi 0, %s60
    %s75 = sphi 0, %s61
    %s79 = sphi 0, %s79
    %s81 = sphi 0, %s79
    %s82 = sphi 0, %s81
    %s96 = sphi 0, %s82
    %s100 = sphi 0, %s100
    %s102 = sphi 0, %s100
    %s103 = sphi 0, %s102
    %s117 = sphi 0, %s103
    %s125 = sphi 0, %s127
    %s128 = sphi 0, %s125
    %s129 = sphi 0, %s128
    %s145 = sphi 0, %s129
    %s153 = sphi 0, %s155
    %s156 = sphi 0, %s153
    %s157 = sphi 0, %s156
    %s173 = sphi 0, %s157
  $region4: #{vgg_block.4} parent=0 // loop_header_branch
    %15 = sbr.rel (%p13) target = $region8
  $region5: #{vgg_block.4} parent=0 // loop_body
    %s17 = ssub.s32 %s12, 1
    %s18 = ssub.s32 %s12, 2
    %s25 = sadd.s32 1, %s20
    %p26 = scmp.ge.s32.totalorder %s25, 1
    %s27 = scalar_select %p26, 0, %s25
    %s28 = sadd.s32 1, %s19
    %s29 = scalar_select %p26, %s28, %s19
    %p30 = scmp.ge.s32.totalorder %s29, 2
    %s31 = scalar_select %p30, 0, %s29
    %s32 = ssub.s32 %s19, %s31
    %p33 = scmp.eq.s32.totalorder %s32, 0
    %s35 = sadd.s32 %s34, 1
    %s36 = scalar_select %p33, %s34, %s35
    %p39 = pneg %p33
    %p40 = scmp.eq.s32.totalorder %s12, 1
    %p41 = por %p39, %p40
    %p42 = scmp.ne.s32.totalorder %s34, %s37
    %p43 = scmp.eq.s32.totalorder %s12, 0
    %p44 = por %p42, %p43
    %p45 = scmp.ne.s32.totalorder %s34, %s37
    %p46 = scmp.eq.s32.totalorder %s17, 1
    %p47 = por %p45, %p46
    %p48 = scmp.ne.s32.totalorder %s37, %s38
    %p49 = scmp.eq.s32.totalorder %s17, 0
    %p50 = por %p48, %p49
    %p51 = scmp.ne.s32.totalorder %s37, %s38
    %p52 = scmp.eq.s32.totalorder %s18, 1
    %p53 = por %p51, %p52
    %p55 = scmp.ne.s32.totalorder %s38, %s54
    %p56 = scmp.eq.s32.totalorder %s18, 0
    %p57 = por %p55, %p56
    %s59 = sadd.s32 %s58, 1
    %p62 = scmp.eq.s32.totalorder %s12, 1
    %p63 = scmp.ne.s32.totalorder %s58, %s60
    %p64 = scmp.eq.s32.totalorder %s12, 0
    %p65 = por %p63, %p64
    %p66 = scmp.ne.s32.totalorder %s58, %s60
    %p67 = scmp.eq.s32.totalorder %s17, 1
    %p68 = por %p66, %p67
    %p69 = scmp.ne.s32.totalorder %s60, %s61
    %p70 = scmp.eq.s32.totalorder %s17, 0
    %p71 = por %p69, %p70
    %p72 = scmp.ne.s32.totalorder %s60, %s61
    %p73 = scmp.eq.s32.totalorder %s18, 1
    %p74 = por %p72, %p73
    %p76 = scmp.ne.s32.totalorder %s61, %s75
    %p77 = scmp.eq.s32.totalorder %s18, 0
    %p78 = por %p76, %p77
    %s80 = sadd.s32 %s79, 1
    %p83 = scmp.eq.s32.totalorder %s12, 1
    %p84 = scmp.ne.s32.totalorder %s79, %s81
    %p85 = scmp.eq.s32.totalorder %s12, 0
    %p86 = por %p84, %p85
    %p87 = scmp.ne.s32.totalorder %s79, %s81
    %p88 = scmp.eq.s32.totalorder %s17, 1
    %p89 = por %p87, %p88
    %p90 = scmp.ne.s32.totalorder %s81, %s82
    %p91 = scmp.eq.s32.totalorder %s17, 0
    %p92 = por %p90, %p91
    %p93 = scmp.ne.s32.totalorder %s81, %s82
    %p94 = scmp.eq.s32.totalorder %s18, 1
    %p95 = por %p93, %p94
    %p97 = scmp.ne.s32.totalorder %s82, %s96
    %p98 = scmp.eq.s32.totalorder %s18, 0
    %p99 = por %p97, %p98
    %s101 = sadd.s32 %s100, 1
    %p104 = scmp.eq.s32.totalorder %s12, 1
    %p105 = scmp.ne.s32.totalorder %s100, %s102
    %p106 = scmp.eq.s32.totalorder %s12, 0
    %p107 = por %p105, %p106
    %p108 = scmp.ne.s32.totalorder %s100, %s102
    %p109 = scmp.eq.s32.totalorder %s17, 1
    %p110 = por %p108, %p109
    %p111 = scmp.ne.s32.totalorder %s102, %s103
    %p112 = scmp.eq.s32.totalorder %s17, 0
    %p113 = por %p111, %p112
    %p114 = scmp.ne.s32.totalorder %s102, %s103
    %p115 = scmp.eq.s32.totalorder %s18, 1
    %p116 = por %p114, %p115
    %p118 = scmp.ne.s32.totalorder %s103, %s117
    %p119 = scmp.eq.s32.totalorder %s18, 0
    %p120 = por %p118, %p119
    %s121 = ssub.s32 %s19, %s31
    %s122 = ssub.s32 %s20, %s27
    %s123 = sor.u32 %s121, %s122
    %p124 = scmp.eq.s32.totalorder %s123, 0
    %s126 = sadd.s32 %s125, 1
    %s127 = scalar_select %p124, %s125, %s126
    %p130 = pneg %p124
    %p131 = scmp.eq.s32.totalorder %s12, 1
    %p132 = por %p130, %p131
    %p133 = scmp.ne.s32.totalorder %s125, %s128
    %p134 = scmp.eq.s32.totalorder %s12, 0
    %p135 = por %p133, %p134
    %p136 = scmp.ne.s32.totalorder %s125, %s128
    %p137 = scmp.eq.s32.totalorder %s17, 1
    %p138 = por %p136, %p137
    %p139 = scmp.ne.s32.totalorder %s128, %s129
    %p140 = scmp.eq.s32.totalorder %s17, 0
    %p141 = por %p139, %p140
    %p142 = scmp.ne.s32.totalorder %s128, %s129
    %p143 = scmp.eq.s32.totalorder %s18, 1
    %p144 = por %p142, %p143
    %p146 = scmp.ne.s32.totalorder %s129, %s145
    %p147 = scmp.eq.s32.totalorder %s18, 0
    %p148 = por %p146, %p147
    %s149 = ssub.s32 %s19, %s31
    %s150 = ssub.s32 %s20, %s27
    %s151 = sor.u32 %s149, %s150
    %p152 = scmp.eq.s32.totalorder %s151, 0
    %s154 = sadd.s32 %s153, 1
    %s155 = scalar_select %p152, %s153, %s154
    %p158 = pneg %p152
    %p159 = scmp.eq.s32.totalorder %s12, 1
    %p160 = por %p158, %p159
    %p161 = scmp.ne.s32.totalorder %s153, %s156
    %p162 = scmp.eq.s32.totalorder %s12, 0
    %p163 = por %p161, %p162
    %p164 = scmp.ne.s32.totalorder %s153, %s156
    %p165 = scmp.eq.s32.totalorder %s17, 1
    %p166 = por %p164, %p165
    %p167 = scmp.ne.s32.totalorder %s156, %s157
    %p168 = scmp.eq.s32.totalorder %s17, 0
    %p169 = por %p167, %p168
    %p170 = scmp.ne.s32.totalorder %s156, %s157
    %p171 = scmp.eq.s32.totalorder %s18, 1
    %p172 = por %p170, %p171
    %p174 = scmp.ne.s32.totalorder %s157, %s173
    %p175 = scmp.eq.s32.totalorder %s18, 0
    %p176 = por %p174, %p175
    %p177 = scmp.le.s32.totalorder 1, %s12
    %p178 = scmp.lt.s32.totalorder %s12, 3
    %p179 = pnand %p177, %p178
    %p180 = pneg %p179
    // Predicated region
    $region9: #{vgg_block.4} parent=5 // pred_check
      _
    $region10: #{vgg_block.4} parent=5 // pred_check_branch
      %182 = sbr.rel (%p179) target = $region12
    $region11: #{vgg_block.4} parent=5 // pred_region
      %s183 = ssub.s32 %s12, 1
      // Predicated region
      $region13: #{vgg_block.4} parent=11 // pred_check
        %p184 = pneg %p71
      $region14: #{vgg_block.4} parent=11 // pred_check_branch
        %186 = sbr.rel (%p184) target = $region16
      $region15: #{vgg_block.4} parent=11 // pred_region
        _
      $region16: #{vgg_block.4} parent=11 // pred_fallthru
        _
      // Predicated region
      $region17: #{vgg_block.4} parent=11 // pred_check
        %p187 = pneg %p92
      $region18: #{vgg_block.4} parent=11 // pred_check_branch
        %189 = sbr.rel (%p187) target = $region20
      $region19: #{vgg_block.4} parent=11 // pred_region
        _
      $region20: #{vgg_block.4} parent=11 // pred_fallthru
        _
      // Predicated region
      $region21: #{vgg_block.4} parent=11 // pred_check
        %p190 = pneg %p113
      $region22: #{vgg_block.4} parent=11 // pred_check_branch
        %192 = sbr.rel (%p190) target = $region24
      $region23: #{vgg_block.4} parent=11 // pred_region
        _
      $region24: #{vgg_block.4} parent=11 // pred_fallthru
        _
    $region12: #{vgg_block.4} parent=5 // pred_fallthru
      _
    %p193 = scmp.lt.s32.totalorder %s12, 2
    // Predicated region
    $region25: #{vgg_block.4} parent=5 // pred_check
      %p194 = pneg %p193
    $region26: #{vgg_block.4} parent=5 // pred_check_branch
      %196 = sbr.rel (%p194) target = $region28
    $region27: #{vgg_block.4} parent=5 // pred_region
      // Predicated region
      $region29: #{vgg_block.4} parent=27 // pred_check
        %p197 = pneg %p44
      $region30: #{vgg_block.4} parent=27 // pred_check_branch
        %199 = sbr.rel (%p197) target = $region32
      $region31: #{vgg_block.4} parent=27 // pred_region
        %p200 = scmp.lt.s32.totalorder %s19, 1
        %s201 = scalar_select %p200, %s19, 1
        %s202 = smul.addr %s201, 32
        %s203 = smul.addr %s202, 4
        %s204 = scalar_lea.vmem %s0, %s203
      $region32: #{vgg_block.4} parent=27 // pred_fallthru
        _
    $region28: #{vgg_block.4} parent=5 // pred_fallthru
      _
    %p205 = scmp.le.s32.totalorder 1, %s12
    %p206 = scmp.lt.s32.totalorder %s12, 3
    %p207 = pnand %p205, %p206
    %p208 = pneg %p207
    // Predicated region
    $region33: #{vgg_block.4} parent=5 // pred_check
      _
    $region34: #{vgg_block.4} parent=5 // pred_check_branch
      %210 = sbr.rel (%p207) target = $region36
    $region35: #{vgg_block.4} parent=5 // pred_region
      %s211 = ssub.s32 %s12, 1
      %p212 = scmp.lt.s32.totalorder %s21, 1
      %s213 = scalar_select %p212, %s21, 1
      %s214 = smul.addr %s213, 32
      %s215 = smul.addr %s214, 4
      %s216 = scalar_lea.vmem %s0, %s215
      %p217 = pneg %p50
      %p218 = pneg %p47
      %p219 = pneg %p71
      %p220 = pneg %p68
      %p221 = pneg %p92
      %p222 = pneg %p89
      %p223 = pneg %p113
      %p224 = pneg %p110
      %p225 = pneg %p141
      %p226 = pneg %p138
      %s227 = smul.u32 16, %s22
      %p228 = scmp.lt.s32.totalorder %s21, 1
      %s229 = scalar_select %p228, %s21, 1
      %p230 = scmp.lt.s32.totalorder %s227, 15
      %s231 = scalar_select %p230, %s227, 15
      %s232 = smul.addr %s231, 2
      %s233 = smul.addr %s229, 32
      %s234 = sadd.s32 %s232, %s233
      %s235 = smul.addr %s234, 4
      %s236 = scalar_lea.vmem %s4, %s235
      %p237 = pneg %p169
      %p238 = pneg %p166
      %p239 = scmp.lt.s32.totalorder %s21, 1
      %s240 = scalar_select %p239, %s21, 1
      %p241 = scmp.lt.s32.totalorder %s22, 0
      %s242 = scalar_select %p241, %s22, 0
      %s243 = sadd.s32 %s242, %s240
      %s244 = smul.addr %s243, 2
      %s245 = scalar_lea.vmem %s5, %s244
      %p246 = scmp.lt.s32.totalorder %s21, 1
      %s247 = scalar_select %p246, %s21, 1
      %s248 = smul.addr %s247, 32
      %s249 = smul.addr %s248, 4
      %s250 = scalar_lea.vmem %s0, %s249
      %s251 = smul.u32 16, %s22
      %p252 = scmp.lt.s32.totalorder %s21, 1
      %s253 = scalar_select %p252, %s21, 1
      %p254 = scmp.lt.s32.totalorder %s251, 15
      %s255 = scalar_select %p254, %s251, 15
      %s256 = smul.addr %s255, 2
      %s257 = smul.addr %s253, 32
      %s258 = sadd.s32 %s256, %s257
      %s259 = smul.addr %s258, 4
      %s260 = scalar_lea.vmem %s4, %s259
      %s261 = smul.u32 16, %s22
      %p262 = scmp.lt.s32.totalorder %s21, 1
      %s263 = scalar_select %p262, %s21, 1
      %p264 = scmp.lt.s32.totalorder %s22, 0
      %s265 = scalar_select %p264, %s22, 0
      %s266 = sadd.s32 %s265, %s263
      %s267 = smul.addr %s266, 2
      %s268 = scalar_lea.vmem %s5, %s267
      %s270 = smul.u32 %s22, 16
      %v271 = vld [vmem:[%s1] sm:$0x1]
      %v272 = vld [vmem:[%s2] sm:$0x1]
      %273 = vst [vmem:[#allocation2] sm:$0xf] 0
      %274 = vst [vmem:[#allocation2 + $0x4] sm:$0xf] 0
      %275 = vst [vmem:[#allocation2 + $0x8] sm:$0x1] 0
      %276 = vst [vmem:[#allocation2 + $0xc] sm:$0xf] 0
      %277 = vst [vmem:[#allocation2 + $0x10] sm:$0xf] 0
      %278 = vst [vmem:[#allocation2 + $0x14] sm:$0x1] 0
      %279 = vst [vmem:[#allocation2 + $0x18] sm:$0xf] 0
      %280 = vst [vmem:[#allocation2 + $0x1c] sm:$0xf] 0
      %281 = vst [vmem:[#allocation2 + $0x20] sm:$0x1] 0
      %282 = vst [vmem:[#allocation2 + $0x24] sm:$0xf] 0
      %283 = vst [vmem:[#allocation2 + $0x28] sm:$0xf] 0
      %284 = vst [vmem:[#allocation2 + $0x2c] sm:$0x1] 0
      %285 = vst [vmem:[#allocation2 + $0x30] sm:$0xf] 0
      %286 = vst [vmem:[#allocation2 + $0x34] sm:$0xf] 0
      %287 = vst [vmem:[#allocation2 + $0x38] sm:$0x1] 0
      %288 = vst [vmem:[#allocation2 + $0x3c] sm:$0xf] 0
      %289 = vst [vmem:[#allocation2 + $0x40] sm:$0xf] 0
      %290 = vst [vmem:[#allocation2 + $0x44] sm:$0x1] 0
      %291 = vst [vmem:[#allocation2 + $0x48] sm:$0xf] 0
      %292 = vst [vmem:[#allocation2 + $0x4c] sm:$0xf] 0
      %293 = vst [vmem:[#allocation2 + $0x50] sm:$0x1] 0
      %294 = vst [vmem:[#allocation2 + $0x54] sm:$0xf] 0
      %295 = vst [vmem:[#allocation2 + $0x58] sm:$0xf] 0
      %296 = vst [vmem:[#allocation2 + $0x5c] sm:$0x1] 0
      %297 = vst [vmem:[#allocation2 + $0x60] sm:$0xf] 0
      %298 = vst [vmem:[#allocation2 + $0x64] sm:$0xf] 0
      %299 = vst [vmem:[#allocation2 + $0x68] sm:$0x1] 0
      %300 = vst [vmem:[#allocation2 + $0x6c] sm:$0xf] 0
      %301 = vst [vmem:[#allocation2 + $0x70] sm:$0xf] 0
      %302 = vst [vmem:[#allocation2 + $0x74] sm:$0x1] 0
      %303 = vst [vmem:[#allocation2 + $0x78] sm:$0xf] 0
      %304 = vst [vmem:[#allocation2 + $0x7c] sm:$0xf] 0
      %305 = vst [vmem:[#allocation2 + $0x80] sm:$0x1] 0
      %306 = vst [vmem:[#allocation2 + $0x84] sm:$0xf] 0
      %307 = vst [vmem:[#allocation2 + $0x88] sm:$0xf] 0
      %308 = vst [vmem:[#allocation2 + $0x8c] sm:$0x1] 0
      %309 = vst [vmem:[#allocation2 + $0x90] sm:$0xf] 0
      %310 = vst [vmem:[#allocation2 + $0x94] sm:$0xf] 0
      %311 = vst [vmem:[#allocation2 + $0x98] sm:$0x1] 0
      %312 = vst [vmem:[#allocation2 + $0x9c] sm:$0xf] 0
      %313 = vst [vmem:[#allocation2 + $0xa0] sm:$0xf] 0
      %314 = vst [vmem:[#allocation2 + $0xa4] sm:$0x1] 0
      %315 = vst [vmem:[#allocation2 + $0xa8] sm:$0xf] 0
      %316 = vst [vmem:[#allocation2 + $0xac] sm:$0xf] 0
      %317 = vst [vmem:[#allocation2 + $0xb0] sm:$0x1] 0
      %318 = vst [vmem:[#allocation2 + $0xb4] sm:$0xf] 0
      %319 = vst [vmem:[#allocation2 + $0xb8] sm:$0xf] 0
      %320 = vst [vmem:[#allocation2 + $0xbc] sm:$0x1] 0
      %321 = vst [vmem:[#allocation2 + $0xc0] sm:$0xf] 0
      %322 = vst [vmem:[#allocation2 + $0xc4] sm:$0xf] 0
      %323 = vst [vmem:[#allocation2 + $0xc8] sm:$0x1] 0
      %324 = vst [vmem:[#allocation2 + $0xcc] sm:$0xf] 0
      %325 = vst [vmem:[#allocation2 + $0xd0] sm:$0xf] 0
      %326 = vst [vmem:[#allocation2 + $0xd4] sm:$0x1] 0
      %s327 = smul.u32 %s270, 2
      %s328 = smul.addr %s327, 4
      %s329 = scalar_lea.vmem %s250, %s328
      %v330 = vld [vmem:[%s329] sm:$0xf]
      %v331 = vld [vmem:[%s329 + $0x4] sm:$0xf]
      %v332 = vld [vmem:[%s329 + $0x8] sm:$0xf]
      %v333 = vld [vmem:[%s329 + $0xc] sm:$0xf]
      %v334 = vld [vmem:[%s329 + $0x10] sm:$0xf]
      %v335 = vld [vmem:[%s329 + $0x14] sm:$0xf]
      %v336 = vld [vmem:[%s329 + $0x18] sm:$0xf]
      %v337 = vld [vmem:[%s329 + $0x1c] sm:$0xf]
      %v338 = vld [vmem:[%s329 + $0x20] sm:$0xf]
      %v339 = vld [vmem:[%s329 + $0x24] sm:$0xf]
      %v340 = vld [vmem:[%s329 + $0x28] sm:$0xf]
      %v341 = vld [vmem:[%s329 + $0x2c] sm:$0xf]
      %v342 = vld [vmem:[%s329 + $0x30] sm:$0xf]
      %v343 = vld [vmem:[%s329 + $0x34] sm:$0xf]
      %v344 = vld [vmem:[%s329 + $0x38] sm:$0xf]
      %v345 = vld [vmem:[%s329 + $0x3c] sm:$0xf]
      %v346 = vld [vmem:[%s329 + $0x40] sm:$0xf]
      %v347 = vld [vmem:[%s329 + $0x44] sm:$0xf]
      %v348 = vld [vmem:[%s329 + $0x48] sm:$0xf]
      %v349 = vld [vmem:[%s329 + $0x4c] sm:$0xf]
      %v350 = vld [vmem:[%s329 + $0x50] sm:$0xf]
      %v351 = vld [vmem:[%s329 + $0x54] sm:$0xf]
      %v352 = vld [vmem:[%s329 + $0x58] sm:$0xf]
      %v353 = vld [vmem:[%s329 + $0x5c] sm:$0xf]
      %v354 = vld [vmem:[%s329 + $0x60] sm:$0xf]
      %v355 = vld [vmem:[%s329 + $0x64] sm:$0xf]
      %v356 = vld [vmem:[%s329 + $0x68] sm:$0xf]
      %v357 = vld [vmem:[%s329 + $0x6c] sm:$0xf]
      %v358 = vld [vmem:[%s329 + $0x70] sm:$0xf]
      %v359 = vld [vmem:[%s329 + $0x74] sm:$0xf]
      %v360 = vld [vmem:[%s329 + $0x78] sm:$0xf]
      %v361 = vld [vmem:[%s329 + $0x7c] sm:$0xf]
      %v362 = vunpack.c.l.bf16 %v330
      %v363 = vunpack.c.l.bf16 %v331
      %v364 = vunpack.c.l.bf16 %v332
      %v365 = vunpack.c.l.bf16 %v333
      %v366 = vunpack.c.l.bf16 %v334
      %v367 = vunpack.c.l.bf16 %v335
      %v368 = vunpack.c.l.bf16 %v336
      %v369 = vunpack.c.l.bf16 %v337
      %v370 = vunpack.c.l.bf16 %v338
      %v371 = vunpack.c.l.bf16 %v339
      %v372 = vunpack.c.l.bf16 %v340
      %v373 = vunpack.c.l.bf16 %v341
      %v374 = vunpack.c.l.bf16 %v342
      %v375 = vunpack.c.l.bf16 %v343
      %v376 = vunpack.c.l.bf16 %v344
      %v377 = vunpack.c.l.bf16 %v345
      %v378 = vunpack.c.l.bf16 %v346
      %v379 = vunpack.c.l.bf16 %v347
      %v380 = vunpack.c.l.bf16 %v348
      %v381 = vunpack.c.l.bf16 %v349
      %v382 = vunpack.c.l.bf16 %v350
      %v383 = vunpack.c.l.bf16 %v351
      %v384 = vunpack.c.l.bf16 %v352
      %v385 = vunpack.c.l.bf16 %v353
      %v386 = vunpack.c.l.bf16 %v354
      %v387 = vunpack.c.l.bf16 %v355
      %v388 = vunpack.c.l.bf16 %v356
      %v389 = vunpack.c.l.bf16 %v357
      %v390 = vunpack.c.l.bf16 %v358
      %v391 = vunpack.c.l.bf16 %v359
      %v392 = vunpack.c.l.bf16 %v360
      %v393 = vunpack.c.l.bf16 %v361
      %v395 = vlaneseq
      %v396 = vshrl.u32 %v395, 7
      %v397 = vsub.s32 0, %v396
      %v398 = vrot.slane %v271, %v397
      %v400 = vmul.f32 %v362, %v398
      %v401 = vmul.f32 %v363, %v398
      %v402 = vmul.f32 %v364, %v398
      %v403 = vmul.f32 %v365, %v398
      %v404 = vmul.f32 %v366, %v398
      %v405 = vmul.f32 %v367, %v398
      %v406 = vmul.f32 %v368, %v398
      %v407 = vmul.f32 %v369, %v398
      %v408 = vmul.f32 %v370, %v398
      %v409 = vmul.f32 %v371, %v398
      %v410 = vmul.f32 %v372, %v398
      %v411 = vmul.f32 %v373, %v398
      %v412 = vmul.f32 %v374, %v398
      %v413 = vmul.f32 %v375, %v398
      %v414 = vmul.f32 %v376, %v398
      %v415 = vmul.f32 %v377, %v398
      %v416 = vmul.f32 %v378, %v398
      %v417 = vmul.f32 %v379, %v398
      %v418 = vmul.f32 %v380, %v398
      %v419 = vmul.f32 %v381, %v398
      %v420 = vmul.f32 %v382, %v398
      %v421 = vmul.f32 %v383, %v398
      %v422 = vmul.f32 %v384, %v398
      %v423 = vmul.f32 %v385, %v398
      %v424 = vmul.f32 %v386, %v398
      %v425 = vmul.f32 %v387, %v398
      %v426 = vmul.f32 %v388, %v398
      %v427 = vmul.f32 %v389, %v398
      %v428 = vmul.f32 %v390, %v398
      %v429 = vmul.f32 %v391, %v398
      %v430 = vmul.f32 %v392, %v398
      %v431 = vmul.f32 %v393, %v398
      %v433 = vlaneseq
      %v434 = vshrl.u32 %v433, 7
      %v435 = vsub.s32 0, %v434
      %v436 = vrot.slane %v272, %v435
      %v438 = vadd.f32 %v400, %v436
      %v439 = vadd.f32 %v401, %v436
      %v440 = vadd.f32 %v402, %v436
      %v441 = vadd.f32 %v403, %v436
      %v442 = vadd.f32 %v404, %v436
      %v443 = vadd.f32 %v405, %v436
      %v444 = vadd.f32 %v406, %v436
      %v445 = vadd.f32 %v407, %v436
      %v446 = vadd.f32 %v408, %v436
      %v447 = vadd.f32 %v409, %v436
      %v448 = vadd.f32 %v410, %v436
      %v449 = vadd.f32 %v411, %v436
      %v450 = vadd.f32 %v412, %v436
      %v451 = vadd.f32 %v413, %v436
      %v452 = vadd.f32 %v414, %v436
      %v453 = vadd.f32 %v415, %v436
      %v454 = vadd.f32 %v416, %v436
      %v455 = vadd.f32 %v417, %v436
      %v456 = vadd.f32 %v418, %v436
      %v457 = vadd.f32 %v419, %v436
      %v458 = vadd.f32 %v420, %v436
      %v459 = vadd.f32 %v421, %v436
      %v460 = vadd.f32 %v422, %v436
      %v461 = vadd.f32 %v423, %v436
      %v462 = vadd.f32 %v424, %v436
      %v463 = vadd.f32 %v425, %v436
      %v464 = vadd.f32 %v426, %v436
      %v465 = vadd.f32 %v427, %v436
      %v466 = vadd.f32 %v428, %v436
      %v467 = vadd.f32 %v429, %v436
      %v468 = vadd.f32 %v430, %v436
      %v469 = vadd.f32 %v431, %v436
      %v470 = vmax.f32 %v438, 0.0
      %v471 = vmax.f32 %v439, 0.0
      %v472 = vmax.f32 %v440, 0.0
      %v473 = vmax.f32 %v441, 0.0
      %v474 = vmax.f32 %v442, 0.0
      %v475 = vmax.f32 %v443, 0.0
      %v476 = vmax.f32 %v444, 0.0
      %v477 = vmax.f32 %v445, 0.0
      %v478 = vmax.f32 %v446, 0.0
      %v479 = vmax.f32 %v447, 0.0
      %v480 = vmax.f32 %v448, 0.0
      %v481 = vmax.f32 %v449, 0.0
      %v482 = vmax.f32 %v450, 0.0
      %v483 = vmax.f32 %v451, 0.0
      %v484 = vmax.f32 %v452, 0.0
      %v485 = vmax.f32 %v453, 0.0
      %v486 = vmax.f32 %v454, 0.0
      %v487 = vmax.f32 %v455, 0.0
      %v488 = vmax.f32 %v456, 0.0
      %v489 = vmax.f32 %v457, 0.0
      %v490 = vmax.f32 %v458, 0.0
      %v491 = vmax.f32 %v459, 0.0
      %v492 = vmax.f32 %v460, 0.0
      %v493 = vmax.f32 %v461, 0.0
      %v494 = vmax.f32 %v462, 0.0
      %v495 = vmax.f32 %v463, 0.0
      %v496 = vmax.f32 %v464, 0.0
      %v497 = vmax.f32 %v465, 0.0
      %v498 = vmax.f32 %v466, 0.0
      %v499 = vmax.f32 %v467, 0.0
      %v500 = vmax.f32 %v468, 0.0
      %v501 = vmax.f32 %v469, 0.0
      %v502 = vpack.c.bf16 %v471, %v470
      %v503 = vpack.c.bf16 %v473, %v472
      %v504 = vpack.c.bf16 %v475, %v474
      %v505 = vpack.c.bf16 %v477, %v476
      %v506 = vpack.c.bf16 %v479, %v478
      %v507 = vpack.c.bf16 %v481, %v480
      %v508 = vpack.c.bf16 %v483, %v482
      %v509 = vpack.c.bf16 %v485, %v484
      %v510 = vpack.c.bf16 %v487, %v486
      %v511 = vpack.c.bf16 %v489, %v488
      %v512 = vpack.c.bf16 %v491, %v490
      %v513 = vpack.c.bf16 %v493, %v492
      %v514 = vpack.c.bf16 %v495, %v494
      %v515 = vpack.c.bf16 %v497, %v496
      %v516 = vpack.c.bf16 %v499, %v498
      %v517 = vpack.c.bf16 %v501, %v500
      %v534 = vunpack.c.l.b16 %v502
      %v535 = vunpack.c.h.b16 %v502
      %v536 = vunpack.c.l.b16 %v503
      %v537 = vunpack.c.h.b16 %v503
      %v538 = vunpack.c.l.b16 %v504
      %v539 = vunpack.c.h.b16 %v504
      %v540 = vunpack.c.l.b16 %v505
      %v541 = vunpack.c.h.b16 %v505
      %v542 = vunpack.c.l.b16 %v506
      %v543 = vunpack.c.h.b16 %v506
      %v544 = vunpack.c.l.b16 %v507
      %v545 = vunpack.c.h.b16 %v507
      %v546 = vunpack.c.l.b16 %v508
      %v547 = vunpack.c.h.b16 %v508
      %v548 = vunpack.c.l.b16 %v509
      %v549 = vunpack.c.h.b16 %v509
      %v550 = vunpack.c.l.b16 %v510
      %v551 = vunpack.c.h.b16 %v510
      %v552 = vunpack.c.l.b16 %v511
      %v553 = vunpack.c.h.b16 %v511
      %v554 = vunpack.c.l.b16 %v512
      %v555 = vunpack.c.h.b16 %v512
      %v556 = vunpack.c.l.b16 %v513
      %v557 = vunpack.c.h.b16 %v513
      %v558 = vunpack.c.l.b16 %v514
      %v559 = vunpack.c.h.b16 %v514
      %v560 = vunpack.c.l.b16 %v515
      %v561 = vunpack.c.h.b16 %v515
      %v562 = vunpack.c.l.b16 %v516
      %v563 = vunpack.c.h.b16 %v516
      %v564 = vunpack.c.l.b16 %v517
      %v565 = vunpack.c.h.b16 %v517
      %v566 = vpack.c.b16 %v534, %v534
      %v567 = vpack.c.b16 %v535, %v535
      %v568 = vpack.c.b16 %v536, %v536
      %v569 = vpack.c.b16 %v537, %v537
      %v570 = vpack.c.b16 %v538, %v538
      %v571 = vpack.c.b16 %v539, %v539
      %v572 = vpack.c.b16 %v540, %v540
      %v573 = vpack.c.b16 %v541, %v541
      %v574 = vpack.c.b16 %v542, %v542
      %v575 = vpack.c.b16 %v543, %v543
      %v576 = vpack.c.b16 %v544, %v544
      %v577 = vpack.c.b16 %v545, %v545
      %v578 = vpack.c.b16 %v546, %v546
      %v579 = vpack.c.b16 %v547, %v547
      %v580 = vpack.c.b16 %v548, %v548
      %v581 = vpack.c.b16 %v549, %v549
      %v582 = vpack.c.b16 %v550, %v550
      %v583 = vpack.c.b16 %v551, %v551
      %v584 = vpack.c.b16 %v552, %v552
      %v585 = vpack.c.b16 %v553, %v553
      %v586 = vpack.c.b16 %v554, %v554
      %v587 = vpack.c.b16 %v555, %v555
      %v588 = vpack.c.b16 %v556, %v556
      %v589 = vpack.c.b16 %v557, %v557
      %v590 = vpack.c.b16 %v558, %v558
      %v591 = vpack.c.b16 %v559, %v559
      %v592 = vpack.c.b16 %v560, %v560
      %v593 = vpack.c.b16 %v561, %v561
      %v594 = vpack.c.b16 %v562, %v562
      %v595 = vpack.c.b16 %v563, %v563
      %v596 = vpack.c.b16 %v564, %v564
      %v597 = vpack.c.b16 %v565, %v565
      %vm598 = vsmask.f32 256
      %vm599 = vsmask.f32 4368
      %vm600 = vmor %vm598, %vm599
      %v602 = vshrl.u32 %v566, 16
      %v604 = vrot.slane %v602, 7
      %v605 = vshll.u32 %v566, 16
      %v607 = vor.u32 %v604, %v605
      %v608 = vrot.slane %v604, 4
      %v610 = vshrl.u32 %v567, 16
      %v612 = vrot.slane %v610, 7
      %v613 = vshll.u32 %v567, 16
      %v615 = vor.u32 %v612, %v613
      %v616 = vsel %vm600, %v608, %v615
      %v617 = vrot.slane %v612, 4
      %v619 = vshrl.u32 %v568, 16
      %v621 = vrot.slane %v619, 7
      %v622 = vshll.u32 %v568, 16
      %v624 = vor.u32 %v621, %v622
      %v625 = vrot.slane %v621, 4
      %v627 = vshrl.u32 %v569, 16
      %v629 = vrot.slane %v627, 7
      %v630 = vshll.u32 %v569, 16
      %v632 = vor.u32 %v629, %v630
      %v633 = vsel %vm600, %v625, %v632
      %v634 = vrot.slane %v629, 4
      %v636 = vshrl.u32 %v570, 16
      %v638 = vrot.slane %v636, 7
      %v639 = vshll.u32 %v570, 16
      %v641 = vor.u32 %v638, %v639
      %v642 = vrot.slane %v638, 4
      %v644 = vshrl.u32 %v571, 16
      %v646 = vrot.slane %v644, 7
      %v647 = vshll.u32 %v571, 16
      %v649 = vor.u32 %v646, %v647
      %v650 = vsel %vm600, %v642, %v649
      %v651 = vrot.slane %v646, 4
      %v653 = vshrl.u32 %v572, 16
      %v655 = vrot.slane %v653, 7
      %v656 = vshll.u32 %v572, 16
      %v658 = vor.u32 %v655, %v656
      %v659 = vrot.slane %v655, 4
      %v661 = vshrl.u32 %v573, 16
      %v663 = vrot.slane %v661, 7
      %v664 = vshll.u32 %v573, 16
      %v666 = vor.u32 %v663, %v664
      %v667 = vsel %vm600, %v659, %v666
      %v668 = vrot.slane %v663, 4
      %v670 = vshrl.u32 %v574, 16
      %v672 = vrot.slane %v670, 7
      %v673 = vshll.u32 %v574, 16
      %v675 = vor.u32 %v672, %v673
      %v676 = vrot.slane %v672, 4
      %v678 = vshrl.u32 %v575, 16
      %v680 = vrot.slane %v678, 7
      %v681 = vshll.u32 %v575, 16
      %v683 = vor.u32 %v680, %v681
      %v684 = vsel %vm600, %v676, %v683
      %v685 = vrot.slane %v680, 4
      %v687 = vshrl.u32 %v576, 16
      %v689 = vrot.slane %v687, 7
      %v690 = vshll.u32 %v576, 16
      %v692 = vor.u32 %v689, %v690
      %v693 = vrot.slane %v689, 4
      %v695 = vshrl.u32 %v577, 16
      %v697 = vrot.slane %v695, 7
      %v698 = vshll.u32 %v577, 16
      %v700 = vor.u32 %v697, %v698
      %v701 = vsel %vm600, %v693, %v700
      %v702 = vrot.slane %v697, 4
      %v704 = vshrl.u32 %v578, 16
      %v706 = vrot.slane %v704, 7
      %v707 = vshll.u32 %v578, 16
      %v709 = vor.u32 %v706, %v707
      %v710 = vrot.slane %v706, 4
      %v712 = vshrl.u32 %v579, 16
      %v714 = vrot.slane %v712, 7
      %v715 = vshll.u32 %v579, 16
      %v717 = vor.u32 %v714, %v715
      %v718 = vsel %vm600, %v710, %v717
      %v719 = vrot.slane %v714, 4
      %v721 = vshrl.u32 %v580, 16
      %v723 = vrot.slane %v721, 7
      %v724 = vshll.u32 %v580, 16
      %v726 = vor.u32 %v723, %v724
      %v727 = vrot.slane %v723, 4
      %v729 = vshrl.u32 %v581, 16
      %v731 = vrot.slane %v729, 7
      %v732 = vshll.u32 %v581, 16
      %v734 = vor.u32 %v731, %v732
      %v735 = vsel %vm600, %v727, %v734
      %v736 = vrot.slane %v731, 4
      %v738 = vshrl.u32 %v582, 16
      %v740 = vrot.slane %v738, 7
      %v741 = vshll.u32 %v582, 16
      %v743 = vor.u32 %v740, %v741
      %v744 = vrot.slane %v740, 4
      %v746 = vshrl.u32 %v583, 16
      %v748 = vrot.slane %v746, 7
      %v749 = vshll.u32 %v583, 16
      %v751 = vor.u32 %v748, %v749
      %v752 = vsel %vm600, %v744, %v751
      %v753 = vrot.slane %v748, 4
      %v755 = vshrl.u32 %v584, 16
      %v757 = vrot.slane %v755, 7
      %v758 = vshll.u32 %v584, 16
      %v760 = vor.u32 %v757, %v758
      %v761 = vrot.slane %v757, 4
      %v763 = vshrl.u32 %v585, 16
      %v765 = vrot.slane %v763, 7
      %v766 = vshll.u32 %v585, 16
      %v768 = vor.u32 %v765, %v766
      %v769 = vsel %vm600, %v761, %v768
      %v770 = vrot.slane %v765, 4
      %v772 = vshrl.u32 %v586, 16
      %v774 = vrot.slane %v772, 7
      %v775 = vshll.u32 %v586, 16
      %v777 = vor.u32 %v774, %v775
      %v778 = vrot.slane %v774, 4
      %v780 = vshrl.u32 %v587, 16
      %v782 = vrot.slane %v780, 7
      %v783 = vshll.u32 %v587, 16
      %v785 = vor.u32 %v782, %v783
      %v786 = vsel %vm600, %v778, %v785
      %v787 = vrot.slane %v782, 4
      %v789 = vshrl.u32 %v588, 16
      %v791 = vrot.slane %v789, 7
      %v792 = vshll.u32 %v588, 16
      %v794 = vor.u32 %v791, %v792
      %v795 = vrot.slane %v791, 4
      %v797 = vshrl.u32 %v589, 16
      %v799 = vrot.slane %v797, 7
      %v800 = vshll.u32 %v589, 16
      %v802 = vor.u32 %v799, %v800
      %v803 = vsel %vm600, %v795, %v802
      %v804 = vrot.slane %v799, 4
      %v806 = vshrl.u32 %v590, 16
      %v808 = vrot.slane %v806, 7
      %v809 = vshll.u32 %v590, 16
      %v811 = vor.u32 %v808, %v809
      %v812 = vrot.slane %v808, 4
      %v814 = vshrl.u32 %v591, 16
      %v816 = vrot.slane %v814, 7
      %v817 = vshll.u32 %v591, 16
      %v819 = vor.u32 %v816, %v817
      %v820 = vsel %vm600, %v812, %v819
      %v821 = vrot.slane %v816, 4
      %v823 = vshrl.u32 %v592, 16
      %v825 = vrot.slane %v823, 7
      %v826 = vshll.u32 %v592, 16
      %v828 = vor.u32 %v825, %v826
      %v829 = vrot.slane %v825, 4
      %v831 = vshrl.u32 %v593, 16
      %v833 = vrot.slane %v831, 7
      %v834 = vshll.u32 %v593, 16
      %v836 = vor.u32 %v833, %v834
      %v837 = vsel %vm600, %v829, %v836
      %v838 = vrot.slane %v833, 4
      %v840 = vshrl.u32 %v594, 16
      %v842 = vrot.slane %v840, 7
      %v843 = vshll.u32 %v594, 16
      %v845 = vor.u32 %v842, %v843
      %v846 = vrot.slane %v842, 4
      %v848 = vshrl.u32 %v595, 16
      %v850 = vrot.slane %v848, 7
      %v851 = vshll.u32 %v595, 16
      %v853 = vor.u32 %v850, %v851
      %v854 = vsel %vm600, %v846, %v853
      %v855 = vrot.slane %v850, 4
      %v857 = vshrl.u32 %v596, 16
      %v859 = vrot.slane %v857, 7
      %v860 = vshll.u32 %v596, 16
      %v862 = vor.u32 %v859, %v860
      %v863 = vrot.slane %v859, 4
      %v865 = vshrl.u32 %v597, 16
      %v867 = vrot.slane %v865, 7
      %v868 = vshll.u32 %v597, 16
      %v870 = vor.u32 %v867, %v868
      %v871 = vsel %vm600, %v863, %v870
      %v872 = vrot.slane %v867, 4
      %s921 = scalar_lea.vmem [#allocation2], 12
      %vm922 = vcmask 1043456
      %vm923 = vsmask.f32 7938
      %vm924 = vmand %vm922, %vm923
      %v925 = vld [vmem:[%s921] sm:$0xf]
      %v926 = vsel %vm924, %v607, %v925
      %927 = vst [vmem:[%s921] sm:$0xf] %v926
      %928 = vst [vmem:[%s921 + $0x4] sm:$0xf] %v616
      %vm929 = vcmask 1040384
      %vm930 = vmand %vm929, %vm598
      %v931 = vld [vmem:[%s921 + $0x8] sm:$0x1]
      %v932 = vsel %vm930, %v617, %v931
      %933 = vst [vmem:[%s921 + $0x8] sm:$0x1] %v932
      %v934 = vld [vmem:[%s921 + $0xc] sm:$0xf]
      %v935 = vsel %vm924, %v624, %v934
      %936 = vst [vmem:[%s921 + $0xc] sm:$0xf] %v935
      %937 = vst [vmem:[%s921 + $0x10] sm:$0xf] %v633
      %v938 = vld [vmem:[%s921 + $0x14] sm:$0x1]
      %v939 = vsel %vm930, %v634, %v938
      %940 = vst [vmem:[%s921 + $0x14] sm:$0x1] %v939
      %v941 = vld [vmem:[%s921 + $0x18] sm:$0xf]
      %v942 = vsel %vm924, %v641, %v941
      %943 = vst [vmem:[%s921 + $0x18] sm:$0xf] %v942
      %944 = vst [vmem:[%s921 + $0x1c] sm:$0xf] %v650
      %v945 = vld [vmem:[%s921 + $0x20] sm:$0x1]
      %v946 = vsel %vm930, %v651, %v945
      %947 = vst [vmem:[%s921 + $0x20] sm:$0x1] %v946
      %v948 = vld [vmem:[%s921 + $0x24] sm:$0xf]
      %v949 = vsel %vm924, %v658, %v948
      %950 = vst [vmem:[%s921 + $0x24] sm:$0xf] %v949
      %951 = vst [vmem:[%s921 + $0x28] sm:$0xf] %v667
      %v952 = vld [vmem:[%s921 + $0x2c] sm:$0x1]
      %v953 = vsel %vm930, %v668, %v952
      %954 = vst [vmem:[%s921 + $0x2c] sm:$0x1] %v953
      %v955 = vld [vmem:[%s921 + $0x30] sm:$0xf]
      %v956 = vsel %vm924, %v675, %v955
      %957 = vst [vmem:[%s921 + $0x30] sm:$0xf] %v956
      %958 = vst [vmem:[%s921 + $0x34] sm:$0xf] %v684
      %v959 = vld [vmem:[%s921 + $0x38] sm:$0x1]
      %v960 = vsel %vm930, %v685, %v959
      %961 = vst [vmem:[%s921 + $0x38] sm:$0x1] %v960
      %v962 = vld [vmem:[%s921 + $0x3c] sm:$0xf]
      %v963 = vsel %vm924, %v692, %v962
      %964 = vst [vmem:[%s921 + $0x3c] sm:$0xf] %v963
      %965 = vst [vmem:[%s921 + $0x40] sm:$0xf] %v701
      %v966 = vld [vmem:[%s921 + $0x44] sm:$0x1]
      %v967 = vsel %vm930, %v702, %v966
      %968 = vst [vmem:[%s921 + $0x44] sm:$0x1] %v967
      %v969 = vld [vmem:[%s921 + $0x48] sm:$0xf]
      %v970 = vsel %vm924, %v709, %v969
      %971 = vst [vmem:[%s921 + $0x48] sm:$0xf] %v970
      %972 = vst [vmem:[%s921 + $0x4c] sm:$0xf] %v718
      %v973 = vld [vmem:[%s921 + $0x50] sm:$0x1]
      %v974 = vsel %vm930, %v719, %v973
      %975 = vst [vmem:[%s921 + $0x50] sm:$0x1] %v974
      %v976 = vld [vmem:[%s921 + $0x54] sm:$0xf]
      %v977 = vsel %vm924, %v726, %v976
      %978 = vst [vmem:[%s921 + $0x54] sm:$0xf] %v977
      %979 = vst [vmem:[%s921 + $0x58] sm:$0xf] %v735
      %v980 = vld [vmem:[%s921 + $0x5c] sm:$0x1]
      %v981 = vsel %vm930, %v736, %v980
      %982 = vst [vmem:[%s921 + $0x5c] sm:$0x1] %v981
      %v983 = vld [vmem:[%s921 + $0x60] sm:$0xf]
      %v984 = vsel %vm924, %v743, %v983
      %985 = vst [vmem:[%s921 + $0x60] sm:$0xf] %v984
      %986 = vst [vmem:[%s921 + $0x64] sm:$0xf] %v752
      %v987 = vld [vmem:[%s921 + $0x68] sm:$0x1]
      %v988 = vsel %vm930, %v753, %v987
      %989 = vst [vmem:[%s921 + $0x68] sm:$0x1] %v988
      %v990 = vld [vmem:[%s921 + $0x6c] sm:$0xf]
      %v991 = vsel %vm924, %v760, %v990
      %992 = vst [vmem:[%s921 + $0x6c] sm:$0xf] %v991
      %993 = vst [vmem:[%s921 + $0x70] sm:$0xf] %v769
      %v994 = vld [vmem:[%s921 + $0x74] sm:$0x1]
      %v995 = vsel %vm930, %v770, %v994
      %996 = vst [vmem:[%s921 + $0x74] sm:$0x1] %v995
      %v997 = vld [vmem:[%s921 + $0x78] sm:$0xf]
      %v998 = vsel %vm924, %v777, %v997
      %999 = vst [vmem:[%s921 + $0x78] sm:$0xf] %v998
      %1000 = vst [vmem:[%s921 + $0x7c] sm:$0xf] %v786
      %v1001 = vld [vmem:[%s921 + $0x80] sm:$0x1]
      %v1002 = vsel %vm930, %v787, %v1001
      %1003 = vst [vmem:[%s921 + $0x80] sm:$0x1] %v1002
      %v1004 = vld [vmem:[%s921 + $0x84] sm:$0xf]
      %v1005 = vsel %vm924, %v794, %v1004
      %1006 = vst [vmem:[%s921 + $0x84] sm:$0xf] %v1005
      %1007 = vst [vmem:[%s921 + $0x88] sm:$0xf] %v803
      %v1008 = vld [vmem:[%s921 + $0x8c] sm:$0x1]
      %v1009 = vsel %vm930, %v804, %v1008
      %1010 = vst [vmem:[%s921 + $0x8c] sm:$0x1] %v1009
      %v1011 = vld [vmem:[%s921 + $0x90] sm:$0xf]
      %v1012 = vsel %vm924, %v811, %v1011
      %1013 = vst [vmem:[%s921 + $0x90] sm:$0xf] %v1012
      %1014 = vst [vmem:[%s921 + $0x94] sm:$0xf] %v820
      %v1015 = vld [vmem:[%s921 + $0x98] sm:$0x1]
      %v1016 = vsel %vm930, %v821, %v1015
      %1017 = vst [vmem:[%s921 + $0x98] sm:$0x1] %v1016
      %v1018 = vld [vmem:[%s921 + $0x9c] sm:$0xf]
      %v1019 = vsel %vm924, %v828, %v1018
      %1020 = vst [vmem:[%s921 + $0x9c] sm:$0xf] %v1019
      %1021 = vst [vmem:[%s921 + $0xa0] sm:$0xf] %v837
      %v1022 = vld [vmem:[%s921 + $0xa4] sm:$0x1]
      %v1023 = vsel %vm930, %v838, %v1022
      %1024 = vst [vmem:[%s921 + $0xa4] sm:$0x1] %v1023
      %v1025 = vld [vmem:[%s921 + $0xa8] sm:$0xf]
      %v1026 = vsel %vm924, %v845, %v1025
      %1027 = vst [vmem:[%s921 + $0xa8] sm:$0xf] %v1026
      %1028 = vst [vmem:[%s921 + $0xac] sm:$0xf] %v854
      %v1029 = vld [vmem:[%s921 + $0xb0] sm:$0x1]
      %v1030 = vsel %vm930, %v855, %v1029
      %1031 = vst [vmem:[%s921 + $0xb0] sm:$0x1] %v1030
      %v1032 = vld [vmem:[%s921 + $0xb4] sm:$0xf]
      %v1033 = vsel %vm924, %v862, %v1032
      %1034 = vst [vmem:[%s921 + $0xb4] sm:$0xf] %v1033
      %1035 = vst [vmem:[%s921 + $0xb8] sm:$0xf] %v871
      %v1036 = vld [vmem:[%s921 + $0xbc] sm:$0x1]
      %v1037 = vsel %vm930, %v872, %v1036
      %1038 = vst [vmem:[%s921 + $0xbc] sm:$0x1] %v1037
      %p1039 = scmp.gt.s32.totalorder %s22, 0
      // Predicated region
      $region37: #{vgg_block.4} parent=35 // pred_check
        %p1040 = pneg %p1039
      $region38: #{vgg_block.4} parent=35 // pred_check_branch
        %1042 = sbr.rel (%p1040) target = $region40
      $region39: #{vgg_block.4} parent=35 // pred_region
        %s1043 = ssub.s32 %s270, 1
        %s1044 = smul.u32 %s1043, 2
        %s1045 = smul.addr %s1044, 4
        %s1046 = scalar_lea.vmem %s250, %s1045
        %v1047 = vld [vmem:[%s1046] sm:$0xf]
        %v1048 = vld [vmem:[%s1046 + $0x4] sm:$0xf]
        %v1049 = vunpack.c.l.bf16 %v1047
        %v1050 = vunpack.c.l.bf16 %v1048
        %v1051 = vmul.f32 %v1049, %v398
        %v1052 = vmul.f32 %v1050, %v398
        %v1053 = vadd.f32 %v1051, %v436
        %v1054 = vadd.f32 %v1052, %v436
        %v1055 = vmax.f32 %v1053, 0.0
        %v1056 = vmax.f32 %v1054, 0.0
        %v1057 = vpack.c.bf16 %v1056, %v1055
        %v1059 = vunpack.c.l.b16 %v1057
        %v1060 = vunpack.c.h.b16 %v1057
        %v1061 = vpack.c.b16 %v1059, %v1059
        %v1062 = vpack.c.b16 %v1060, %v1060
        %v1064 = vshrl.u32 %v1061, 16
        %v1066 = vrot.slane %v1064, 7
        %v1067 = vshll.u32 %v1061, 16
        %v1069 = vor.u32 %v1066, %v1067
        %v1070 = vrot.slane %v1066, 4
        %v1072 = vshrl.u32 %v1062, 16
        %v1074 = vrot.slane %v1072, 7
        %v1075 = vshll.u32 %v1062, 16
        %v1077 = vor.u32 %v1074, %v1075
        %v1078 = vsel %vm600, %v1070, %v1077
        %v1079 = vrot.slane %v1074, 4
        %v1083 = vld [vmem:[#allocation2] sm:$0xf]
        %v1084 = vsel %vm924, %v1069, %v1083
        %1085 = vst [vmem:[#allocation2] sm:$0xf] %v1084
        %1086 = vst [vmem:[#allocation2 + $0x4] sm:$0xf] %v1078
        %v1087 = vld [vmem:[#allocation2 + $0x8] sm:$0x1]
        %v1088 = vsel %vm930, %v1079, %v1087
        %1089 = vst [vmem:[#allocation2 + $0x8] sm:$0x1] %v1088
      $region40: #{vgg_block.4} parent=35 // pred_fallthru
        _
      %p1090 = scmp.lt.s32.totalorder %s22, 0
      // Predicated region
      $region41: #{vgg_block.4} parent=35 // pred_check
        %p1091 = pneg %p1090
      $region42: #{vgg_block.4} parent=35 // pred_check_branch
        %1093 = sbr.rel (%p1091) target = $region44
      $region43: #{vgg_block.4} parent=35 // pred_region
        %s1094 = sadd.s32 %s270, 16
        %s1095 = smul.u32 %s1094, 2
        %s1096 = smul.addr %s1095, 4
        %s1097 = scalar_lea.vmem %s250, %s1096
        %v1098 = vld [vmem:[%s1097] sm:$0xf]
        %v1099 = vld [vmem:[%s1097 + $0x4] sm:$0xf]
        %v1100 = vunpack.c.l.bf16 %v1098
        %v1101 = vunpack.c.l.bf16 %v1099
        %v1102 = vmul.f32 %v1100, %v398
        %v1103 = vmul.f32 %v1101, %v398
        %v1104 = vadd.f32 %v1102, %v436
        %v1105 = vadd.f32 %v1103, %v436
        %v1106 = vmax.f32 %v1104, 0.0
        %v1107 = vmax.f32 %v1105, 0.0
        %v1108 = vpack.c.bf16 %v1107, %v1106
        %v1110 = vunpack.c.l.b16 %v1108
        %v1111 = vunpack.c.h.b16 %v1108
        %v1112 = vpack.c.b16 %v1110, %v1110
        %v1113 = vpack.c.b16 %v1111, %v1111
        %v1115 = vshrl.u32 %v1112, 16
        %v1117 = vrot.slane %v1115, 7
        %v1118 = vshll.u32 %v1112, 16
        %v1120 = vor.u32 %v1117, %v1118
        %v1121 = vrot.slane %v1117, 4
        %v1123 = vshrl.u32 %v1113, 16
        %v1125 = vrot.slane %v1123, 7
        %v1126 = vshll.u32 %v1113, 16
        %v1128 = vor.u32 %v1125, %v1126
        %v1129 = vsel %vm600, %v1121, %v1128
        %v1130 = vrot.slane %v1125, 4
        %s1134 = scalar_lea.vmem [#allocation2], 204
        %v1135 = vld [vmem:[%s1134] sm:$0xf]
        %v1136 = vsel %vm924, %v1120, %v1135
        %1137 = vst [vmem:[%s1134] sm:$0xf] %v1136
        %1138 = vst [vmem:[%s1134 + $0x4] sm:$0xf] %v1129
        %v1139 = vld [vmem:[%s1134 + $0x8] sm:$0x1]
        %v1140 = vsel %vm930, %v1130, %v1139
        %1141 = vst [vmem:[%s1134 + $0x8] sm:$0x1] %v1140
      $region44: #{vgg_block.4} parent=35 // pred_fallthru
        _
      %v1142 = vld [vmem:[#allocation2] sm:$0xf]
      %v1143 = vld [vmem:[#allocation2 + $0x4] sm:$0xf]
      %v1144 = vld [vmem:[#allocation2 + $0xc] sm:$0xf]
      %v1145 = vld [vmem:[#allocation2 + $0x10] sm:$0xf]
      %v1146 = vld [vmem:[#allocation2 + $0x18] sm:$0xf]
      %v1147 = vld [vmem:[#allocation2 + $0x1c] sm:$0xf]
      %v1148 = vld [vmem:[#allocation2 + $0x24] sm:$0xf]
      %v1149 = vld [vmem:[#allocation2 + $0x28] sm:$0xf]
      %v1150 = vld [vmem:[#allocation2 + $0x30] sm:$0xf]
      %v1151 = vld [vmem:[#allocation2 + $0x34] sm:$0xf]
      %v1152 = vld [vmem:[#allocation2 + $0x3c] sm:$0xf]
      %v1153 = vld [vmem:[#allocation2 + $0x40] sm:$0xf]
      %v1154 = vld [vmem:[#allocation2 + $0x48] sm:$0xf]
      %v1155 = vld [vmem:[#allocation2 + $0x4c] sm:$0xf]
      %v1156 = vld [vmem:[#allocation2 + $0x54] sm:$0xf]
      %v1157 = vld [vmem:[#allocation2 + $0x58] sm:$0xf]
      %v1158 = vld [vmem:[#allocation2 + $0x60] sm:$0xf]
      %v1159 = vld [vmem:[#allocation2 + $0x64] sm:$0xf]
      %v1160 = vld [vmem:[#allocation2 + $0x6c] sm:$0xf]
      %v1161 = vld [vmem:[#allocation2 + $0x70] sm:$0xf]
      %v1162 = vld [vmem:[#allocation2 + $0x78] sm:$0xf]
      %v1163 = vld [vmem:[#allocation2 + $0x7c] sm:$0xf]
      %v1164 = vld [vmem:[#allocation2 + $0x84] sm:$0xf]
      %v1165 = vld [vmem:[#allocation2 + $0x88] sm:$0xf]
      %v1166 = vld [vmem:[#allocation2 + $0x90] sm:$0xf]
      %v1167 = vld [vmem:[#allocation2 + $0x94] sm:$0xf]
      %v1168 = vld [vmem:[#allocation2 + $0x9c] sm:$0xf]
      %v1169 = vld [vmem:[#allocation2 + $0xa0] sm:$0xf]
      %v1170 = vld [vmem:[#allocation2 + $0xa8] sm:$0xf]
      %v1171 = vld [vmem:[#allocation2 + $0xac] sm:$0xf]
      %v1172 = vld [vmem:[#allocation2 + $0xb4] sm:$0xf]
      %v1173 = vld [vmem:[#allocation2 + $0xb8] sm:$0xf]
      %1174 = vst [vmem:[#allocation3] sm:$0xf] %v1142
      %1175 = vst [vmem:[#allocation3 + $0x24] sm:$0xf] %v1143
      %1176 = vst [vmem:[#allocation3 + $0x48] sm:$0xf] %v1144
      %1177 = vst [vmem:[#allocation3 + $0x6c] sm:$0xf] %v1145
      %1178 = vst [vmem:[#allocation3 + $0x90] sm:$0xf] %v1146
      %1179 = vst [vmem:[#allocation3 + $0xb4] sm:$0xf] %v1147
      %1180 = vst [vmem:[#allocation3 + $0xd8] sm:$0xf] %v1148
      %1181 = vst [vmem:[#allocation3 + $0xfc] sm:$0xf] %v1149
      %1182 = vst [vmem:[#allocation3 + $0x120] sm:$0xf] %v1150
      %1183 = vst [vmem:[#allocation3 + $0x144] sm:$0xf] %v1151
      %1184 = vst [vmem:[#allocation3 + $0x168] sm:$0xf] %v1152
      %1185 = vst [vmem:[#allocation3 + $0x18c] sm:$0xf] %v1153
      %1186 = vst [vmem:[#allocation3 + $0x1b0] sm:$0xf] %v1154
      %1187 = vst [vmem:[#allocation3 + $0x1d4] sm:$0xf] %v1155
      %1188 = vst [vmem:[#allocation3 + $0x1f8] sm:$0xf] %v1156
      %1189 = vst [vmem:[#allocation3 + $0x21c] sm:$0xf] %v1157
      %1190 = vst [vmem:[#allocation3 + $0x240] sm:$0xf] %v1158
      %1191 = vst [vmem:[#allocation3 + $0x264] sm:$0xf] %v1159
      %1192 = vst [vmem:[#allocation3 + $0x288] sm:$0xf] %v1160
      %1193 = vst [vmem:[#allocation3 + $0x2ac] sm:$0xf] %v1161
      %1194 = vst [vmem:[#allocation3 + $0x2d0] sm:$0xf] %v1162
      %1195 = vst [vmem:[#allocation3 + $0x2f4] sm:$0xf] %v1163
      %1196 = vst [vmem:[#allocation3 + $0x318] sm:$0xf] %v1164
      %1197 = vst [vmem:[#allocation3 + $0x33c] sm:$0xf] %v1165
      %1198 = vst [vmem:[#allocation3 + $0x360] sm:$0xf] %v1166
      %1199 = vst [vmem:[#allocation3 + $0x384] sm:$0xf] %v1167
      %1200 = vst [vmem:[#allocation3 + $0x3a8] sm:$0xf] %v1168
      %1201 = vst [vmem:[#allocation3 + $0x3cc] sm:$0xf] %v1169
      %1202 = vst [vmem:[#allocation3 + $0x3f0] sm:$0xf] %v1170
      %1203 = vst [vmem:[#allocation3 + $0x414] sm:$0xf] %v1171
      %1204 = vst [vmem:[#allocation3 + $0x438] sm:$0xf] %v1172
      %1205 = vst [vmem:[#allocation3 + $0x45c] sm:$0xf] %v1173
      %v1206 = vld [vmem:[#allocation2] sm:$0xf]
      %v1207 = vld [vmem:[#allocation2 + $0x4] sm:$0xf]
      %v1208 = vld [vmem:[#allocation2 + $0x8] sm:$0x1]
      %v1209 = vld [vmem:[#allocation2 + $0xc] sm:$0xf]
      %v1210 = vld [vmem:[#allocation2 + $0x10] sm:$0xf]
      %v1211 = vld [vmem:[#allocation2 + $0x14] sm:$0x1]
      %v1212 = vld [vmem:[#allocation2 + $0x18] sm:$0xf]
      %v1213 = vld [vmem:[#allocation2 + $0x1c] sm:$0xf]
      %v1214 = vld [vmem:[#allocation2 + $0x20] sm:$0x1]
      %v1215 = vld [vmem:[#allocation2 + $0x24] sm:$0xf]
      %v1216 = vld [vmem:[#allocation2 + $0x28] sm:$0xf]
      %v1217 = vld [vmem:[#allocation2 + $0x2c] sm:$0x1]
      %v1218 = vld [vmem:[#allocation2 + $0x30] sm:$0xf]
      %v1219 = vld [vmem:[#allocation2 + $0x34] sm:$0xf]
      %v1220 = vld [vmem:[#allocation2 + $0x38] sm:$0x1]
      %v1221 = vld [vmem:[#allocation2 + $0x3c] sm:$0xf]
      %v1222 = vld [vmem:[#allocation2 + $0x40] sm:$0xf]
      %v1223 = vld [vmem:[#allocation2 + $0x44] sm:$0x1]
      %v1224 = vld [vmem:[#allocation2 + $0x48] sm:$0xf]
      %v1225 = vld [vmem:[#allocation2 + $0x4c] sm:$0xf]
      %v1226 = vld [vmem:[#allocation2 + $0x50] sm:$0x1]
      %v1227 = vld [vmem:[#allocation2 + $0x54] sm:$0xf]
      %v1228 = vld [vmem:[#allocation2 + $0x58] sm:$0xf]
      %v1229 = vld [vmem:[#allocation2 + $0x5c] sm:$0x1]
      %v1230 = vld [vmem:[#allocation2 + $0x60] sm:$0xf]
      %v1231 = vld [vmem:[#allocation2 + $0x64] sm:$0xf]
      %v1232 = vld [vmem:[#allocation2 + $0x68] sm:$0x1]
      %v1233 = vld [vmem:[#allocation2 + $0x6c] sm:$0xf]
      %v1234 = vld [vmem:[#allocation2 + $0x70] sm:$0xf]
      %v1235 = vld [vmem:[#allocation2 + $0x74] sm:$0x1]
      %v1236 = vld [vmem:[#allocation2 + $0x78] sm:$0xf]
      %v1237 = vld [vmem:[#allocation2 + $0x7c] sm:$0xf]
      %v1238 = vld [vmem:[#allocation2 + $0x80] sm:$0x1]
      %v1239 = vld [vmem:[#allocation2 + $0x84] sm:$0xf]
      %v1240 = vld [vmem:[#allocation2 + $0x88] sm:$0xf]
      %v1241 = vld [vmem:[#allocation2 + $0x8c] sm:$0x1]
      %v1242 = vld [vmem:[#allocation2 + $0x90] sm:$0xf]
      %v1243 = vld [vmem:[#allocation2 + $0x94] sm:$0xf]
      %v1244 = vld [vmem:[#allocation2 + $0x98] sm:$0x1]
      %v1245 = vld [vmem:[#allocation2 + $0x9c] sm:$0xf]
      %v1246 = vld [vmem:[#allocation2 + $0xa0] sm:$0xf]
      %v1247 = vld [vmem:[#allocation2 + $0xa4] sm:$0x1]
      %v1248 = vld [vmem:[#allocation2 + $0xa8] sm:$0xf]
      %v1249 = vld [vmem:[#allocation2 + $0xac] sm:$0xf]
      %v1250 = vld [vmem:[#allocation2 + $0xb0] sm:$0x1]
      %v1251 = vld [vmem:[#allocation2 + $0xb4] sm:$0xf]
      %v1252 = vld [vmem:[#allocation2 + $0xb8] sm:$0xf]
      %v1253 = vld [vmem:[#allocation2 + $0xbc] sm:$0x1]
      %vm1254 = vsmask.f32 3328
      %vm1255 = vsmask.f32 7440
      %vm1256 = vmor %vm1254, %vm1255
      %v1258 = vshrl.u32 %v1206, 16
      %v1260 = vrot.slane %v1258, 4
      %v1261 = vshll.u32 %v1206, 16
      %v1263 = vrot.slane %v1261, 5
      %v1264 = vor.u32 %v1260, %v1263
      %v1265 = vrot.slane %v1264, 4
      %v1267 = vshll.u32 %v1207, 16
      %v1269 = vrot.slane %v1267, 5
      %v1270 = vsel %vm1256, %v1265, %v1269
      %v1271 = vshrl.u32 %v1207, 16
      %v1273 = vrot.slane %v1271, 4
      %v1274 = vor.u32 %v1273, %v1269
      %v1275 = vrot.slane %v1274, 4
      %v1277 = vshll.u32 %v1208, 16
      %v1279 = vrot.slane %v1277, 5
      %v1280 = vsel %vm1256, %v1275, %v1279
      %v1282 = vshrl.u32 %v1209, 16
      %v1284 = vrot.slane %v1282, 4
      %v1285 = vshll.u32 %v1209, 16
      %v1287 = vrot.slane %v1285, 5
      %v1288 = vor.u32 %v1284, %v1287
      %v1289 = vrot.slane %v1288, 4
      %v1291 = vshll.u32 %v1210, 16
      %v1293 = vrot.slane %v1291, 5
      %v1294 = vsel %vm1256, %v1289, %v1293
      %v1295 = vshrl.u32 %v1210, 16
      %v1297 = vrot.slane %v1295, 4
      %v1298 = vor.u32 %v1297, %v1293
      %v1299 = vrot.slane %v1298, 4
      %v1301 = vshll.u32 %v1211, 16
      %v1303 = vrot.slane %v1301, 5
      %v1304 = vsel %vm1256, %v1299, %v1303
      %v1306 = vshrl.u32 %v1212, 16
      %v1308 = vrot.slane %v1306, 4
      %v1309 = vshll.u32 %v1212, 16
      %v1311 = vrot.slane %v1309, 5
      %v1312 = vor.u32 %v1308, %v1311
      %v1313 = vrot.slane %v1312, 4
      %v1315 = vshll.u32 %v1213, 16
      %v1317 = vrot.slane %v1315, 5
      %v1318 = vsel %vm1256, %v1313, %v1317
      %v1319 = vshrl.u32 %v1213, 16
      %v1321 = vrot.slane %v1319, 4
      %v1322 = vor.u32 %v1321, %v1317
      %v1323 = vrot.slane %v1322, 4
      %v1325 = vshll.u32 %v1214, 16
      %v1327 = vrot.slane %v1325, 5
      %v1328 = vsel %vm1256, %v1323, %v1327
      %v1330 = vshrl.u32 %v1215, 16
      %v1332 = vrot.slane %v1330, 4
      %v1333 = vshll.u32 %v1215, 16
      %v1335 = vrot.slane %v1333, 5
      %v1336 = vor.u32 %v1332, %v1335
      %v1337 = vrot.slane %v1336, 4
      %v1339 = vshll.u32 %v1216, 16
      %v1341 = vrot.slane %v1339, 5
      %v1342 = vsel %vm1256, %v1337, %v1341
      %v1343 = vshrl.u32 %v1216, 16
      %v1345 = vrot.slane %v1343, 4
      %v1346 = vor.u32 %v1345, %v1341
      %v1347 = vrot.slane %v1346, 4
      %v1349 = vshll.u32 %v1217, 16
      %v1351 = vrot.slane %v1349, 5
      %v1352 = vsel %vm1256, %v1347, %v1351
      %v1354 = vshrl.u32 %v1218, 16
      %v1356 = vrot.slane %v1354, 4
      %v1357 = vshll.u32 %v1218, 16
      %v1359 = vrot.slane %v1357, 5
      %v1360 = vor.u32 %v1356, %v1359
      %v1361 = vrot.slane %v1360, 4
      %v1363 = vshll.u32 %v1219, 16
      %v1365 = vrot.slane %v1363, 5
      %v1366 = vsel %vm1256, %v1361, %v1365
      %v1367 = vshrl.u32 %v1219, 16
      %v1369 = vrot.slane %v1367, 4
      %v1370 = vor.u32 %v1369, %v1365
      %v1371 = vrot.slane %v1370, 4
      %v1373 = vshll.u32 %v1220, 16
      %v1375 = vrot.slane %v1373, 5
      %v1376 = vsel %vm1256, %v1371, %v1375
      %v1378 = vshrl.u32 %v1221, 16
      %v1380 = vrot.slane %v1378, 4
      %v1381 = vshll.u32 %v1221, 16
      %v1383 = vrot.slane %v1381, 5
      %v1384 = vor.u32 %v1380, %v1383
      %v1385 = vrot.slane %v1384, 4
      %v1387 = vshll.u32 %v1222, 16
      %v1389 = vrot.slane %v1387, 5
      %v1390 = vsel %vm1256, %v1385, %v1389
      %v1391 = vshrl.u32 %v1222, 16
      %v1393 = vrot.slane %v1391, 4
      %v1394 = vor.u32 %v1393, %v1389
      %v1395 = vrot.slane %v1394, 4
      %v1397 = vshll.u32 %v1223, 16
      %v1399 = vrot.slane %v1397, 5
      %v1400 = vsel %vm1256, %v1395, %v1399
      %v1402 = vshrl.u32 %v1224, 16
      %v1404 = vrot.slane %v1402, 4
      %v1405 = vshll.u32 %v1224, 16
      %v1407 = vrot.slane %v1405, 5
      %v1408 = vor.u32 %v1404, %v1407
      %v1409 = vrot.slane %v1408, 4
      %v1411 = vshll.u32 %v1225, 16
      %v1413 = vrot.slane %v1411, 5
      %v1414 = vsel %vm1256, %v1409, %v1413
      %v1415 = vshrl.u32 %v1225, 16
      %v1417 = vrot.slane %v1415, 4
      %v1418 = vor.u32 %v1417, %v1413
      %v1419 = vrot.slane %v1418, 4
      %v1421 = vshll.u32 %v1226, 16
      %v1423 = vrot.slane %v1421, 5
      %v1424 = vsel %vm1256, %v1419, %v1423
      %v1426 = vshrl.u32 %v1227, 16
      %v1428 = vrot.slane %v1426, 4
      %v1429 = vshll.u32 %v1227, 16
      %v1431 = vrot.slane %v1429, 5
      %v1432 = vor.u32 %v1428, %v1431
      %v1433 = vrot.slane %v1432, 4
      %v1435 = vshll.u32 %v1228, 16
      %v1437 = vrot.slane %v1435, 5
      %v1438 = vsel %vm1256, %v1433, %v1437
      %v1439 = vshrl.u32 %v1228, 16
      %v1441 = vrot.slane %v1439, 4
      %v1442 = vor.u32 %v1441, %v1437
      %v1443 = vrot.slane %v1442, 4
      %v1445 = vshll.u32 %v1229, 16
      %v1447 = vrot.slane %v1445, 5
      %v1448 = vsel %vm1256, %v1443, %v1447
      %v1450 = vshrl.u32 %v1230, 16
      %v1452 = vrot.slane %v1450, 4
      %v1453 = vshll.u32 %v1230, 16
      %v1455 = vrot.slane %v1453, 5
      %v1456 = vor.u32 %v1452, %v1455
      %v1457 = vrot.slane %v1456, 4
      %v1459 = vshll.u32 %v1231, 16
      %v1461 = vrot.slane %v1459, 5
      %v1462 = vsel %vm1256, %v1457, %v1461
      %v1463 = vshrl.u32 %v1231, 16
      %v1465 = vrot.slane %v1463, 4
      %v1466 = vor.u32 %v1465, %v1461
      %v1467 = vrot.slane %v1466, 4
      %v1469 = vshll.u32 %v1232, 16
      %v1471 = vrot.slane %v1469, 5
      %v1472 = vsel %vm1256, %v1467, %v1471
      %v1474 = vshrl.u32 %v1233, 16
      %v1476 = vrot.slane %v1474, 4
      %v1477 = vshll.u32 %v1233, 16
      %v1479 = vrot.slane %v1477, 5
      %v1480 = vor.u32 %v1476, %v1479
      %v1481 = vrot.slane %v1480, 4
      %v1483 = vshll.u32 %v1234, 16
      %v1485 = vrot.slane %v1483, 5
      %v1486 = vsel %vm1256, %v1481, %v1485
      %v1487 = vshrl.u32 %v1234, 16
      %v1489 = vrot.slane %v1487, 4
      %v1490 = vor.u32 %v1489, %v1485
      %v1491 = vrot.slane %v1490, 4
      %v1493 = vshll.u32 %v1235, 16
      %v1495 = vrot.slane %v1493, 5
      %v1496 = vsel %vm1256, %v1491, %v1495
      %v1498 = vshrl.u32 %v1236, 16
      %v1500 = vrot.slane %v1498, 4
      %v1501 = vshll.u32 %v1236, 16
      %v1503 = vrot.slane %v1501, 5
      %v1504 = vor.u32 %v1500, %v1503
      %v1505 = vrot.slane %v1504, 4
      %v1507 = vshll.u32 %v1237, 16
      %v1509 = vrot.slane %v1507, 5
      %v1510 = vsel %vm1256, %v1505, %v1509
      %v1511 = vshrl.u32 %v1237, 16
      %v1513 = vrot.slane %v1511, 4
      %v1514 = vor.u32 %v1513, %v1509
      %v1515 = vrot.slane %v1514, 4
      %v1517 = vshll.u32 %v1238, 16
      %v1519 = vrot.slane %v1517, 5
      %v1520 = vsel %vm1256, %v1515, %v1519
      %v1522 = vshrl.u32 %v1239, 16
      %v1524 = vrot.slane %v1522, 4
      %v1525 = vshll.u32 %v1239, 16
      %v1527 = vrot.slane %v1525, 5
      %v1528 = vor.u32 %v1524, %v1527
      %v1529 = vrot.slane %v1528, 4
      %v1531 = vshll.u32 %v1240, 16
      %v1533 = vrot.slane %v1531, 5
      %v1534 = vsel %vm1256, %v1529, %v1533
      %v1535 = vshrl.u32 %v1240, 16
      %v1537 = vrot.slane %v1535, 4
      %v1538 = vor.u32 %v1537, %v1533
      %v1539 = vrot.slane %v1538, 4
      %v1541 = vshll.u32 %v1241, 16
      %v1543 = vrot.slane %v1541, 5
      %v1544 = vsel %vm1256, %v1539, %v1543
      %v1546 = vshrl.u32 %v1242, 16
      %v1548 = vrot.slane %v1546, 4
      %v1549 = vshll.u32 %v1242, 16
      %v1551 = vrot.slane %v1549, 5
      %v1552 = vor.u32 %v1548, %v1551
      %v1553 = vrot.slane %v1552, 4
      %v1555 = vshll.u32 %v1243, 16
      %v1557 = vrot.slane %v1555, 5
      %v1558 = vsel %vm1256, %v1553, %v1557
      %v1559 = vshrl.u32 %v1243, 16
      %v1561 = vrot.slane %v1559, 4
      %v1562 = vor.u32 %v1561, %v1557
      %v1563 = vrot.slane %v1562, 4
      %v1565 = vshll.u32 %v1244, 16
      %v1567 = vrot.slane %v1565, 5
      %v1568 = vsel %vm1256, %v1563, %v1567
      %v1570 = vshrl.u32 %v1245, 16
      %v1572 = vrot.slane %v1570, 4
      %v1573 = vshll.u32 %v1245, 16
      %v1575 = vrot.slane %v1573, 5
      %v1576 = vor.u32 %v1572, %v1575
      %v1577 = vrot.slane %v1576, 4
      %v1579 = vshll.u32 %v1246, 16
      %v1581 = vrot.slane %v1579, 5
      %v1582 = vsel %vm1256, %v1577, %v1581
      %v1583 = vshrl.u32 %v1246, 16
      %v1585 = vrot.slane %v1583, 4
      %v1586 = vor.u32 %v1585, %v1581
      %v1587 = vrot.slane %v1586, 4
      %v1589 = vshll.u32 %v1247, 16
      %v1591 = vrot.slane %v1589, 5
      %v1592 = vsel %vm1256, %v1587, %v1591
      %v1594 = vshrl.u32 %v1248, 16
      %v1596 = vrot.slane %v1594, 4
      %v1597 = vshll.u32 %v1248, 16
      %v1599 = vrot.slane %v1597, 5
      %v1600 = vor.u32 %v1596, %v1599
      %v1601 = vrot.slane %v1600, 4
      %v1603 = vshll.u32 %v1249, 16
      %v1605 = vrot.slane %v1603, 5
      %v1606 = vsel %vm1256, %v1601, %v1605
      %v1607 = vshrl.u32 %v1249, 16
      %v1609 = vrot.slane %v1607, 4
      %v1610 = vor.u32 %v1609, %v1605
      %v1611 = vrot.slane %v1610, 4
      %v1613 = vshll.u32 %v1250, 16
      %v1615 = vrot.slane %v1613, 5
      %v1616 = vsel %vm1256, %v1611, %v1615
      %v1618 = vshrl.u32 %v1251, 16
      %v1620 = vrot.slane %v1618, 4
      %v1621 = vshll.u32 %v1251, 16
      %v1623 = vrot.slane %v1621, 5
      %v1624 = vor.u32 %v1620, %v1623
      %v1625 = vrot.slane %v1624, 4
      %v1627 = vshll.u32 %v1252, 16
      %v1629 = vrot.slane %v1627, 5
      %v1630 = vsel %vm1256, %v1625, %v1629
      %v1631 = vshrl.u32 %v1252, 16
      %v1633 = vrot.slane %v1631, 4
      %v1634 = vor.u32 %v1633, %v1629
      %v1635 = vrot.slane %v1634, 4
      %v1637 = vshll.u32 %v1253, 16
      %v1639 = vrot.slane %v1637, 5
      %v1640 = vsel %vm1256, %v1635, %v1639
      %1673 = vst [vmem:[#allocation3 + $0x4] sm:$0xf] %v1270
      %1674 = vst [vmem:[#allocation3 + $0x28] sm:$0xf] %v1280
      %1675 = vst [vmem:[#allocation3 + $0x4c] sm:$0xf] %v1294
      %1676 = vst [vmem:[#allocation3 + $0x70] sm:$0xf] %v1304
      %1677 = vst [vmem:[#allocation3 + $0x94] sm:$0xf] %v1318
      %1678 = vst [vmem:[#allocation3 + $0xb8] sm:$0xf] %v1328
      %1679 = vst [vmem:[#allocation3 + $0xdc] sm:$0xf] %v1342
      %1680 = vst [vmem:[#allocation3 + $0x100] sm:$0xf] %v1352
      %1681 = vst [vmem:[#allocation3 + $0x124] sm:$0xf] %v1366
      %1682 = vst [vmem:[#allocation3 + $0x148] sm:$0xf] %v1376
      %1683 = vst [vmem:[#allocation3 + $0x16c] sm:$0xf] %v1390
      %1684 = vst [vmem:[#allocation3 + $0x190] sm:$0xf] %v1400
      %1685 = vst [vmem:[#allocation3 + $0x1b4] sm:$0xf] %v1414
      %1686 = vst [vmem:[#allocation3 + $0x1d8] sm:$0xf] %v1424
      %1687 = vst [vmem:[#allocation3 + $0x1fc] sm:$0xf] %v1438
      %1688 = vst [vmem:[#allocation3 + $0x220] sm:$0xf] %v1448
      %1689 = vst [vmem:[#allocation3 + $0x244] sm:$0xf] %v1462
      %1690 = vst [vmem:[#allocation3 + $0x268] sm:$0xf] %v1472
      %1691 = vst [vmem:[#allocation3 + $0x28c] sm:$0xf] %v1486
      %1692 = vst [vmem:[#allocation3 + $0x2b0] sm:$0xf] %v1496
      %1693 = vst [vmem:[#allocation3 + $0x2d4] sm:$0xf] %v1510
      %1694 = vst [vmem:[#allocation3 + $0x2f8] sm:$0xf] %v1520
      %1695 = vst [vmem:[#allocation3 + $0x31c] sm:$0xf] %v1534
      %1696 = vst [vmem:[#allocation3 + $0x340] sm:$0xf] %v1544
      %1697 = vst [vmem:[#allocation3 + $0x364] sm:$0xf] %v1558
      %1698 = vst [vmem:[#allocation3 + $0x388] sm:$0xf] %v1568
      %1699 = vst [vmem:[#allocation3 + $0x3ac] sm:$0xf] %v1582
      %1700 = vst [vmem:[#allocation3 + $0x3d0] sm:$0xf] %v1592
      %1701 = vst [vmem:[#allocation3 + $0x3f4] sm:$0xf] %v1606
      %1702 = vst [vmem:[#allocation3 + $0x418] sm:$0xf] %v1616
      %1703 = vst [vmem:[#allocation3 + $0x43c] sm:$0xf] %v1630
      %1704 = vst [vmem:[#allocation3 + $0x460] sm:$0xf] %v1640
      %v1705 = vld [vmem:[#allocation2] sm:$0xe]
      %v1706 = vld [vmem:[#allocation2 + $0x4] sm:$0xf]
      %v1707 = vld [vmem:[#allocation2 + $0x8] sm:$0x1]
      %v1708 = vld [vmem:[#allocation2 + $0xc] sm:$0xe]
      %v1709 = vld [vmem:[#allocation2 + $0x10] sm:$0xf]
      %v1710 = vld [vmem:[#allocation2 + $0x14] sm:$0x1]
      %v1711 = vld [vmem:[#allocation2 + $0x18] sm:$0xe]
      %v1712 = vld [vmem:[#allocation2 + $0x1c] sm:$0xf]
      %v1713 = vld [vmem:[#allocation2 + $0x20] sm:$0x1]
      %v1714 = vld [vmem:[#allocation2 + $0x24] sm:$0xe]
      %v1715 = vld [vmem:[#allocation2 + $0x28] sm:$0xf]
      %v1716 = vld [vmem:[#allocation2 + $0x2c] sm:$0x1]
      %v1717 = vld [vmem:[#allocation2 + $0x30] sm:$0xe]
      %v1718 = vld [vmem:[#allocation2 + $0x34] sm:$0xf]
      %v1719 = vld [vmem:[#allocation2 + $0x38] sm:$0x1]
      %v1720 = vld [vmem:[#allocation2 + $0x3c] sm:$0xe]
      %v1721 = vld [vmem:[#allocation2 + $0x40] sm:$0xf]
      %v1722 = vld [vmem:[#allocation2 + $0x44] sm:$0x1]
      %v1723 = vld [vmem:[#allocation2 + $0x48] sm:$0xe]
      %v1724 = vld [vmem:[#allocation2 + $0x4c] sm:$0xf]
      %v1725 = vld [vmem:[#allocation2 + $0x50] sm:$0x1]
      %v1726 = vld [vmem:[#allocation2 + $0x54] sm:$0xe]
      %v1727 = vld [vmem:[#allocation2 + $0x58] sm:$0xf]
      %v1728 = vld [vmem:[#allocation2 + $0x5c] sm:$0x1]
      %v1729 = vld [vmem:[#allocation2 + $0x60] sm:$0xe]
      %v1730 = vld [vmem:[#allocation2 + $0x64] sm:$0xf]
      %v1731 = vld [vmem:[#allocation2 + $0x68] sm:$0x1]
      %v1732 = vld [vmem:[#allocation2 + $0x6c] sm:$0xe]
      %v1733 = vld [vmem:[#allocation2 + $0x70] sm:$0xf]
      %v1734 = vld [vmem:[#allocation2 + $0x74] sm:$0x1]
      %v1735 = vld [vmem:[#allocation2 + $0x78] sm:$0xe]
      %v1736 = vld [vmem:[#allocation2 + $0x7c] sm:$0xf]
      %v1737 = vld [vmem:[#allocation2 + $0x80] sm:$0x1]
      %v1738 = vld [vmem:[#allocation2 + $0x84] sm:$0xe]
      %v1739 = vld [vmem:[#allocation2 + $0x88] sm:$0xf]
      %v1740 = vld [vmem:[#allocation2 + $0x8c] sm:$0x1]
      %v1741 = vld [vmem:[#allocation2 + $0x90] sm:$0xe]
      %v1742 = vld [vmem:[#allocation2 + $0x94] sm:$0xf]
      %v1743 = vld [vmem:[#allocation2 + $0x98] sm:$0x1]
      %v1744 = vld [vmem:[#allocation2 + $0x9c] sm:$0xe]
      %v1745 = vld [vmem:[#allocation2 + $0xa0] sm:$0xf]
      %v1746 = vld [vmem:[#allocation2 + $0xa4] sm:$0x1]
      %v1747 = vld [vmem:[#allocation2 + $0xa8] sm:$0xe]
      %v1748 = vld [vmem:[#allocation2 + $0xac] sm:$0xf]
      %v1749 = vld [vmem:[#allocation2 + $0xb0] sm:$0x1]
      %v1750 = vld [vmem:[#allocation2 + $0xb4] sm:$0xe]
      %v1751 = vld [vmem:[#allocation2 + $0xb8] sm:$0xf]
      %v1752 = vld [vmem:[#allocation2 + $0xbc] sm:$0x1]
      %vm1801 = vcmask 1042432
      %vm1802 = vcmask 1046532
      %vm1803 = vmor %vm1801, %vm1802
      %v1804 = vrot.slane %v1705, 5
      %v1805 = vrot.slane %v1804, 4
      %v1806 = vrot.slane %v1706, 5
      %v1807 = vsel %vm1803, %v1805, %v1806
      %v1808 = vrot.slane %v1806, 4
      %v1809 = vrot.slane %v1707, 5
      %v1810 = vsel %vm1803, %v1808, %v1809
      %v1811 = vrot.slane %v1708, 5
      %v1812 = vrot.slane %v1811, 4
      %v1813 = vrot.slane %v1709, 5
      %v1814 = vsel %vm1803, %v1812, %v1813
      %v1815 = vrot.slane %v1813, 4
      %v1816 = vrot.slane %v1710, 5
      %v1817 = vsel %vm1803, %v1815, %v1816
      %v1818 = vrot.slane %v1711, 5
      %v1819 = vrot.slane %v1818, 4
      %v1820 = vrot.slane %v1712, 5
      %v1821 = vsel %vm1803, %v1819, %v1820
      %v1822 = vrot.slane %v1820, 4
      %v1823 = vrot.slane %v1713, 5
      %v1824 = vsel %vm1803, %v1822, %v1823
      %v1825 = vrot.slane %v1714, 5
      %v1826 = vrot.slane %v1825, 4
      %v1827 = vrot.slane %v1715, 5
      %v1828 = vsel %vm1803, %v1826, %v1827
      %v1829 = vrot.slane %v1827, 4
      %v1830 = vrot.slane %v1716, 5
      %v1831 = vsel %vm1803, %v1829, %v1830
      %v1832 = vrot.slane %v1717, 5
      %v1833 = vrot.slane %v1832, 4
      %v1834 = vrot.slane %v1718, 5
      %v1835 = vsel %vm1803, %v1833, %v1834
      %v1836 = vrot.slane %v1834, 4
      %v1837 = vrot.slane %v1719, 5
      %v1838 = vsel %vm1803, %v1836, %v1837
      %v1839 = vrot.slane %v1720, 5
      %v1840 = vrot.slane %v1839, 4
      %v1841 = vrot.slane %v1721, 5
      %v1842 = vsel %vm1803, %v1840, %v1841
      %v1843 = vrot.slane %v1841, 4
      %v1844 = vrot.slane %v1722, 5
      %v1845 = vsel %vm1803, %v1843, %v1844
      %v1846 = vrot.slane %v1723, 5
      %v1847 = vrot.slane %v1846, 4
      %v1848 = vrot.slane %v1724, 5
      %v1849 = vsel %vm1803, %v1847, %v1848
      %v1850 = vrot.slane %v1848, 4
      %v1851 = vrot.slane %v1725, 5
      %v1852 = vsel %vm1803, %v1850, %v1851
      %v1853 = vrot.slane %v1726, 5
      %v1854 = vrot.slane %v1853, 4
      %v1855 = vrot.slane %v1727, 5
      %v1856 = vsel %vm1803, %v1854, %v1855
      %v1857 = vrot.slane %v1855, 4
      %v1858 = vrot.slane %v1728, 5
      %v1859 = vsel %vm1803, %v1857, %v1858
      %v1860 = vrot.slane %v1729, 5
      %v1861 = vrot.slane %v1860, 4
      %v1862 = vrot.slane %v1730, 5
      %v1863 = vsel %vm1803, %v1861, %v1862
      %v1864 = vrot.slane %v1862, 4
      %v1865 = vrot.slane %v1731, 5
      %v1866 = vsel %vm1803, %v1864, %v1865
      %v1867 = vrot.slane %v1732, 5
      %v1868 = vrot.slane %v1867, 4
      %v1869 = vrot.slane %v1733, 5
      %v1870 = vsel %vm1803, %v1868, %v1869
      %v1871 = vrot.slane %v1869, 4
      %v1872 = vrot.slane %v1734, 5
      %v1873 = vsel %vm1803, %v1871, %v1872
      %v1874 = vrot.slane %v1735, 5
      %v1875 = vrot.slane %v1874, 4
      %v1876 = vrot.slane %v1736, 5
      %v1877 = vsel %vm1803, %v1875, %v1876
      %v1878 = vrot.slane %v1876, 4
      %v1879 = vrot.slane %v1737, 5
      %v1880 = vsel %vm1803, %v1878, %v1879
      %v1881 = vrot.slane %v1738, 5
      %v1882 = vrot.slane %v1881, 4
      %v1883 = vrot.slane %v1739, 5
      %v1884 = vsel %vm1803, %v1882, %v1883
      %v1885 = vrot.slane %v1883, 4
      %v1886 = vrot.slane %v1740, 5
      %v1887 = vsel %vm1803, %v1885, %v1886
      %v1888 = vrot.slane %v1741, 5
      %v1889 = vrot.slane %v1888, 4
      %v1890 = vrot.slane %v1742, 5
      %v1891 = vsel %vm1803, %v1889, %v1890
      %v1892 = vrot.slane %v1890, 4
      %v1893 = vrot.slane %v1743, 5
      %v1894 = vsel %vm1803, %v1892, %v1893
      %v1895 = vrot.slane %v1744, 5
      %v1896 = vrot.slane %v1895, 4
      %v1897 = vrot.slane %v1745, 5
      %v1898 = vsel %vm1803, %v1896, %v1897
      %v1899 = vrot.slane %v1897, 4
      %v1900 = vrot.slane %v1746, 5
      %v1901 = vsel %vm1803, %v1899, %v1900
      %v1902 = vrot.slane %v1747, 5
      %v1903 = vrot.slane %v1902, 4
      %v1904 = vrot.slane %v1748, 5
      %v1905 = vsel %vm1803, %v1903, %v1904
      %v1906 = vrot.slane %v1904, 4
      %v1907 = vrot.slane %v1749, 5
      %v1908 = vsel %vm1803, %v1906, %v1907
      %v1909 = vrot.slane %v1750, 5
      %v1910 = vrot.slane %v1909, 4
      %v1911 = vrot.slane %v1751, 5
      %v1912 = vsel %vm1803, %v1910, %v1911
      %v1913 = vrot.slane %v1911, 4
      %v1914 = vrot.slane %v1752, 5
      %v1915 = vsel %vm1803, %v1913, %v1914
      %1948 = vst [vmem:[#allocation3 + $0x8] sm:$0xf] %v1807
      %1949 = vst [vmem:[#allocation3 + $0x2c] sm:$0xf] %v1810
      %1950 = vst [vmem:[#allocation3 + $0x50] sm:$0xf] %v1814
      %1951 = vst [vmem:[#allocation3 + $0x74] sm:$0xf] %v1817
      %1952 = vst [vmem:[#allocation3 + $0x98] sm:$0xf] %v1821
      %1953 = vst [vmem:[#allocation3 + $0xbc] sm:$0xf] %v1824
      %1954 = vst [vmem:[#allocation3 + $0xe0] sm:$0xf] %v1828
      %1955 = vst [vmem:[#allocation3 + $0x104] sm:$0xf] %v1831
      %1956 = vst [vmem:[#allocation3 + $0x128] sm:$0xf] %v1835
      %1957 = vst [vmem:[#allocation3 + $0x14c] sm:$0xf] %v1838
      %1958 = vst [vmem:[#allocation3 + $0x170] sm:$0xf] %v1842
      %1959 = vst [vmem:[#allocation3 + $0x194] sm:$0xf] %v1845
      %1960 = vst [vmem:[#allocation3 + $0x1b8] sm:$0xf] %v1849
      %1961 = vst [vmem:[#allocation3 + $0x1dc] sm:$0xf] %v1852
      %1962 = vst [vmem:[#allocation3 + $0x200] sm:$0xf] %v1856
      %1963 = vst [vmem:[#allocation3 + $0x224] sm:$0xf] %v1859
      %1964 = vst [vmem:[#allocation3 + $0x248] sm:$0xf] %v1863
      %1965 = vst [vmem:[#allocation3 + $0x26c] sm:$0xf] %v1866
      %1966 = vst [vmem:[#allocation3 + $0x290] sm:$0xf] %v1870
      %1967 = vst [vmem:[#allocation3 + $0x2b4] sm:$0xf] %v1873
      %1968 = vst [vmem:[#allocation3 + $0x2d8] sm:$0xf] %v1877
      %1969 = vst [vmem:[#allocation3 + $0x2fc] sm:$0xf] %v1880
      %1970 = vst [vmem:[#allocation3 + $0x320] sm:$0xf] %v1884
      %1971 = vst [vmem:[#allocation3 + $0x344] sm:$0xf] %v1887
      %1972 = vst [vmem:[#allocation3 + $0x368] sm:$0xf] %v1891
      %1973 = vst [vmem:[#allocation3 + $0x38c] sm:$0xf] %v1894
      %1974 = vst [vmem:[#allocation3 + $0x3b0] sm:$0xf] %v1898
      %1975 = vst [vmem:[#allocation3 + $0x3d4] sm:$0xf] %v1901
      %1976 = vst [vmem:[#allocation3 + $0x3f8] sm:$0xf] %v1905
      %1977 = vst [vmem:[#allocation3 + $0x41c] sm:$0xf] %v1908
      %1978 = vst [vmem:[#allocation3 + $0x440] sm:$0xf] %v1912
      %1979 = vst [vmem:[#allocation3 + $0x464] sm:$0xf] %v1915
      %v1980 = vld [vmem:[%s921] sm:$0xf]
      %v1981 = vld [vmem:[%s921 + $0x4] sm:$0xf]
      %v1982 = vld [vmem:[%s921 + $0xc] sm:$0xf]
      %v1983 = vld [vmem:[%s921 + $0x10] sm:$0xf]
      %v1984 = vld [vmem:[%s921 + $0x18] sm:$0xf]
      %v1985 = vld [vmem:[%s921 + $0x1c] sm:$0xf]
      %v1986 = vld [vmem:[%s921 + $0x24] sm:$0xf]
      %v1987 = vld [vmem:[%s921 + $0x28] sm:$0xf]
      %v1988 = vld [vmem:[%s921 + $0x30] sm:$0xf]
      %v1989 = vld [vmem:[%s921 + $0x34] sm:$0xf]
      %v1990 = vld [vmem:[%s921 + $0x3c] sm:$0xf]
      %v1991 = vld [vmem:[%s921 + $0x40] sm:$0xf]
      %v1992 = vld [vmem:[%s921 + $0x48] sm:$0xf]
      %v1993 = vld [vmem:[%s921 + $0x4c] sm:$0xf]
      %v1994 = vld [vmem:[%s921 + $0x54] sm:$0xf]
      %v1995 = vld [vmem:[%s921 + $0x58] sm:$0xf]
      %v1996 = vld [vmem:[%s921 + $0x60] sm:$0xf]
      %v1997 = vld [vmem:[%s921 + $0x64] sm:$0xf]
      %v1998 = vld [vmem:[%s921 + $0x6c] sm:$0xf]
      %v1999 = vld [vmem:[%s921 + $0x70] sm:$0xf]
      %v2000 = vld [vmem:[%s921 + $0x78] sm:$0xf]
      %v2001 = vld [vmem:[%s921 + $0x7c] sm:$0xf]
      %v2002 = vld [vmem:[%s921 + $0x84] sm:$0xf]
      %v2003 = vld [vmem:[%s921 + $0x88] sm:$0xf]
      %v2004 = vld [vmem:[%s921 + $0x90] sm:$0xf]
      %v2005 = vld [vmem:[%s921 + $0x94] sm:$0xf]
      %v2006 = vld [vmem:[%s921 + $0x9c] sm:$0xf]
      %v2007 = vld [vmem:[%s921 + $0xa0] sm:$0xf]
      %v2008 = vld [vmem:[%s921 + $0xa8] sm:$0xf]
      %v2009 = vld [vmem:[%s921 + $0xac] sm:$0xf]
      %v2010 = vld [vmem:[%s921 + $0xb4] sm:$0xf]
      %v2011 = vld [vmem:[%s921 + $0xb8] sm:$0xf]
      %2012 = vst [vmem:[#allocation3 + $0xc] sm:$0xf] %v1980
      %2013 = vst [vmem:[#allocation3 + $0x30] sm:$0xf] %v1981
      %2014 = vst [vmem:[#allocation3 + $0x54] sm:$0xf] %v1982
      %2015 = vst [vmem:[#allocation3 + $0x78] sm:$0xf] %v1983
      %2016 = vst [vmem:[#allocation3 + $0x9c] sm:$0xf] %v1984
      %2017 = vst [vmem:[#allocation3 + $0xc0] sm:$0xf] %v1985
      %2018 = vst [vmem:[#allocation3 + $0xe4] sm:$0xf] %v1986
      %2019 = vst [vmem:[#allocation3 + $0x108] sm:$0xf] %v1987
      %2020 = vst [vmem:[#allocation3 + $0x12c] sm:$0xf] %v1988
      %2021 = vst [vmem:[#allocation3 + $0x150] sm:$0xf] %v1989
      %2022 = vst [vmem:[#allocation3 + $0x174] sm:$0xf] %v1990
      %2023 = vst [vmem:[#allocation3 + $0x198] sm:$0xf] %v1991
      %2024 = vst [vmem:[#allocation3 + $0x1bc] sm:$0xf] %v1992
      %2025 = vst [vmem:[#allocation3 + $0x1e0] sm:$0xf] %v1993
      %2026 = vst [vmem:[#allocation3 + $0x204] sm:$0xf] %v1994
      %2027 = vst [vmem:[#allocation3 + $0x228] sm:$0xf] %v1995
      %2028 = vst [vmem:[#allocation3 + $0x24c] sm:$0xf] %v1996
      %2029 = vst [vmem:[#allocation3 + $0x270] sm:$0xf] %v1997
      %2030 = vst [vmem:[#allocation3 + $0x294] sm:$0xf] %v1998
      %2031 = vst [vmem:[#allocation3 + $0x2b8] sm:$0xf] %v1999
      %2032 = vst [vmem:[#allocation3 + $0x2dc] sm:$0xf] %v2000
      %2033 = vst [vmem:[#allocation3 + $0x300] sm:$0xf] %v2001
      %2034 = vst [vmem:[#allocation3 + $0x324] sm:$0xf] %v2002
      %2035 = vst [vmem:[#allocation3 + $0x348] sm:$0xf] %v2003
      %2036 = vst [vmem:[#allocation3 + $0x36c] sm:$0xf] %v2004
      %2037 = vst [vmem:[#allocation3 + $0x390] sm:$0xf] %v2005
      %2038 = vst [vmem:[#allocation3 + $0x3b4] sm:$0xf] %v2006
      %2039 = vst [vmem:[#allocation3 + $0x3d8] sm:$0xf] %v2007
      %2040 = vst [vmem:[#allocation3 + $0x3fc] sm:$0xf] %v2008
      %2041 = vst [vmem:[#allocation3 + $0x420] sm:$0xf] %v2009
      %2042 = vst [vmem:[#allocation3 + $0x444] sm:$0xf] %v2010
      %2043 = vst [vmem:[#allocation3 + $0x468] sm:$0xf] %v2011
      %v2044 = vld [vmem:[%s921] sm:$0xf]
      %v2045 = vld [vmem:[%s921 + $0x4] sm:$0xf]
      %v2046 = vld [vmem:[%s921 + $0x8] sm:$0x1]
      %v2047 = vld [vmem:[%s921 + $0xc] sm:$0xf]
      %v2048 = vld [vmem:[%s921 + $0x10] sm:$0xf]
      %v2049 = vld [vmem:[%s921 + $0x14] sm:$0x1]
      %v2050 = vld [vmem:[%s921 + $0x18] sm:$0xf]
      %v2051 = vld [vmem:[%s921 + $0x1c] sm:$0xf]
      %v2052 = vld [vmem:[%s921 + $0x20] sm:$0x1]
      %v2053 = vld [vmem:[%s921 + $0x24] sm:$0xf]
      %v2054 = vld [vmem:[%s921 + $0x28] sm:$0xf]
      %v2055 = vld [vmem:[%s921 + $0x2c] sm:$0x1]
      %v2056 = vld [vmem:[%s921 + $0x30] sm:$0xf]
      %v2057 = vld [vmem:[%s921 + $0x34] sm:$0xf]
      %v2058 = vld [vmem:[%s921 + $0x38] sm:$0x1]
      %v2059 = vld [vmem:[%s921 + $0x3c] sm:$0xf]
      %v2060 = vld [vmem:[%s921 + $0x40] sm:$0xf]
      %v2061 = vld [vmem:[%s921 + $0x44] sm:$0x1]
      %v2062 = vld [vmem:[%s921 + $0x48] sm:$0xf]
      %v2063 = vld [vmem:[%s921 + $0x4c] sm:$0xf]
      %v2064 = vld [vmem:[%s921 + $0x50] sm:$0x1]
      %v2065 = vld [vmem:[%s921 + $0x54] sm:$0xf]
      %v2066 = vld [vmem:[%s921 + $0x58] sm:$0xf]
      %v2067 = vld [vmem:[%s921 + $0x5c] sm:$0x1]
      %v2068 = vld [vmem:[%s921 + $0x60] sm:$0xf]
      %v2069 = vld [vmem:[%s921 + $0x64] sm:$0xf]
      %v2070 = vld [vmem:[%s921 + $0x68] sm:$0x1]
      %v2071 = vld [vmem:[%s921 + $0x6c] sm:$0xf]
      %v2072 = vld [vmem:[%s921 + $0x70] sm:$0xf]
      %v2073 = vld [vmem:[%s921 + $0x74] sm:$0x1]
      %v2074 = vld [vmem:[%s921 + $0x78] sm:$0xf]
      %v2075 = vld [vmem:[%s921 + $0x7c] sm:$0xf]
      %v2076 = vld [vmem:[%s921 + $0x80] sm:$0x1]
      %v2077 = vld [vmem:[%s921 + $0x84] sm:$0xf]
      %v2078 = vld [vmem:[%s921 + $0x88] sm:$0xf]
      %v2079 = vld [vmem:[%s921 + $0x8c] sm:$0x1]
      %v2080 = vld [vmem:[%s921 + $0x90] sm:$0xf]
      %v2081 = vld [vmem:[%s921 + $0x94] sm:$0xf]
      %v2082 = vld [vmem:[%s921 + $0x98] sm:$0x1]
      %v2083 = vld [vmem:[%s921 + $0x9c] sm:$0xf]
      %v2084 = vld [vmem:[%s921 + $0xa0] sm:$0xf]
      %v2085 = vld [vmem:[%s921 + $0xa4] sm:$0x1]
      %v2086 = vld [vmem:[%s921 + $0xa8] sm:$0xf]
      %v2087 = vld [vmem:[%s921 + $0xac] sm:$0xf]
      %v2088 = vld [vmem:[%s921 + $0xb0] sm:$0x1]
      %v2089 = vld [vmem:[%s921 + $0xb4] sm:$0xf]
      %v2090 = vld [vmem:[%s921 + $0xb8] sm:$0xf]
      %v2091 = vld [vmem:[%s921 + $0xbc] sm:$0x1]
      %v2093 = vshrl.u32 %v2044, 16
      %v2095 = vrot.slane %v2093, 4
      %v2096 = vshll.u32 %v2044, 16
      %v2098 = vrot.slane %v2096, 5
      %v2099 = vor.u32 %v2095, %v2098
      %v2100 = vrot.slane %v2099, 4
      %v2102 = vshll.u32 %v2045, 16
      %v2104 = vrot.slane %v2102, 5
      %v2105 = vsel %vm1256, %v2100, %v2104
      %v2106 = vshrl.u32 %v2045, 16
      %v2108 = vrot.slane %v2106, 4
      %v2109 = vor.u32 %v2108, %v2104
      %v2110 = vrot.slane %v2109, 4
      %v2112 = vshll.u32 %v2046, 16
      %v2114 = vrot.slane %v2112, 5
      %v2115 = vsel %vm1256, %v2110, %v2114
      %v2117 = vshrl.u32 %v2047, 16
      %v2119 = vrot.slane %v2117, 4
      %v2120 = vshll.u32 %v2047, 16
      %v2122 = vrot.slane %v2120, 5
      %v2123 = vor.u32 %v2119, %v2122
      %v2124 = vrot.slane %v2123, 4
      %v2126 = vshll.u32 %v2048, 16
      %v2128 = vrot.slane %v2126, 5
      %v2129 = vsel %vm1256, %v2124, %v2128
      %v2130 = vshrl.u32 %v2048, 16
      %v2132 = vrot.slane %v2130, 4
      %v2133 = vor.u32 %v2132, %v2128
      %v2134 = vrot.slane %v2133, 4
      %v2136 = vshll.u32 %v2049, 16
      %v2138 = vrot.slane %v2136, 5
      %v2139 = vsel %vm1256, %v2134, %v2138
      %v2141 = vshrl.u32 %v2050, 16
      %v2143 = vrot.slane %v2141, 4
      %v2144 = vshll.u32 %v2050, 16
      %v2146 = vrot.slane %v2144, 5
      %v2147 = vor.u32 %v2143, %v2146
      %v2148 = vrot.slane %v2147, 4
      %v2150 = vshll.u32 %v2051, 16
      %v2152 = vrot.slane %v2150, 5
      %v2153 = vsel %vm1256, %v2148, %v2152
      %v2154 = vshrl.u32 %v2051, 16
      %v2156 = vrot.slane %v2154, 4
      %v2157 = vor.u32 %v2156, %v2152
      %v2158 = vrot.slane %v2157, 4
      %v2160 = vshll.u32 %v2052, 16
      %v2162 = vrot.slane %v2160, 5
      %v2163 = vsel %vm1256, %v2158, %v2162
      %v2165 = vshrl.u32 %v2053, 16
      %v2167 = vrot.slane %v2165, 4
      %v2168 = vshll.u32 %v2053, 16
      %v2170 = vrot.slane %v2168, 5
      %v2171 = vor.u32 %v2167, %v2170
      %v2172 = vrot.slane %v2171, 4
      %v2174 = vshll.u32 %v2054, 16
      %v2176 = vrot.slane %v2174, 5
      %v2177 = vsel %vm1256, %v2172, %v2176
      %v2178 = vshrl.u32 %v2054, 16
      %v2180 = vrot.slane %v2178, 4
      %v2181 = vor.u32 %v2180, %v2176
      %v2182 = vrot.slane %v2181, 4
      %v2184 = vshll.u32 %v2055, 16
      %v2186 = vrot.slane %v2184, 5
      %v2187 = vsel %vm1256, %v2182, %v2186
      %v2189 = vshrl.u32 %v2056, 16
      %v2191 = vrot.slane %v2189, 4
      %v2192 = vshll.u32 %v2056, 16
      %v2194 = vrot.slane %v2192, 5
      %v2195 = vor.u32 %v2191, %v2194
      %v2196 = vrot.slane %v2195, 4
      %v2198 = vshll.u32 %v2057, 16
      %v2200 = vrot.slane %v2198, 5
      %v2201 = vsel %vm1256, %v2196, %v2200
      %v2202 = vshrl.u32 %v2057, 16
      %v2204 = vrot.slane %v2202, 4
      %v2205 = vor.u32 %v2204, %v2200
      %v2206 = vrot.slane %v2205, 4
      %v2208 = vshll.u32 %v2058, 16
      %v2210 = vrot.slane %v2208, 5
      %v2211 = vsel %vm1256, %v2206, %v2210
      %v2213 = vshrl.u32 %v2059, 16
      %v2215 = vrot.slane %v2213, 4
      %v2216 = vshll.u32 %v2059, 16
      %v2218 = vrot.slane %v2216, 5
      %v2219 = vor.u32 %v2215, %v2218
      %v2220 = vrot.slane %v2219, 4
      %v2222 = vshll.u32 %v2060, 16
      %v2224 = vrot.slane %v2222, 5
      %v2225 = vsel %vm1256, %v2220, %v2224
      %v2226 = vshrl.u32 %v2060, 16
      %v2228 = vrot.slane %v2226, 4
      %v2229 = vor.u32 %v2228, %v2224
      %v2230 = vrot.slane %v2229, 4
      %v2232 = vshll.u32 %v2061, 16
      %v2234 = vrot.slane %v2232, 5
      %v2235 = vsel %vm1256, %v2230, %v2234
      %v2237 = vshrl.u32 %v2062, 16
      %v2239 = vrot.slane %v2237, 4
      %v2240 = vshll.u32 %v2062, 16
      %v2242 = vrot.slane %v2240, 5
      %v2243 = vor.u32 %v2239, %v2242
      %v2244 = vrot.slane %v2243, 4
      %v2246 = vshll.u32 %v2063, 16
      %v2248 = vrot.slane %v2246, 5
      %v2249 = vsel %vm1256, %v2244, %v2248
      %v2250 = vshrl.u32 %v2063, 16
      %v2252 = vrot.slane %v2250, 4
      %v2253 = vor.u32 %v2252, %v2248
      %v2254 = vrot.slane %v2253, 4
      %v2256 = vshll.u32 %v2064, 16
      %v2258 = vrot.slane %v2256, 5
      %v2259 = vsel %vm1256, %v2254, %v2258
      %v2261 = vshrl.u32 %v2065, 16
      %v2263 = vrot.slane %v2261, 4
      %v2264 = vshll.u32 %v2065, 16
      %v2266 = vrot.slane %v2264, 5
      %v2267 = vor.u32 %v2263, %v2266
      %v2268 = vrot.slane %v2267, 4
      %v2270 = vshll.u32 %v2066, 16
      %v2272 = vrot.slane %v2270, 5
      %v2273 = vsel %vm1256, %v2268, %v2272
      %v2274 = vshrl.u32 %v2066, 16
      %v2276 = vrot.slane %v2274, 4
      %v2277 = vor.u32 %v2276, %v2272
      %v2278 = vrot.slane %v2277, 4
      %v2280 = vshll.u32 %v2067, 16
      %v2282 = vrot.slane %v2280, 5
      %v2283 = vsel %vm1256, %v2278, %v2282
      %v2285 = vshrl.u32 %v2068, 16
      %v2287 = vrot.slane %v2285, 4
      %v2288 = vshll.u32 %v2068, 16
      %v2290 = vrot.slane %v2288, 5
      %v2291 = vor.u32 %v2287, %v2290
      %v2292 = vrot.slane %v2291, 4
      %v2294 = vshll.u32 %v2069, 16
      %v2296 = vrot.slane %v2294, 5
      %v2297 = vsel %vm1256, %v2292, %v2296
      %v2298 = vshrl.u32 %v2069, 16
      %v2300 = vrot.slane %v2298, 4
      %v2301 = vor.u32 %v2300, %v2296
      %v2302 = vrot.slane %v2301, 4
      %v2304 = vshll.u32 %v2070, 16
      %v2306 = vrot.slane %v2304, 5
      %v2307 = vsel %vm1256, %v2302, %v2306
      %v2309 = vshrl.u32 %v2071, 16
      %v2311 = vrot.slane %v2309, 4
      %v2312 = vshll.u32 %v2071, 16
      %v2314 = vrot.slane %v2312, 5
      %v2315 = vor.u32 %v2311, %v2314
      %v2316 = vrot.slane %v2315, 4
      %v2318 = vshll.u32 %v2072, 16
      %v2320 = vrot.slane %v2318, 5
      %v2321 = vsel %vm1256, %v2316, %v2320
      %v2322 = vshrl.u32 %v2072, 16
      %v2324 = vrot.slane %v2322, 4
      %v2325 = vor.u32 %v2324, %v2320
      %v2326 = vrot.slane %v2325, 4
      %v2328 = vshll.u32 %v2073, 16
      %v2330 = vrot.slane %v2328, 5
      %v2331 = vsel %vm1256, %v2326, %v2330
      %v2333 = vshrl.u32 %v2074, 16
      %v2335 = vrot.slane %v2333, 4
      %v2336 = vshll.u32 %v2074, 16
      %v2338 = vrot.slane %v2336, 5
      %v2339 = vor.u32 %v2335, %v2338
      %v2340 = vrot.slane %v2339, 4
      %v2342 = vshll.u32 %v2075, 16
      %v2344 = vrot.slane %v2342, 5
      %v2345 = vsel %vm1256, %v2340, %v2344
      %v2346 = vshrl.u32 %v2075, 16
      %v2348 = vrot.slane %v2346, 4
      %v2349 = vor.u32 %v2348, %v2344
      %v2350 = vrot.slane %v2349, 4
      %v2352 = vshll.u32 %v2076, 16
      %v2354 = vrot.slane %v2352, 5
      %v2355 = vsel %vm1256, %v2350, %v2354
      %v2357 = vshrl.u32 %v2077, 16
      %v2359 = vrot.slane %v2357, 4
      %v2360 = vshll.u32 %v2077, 16
      %v2362 = vrot.slane %v2360, 5
      %v2363 = vor.u32 %v2359, %v2362
      %v2364 = vrot.slane %v2363, 4
      %v2366 = vshll.u32 %v2078, 16
      %v2368 = vrot.slane %v2366, 5
      %v2369 = vsel %vm1256, %v2364, %v2368
      %v2370 = vshrl.u32 %v2078, 16
      %v2372 = vrot.slane %v2370, 4
      %v2373 = vor.u32 %v2372, %v2368
      %v2374 = vrot.slane %v2373, 4
      %v2376 = vshll.u32 %v2079, 16
      %v2378 = vrot.slane %v2376, 5
      %v2379 = vsel %vm1256, %v2374, %v2378
      %v2381 = vshrl.u32 %v2080, 16
      %v2383 = vrot.slane %v2381, 4
      %v2384 = vshll.u32 %v2080, 16
      %v2386 = vrot.slane %v2384, 5
      %v2387 = vor.u32 %v2383, %v2386
      %v2388 = vrot.slane %v2387, 4
      %v2390 = vshll.u32 %v2081, 16
      %v2392 = vrot.slane %v2390, 5
      %v2393 = vsel %vm1256, %v2388, %v2392
      %v2394 = vshrl.u32 %v2081, 16
      %v2396 = vrot.slane %v2394, 4
      %v2397 = vor.u32 %v2396, %v2392
      %v2398 = vrot.slane %v2397, 4
      %v2400 = vshll.u32 %v2082, 16
      %v2402 = vrot.slane %v2400, 5
      %v2403 = vsel %vm1256, %v2398, %v2402
      %v2405 = vshrl.u32 %v2083, 16
      %v2407 = vrot.slane %v2405, 4
      %v2408 = vshll.u32 %v2083, 16
      %v2410 = vrot.slane %v2408, 5
      %v2411 = vor.u32 %v2407, %v2410
      %v2412 = vrot.slane %v2411, 4
      %v2414 = vshll.u32 %v2084, 16
      %v2416 = vrot.slane %v2414, 5
      %v2417 = vsel %vm1256, %v2412, %v2416
      %v2418 = vshrl.u32 %v2084, 16
      %v2420 = vrot.slane %v2418, 4
      %v2421 = vor.u32 %v2420, %v2416
      %v2422 = vrot.slane %v2421, 4
      %v2424 = vshll.u32 %v2085, 16
      %v2426 = vrot.slane %v2424, 5
      %v2427 = vsel %vm1256, %v2422, %v2426
      %v2429 = vshrl.u32 %v2086, 16
      %v2431 = vrot.slane %v2429, 4
      %v2432 = vshll.u32 %v2086, 16
      %v2434 = vrot.slane %v2432, 5
      %v2435 = vor.u32 %v2431, %v2434
      %v2436 = vrot.slane %v2435, 4
      %v2438 = vshll.u32 %v2087, 16
      %v2440 = vrot.slane %v2438, 5
      %v2441 = vsel %vm1256, %v2436, %v2440
      %v2442 = vshrl.u32 %v2087, 16
      %v2444 = vrot.slane %v2442, 4
      %v2445 = vor.u32 %v2444, %v2440
      %v2446 = vrot.slane %v2445, 4
      %v2448 = vshll.u32 %v2088, 16
      %v2450 = vrot.slane %v2448, 5
      %v2451 = vsel %vm1256, %v2446, %v2450
      %v2453 = vshrl.u32 %v2089, 16
      %v2455 = vrot.slane %v2453, 4
      %v2456 = vshll.u32 %v2089, 16
      %v2458 = vrot.slane %v2456, 5
      %v2459 = vor.u32 %v2455, %v2458
      %v2460 = vrot.slane %v2459, 4
      %v2462 = vshll.u32 %v2090, 16
      %v2464 = vrot.slane %v2462, 5
      %v2465 = vsel %vm1256, %v2460, %v2464
      %v2466 = vshrl.u32 %v2090, 16
      %v2468 = vrot.slane %v2466, 4
      %v2469 = vor.u32 %v2468, %v2464
      %v2470 = vrot.slane %v2469, 4
      %v2472 = vshll.u32 %v2091, 16
      %v2474 = vrot.slane %v2472, 5
      %v2475 = vsel %vm1256, %v2470, %v2474
      %2508 = vst [vmem:[#allocation3 + $0x10] sm:$0xf] %v2105
      %2509 = vst [vmem:[#allocation3 + $0x34] sm:$0xf] %v2115
      %2510 = vst [vmem:[#allocation3 + $0x58] sm:$0xf] %v2129
      %2511 = vst [vmem:[#allocation3 + $0x7c] sm:$0xf] %v2139
      %2512 = vst [vmem:[#allocation3 + $0xa0] sm:$0xf] %v2153
      %2513 = vst [vmem:[#allocation3 + $0xc4] sm:$0xf] %v2163
      %2514 = vst [vmem:[#allocation3 + $0xe8] sm:$0xf] %v2177
      %2515 = vst [vmem:[#allocation3 + $0x10c] sm:$0xf] %v2187
      %2516 = vst [vmem:[#allocation3 + $0x130] sm:$0xf] %v2201
      %2517 = vst [vmem:[#allocation3 + $0x154] sm:$0xf] %v2211
      %2518 = vst [vmem:[#allocation3 + $0x178] sm:$0xf] %v2225
      %2519 = vst [vmem:[#allocation3 + $0x19c] sm:$0xf] %v2235
      %2520 = vst [vmem:[#allocation3 + $0x1c0] sm:$0xf] %v2249
      %2521 = vst [vmem:[#allocation3 + $0x1e4] sm:$0xf] %v2259
      %2522 = vst [vmem:[#allocation3 + $0x208] sm:$0xf] %v2273
      %2523 = vst [vmem:[#allocation3 + $0x22c] sm:$0xf] %v2283
      %2524 = vst [vmem:[#allocation3 + $0x250] sm:$0xf] %v2297
      %2525 = vst [vmem:[#allocation3 + $0x274] sm:$0xf] %v2307
      %2526 = vst [vmem:[#allocation3 + $0x298] sm:$0xf] %v2321
      %2527 = vst [vmem:[#allocation3 + $0x2bc] sm:$0xf] %v2331
      %2528 = vst [vmem:[#allocation3 + $0x2e0] sm:$0xf] %v2345
      %2529 = vst [vmem:[#allocation3 + $0x304] sm:$0xf] %v2355
      %2530 = vst [vmem:[#allocation3 + $0x328] sm:$0xf] %v2369
      %2531 = vst [vmem:[#allocation3 + $0x34c] sm:$0xf] %v2379
      %2532 = vst [vmem:[#allocation3 + $0x370] sm:$0xf] %v2393
      %2533 = vst [vmem:[#allocation3 + $0x394] sm:$0xf] %v2403
      %2534 = vst [vmem:[#allocation3 + $0x3b8] sm:$0xf] %v2417
      %2535 = vst [vmem:[#allocation3 + $0x3dc] sm:$0xf] %v2427
      %2536 = vst [vmem:[#allocation3 + $0x400] sm:$0xf] %v2441
      %2537 = vst [vmem:[#allocation3 + $0x424] sm:$0xf] %v2451
      %2538 = vst [vmem:[#allocation3 + $0x448] sm:$0xf] %v2465
      %2539 = vst [vmem:[#allocation3 + $0x46c] sm:$0xf] %v2475
      %v2540 = vld [vmem:[%s921] sm:$0xe]
      %v2541 = vld [vmem:[%s921 + $0x4] sm:$0xf]
      %v2542 = vld [vmem:[%s921 + $0x8] sm:$0x1]
      %v2543 = vld [vmem:[%s921 + $0xc] sm:$0xe]
      %v2544 = vld [vmem:[%s921 + $0x10] sm:$0xf]
      %v2545 = vld [vmem:[%s921 + $0x14] sm:$0x1]
      %v2546 = vld [vmem:[%s921 + $0x18] sm:$0xe]
      %v2547 = vld [vmem:[%s921 + $0x1c] sm:$0xf]
      %v2548 = vld [vmem:[%s921 + $0x20] sm:$0x1]
      %v2549 = vld [vmem:[%s921 + $0x24] sm:$0xe]
      %v2550 = vld [vmem:[%s921 + $0x28] sm:$0xf]
      %v2551 = vld [vmem:[%s921 + $0x2c] sm:$0x1]
      %v2552 = vld [vmem:[%s921 + $0x30] sm:$0xe]
      %v2553 = vld [vmem:[%s921 + $0x34] sm:$0xf]
      %v2554 = vld [vmem:[%s921 + $0x38] sm:$0x1]
      %v2555 = vld [vmem:[%s921 + $0x3c] sm:$0xe]
      %v2556 = vld [vmem:[%s921 + $0x40] sm:$0xf]
      %v2557 = vld [vmem:[%s921 + $0x44] sm:$0x1]
      %v2558 = vld [vmem:[%s921 + $0x48] sm:$0xe]
      %v2559 = vld [vmem:[%s921 + $0x4c] sm:$0xf]
      %v2560 = vld [vmem:[%s921 + $0x50] sm:$0x1]
      %v2561 = vld [vmem:[%s921 + $0x54] sm:$0xe]
      %v2562 = vld [vmem:[%s921 + $0x58] sm:$0xf]
      %v2563 = vld [vmem:[%s921 + $0x5c] sm:$0x1]
      %v2564 = vld [vmem:[%s921 + $0x60] sm:$0xe]
      %v2565 = vld [vmem:[%s921 + $0x64] sm:$0xf]
      %v2566 = vld [vmem:[%s921 + $0x68] sm:$0x1]
      %v2567 = vld [vmem:[%s921 + $0x6c] sm:$0xe]
      %v2568 = vld [vmem:[%s921 + $0x70] sm:$0xf]
      %v2569 = vld [vmem:[%s921 + $0x74] sm:$0x1]
      %v2570 = vld [vmem:[%s921 + $0x78] sm:$0xe]
      %v2571 = vld [vmem:[%s921 + $0x7c] sm:$0xf]
      %v2572 = vld [vmem:[%s921 + $0x80] sm:$0x1]
      %v2573 = vld [vmem:[%s921 + $0x84] sm:$0xe]
      %v2574 = vld [vmem:[%s921 + $0x88] sm:$0xf]
      %v2575 = vld [vmem:[%s921 + $0x8c] sm:$0x1]
      %v2576 = vld [vmem:[%s921 + $0x90] sm:$0xe]
      %v2577 = vld [vmem:[%s921 + $0x94] sm:$0xf]
      %v2578 = vld [vmem:[%s921 + $0x98] sm:$0x1]
      %v2579 = vld [vmem:[%s921 + $0x9c] sm:$0xe]
      %v2580 = vld [vmem:[%s921 + $0xa0] sm:$0xf]
      %v2581 = vld [vmem:[%s921 + $0xa4] sm:$0x1]
      %v2582 = vld [vmem:[%s921 + $0xa8] sm:$0xe]
      %v2583 = vld [vmem:[%s921 + $0xac] sm:$0xf]
      %v2584 = vld [vmem:[%s921 + $0xb0] sm:$0x1]
      %v2585 = vld [vmem:[%s921 + $0xb4] sm:$0xe]
      %v2586 = vld [vmem:[%s921 + $0xb8] sm:$0xf]
      %v2587 = vld [vmem:[%s921 + $0xbc] sm:$0x1]
      %v2636 = vrot.slane %v2540, 5
      %v2637 = vrot.slane %v2636, 4
      %v2638 = vrot.slane %v2541, 5
      %v2639 = vsel %vm1803, %v2637, %v2638
      %v2640 = vrot.slane %v2638, 4
      %v2641 = vrot.slane %v2542, 5
      %v2642 = vsel %vm1803, %v2640, %v2641
      %v2643 = vrot.slane %v2543, 5
      %v2644 = vrot.slane %v2643, 4
      %v2645 = vrot.slane %v2544, 5
      %v2646 = vsel %vm1803, %v2644, %v2645
      %v2647 = vrot.slane %v2645, 4
      %v2648 = vrot.slane %v2545, 5
      %v2649 = vsel %vm1803, %v2647, %v2648
      %v2650 = vrot.slane %v2546, 5
      %v2651 = vrot.slane %v2650, 4
      %v2652 = vrot.slane %v2547, 5
      %v2653 = vsel %vm1803, %v2651, %v2652
      %v2654 = vrot.slane %v2652, 4
      %v2655 = vrot.slane %v2548, 5
      %v2656 = vsel %vm1803, %v2654, %v2655
      %v2657 = vrot.slane %v2549, 5
      %v2658 = vrot.slane %v2657, 4
      %v2659 = vrot.slane %v2550, 5
      %v2660 = vsel %vm1803, %v2658, %v2659
      %v2661 = vrot.slane %v2659, 4
      %v2662 = vrot.slane %v2551, 5
      %v2663 = vsel %vm1803, %v2661, %v2662
      %v2664 = vrot.slane %v2552, 5
      %v2665 = vrot.slane %v2664, 4
      %v2666 = vrot.slane %v2553, 5
      %v2667 = vsel %vm1803, %v2665, %v2666
      %v2668 = vrot.slane %v2666, 4
      %v2669 = vrot.slane %v2554, 5
      %v2670 = vsel %vm1803, %v2668, %v2669
      %v2671 = vrot.slane %v2555, 5
      %v2672 = vrot.slane %v2671, 4
      %v2673 = vrot.slane %v2556, 5
      %v2674 = vsel %vm1803, %v2672, %v2673
      %v2675 = vrot.slane %v2673, 4
      %v2676 = vrot.slane %v2557, 5
      %v2677 = vsel %vm1803, %v2675, %v2676
      %v2678 = vrot.slane %v2558, 5
      %v2679 = vrot.slane %v2678, 4
      %v2680 = vrot.slane %v2559, 5
      %v2681 = vsel %vm1803, %v2679, %v2680
      %v2682 = vrot.slane %v2680, 4
      %v2683 = vrot.slane %v2560, 5
      %v2684 = vsel %vm1803, %v2682, %v2683
      %v2685 = vrot.slane %v2561, 5
      %v2686 = vrot.slane %v2685, 4
      %v2687 = vrot.slane %v2562, 5
      %v2688 = vsel %vm1803, %v2686, %v2687
      %v2689 = vrot.slane %v2687, 4
      %v2690 = vrot.slane %v2563, 5
      %v2691 = vsel %vm1803, %v2689, %v2690
      %v2692 = vrot.slane %v2564, 5
      %v2693 = vrot.slane %v2692, 4
      %v2694 = vrot.slane %v2565, 5
      %v2695 = vsel %vm1803, %v2693, %v2694
      %v2696 = vrot.slane %v2694, 4
      %v2697 = vrot.slane %v2566, 5
      %v2698 = vsel %vm1803, %v2696, %v2697
      %v2699 = vrot.slane %v2567, 5
      %v2700 = vrot.slane %v2699, 4
      %v2701 = vrot.slane %v2568, 5
      %v2702 = vsel %vm1803, %v2700, %v2701
      %v2703 = vrot.slane %v2701, 4
      %v2704 = vrot.slane %v2569, 5
      %v2705 = vsel %vm1803, %v2703, %v2704
      %v2706 = vrot.slane %v2570, 5
      %v2707 = vrot.slane %v2706, 4
      %v2708 = vrot.slane %v2571, 5
      %v2709 = vsel %vm1803, %v2707, %v2708
      %v2710 = vrot.slane %v2708, 4
      %v2711 = vrot.slane %v2572, 5
      %v2712 = vsel %vm1803, %v2710, %v2711
      %v2713 = vrot.slane %v2573, 5
      %v2714 = vrot.slane %v2713, 4
      %v2715 = vrot.slane %v2574, 5
      %v2716 = vsel %vm1803, %v2714, %v2715
      %v2717 = vrot.slane %v2715, 4
      %v2718 = vrot.slane %v2575, 5
      %v2719 = vsel %vm1803, %v2717, %v2718
      %v2720 = vrot.slane %v2576, 5
      %v2721 = vrot.slane %v2720, 4
      %v2722 = vrot.slane %v2577, 5
      %v2723 = vsel %vm1803, %v2721, %v2722
      %v2724 = vrot.slane %v2722, 4
      %v2725 = vrot.slane %v2578, 5
      %v2726 = vsel %vm1803, %v2724, %v2725
      %v2727 = vrot.slane %v2579, 5
      %v2728 = vrot.slane %v2727, 4
      %v2729 = vrot.slane %v2580, 5
      %v2730 = vsel %vm1803, %v2728, %v2729
      %v2731 = vrot.slane %v2729, 4
      %v2732 = vrot.slane %v2581, 5
      %v2733 = vsel %vm1803, %v2731, %v2732
      %v2734 = vrot.slane %v2582, 5
      %v2735 = vrot.slane %v2734, 4
      %v2736 = vrot.slane %v2583, 5
      %v2737 = vsel %vm1803, %v2735, %v2736
      %v2738 = vrot.slane %v2736, 4
      %v2739 = vrot.slane %v2584, 5
      %v2740 = vsel %vm1803, %v2738, %v2739
      %v2741 = vrot.slane %v2585, 5
      %v2742 = vrot.slane %v2741, 4
      %v2743 = vrot.slane %v2586, 5
      %v2744 = vsel %vm1803, %v2742, %v2743
      %v2745 = vrot.slane %v2743, 4
      %v2746 = vrot.slane %v2587, 5
      %v2747 = vsel %vm1803, %v2745, %v2746
      %2780 = vst [vmem:[#allocation3 + $0x14] sm:$0xf] %v2639
      %2781 = vst [vmem:[#allocation3 + $0x38] sm:$0xf] %v2642
      %2782 = vst [vmem:[#allocation3 + $0x5c] sm:$0xf] %v2646
      %2783 = vst [vmem:[#allocation3 + $0x80] sm:$0xf] %v2649
      %2784 = vst [vmem:[#allocation3 + $0xa4] sm:$0xf] %v2653
      %2785 = vst [vmem:[#allocation3 + $0xc8] sm:$0xf] %v2656
      %2786 = vst [vmem:[#allocation3 + $0xec] sm:$0xf] %v2660
      %2787 = vst [vmem:[#allocation3 + $0x110] sm:$0xf] %v2663
      %2788 = vst [vmem:[#allocation3 + $0x134] sm:$0xf] %v2667
      %2789 = vst [vmem:[#allocation3 + $0x158] sm:$0xf] %v2670
      %2790 = vst [vmem:[#allocation3 + $0x17c] sm:$0xf] %v2674
      %2791 = vst [vmem:[#allocation3 + $0x1a0] sm:$0xf] %v2677
      %2792 = vst [vmem:[#allocation3 + $0x1c4] sm:$0xf] %v2681
      %2793 = vst [vmem:[#allocation3 + $0x1e8] sm:$0xf] %v2684
      %2794 = vst [vmem:[#allocation3 + $0x20c] sm:$0xf] %v2688
      %2795 = vst [vmem:[#allocation3 + $0x230] sm:$0xf] %v2691
      %2796 = vst [vmem:[#allocation3 + $0x254] sm:$0xf] %v2695
      %2797 = vst [vmem:[#allocation3 + $0x278] sm:$0xf] %v2698
      %2798 = vst [vmem:[#allocation3 + $0x29c] sm:$0xf] %v2702
      %2799 = vst [vmem:[#allocation3 + $0x2c0] sm:$0xf] %v2705
      %2800 = vst [vmem:[#allocation3 + $0x2e4] sm:$0xf] %v2709
      %2801 = vst [vmem:[#allocation3 + $0x308] sm:$0xf] %v2712
      %2802 = vst [vmem:[#allocation3 + $0x32c] sm:$0xf] %v2716
      %2803 = vst [vmem:[#allocation3 + $0x350] sm:$0xf] %v2719
      %2804 = vst [vmem:[#allocation3 + $0x374] sm:$0xf] %v2723
      %2805 = vst [vmem:[#allocation3 + $0x398] sm:$0xf] %v2726
      %2806 = vst [vmem:[#allocation3 + $0x3bc] sm:$0xf] %v2730
      %2807 = vst [vmem:[#allocation3 + $0x3e0] sm:$0xf] %v2733
      %2808 = vst [vmem:[#allocation3 + $0x404] sm:$0xf] %v2737
      %2809 = vst [vmem:[#allocation3 + $0x428] sm:$0xf] %v2740
      %2810 = vst [vmem:[#allocation3 + $0x44c] sm:$0xf] %v2744
      %2811 = vst [vmem:[#allocation3 + $0x470] sm:$0xf] %v2747
      %s2812 = scalar_lea.vmem [#allocation2], 24
      %v2813 = vld [vmem:[%s2812] sm:$0xf]
      %v2814 = vld [vmem:[%s2812 + $0x4] sm:$0xf]
      %v2815 = vld [vmem:[%s2812 + $0xc] sm:$0xf]
      %v2816 = vld [vmem:[%s2812 + $0x10] sm:$0xf]
      %v2817 = vld [vmem:[%s2812 + $0x18] sm:$0xf]
      %v2818 = vld [vmem:[%s2812 + $0x1c] sm:$0xf]
      %v2819 = vld [vmem:[%s2812 + $0x24] sm:$0xf]
      %v2820 = vld [vmem:[%s2812 + $0x28] sm:$0xf]
      %v2821 = vld [vmem:[%s2812 + $0x30] sm:$0xf]
      %v2822 = vld [vmem:[%s2812 + $0x34] sm:$0xf]
      %v2823 = vld [vmem:[%s2812 + $0x3c] sm:$0xf]
      %v2824 = vld [vmem:[%s2812 + $0x40] sm:$0xf]
      %v2825 = vld [vmem:[%s2812 + $0x48] sm:$0xf]
      %v2826 = vld [vmem:[%s2812 + $0x4c] sm:$0xf]
      %v2827 = vld [vmem:[%s2812 + $0x54] sm:$0xf]
      %v2828 = vld [vmem:[%s2812 + $0x58] sm:$0xf]
      %v2829 = vld [vmem:[%s2812 + $0x60] sm:$0xf]
      %v2830 = vld [vmem:[%s2812 + $0x64] sm:$0xf]
      %v2831 = vld [vmem:[%s2812 + $0x6c] sm:$0xf]
      %v2832 = vld [vmem:[%s2812 + $0x70] sm:$0xf]
      %v2833 = vld [vmem:[%s2812 + $0x78] sm:$0xf]
      %v2834 = vld [vmem:[%s2812 + $0x7c] sm:$0xf]
      %v2835 = vld [vmem:[%s2812 + $0x84] sm:$0xf]
      %v2836 = vld [vmem:[%s2812 + $0x88] sm:$0xf]
      %v2837 = vld [vmem:[%s2812 + $0x90] sm:$0xf]
      %v2838 = vld [vmem:[%s2812 + $0x94] sm:$0xf]
      %v2839 = vld [vmem:[%s2812 + $0x9c] sm:$0xf]
      %v2840 = vld [vmem:[%s2812 + $0xa0] sm:$0xf]
      %v2841 = vld [vmem:[%s2812 + $0xa8] sm:$0xf]
      %v2842 = vld [vmem:[%s2812 + $0xac] sm:$0xf]
      %v2843 = vld [vmem:[%s2812 + $0xb4] sm:$0xf]
      %v2844 = vld [vmem:[%s2812 + $0xb8] sm:$0xf]
      %2845 = vst [vmem:[#allocation3 + $0x18] sm:$0xf] %v2813
      %2846 = vst [vmem:[#allocation3 + $0x3c] sm:$0xf] %v2814
      %2847 = vst [vmem:[#allocation3 + $0x60] sm:$0xf] %v2815
      %2848 = vst [vmem:[#allocation3 + $0x84] sm:$0xf] %v2816
      %2849 = vst [vmem:[#allocation3 + $0xa8] sm:$0xf] %v2817
      %2850 = vst [vmem:[#allocation3 + $0xcc] sm:$0xf] %v2818
      %2851 = vst [vmem:[#allocation3 + $0xf0] sm:$0xf] %v2819
      %2852 = vst [vmem:[#allocation3 + $0x114] sm:$0xf] %v2820
      %2853 = vst [vmem:[#allocation3 + $0x138] sm:$0xf] %v2821
      %2854 = vst [vmem:[#allocation3 + $0x15c] sm:$0xf] %v2822
      %2855 = vst [vmem:[#allocation3 + $0x180] sm:$0xf] %v2823
      %2856 = vst [vmem:[#allocation3 + $0x1a4] sm:$0xf] %v2824
      %2857 = vst [vmem:[#allocation3 + $0x1c8] sm:$0xf] %v2825
      %2858 = vst [vmem:[#allocation3 + $0x1ec] sm:$0xf] %v2826
      %2859 = vst [vmem:[#allocation3 + $0x210] sm:$0xf] %v2827
      %2860 = vst [vmem:[#allocation3 + $0x234] sm:$0xf] %v2828
      %2861 = vst [vmem:[#allocation3 + $0x258] sm:$0xf] %v2829
      %2862 = vst [vmem:[#allocation3 + $0x27c] sm:$0xf] %v2830
      %2863 = vst [vmem:[#allocation3 + $0x2a0] sm:$0xf] %v2831
      %2864 = vst [vmem:[#allocation3 + $0x2c4] sm:$0xf] %v2832
      %2865 = vst [vmem:[#allocation3 + $0x2e8] sm:$0xf] %v2833
      %2866 = vst [vmem:[#allocation3 + $0x30c] sm:$0xf] %v2834
      %2867 = vst [vmem:[#allocation3 + $0x330] sm:$0xf] %v2835
      %2868 = vst [vmem:[#allocation3 + $0x354] sm:$0xf] %v2836
      %2869 = vst [vmem:[#allocation3 + $0x378] sm:$0xf] %v2837
      %2870 = vst [vmem:[#allocation3 + $0x39c] sm:$0xf] %v2838
      %2871 = vst [vmem:[#allocation3 + $0x3c0] sm:$0xf] %v2839
      %2872 = vst [vmem:[#allocation3 + $0x3e4] sm:$0xf] %v2840
      %2873 = vst [vmem:[#allocation3 + $0x408] sm:$0xf] %v2841
      %2874 = vst [vmem:[#allocation3 + $0x42c] sm:$0xf] %v2842
      %2875 = vst [vmem:[#allocation3 + $0x450] sm:$0xf] %v2843
      %2876 = vst [vmem:[#allocation3 + $0x474] sm:$0xf] %v2844
      %v2877 = vld [vmem:[%s2812] sm:$0xf]
      %v2878 = vld [vmem:[%s2812 + $0x4] sm:$0xf]
      %v2879 = vld [vmem:[%s2812 + $0x8] sm:$0x1]
      %v2880 = vld [vmem:[%s2812 + $0xc] sm:$0xf]
      %v2881 = vld [vmem:[%s2812 + $0x10] sm:$0xf]
      %v2882 = vld [vmem:[%s2812 + $0x14] sm:$0x1]
      %v2883 = vld [vmem:[%s2812 + $0x18] sm:$0xf]
      %v2884 = vld [vmem:[%s2812 + $0x1c] sm:$0xf]
      %v2885 = vld [vmem:[%s2812 + $0x20] sm:$0x1]
      %v2886 = vld [vmem:[%s2812 + $0x24] sm:$0xf]
      %v2887 = vld [vmem:[%s2812 + $0x28] sm:$0xf]
      %v2888 = vld [vmem:[%s2812 + $0x2c] sm:$0x1]
      %v2889 = vld [vmem:[%s2812 + $0x30] sm:$0xf]
      %v2890 = vld [vmem:[%s2812 + $0x34] sm:$0xf]
      %v2891 = vld [vmem:[%s2812 + $0x38] sm:$0x1]
      %v2892 = vld [vmem:[%s2812 + $0x3c] sm:$0xf]
      %v2893 = vld [vmem:[%s2812 + $0x40] sm:$0xf]
      %v2894 = vld [vmem:[%s2812 + $0x44] sm:$0x1]
      %v2895 = vld [vmem:[%s2812 + $0x48] sm:$0xf]
      %v2896 = vld [vmem:[%s2812 + $0x4c] sm:$0xf]
      %v2897 = vld [vmem:[%s2812 + $0x50] sm:$0x1]
      %v2898 = vld [vmem:[%s2812 + $0x54] sm:$0xf]
      %v2899 = vld [vmem:[%s2812 + $0x58] sm:$0xf]
      %v2900 = vld [vmem:[%s2812 + $0x5c] sm:$0x1]
      %v2901 = vld [vmem:[%s2812 + $0x60] sm:$0xf]
      %v2902 = vld [vmem:[%s2812 + $0x64] sm:$0xf]
      %v2903 = vld [vmem:[%s2812 + $0x68] sm:$0x1]
      %v2904 = vld [vmem:[%s2812 + $0x6c] sm:$0xf]
      %v2905 = vld [vmem:[%s2812 + $0x70] sm:$0xf]
      %v2906 = vld [vmem:[%s2812 + $0x74] sm:$0x1]
      %v2907 = vld [vmem:[%s2812 + $0x78] sm:$0xf]
      %v2908 = vld [vmem:[%s2812 + $0x7c] sm:$0xf]
      %v2909 = vld [vmem:[%s2812 + $0x80] sm:$0x1]
      %v2910 = vld [vmem:[%s2812 + $0x84] sm:$0xf]
      %v2911 = vld [vmem:[%s2812 + $0x88] sm:$0xf]
      %v2912 = vld [vmem:[%s2812 + $0x8c] sm:$0x1]
      %v2913 = vld [vmem:[%s2812 + $0x90] sm:$0xf]
      %v2914 = vld [vmem:[%s2812 + $0x94] sm:$0xf]
      %v2915 = vld [vmem:[%s2812 + $0x98] sm:$0x1]
      %v2916 = vld [vmem:[%s2812 + $0x9c] sm:$0xf]
      %v2917 = vld [vmem:[%s2812 + $0xa0] sm:$0xf]
      %v2918 = vld [vmem:[%s2812 + $0xa4] sm:$0x1]
      %v2919 = vld [vmem:[%s2812 + $0xa8] sm:$0xf]
      %v2920 = vld [vmem:[%s2812 + $0xac] sm:$0xf]
      %v2921 = vld [vmem:[%s2812 + $0xb0] sm:$0x1]
      %v2922 = vld [vmem:[%s2812 + $0xb4] sm:$0xf]
      %v2923 = vld [vmem:[%s2812 + $0xb8] sm:$0xf]
      %v2924 = vld [vmem:[%s2812 + $0xbc] sm:$0x1]
      %v2926 = vshrl.u32 %v2877, 16
      %v2928 = vrot.slane %v2926, 4
      %v2929 = vshll.u32 %v2877, 16
      %v2931 = vrot.slane %v2929, 5
      %v2932 = vor.u32 %v2928, %v2931
      %v2933 = vrot.slane %v2932, 4
      %v2935 = vshll.u32 %v2878, 16
      %v2937 = vrot.slane %v2935, 5
      %v2938 = vsel %vm1256, %v2933, %v2937
      %v2939 = vshrl.u32 %v2878, 16
      %v2941 = vrot.slane %v2939, 4
      %v2942 = vor.u32 %v2941, %v2937
      %v2943 = vrot.slane %v2942, 4
      %v2945 = vshll.u32 %v2879, 16
      %v2947 = vrot.slane %v2945, 5
      %v2948 = vsel %vm1256, %v2943, %v2947
      %v2950 = vshrl.u32 %v2880, 16
      %v2952 = vrot.slane %v2950, 4
      %v2953 = vshll.u32 %v2880, 16
      %v2955 = vrot.slane %v2953, 5
      %v2956 = vor.u32 %v2952, %v2955
      %v2957 = vrot.slane %v2956, 4
      %v2959 = vshll.u32 %v2881, 16
      %v2961 = vrot.slane %v2959, 5
      %v2962 = vsel %vm1256, %v2957, %v2961
      %v2963 = vshrl.u32 %v2881, 16
      %v2965 = vrot.slane %v2963, 4
      %v2966 = vor.u32 %v2965, %v2961
      %v2967 = vrot.slane %v2966, 4
      %v2969 = vshll.u32 %v2882, 16
      %v2971 = vrot.slane %v2969, 5
      %v2972 = vsel %vm1256, %v2967, %v2971
      %v2974 = vshrl.u32 %v2883, 16
      %v2976 = vrot.slane %v2974, 4
      %v2977 = vshll.u32 %v2883, 16
      %v2979 = vrot.slane %v2977, 5
      %v2980 = vor.u32 %v2976, %v2979
      %v2981 = vrot.slane %v2980, 4
      %v2983 = vshll.u32 %v2884, 16
      %v2985 = vrot.slane %v2983, 5
      %v2986 = vsel %vm1256, %v2981, %v2985
      %v2987 = vshrl.u32 %v2884, 16
      %v2989 = vrot.slane %v2987, 4
      %v2990 = vor.u32 %v2989, %v2985
      %v2991 = vrot.slane %v2990, 4
      %v2993 = vshll.u32 %v2885, 16
      %v2995 = vrot.slane %v2993, 5
      %v2996 = vsel %vm1256, %v2991, %v2995
      %v2998 = vshrl.u32 %v2886, 16
      %v3000 = vrot.slane %v2998, 4
      %v3001 = vshll.u32 %v2886, 16
      %v3003 = vrot.slane %v3001, 5
      %v3004 = vor.u32 %v3000, %v3003
      %v3005 = vrot.slane %v3004, 4
      %v3007 = vshll.u32 %v2887, 16
      %v3009 = vrot.slane %v3007, 5
      %v3010 = vsel %vm1256, %v3005, %v3009
      %v3011 = vshrl.u32 %v2887, 16
      %v3013 = vrot.slane %v3011, 4
      %v3014 = vor.u32 %v3013, %v3009
      %v3015 = vrot.slane %v3014, 4
      %v3017 = vshll.u32 %v2888, 16
      %v3019 = vrot.slane %v3017, 5
      %v3020 = vsel %vm1256, %v3015, %v3019
      %v3022 = vshrl.u32 %v2889, 16
      %v3024 = vrot.slane %v3022, 4
      %v3025 = vshll.u32 %v2889, 16
      %v3027 = vrot.slane %v3025, 5
      %v3028 = vor.u32 %v3024, %v3027
      %v3029 = vrot.slane %v3028, 4
      %v3031 = vshll.u32 %v2890, 16
      %v3033 = vrot.slane %v3031, 5
      %v3034 = vsel %vm1256, %v3029, %v3033
      %v3035 = vshrl.u32 %v2890, 16
      %v3037 = vrot.slane %v3035, 4
      %v3038 = vor.u32 %v3037, %v3033
      %v3039 = vrot.slane %v3038, 4
      %v3041 = vshll.u32 %v2891, 16
      %v3043 = vrot.slane %v3041, 5
      %v3044 = vsel %vm1256, %v3039, %v3043
      %v3046 = vshrl.u32 %v2892, 16
      %v3048 = vrot.slane %v3046, 4
      %v3049 = vshll.u32 %v2892, 16
      %v3051 = vrot.slane %v3049, 5
      %v3052 = vor.u32 %v3048, %v3051
      %v3053 = vrot.slane %v3052, 4
      %v3055 = vshll.u32 %v2893, 16
      %v3057 = vrot.slane %v3055, 5
      %v3058 = vsel %vm1256, %v3053, %v3057
      %v3059 = vshrl.u32 %v2893, 16
      %v3061 = vrot.slane %v3059, 4
      %v3062 = vor.u32 %v3061, %v3057
      %v3063 = vrot.slane %v3062, 4
      %v3065 = vshll.u32 %v2894, 16
      %v3067 = vrot.slane %v3065, 5
      %v3068 = vsel %vm1256, %v3063, %v3067
      %v3070 = vshrl.u32 %v2895, 16
      %v3072 = vrot.slane %v3070, 4
      %v3073 = vshll.u32 %v2895, 16
      %v3075 = vrot.slane %v3073, 5
      %v3076 = vor.u32 %v3072, %v3075
      %v3077 = vrot.slane %v3076, 4
      %v3079 = vshll.u32 %v2896, 16
      %v3081 = vrot.slane %v3079, 5
      %v3082 = vsel %vm1256, %v3077, %v3081
      %v3083 = vshrl.u32 %v2896, 16
      %v3085 = vrot.slane %v3083, 4
      %v3086 = vor.u32 %v3085, %v3081
      %v3087 = vrot.slane %v3086, 4
      %v3089 = vshll.u32 %v2897, 16
      %v3091 = vrot.slane %v3089, 5
      %v3092 = vsel %vm1256, %v3087, %v3091
      %v3094 = vshrl.u32 %v2898, 16
      %v3096 = vrot.slane %v3094, 4
      %v3097 = vshll.u32 %v2898, 16
      %v3099 = vrot.slane %v3097, 5
      %v3100 = vor.u32 %v3096, %v3099
      %v3101 = vrot.slane %v3100, 4
      %v3103 = vshll.u32 %v2899, 16
      %v3105 = vrot.slane %v3103, 5
      %v3106 = vsel %vm1256, %v3101, %v3105
      %v3107 = vshrl.u32 %v2899, 16
      %v3109 = vrot.slane %v3107, 4
      %v3110 = vor.u32 %v3109, %v3105
      %v3111 = vrot.slane %v3110, 4
      %v3113 = vshll.u32 %v2900, 16
      %v3115 = vrot.slane %v3113, 5
      %v3116 = vsel %vm1256, %v3111, %v3115
      %v3118 = vshrl.u32 %v2901, 16
      %v3120 = vrot.slane %v3118, 4
      %v3121 = vshll.u32 %v2901, 16
      %v3123 = vrot.slane %v3121, 5
      %v3124 = vor.u32 %v3120, %v3123
      %v3125 = vrot.slane %v3124, 4
      %v3127 = vshll.u32 %v2902, 16
      %v3129 = vrot.slane %v3127, 5
      %v3130 = vsel %vm1256, %v3125, %v3129
      %v3131 = vshrl.u32 %v2902, 16
      %v3133 = vrot.slane %v3131, 4
      %v3134 = vor.u32 %v3133, %v3129
      %v3135 = vrot.slane %v3134, 4
      %v3137 = vshll.u32 %v2903, 16
      %v3139 = vrot.slane %v3137, 5
      %v3140 = vsel %vm1256, %v3135, %v3139
      %v3142 = vshrl.u32 %v2904, 16
      %v3144 = vrot.slane %v3142, 4
      %v3145 = vshll.u32 %v2904, 16
      %v3147 = vrot.slane %v3145, 5
      %v3148 = vor.u32 %v3144, %v3147
      %v3149 = vrot.slane %v3148, 4
      %v3151 = vshll.u32 %v2905, 16
      %v3153 = vrot.slane %v3151, 5
      %v3154 = vsel %vm1256, %v3149, %v3153
      %v3155 = vshrl.u32 %v2905, 16
      %v3157 = vrot.slane %v3155, 4
      %v3158 = vor.u32 %v3157, %v3153
      %v3159 = vrot.slane %v3158, 4
      %v3161 = vshll.u32 %v2906, 16
      %v3163 = vrot.slane %v3161, 5
      %v3164 = vsel %vm1256, %v3159, %v3163
      %v3166 = vshrl.u32 %v2907, 16
      %v3168 = vrot.slane %v3166, 4
      %v3169 = vshll.u32 %v2907, 16
      %v3171 = vrot.slane %v3169, 5
      %v3172 = vor.u32 %v3168, %v3171
      %v3173 = vrot.slane %v3172, 4
      %v3175 = vshll.u32 %v2908, 16
      %v3177 = vrot.slane %v3175, 5
      %v3178 = vsel %vm1256, %v3173, %v3177
      %v3179 = vshrl.u32 %v2908, 16
      %v3181 = vrot.slane %v3179, 4
      %v3182 = vor.u32 %v3181, %v3177
      %v3183 = vrot.slane %v3182, 4
      %v3185 = vshll.u32 %v2909, 16
      %v3187 = vrot.slane %v3185, 5
      %v3188 = vsel %vm1256, %v3183, %v3187
      %v3190 = vshrl.u32 %v2910, 16
      %v3192 = vrot.slane %v3190, 4
      %v3193 = vshll.u32 %v2910, 16
      %v3195 = vrot.slane %v3193, 5
      %v3196 = vor.u32 %v3192, %v3195
      %v3197 = vrot.slane %v3196, 4
      %v3199 = vshll.u32 %v2911, 16
      %v3201 = vrot.slane %v3199, 5
      %v3202 = vsel %vm1256, %v3197, %v3201
      %v3203 = vshrl.u32 %v2911, 16
      %v3205 = vrot.slane %v3203, 4
      %v3206 = vor.u32 %v3205, %v3201
      %v3207 = vrot.slane %v3206, 4
      %v3209 = vshll.u32 %v2912, 16
      %v3211 = vrot.slane %v3209, 5
      %v3212 = vsel %vm1256, %v3207, %v3211
      %v3214 = vshrl.u32 %v2913, 16
      %v3216 = vrot.slane %v3214, 4
      %v3217 = vshll.u32 %v2913, 16
      %v3219 = vrot.slane %v3217, 5
      %v3220 = vor.u32 %v3216, %v3219
      %v3221 = vrot.slane %v3220, 4
      %v3223 = vshll.u32 %v2914, 16
      %v3225 = vrot.slane %v3223, 5
      %v3226 = vsel %vm1256, %v3221, %v3225
      %v3227 = vshrl.u32 %v2914, 16
      %v3229 = vrot.slane %v3227, 4
      %v3230 = vor.u32 %v3229, %v3225
      %v3231 = vrot.slane %v3230, 4
      %v3233 = vshll.u32 %v2915, 16
      %v3235 = vrot.slane %v3233, 5
      %v3236 = vsel %vm1256, %v3231, %v3235
      %v3238 = vshrl.u32 %v2916, 16
      %v3240 = vrot.slane %v3238, 4
      %v3241 = vshll.u32 %v2916, 16
      %v3243 = vrot.slane %v3241, 5
      %v3244 = vor.u32 %v3240, %v3243
      %v3245 = vrot.slane %v3244, 4
      %v3247 = vshll.u32 %v2917, 16
      %v3249 = vrot.slane %v3247, 5
      %v3250 = vsel %vm1256, %v3245, %v3249
      %v3251 = vshrl.u32 %v2917, 16
      %v3253 = vrot.slane %v3251, 4
      %v3254 = vor.u32 %v3253, %v3249
      %v3255 = vrot.slane %v3254, 4
      %v3257 = vshll.u32 %v2918, 16
      %v3259 = vrot.slane %v3257, 5
      %v3260 = vsel %vm1256, %v3255, %v3259
      %v3262 = vshrl.u32 %v2919, 16
      %v3264 = vrot.slane %v3262, 4
      %v3265 = vshll.u32 %v2919, 16
      %v3267 = vrot.slane %v3265, 5
      %v3268 = vor.u32 %v3264, %v3267
      %v3269 = vrot.slane %v3268, 4
      %v3271 = vshll.u32 %v2920, 16
      %v3273 = vrot.slane %v3271, 5
      %v3274 = vsel %vm1256, %v3269, %v3273
      %v3275 = vshrl.u32 %v2920, 16
      %v3277 = vrot.slane %v3275, 4
      %v3278 = vor.u32 %v3277, %v3273
      %v3279 = vrot.slane %v3278, 4
      %v3281 = vshll.u32 %v2921, 16
      %v3283 = vrot.slane %v3281, 5
      %v3284 = vsel %vm1256, %v3279, %v3283
      %v3286 = vshrl.u32 %v2922, 16
      %v3288 = vrot.slane %v3286, 4
      %v3289 = vshll.u32 %v2922, 16
      %v3291 = vrot.slane %v3289, 5
      %v3292 = vor.u32 %v3288, %v3291
      %v3293 = vrot.slane %v3292, 4
      %v3295 = vshll.u32 %v2923, 16
      %v3297 = vrot.slane %v3295, 5
      %v3298 = vsel %vm1256, %v3293, %v3297
      %v3299 = vshrl.u32 %v2923, 16
      %v3301 = vrot.slane %v3299, 4
      %v3302 = vor.u32 %v3301, %v3297
      %v3303 = vrot.slane %v3302, 4
      %v3305 = vshll.u32 %v2924, 16
      %v3307 = vrot.slane %v3305, 5
      %v3308 = vsel %vm1256, %v3303, %v3307
      %3341 = vst [vmem:[#allocation3 + $0x1c] sm:$0xf] %v2938
      %3342 = vst [vmem:[#allocation3 + $0x40] sm:$0xf] %v2948
      %3343 = vst [vmem:[#allocation3 + $0x64] sm:$0xf] %v2962
      %3344 = vst [vmem:[#allocation3 + $0x88] sm:$0xf] %v2972
      %3345 = vst [vmem:[#allocation3 + $0xac] sm:$0xf] %v2986
      %3346 = vst [vmem:[#allocation3 + $0xd0] sm:$0xf] %v2996
      %3347 = vst [vmem:[#allocation3 + $0xf4] sm:$0xf] %v3010
      %3348 = vst [vmem:[#allocation3 + $0x118] sm:$0xf] %v3020
      %3349 = vst [vmem:[#allocation3 + $0x13c] sm:$0xf] %v3034
      %3350 = vst [vmem:[#allocation3 + $0x160] sm:$0xf] %v3044
      %3351 = vst [vmem:[#allocation3 + $0x184] sm:$0xf] %v3058
      %3352 = vst [vmem:[#allocation3 + $0x1a8] sm:$0xf] %v3068
      %3353 = vst [vmem:[#allocation3 + $0x1cc] sm:$0xf] %v3082
      %3354 = vst [vmem:[#allocation3 + $0x1f0] sm:$0xf] %v3092
      %3355 = vst [vmem:[#allocation3 + $0x214] sm:$0xf] %v3106
      %3356 = vst [vmem:[#allocation3 + $0x238] sm:$0xf] %v3116
      %3357 = vst [vmem:[#allocation3 + $0x25c] sm:$0xf] %v3130
      %3358 = vst [vmem:[#allocation3 + $0x280] sm:$0xf] %v3140
      %3359 = vst [vmem:[#allocation3 + $0x2a4] sm:$0xf] %v3154
      %3360 = vst [vmem:[#allocation3 + $0x2c8] sm:$0xf] %v3164
      %3361 = vst [vmem:[#allocation3 + $0x2ec] sm:$0xf] %v3178
      %3362 = vst [vmem:[#allocation3 + $0x310] sm:$0xf] %v3188
      %3363 = vst [vmem:[#allocation3 + $0x334] sm:$0xf] %v3202
      %3364 = vst [vmem:[#allocation3 + $0x358] sm:$0xf] %v3212
      %3365 = vst [vmem:[#allocation3 + $0x37c] sm:$0xf] %v3226
      %3366 = vst [vmem:[#allocation3 + $0x3a0] sm:$0xf] %v3236
      %3367 = vst [vmem:[#allocation3 + $0x3c4] sm:$0xf] %v3250
      %3368 = vst [vmem:[#allocation3 + $0x3e8] sm:$0xf] %v3260
      %3369 = vst [vmem:[#allocation3 + $0x40c] sm:$0xf] %v3274
      %3370 = vst [vmem:[#allocation3 + $0x430] sm:$0xf] %v3284
      %3371 = vst [vmem:[#allocation3 + $0x454] sm:$0xf] %v3298
      %3372 = vst [vmem:[#allocation3 + $0x478] sm:$0xf] %v3308
      %v3373 = vld [vmem:[%s2812] sm:$0xe]
      %v3374 = vld [vmem:[%s2812 + $0x4] sm:$0xf]
      %v3375 = vld [vmem:[%s2812 + $0x8] sm:$0x1]
      %v3376 = vld [vmem:[%s2812 + $0xc] sm:$0xe]
      %v3377 = vld [vmem:[%s2812 + $0x10] sm:$0xf]
      %v3378 = vld [vmem:[%s2812 + $0x14] sm:$0x1]
      %v3379 = vld [vmem:[%s2812 + $0x18] sm:$0xe]
      %v3380 = vld [vmem:[%s2812 + $0x1c] sm:$0xf]
      %v3381 = vld [vmem:[%s2812 + $0x20] sm:$0x1]
      %v3382 = vld [vmem:[%s2812 + $0x24] sm:$0xe]
      %v3383 = vld [vmem:[%s2812 + $0x28] sm:$0xf]
      %v3384 = vld [vmem:[%s2812 + $0x2c] sm:$0x1]
      %v3385 = vld [vmem:[%s2812 + $0x30] sm:$0xe]
      %v3386 = vld [vmem:[%s2812 + $0x34] sm:$0xf]
      %v3387 = vld [vmem:[%s2812 + $0x38] sm:$0x1]
      %v3388 = vld [vmem:[%s2812 + $0x3c] sm:$0xe]
      %v3389 = vld [vmem:[%s2812 + $0x40] sm:$0xf]
      %v3390 = vld [vmem:[%s2812 + $0x44] sm:$0x1]
      %v3391 = vld [vmem:[%s2812 + $0x48] sm:$0xe]
      %v3392 = vld [vmem:[%s2812 + $0x4c] sm:$0xf]
      %v3393 = vld [vmem:[%s2812 + $0x50] sm:$0x1]
      %v3394 = vld [vmem:[%s2812 + $0x54] sm:$0xe]
      %v3395 = vld [vmem:[%s2812 + $0x58] sm:$0xf]
      %v3396 = vld [vmem:[%s2812 + $0x5c] sm:$0x1]
      %v3397 = vld [vmem:[%s2812 + $0x60] sm:$0xe]
      %v3398 = vld [vmem:[%s2812 + $0x64] sm:$0xf]
      %v3399 = vld [vmem:[%s2812 + $0x68] sm:$0x1]
      %v3400 = vld [vmem:[%s2812 + $0x6c] sm:$0xe]
      %v3401 = vld [vmem:[%s2812 + $0x70] sm:$0xf]
      %v3402 = vld [vmem:[%s2812 + $0x74] sm:$0x1]
      %v3403 = vld [vmem:[%s2812 + $0x78] sm:$0xe]
      %v3404 = vld [vmem:[%s2812 + $0x7c] sm:$0xf]
      %v3405 = vld [vmem:[%s2812 + $0x80] sm:$0x1]
      %v3406 = vld [vmem:[%s2812 + $0x84] sm:$0xe]
      %v3407 = vld [vmem:[%s2812 + $0x88] sm:$0xf]
      %v3408 = vld [vmem:[%s2812 + $0x8c] sm:$0x1]
      %v3409 = vld [vmem:[%s2812 + $0x90] sm:$0xe]
      %v3410 = vld [vmem:[%s2812 + $0x94] sm:$0xf]
      %v3411 = vld [vmem:[%s2812 + $0x98] sm:$0x1]
      %v3412 = vld [vmem:[%s2812 + $0x9c] sm:$0xe]
      %v3413 = vld [vmem:[%s2812 + $0xa0] sm:$0xf]
      %v3414 = vld [vmem:[%s2812 + $0xa4] sm:$0x1]
      %v3415 = vld [vmem:[%s2812 + $0xa8] sm:$0xe]
      %v3416 = vld [vmem:[%s2812 + $0xac] sm:$0xf]
      %v3417 = vld [vmem:[%s2812 + $0xb0] sm:$0x1]
      %v3418 = vld [vmem:[%s2812 + $0xb4] sm:$0xe]
      %v3419 = vld [vmem:[%s2812 + $0xb8] sm:$0xf]
      %v3420 = vld [vmem:[%s2812 + $0xbc] sm:$0x1]
      %v3469 = vrot.slane %v3373, 5
      %v3470 = vrot.slane %v3469, 4
      %v3471 = vrot.slane %v3374, 5
      %v3472 = vsel %vm1803, %v3470, %v3471
      %v3473 = vrot.slane %v3471, 4
      %v3474 = vrot.slane %v3375, 5
      %v3475 = vsel %vm1803, %v3473, %v3474
      %v3476 = vrot.slane %v3376, 5
      %v3477 = vrot.slane %v3476, 4
      %v3478 = vrot.slane %v3377, 5
      %v3479 = vsel %vm1803, %v3477, %v3478
      %v3480 = vrot.slane %v3478, 4
      %v3481 = vrot.slane %v3378, 5
      %v3482 = vsel %vm1803, %v3480, %v3481
      %v3483 = vrot.slane %v3379, 5
      %v3484 = vrot.slane %v3483, 4
      %v3485 = vrot.slane %v3380, 5
      %v3486 = vsel %vm1803, %v3484, %v3485
      %v3487 = vrot.slane %v3485, 4
      %v3488 = vrot.slane %v3381, 5
      %v3489 = vsel %vm1803, %v3487, %v3488
      %v3490 = vrot.slane %v3382, 5
      %v3491 = vrot.slane %v3490, 4
      %v3492 = vrot.slane %v3383, 5
      %v3493 = vsel %vm1803, %v3491, %v3492
      %v3494 = vrot.slane %v3492, 4
      %v3495 = vrot.slane %v3384, 5
      %v3496 = vsel %vm1803, %v3494, %v3495
      %v3497 = vrot.slane %v3385, 5
      %v3498 = vrot.slane %v3497, 4
      %v3499 = vrot.slane %v3386, 5
      %v3500 = vsel %vm1803, %v3498, %v3499
      %v3501 = vrot.slane %v3499, 4
      %v3502 = vrot.slane %v3387, 5
      %v3503 = vsel %vm1803, %v3501, %v3502
      %v3504 = vrot.slane %v3388, 5
      %v3505 = vrot.slane %v3504, 4
      %v3506 = vrot.slane %v3389, 5
      %v3507 = vsel %vm1803, %v3505, %v3506
      %v3508 = vrot.slane %v3506, 4
      %v3509 = vrot.slane %v3390, 5
      %v3510 = vsel %vm1803, %v3508, %v3509
      %v3511 = vrot.slane %v3391, 5
      %v3512 = vrot.slane %v3511, 4
      %v3513 = vrot.slane %v3392, 5
      %v3514 = vsel %vm1803, %v3512, %v3513
      %v3515 = vrot.slane %v3513, 4
      %v3516 = vrot.slane %v3393, 5
      %v3517 = vsel %vm1803, %v3515, %v3516
      %v3518 = vrot.slane %v3394, 5
      %v3519 = vrot.slane %v3518, 4
      %v3520 = vrot.slane %v3395, 5
      %v3521 = vsel %vm1803, %v3519, %v3520
      %v3522 = vrot.slane %v3520, 4
      %v3523 = vrot.slane %v3396, 5
      %v3524 = vsel %vm1803, %v3522, %v3523
      %v3525 = vrot.slane %v3397, 5
      %v3526 = vrot.slane %v3525, 4
      %v3527 = vrot.slane %v3398, 5
      %v3528 = vsel %vm1803, %v3526, %v3527
      %v3529 = vrot.slane %v3527, 4
      %v3530 = vrot.slane %v3399, 5
      %v3531 = vsel %vm1803, %v3529, %v3530
      %v3532 = vrot.slane %v3400, 5
      %v3533 = vrot.slane %v3532, 4
      %v3534 = vrot.slane %v3401, 5
      %v3535 = vsel %vm1803, %v3533, %v3534
      %v3536 = vrot.slane %v3534, 4
      %v3537 = vrot.slane %v3402, 5
      %v3538 = vsel %vm1803, %v3536, %v3537
      %v3539 = vrot.slane %v3403, 5
      %v3540 = vrot.slane %v3539, 4
      %v3541 = vrot.slane %v3404, 5
      %v3542 = vsel %vm1803, %v3540, %v3541
      %v3543 = vrot.slane %v3541, 4
      %v3544 = vrot.slane %v3405, 5
      %v3545 = vsel %vm1803, %v3543, %v3544
      %v3546 = vrot.slane %v3406, 5
      %v3547 = vrot.slane %v3546, 4
      %v3548 = vrot.slane %v3407, 5
      %v3549 = vsel %vm1803, %v3547, %v3548
      %v3550 = vrot.slane %v3548, 4
      %v3551 = vrot.slane %v3408, 5
      %v3552 = vsel %vm1803, %v3550, %v3551
      %v3553 = vrot.slane %v3409, 5
      %v3554 = vrot.slane %v3553, 4
      %v3555 = vrot.slane %v3410, 5
      %v3556 = vsel %vm1803, %v3554, %v3555
      %v3557 = vrot.slane %v3555, 4
      %v3558 = vrot.slane %v3411, 5
      %v3559 = vsel %vm1803, %v3557, %v3558
      %v3560 = vrot.slane %v3412, 5
      %v3561 = vrot.slane %v3560, 4
      %v3562 = vrot.slane %v3413, 5
      %v3563 = vsel %vm1803, %v3561, %v3562
      %v3564 = vrot.slane %v3562, 4
      %v3565 = vrot.slane %v3414, 5
      %v3566 = vsel %vm1803, %v3564, %v3565
      %v3567 = vrot.slane %v3415, 5
      %v3568 = vrot.slane %v3567, 4
      %v3569 = vrot.slane %v3416, 5
      %v3570 = vsel %vm1803, %v3568, %v3569
      %v3571 = vrot.slane %v3569, 4
      %v3572 = vrot.slane %v3417, 5
      %v3573 = vsel %vm1803, %v3571, %v3572
      %v3574 = vrot.slane %v3418, 5
      %v3575 = vrot.slane %v3574, 4
      %v3576 = vrot.slane %v3419, 5
      %v3577 = vsel %vm1803, %v3575, %v3576
      %v3578 = vrot.slane %v3576, 4
      %v3579 = vrot.slane %v3420, 5
      %v3580 = vsel %vm1803, %v3578, %v3579
      %3613 = vst [vmem:[#allocation3 + $0x20] sm:$0xf] %v3472
      %3614 = vst [vmem:[#allocation3 + $0x44] sm:$0xf] %v3475
      %3615 = vst [vmem:[#allocation3 + $0x68] sm:$0xf] %v3479
      %3616 = vst [vmem:[#allocation3 + $0x8c] sm:$0xf] %v3482
      %3617 = vst [vmem:[#allocation3 + $0xb0] sm:$0xf] %v3486
      %3618 = vst [vmem:[#allocation3 + $0xd4] sm:$0xf] %v3489
      %3619 = vst [vmem:[#allocation3 + $0xf8] sm:$0xf] %v3493
      %3620 = vst [vmem:[#allocation3 + $0x11c] sm:$0xf] %v3496
      %3621 = vst [vmem:[#allocation3 + $0x140] sm:$0xf] %v3500
      %3622 = vst [vmem:[#allocation3 + $0x164] sm:$0xf] %v3503
      %3623 = vst [vmem:[#allocation3 + $0x188] sm:$0xf] %v3507
      %3624 = vst [vmem:[#allocation3 + $0x1ac] sm:$0xf] %v3510
      %3625 = vst [vmem:[#allocation3 + $0x1d0] sm:$0xf] %v3514
      %3626 = vst [vmem:[#allocation3 + $0x1f4] sm:$0xf] %v3517
      %3627 = vst [vmem:[#allocation3 + $0x218] sm:$0xf] %v3521
      %3628 = vst [vmem:[#allocation3 + $0x23c] sm:$0xf] %v3524
      %3629 = vst [vmem:[#allocation3 + $0x260] sm:$0xf] %v3528
      %3630 = vst [vmem:[#allocation3 + $0x284] sm:$0xf] %v3531
      %3631 = vst [vmem:[#allocation3 + $0x2a8] sm:$0xf] %v3535
      %3632 = vst [vmem:[#allocation3 + $0x2cc] sm:$0xf] %v3538
      %3633 = vst [vmem:[#allocation3 + $0x2f0] sm:$0xf] %v3542
      %3634 = vst [vmem:[#allocation3 + $0x314] sm:$0xf] %v3545
      %3635 = vst [vmem:[#allocation3 + $0x338] sm:$0xf] %v3549
      %3636 = vst [vmem:[#allocation3 + $0x35c] sm:$0xf] %v3552
      %3637 = vst [vmem:[#allocation3 + $0x380] sm:$0xf] %v3556
      %3638 = vst [vmem:[#allocation3 + $0x3a4] sm:$0xf] %v3559
      %3639 = vst [vmem:[#allocation3 + $0x3c8] sm:$0xf] %v3563
      %3640 = vst [vmem:[#allocation3 + $0x3ec] sm:$0xf] %v3566
      %3641 = vst [vmem:[#allocation3 + $0x410] sm:$0xf] %v3570
      %3642 = vst [vmem:[#allocation3 + $0x434] sm:$0xf] %v3573
      %3643 = vst [vmem:[#allocation3 + $0x458] sm:$0xf] %v3577
      %3644 = vst [vmem:[#allocation3 + $0x47c] sm:$0xf] %v3580
      %v3645 = vld [vmem:[#allocation3] sm:$0xff]
      %v3646 = vld [vmem:[#allocation3 + $0x8] sm:$0xff]
      %v3647 = vld [vmem:[#allocation3 + $0x10] sm:$0xff]
      %v3648 = vld [vmem:[#allocation3 + $0x18] sm:$0xff]
      %v3649 = vld [vmem:[#allocation3 + $0x20] sm:$0xf]
      %v3650 = vld [vmem:[#allocation3 + $0x24] sm:$0xff]
      %v3651 = vld [vmem:[#allocation3 + $0x2c] sm:$0xff]
      %v3652 = vld [vmem:[#allocation3 + $0x34] sm:$0xff]
      %v3653 = vld [vmem:[#allocation3 + $0x3c] sm:$0xff]
      %v3654 = vld [vmem:[#allocation3 + $0x44] sm:$0xf]
      %v3655 = vld [vmem:[#allocation3 + $0x48] sm:$0xff]
      %v3656 = vld [vmem:[#allocation3 + $0x50] sm:$0xff]
      %v3657 = vld [vmem:[#allocation3 + $0x58] sm:$0xff]
      %v3658 = vld [vmem:[#allocation3 + $0x60] sm:$0xff]
      %v3659 = vld [vmem:[#allocation3 + $0x68] sm:$0xf]
      %v3660 = vld [vmem:[#allocation3 + $0x6c] sm:$0xff]
      %v3661 = vld [vmem:[#allocation3 + $0x74] sm:$0xff]
      %v3662 = vld [vmem:[#allocation3 + $0x7c] sm:$0xff]
      %v3663 = vld [vmem:[#allocation3 + $0x84] sm:$0xff]
      %v3664 = vld [vmem:[#allocation3 + $0x8c] sm:$0xf]
      %v3665 = vld [vmem:[#allocation3 + $0x90] sm:$0xff]
      %v3666 = vld [vmem:[#allocation3 + $0x98] sm:$0xff]
      %v3667 = vld [vmem:[#allocation3 + $0xa0] sm:$0xff]
      %v3668 = vld [vmem:[#allocation3 + $0xa8] sm:$0xff]
      %v3669 = vld [vmem:[#allocation3 + $0xb0] sm:$0xf]
      %v3670 = vld [vmem:[#allocation3 + $0xb4] sm:$0xff]
      %v3671 = vld [vmem:[#allocation3 + $0xbc] sm:$0xff]
      %v3672 = vld [vmem:[#allocation3 + $0xc4] sm:$0xff]
      %v3673 = vld [vmem:[#allocation3 + $0xcc] sm:$0xff]
      %v3674 = vld [vmem:[#allocation3 + $0xd4] sm:$0xf]
      %v3675 = vld [vmem:[#allocation3 + $0xd8] sm:$0xff]
      %v3676 = vld [vmem:[#allocation3 + $0xe0] sm:$0xff]
      %v3677 = vld [vmem:[#allocation3 + $0xe8] sm:$0xff]
      %v3678 = vld [vmem:[#allocation3 + $0xf0] sm:$0xff]
      %v3679 = vld [vmem:[#allocation3 + $0xf8] sm:$0xf]
      %v3680 = vld [vmem:[#allocation3 + $0xfc] sm:$0xff]
      %v3681 = vld [vmem:[#allocation3 + $0x104] sm:$0xff]
      %v3682 = vld [vmem:[#allocation3 + $0x10c] sm:$0xff]
      %v3683 = vld [vmem:[#allocation3 + $0x114] sm:$0xff]
      %v3684 = vld [vmem:[#allocation3 + $0x11c] sm:$0xf]
      %v3685 = vld [vmem:[#allocation3 + $0x120] sm:$0xff]
      %v3686 = vld [vmem:[#allocation3 + $0x128] sm:$0xff]
      %v3687 = vld [vmem:[#allocation3 + $0x130] sm:$0xff]
      %v3688 = vld [vmem:[#allocation3 + $0x138] sm:$0xff]
      %v3689 = vld [vmem:[#allocation3 + $0x140] sm:$0xf]
      %v3690 = vld [vmem:[#allocation3 + $0x144] sm:$0xff]
      %v3691 = vld [vmem:[#allocation3 + $0x14c] sm:$0xff]
      %v3692 = vld [vmem:[#allocation3 + $0x154] sm:$0xff]
      %v3693 = vld [vmem:[#allocation3 + $0x15c] sm:$0xff]
      %v3694 = vld [vmem:[#allocation3 + $0x164] sm:$0xf]
      %v3695 = vld [vmem:[#allocation3 + $0x168] sm:$0xff]
      %v3696 = vld [vmem:[#allocation3 + $0x170] sm:$0xff]
      %v3697 = vld [vmem:[#allocation3 + $0x178] sm:$0xff]
      %v3698 = vld [vmem:[#allocation3 + $0x180] sm:$0xff]
      %v3699 = vld [vmem:[#allocation3 + $0x188] sm:$0xf]
      %v3700 = vld [vmem:[#allocation3 + $0x18c] sm:$0xff]
      %v3701 = vld [vmem:[#allocation3 + $0x194] sm:$0xff]
      %v3702 = vld [vmem:[#allocation3 + $0x19c] sm:$0xff]
      %v3703 = vld [vmem:[#allocation3 + $0x1a4] sm:$0xff]
      %v3704 = vld [vmem:[#allocation3 + $0x1ac] sm:$0xf]
      %v3705 = vld [vmem:[#allocation3 + $0x1b0] sm:$0xff]
      %v3706 = vld [vmem:[#allocation3 + $0x1b8] sm:$0xff]
      %v3707 = vld [vmem:[#allocation3 + $0x1c0] sm:$0xff]
      %v3708 = vld [vmem:[#allocation3 + $0x1c8] sm:$0xff]
      %v3709 = vld [vmem:[#allocation3 + $0x1d0] sm:$0xf]
      %v3710 = vld [vmem:[#allocation3 + $0x1d4] sm:$0xff]
      %v3711 = vld [vmem:[#allocation3 + $0x1dc] sm:$0xff]
      %v3712 = vld [vmem:[#allocation3 + $0x1e4] sm:$0xff]
      %v3713 = vld [vmem:[#allocation3 + $0x1ec] sm:$0xff]
      %v3714 = vld [vmem:[#allocation3 + $0x1f4] sm:$0xf]
      %v3715 = vld [vmem:[#allocation3 + $0x1f8] sm:$0xff]
      %v3716 = vld [vmem:[#allocation3 + $0x200] sm:$0xff]
      %v3717 = vld [vmem:[#allocation3 + $0x208] sm:$0xff]
      %v3718 = vld [vmem:[#allocation3 + $0x210] sm:$0xff]
      %v3719 = vld [vmem:[#allocation3 + $0x218] sm:$0xf]
      %v3720 = vld [vmem:[#allocation3 + $0x21c] sm:$0xff]
      %v3721 = vld [vmem:[#allocation3 + $0x224] sm:$0xff]
      %v3722 = vld [vmem:[#allocation3 + $0x22c] sm:$0xff]
      %v3723 = vld [vmem:[#allocation3 + $0x234] sm:$0xff]
      %v3724 = vld [vmem:[#allocation3 + $0x23c] sm:$0xf]
      %v3725 = vld [vmem:[#allocation3 + $0x240] sm:$0xff]
      %v3726 = vld [vmem:[#allocation3 + $0x248] sm:$0xff]
      %v3727 = vld [vmem:[#allocation3 + $0x250] sm:$0xff]
      %v3728 = vld [vmem:[#allocation3 + $0x258] sm:$0xff]
      %v3729 = vld [vmem:[#allocation3 + $0x260] sm:$0xf]
      %v3730 = vld [vmem:[#allocation3 + $0x264] sm:$0xff]
      %v3731 = vld [vmem:[#allocation3 + $0x26c] sm:$0xff]
      %v3732 = vld [vmem:[#allocation3 + $0x274] sm:$0xff]
      %v3733 = vld [vmem:[#allocation3 + $0x27c] sm:$0xff]
      %v3734 = vld [vmem:[#allocation3 + $0x284] sm:$0xf]
      %v3735 = vld [vmem:[#allocation3 + $0x288] sm:$0xff]
      %v3736 = vld [vmem:[#allocation3 + $0x290] sm:$0xff]
      %v3737 = vld [vmem:[#allocation3 + $0x298] sm:$0xff]
      %v3738 = vld [vmem:[#allocation3 + $0x2a0] sm:$0xff]
      %v3739 = vld [vmem:[#allocation3 + $0x2a8] sm:$0xf]
      %v3740 = vld [vmem:[#allocation3 + $0x2ac] sm:$0xff]
      %v3741 = vld [vmem:[#allocation3 + $0x2b4] sm:$0xff]
      %v3742 = vld [vmem:[#allocation3 + $0x2bc] sm:$0xff]
      %v3743 = vld [vmem:[#allocation3 + $0x2c4] sm:$0xff]
      %v3744 = vld [vmem:[#allocation3 + $0x2cc] sm:$0xf]
      %v3745 = vld [vmem:[#allocation3 + $0x2d0] sm:$0xff]
      %v3746 = vld [vmem:[#allocation3 + $0x2d8] sm:$0xff]
      %v3747 = vld [vmem:[#allocation3 + $0x2e0] sm:$0xff]
      %v3748 = vld [vmem:[#allocation3 + $0x2e8] sm:$0xff]
      %v3749 = vld [vmem:[#allocation3 + $0x2f0] sm:$0xf]
      %v3750 = vld [vmem:[#allocation3 + $0x2f4] sm:$0xff]
      %v3751 = vld [vmem:[#allocation3 + $0x2fc] sm:$0xff]
      %v3752 = vld [vmem:[#allocation3 + $0x304] sm:$0xff]
      %v3753 = vld [vmem:[#allocation3 + $0x30c] sm:$0xff]
      %v3754 = vld [vmem:[#allocation3 + $0x314] sm:$0xf]
      %v3755 = vld [vmem:[#allocation3 + $0x318] sm:$0xff]
      %v3756 = vld [vmem:[#allocation3 + $0x320] sm:$0xff]
      %v3757 = vld [vmem:[#allocation3 + $0x328] sm:$0xff]
      %v3758 = vld [vmem:[#allocation3 + $0x330] sm:$0xff]
      %v3759 = vld [vmem:[#allocation3 + $0x338] sm:$0xf]
      %v3760 = vld [vmem:[#allocation3 + $0x33c] sm:$0xff]
      %v3761 = vld [vmem:[#allocation3 + $0x344] sm:$0xff]
      %v3762 = vld [vmem:[#allocation3 + $0x34c] sm:$0xff]
      %v3763 = vld [vmem:[#allocation3 + $0x354] sm:$0xff]
      %v3764 = vld [vmem:[#allocation3 + $0x35c] sm:$0xf]
      %v3765 = vld [vmem:[#allocation3 + $0x360] sm:$0xff]
      %v3766 = vld [vmem:[#allocation3 + $0x368] sm:$0xff]
      %v3767 = vld [vmem:[#allocation3 + $0x370] sm:$0xff]
      %v3768 = vld [vmem:[#allocation3 + $0x378] sm:$0xff]
      %v3769 = vld [vmem:[#allocation3 + $0x380] sm:$0xf]
      %v3770 = vld [vmem:[#allocation3 + $0x384] sm:$0xff]
      %v3771 = vld [vmem:[#allocation3 + $0x38c] sm:$0xff]
      %v3772 = vld [vmem:[#allocation3 + $0x394] sm:$0xff]
      %v3773 = vld [vmem:[#allocation3 + $0x39c] sm:$0xff]
      %v3774 = vld [vmem:[#allocation3 + $0x3a4] sm:$0xf]
      %v3775 = vld [vmem:[#allocation3 + $0x3a8] sm:$0xff]
      %v3776 = vld [vmem:[#allocation3 + $0x3b0] sm:$0xff]
      %v3777 = vld [vmem:[#allocation3 + $0x3b8] sm:$0xff]
      %v3778 = vld [vmem:[#allocation3 + $0x3c0] sm:$0xff]
      %v3779 = vld [vmem:[#allocation3 + $0x3c8] sm:$0xf]
      %v3780 = vld [vmem:[#allocation3 + $0x3cc] sm:$0xff]
      %v3781 = vld [vmem:[#allocation3 + $0x3d4] sm:$0xff]
      %v3782 = vld [vmem:[#allocation3 + $0x3dc] sm:$0xff]
      %v3783 = vld [vmem:[#allocation3 + $0x3e4] sm:$0xff]
      %v3784 = vld [vmem:[#allocation3 + $0x3ec] sm:$0xf]
      %v3785 = vld [vmem:[#allocation3 + $0x3f0] sm:$0xff]
      %v3786 = vld [vmem:[#allocation3 + $0x3f8] sm:$0xff]
      %v3787 = vld [vmem:[#allocation3 + $0x400] sm:$0xff]
      %v3788 = vld [vmem:[#allocation3 + $0x408] sm:$0xff]
      %v3789 = vld [vmem:[#allocation3 + $0x410] sm:$0xf]
      %v3790 = vld [vmem:[#allocation3 + $0x414] sm:$0xff]
      %v3791 = vld [vmem:[#allocation3 + $0x41c] sm:$0xff]
      %v3792 = vld [vmem:[#allocation3 + $0x424] sm:$0xff]
      %v3793 = vld [vmem:[#allocation3 + $0x42c] sm:$0xff]
      %v3794 = vld [vmem:[#allocation3 + $0x434] sm:$0xf]
      %v3795 = vld [vmem:[#allocation3 + $0x438] sm:$0xff]
      %v3796 = vld [vmem:[#allocation3 + $0x440] sm:$0xff]
      %v3797 = vld [vmem:[#allocation3 + $0x448] sm:$0xff]
      %v3798 = vld [vmem:[#allocation3 + $0x450] sm:$0xff]
      %v3799 = vld [vmem:[#allocation3 + $0x458] sm:$0xf]
      %v3800 = vld [vmem:[#allocation3 + $0x45c] sm:$0xff]
      %v3801 = vld [vmem:[#allocation3 + $0x464] sm:$0xff]
      %v3802 = vld [vmem:[#allocation3 + $0x46c] sm:$0xff]
      %v3803 = vld [vmem:[#allocation3 + $0x474] sm:$0xff]
      %v3804 = vld [vmem:[#allocation3 + $0x47c] sm:$0xf]
      %v3805 = vld [vmem:[%s3] sm:$0xf]
      %v3806 = vld [vmem:[%s3 + $0x4] sm:$0xf]
      %v3807 = vld [vmem:[%s3 + $0x8] sm:$0xf]
      %v3808 = vld [vmem:[%s3 + $0xc] sm:$0xf]
      %v3809 = vld [vmem:[%s3 + $0x10] sm:$0xf]
      %v3810 = vld [vmem:[%s3 + $0x14] sm:$0xf]
      %v3811 = vld [vmem:[%s3 + $0x18] sm:$0xf]
      %v3812 = vld [vmem:[%s3 + $0x1c] sm:$0xf]
      %v3813 = vld [vmem:[%s3 + $0x20] sm:$0xf]
      %v3814 = vld [vmem:[%s3 + $0x24] sm:$0xf]
      %v3815 = vld [vmem:[%s3 + $0x28] sm:$0xf]
      %v3816 = vld [vmem:[%s3 + $0x2c] sm:$0xf]
      %v3817 = vld [vmem:[%s3 + $0x30] sm:$0xf]
      %v3818 = vld [vmem:[%s3 + $0x34] sm:$0xf]
      %v3819 = vld [vmem:[%s3 + $0x38] sm:$0xf]
      %v3820 = vld [vmem:[%s3 + $0x3c] sm:$0xf]
      %v3821 = vld [vmem:[%s3 + $0x40] sm:$0xf]
      %v3822 = vld [vmem:[%s3 + $0x44] sm:$0xf]
      %v3823 = vld [vmem:[%s3 + $0x48] sm:$0xf]
      %v3824 = vld [vmem:[%s3 + $0x4c] sm:$0xf]
      %v3825 = vld [vmem:[%s3 + $0x50] sm:$0xf]
      %v3826 = vld [vmem:[%s3 + $0x54] sm:$0xf]
      %v3827 = vld [vmem:[%s3 + $0x58] sm:$0xf]
      %v3828 = vld [vmem:[%s3 + $0x5c] sm:$0xf]
      %v3829 = vld [vmem:[%s3 + $0x60] sm:$0xf]
      %v3830 = vld [vmem:[%s3 + $0x64] sm:$0xf]
      %v3831 = vld [vmem:[%s3 + $0x68] sm:$0xf]
      %v3832 = vld [vmem:[%s3 + $0x6c] sm:$0xf]
      %v3833 = vld [vmem:[%s3 + $0x70] sm:$0xf]
      %v3834 = vld [vmem:[%s3 + $0x74] sm:$0xf]
      %v3835 = vld [vmem:[%s3 + $0x78] sm:$0xf]
      %v3836 = vld [vmem:[%s3 + $0x7c] sm:$0xf]
      %v3837 = vld [vmem:[%s3 + $0x80] sm:$0xf]
      %v3838 = vld [vmem:[%s3 + $0x84] sm:$0xf]
      %v3839 = vld [vmem:[%s3 + $0x88] sm:$0xf]
      %v3840 = vld [vmem:[%s3 + $0x8c] sm:$0xf]
      %v3841 = vld [vmem:[%s3 + $0x90] sm:$0xf]
      %v3842 = vld [vmem:[%s3 + $0x94] sm:$0xf]
      %v3843 = vld [vmem:[%s3 + $0x98] sm:$0xf]
      %v3844 = vld [vmem:[%s3 + $0x9c] sm:$0xf]
      %v3845 = vld [vmem:[%s3 + $0xa0] sm:$0xf]
      %v3846 = vld [vmem:[%s3 + $0xa4] sm:$0xf]
      %v3847 = vld [vmem:[%s3 + $0xa8] sm:$0xf]
      %v3848 = vld [vmem:[%s3 + $0xac] sm:$0xf]
      %v3849 = vld [vmem:[%s3 + $0xb0] sm:$0xf]
      %v3850 = vld [vmem:[%s3 + $0xb4] sm:$0xf]
      %v3851 = vld [vmem:[%s3 + $0xb8] sm:$0xf]
      %v3852 = vld [vmem:[%s3 + $0xbc] sm:$0xf]
      %v3853 = vld [vmem:[%s3 + $0xc0] sm:$0xf]
      %v3854 = vld [vmem:[%s3 + $0xc4] sm:$0xf]
      %v3855 = vld [vmem:[%s3 + $0xc8] sm:$0xf]
      %v3856 = vld [vmem:[%s3 + $0xcc] sm:$0xf]
      %v3857 = vld [vmem:[%s3 + $0xd0] sm:$0xf]
      %v3858 = vld [vmem:[%s3 + $0xd4] sm:$0xf]
      %v3859 = vld [vmem:[%s3 + $0xd8] sm:$0xf]
      %v3860 = vld [vmem:[%s3 + $0xdc] sm:$0xf]
      %v3861 = vld [vmem:[%s3 + $0xe0] sm:$0xf]
      %v3862 = vld [vmem:[%s3 + $0xe4] sm:$0xf]
      %v3863 = vld [vmem:[%s3 + $0xe8] sm:$0xf]
      %v3864 = vld [vmem:[%s3 + $0xec] sm:$0xf]
      %v3865 = vld [vmem:[%s3 + $0xf0] sm:$0xf]
      %v3866 = vld [vmem:[%s3 + $0xf4] sm:$0xf]
      %v3867 = vld [vmem:[%s3 + $0xf8] sm:$0xf]
      %v3868 = vld [vmem:[%s3 + $0xfc] sm:$0xf]
      %v3869 = vld [vmem:[%s3 + $0x100] sm:$0xf]
      %v3870 = vld [vmem:[%s3 + $0x104] sm:$0xf]
      %v3871 = vld [vmem:[%s3 + $0x108] sm:$0xf]
      %v3872 = vld [vmem:[%s3 + $0x10c] sm:$0xf]
      %v3873 = vld [vmem:[%s3 + $0x110] sm:$0xf]
      %v3874 = vld [vmem:[%s3 + $0x114] sm:$0xf]
      %v3875 = vld [vmem:[%s3 + $0x118] sm:$0xf]
      %v3876 = vld [vmem:[%s3 + $0x11c] sm:$0xf]
      %v3877 = vld [vmem:[%s3 + $0x120] sm:$0xf]
      %v3878 = vld [vmem:[%s3 + $0x124] sm:$0xf]
      %v3879 = vld [vmem:[%s3 + $0x128] sm:$0xf]
      %v3880 = vld [vmem:[%s3 + $0x12c] sm:$0xf]
      %v3881 = vld [vmem:[%s3 + $0x130] sm:$0xf]
      %v3882 = vld [vmem:[%s3 + $0x134] sm:$0xf]
      %v3883 = vld [vmem:[%s3 + $0x138] sm:$0xf]
      %v3884 = vld [vmem:[%s3 + $0x13c] sm:$0xf]
      %v3885 = vld [vmem:[%s3 + $0x140] sm:$0xf]
      %v3886 = vld [vmem:[%s3 + $0x144] sm:$0xf]
      %v3887 = vld [vmem:[%s3 + $0x148] sm:$0xf]
      %v3888 = vld [vmem:[%s3 + $0x14c] sm:$0xf]
      %v3889 = vld [vmem:[%s3 + $0x150] sm:$0xf]
      %v3890 = vld [vmem:[%s3 + $0x154] sm:$0xf]
      %v3891 = vld [vmem:[%s3 + $0x158] sm:$0xf]
      %v3892 = vld [vmem:[%s3 + $0x15c] sm:$0xf]
      %v3893 = vld [vmem:[%s3 + $0x160] sm:$0xf]
      %v3894 = vld [vmem:[%s3 + $0x164] sm:$0xf]
      %v3895 = vld [vmem:[%s3 + $0x168] sm:$0xf]
      %v3896 = vld [vmem:[%s3 + $0x16c] sm:$0xf]
      %v3897 = vld [vmem:[%s3 + $0x170] sm:$0xf]
      %v3898 = vld [vmem:[%s3 + $0x174] sm:$0xf]
      %v3899 = vld [vmem:[%s3 + $0x178] sm:$0xf]
      %v3900 = vld [vmem:[%s3 + $0x17c] sm:$0xf]
      %v3901 = vld [vmem:[%s3 + $0x180] sm:$0xf]
      %v3902 = vld [vmem:[%s3 + $0x184] sm:$0xf]
      %v3903 = vld [vmem:[%s3 + $0x188] sm:$0xf]
      %v3904 = vld [vmem:[%s3 + $0x18c] sm:$0xf]
      %v3905 = vld [vmem:[%s3 + $0x190] sm:$0xf]
      %v3906 = vld [vmem:[%s3 + $0x194] sm:$0xf]
      %v3907 = vld [vmem:[%s3 + $0x198] sm:$0xf]
      %v3908 = vld [vmem:[%s3 + $0x19c] sm:$0xf]
      %v3909 = vld [vmem:[%s3 + $0x1a0] sm:$0xf]
      %v3910 = vld [vmem:[%s3 + $0x1a4] sm:$0xf]
      %v3911 = vld [vmem:[%s3 + $0x1a8] sm:$0xf]
      %v3912 = vld [vmem:[%s3 + $0x1ac] sm:$0xf]
      %v3913 = vld [vmem:[%s3 + $0x1b0] sm:$0xf]
      %v3914 = vld [vmem:[%s3 + $0x1b4] sm:$0xf]
      %v3915 = vld [vmem:[%s3 + $0x1b8] sm:$0xf]
      %v3916 = vld [vmem:[%s3 + $0x1bc] sm:$0xf]
      %v3917 = vld [vmem:[%s3 + $0x1c0] sm:$0xf]
      %v3918 = vld [vmem:[%s3 + $0x1c4] sm:$0xf]
      %v3919 = vld [vmem:[%s3 + $0x1c8] sm:$0xf]
      %v3920 = vld [vmem:[%s3 + $0x1cc] sm:$0xf]
      %v3921 = vld [vmem:[%s3 + $0x1d0] sm:$0xf]
      %v3922 = vld [vmem:[%s3 + $0x1d4] sm:$0xf]
      %v3923 = vld [vmem:[%s3 + $0x1d8] sm:$0xf]
      %v3924 = vld [vmem:[%s3 + $0x1dc] sm:$0xf]
      %v3925 = vld [vmem:[%s3 + $0x1e0] sm:$0xf]
      %v3926 = vld [vmem:[%s3 + $0x1e4] sm:$0xf]
      %v3927 = vld [vmem:[%s3 + $0x1e8] sm:$0xf]
      %v3928 = vld [vmem:[%s3 + $0x1ec] sm:$0xf]
      %v3929 = vld [vmem:[%s3 + $0x1f0] sm:$0xf]
      %v3930 = vld [vmem:[%s3 + $0x1f4] sm:$0xf]
      %v3931 = vld [vmem:[%s3 + $0x1f8] sm:$0xf]
      %v3932 = vld [vmem:[%s3 + $0x1fc] sm:$0xf]
      %v3933 = vld [vmem:[%s3 + $0x200] sm:$0xf]
      %v3934 = vld [vmem:[%s3 + $0x204] sm:$0xf]
      %v3935 = vld [vmem:[%s3 + $0x208] sm:$0xf]
      %v3936 = vld [vmem:[%s3 + $0x20c] sm:$0xf]
      %v3937 = vld [vmem:[%s3 + $0x210] sm:$0xf]
      %v3938 = vld [vmem:[%s3 + $0x214] sm:$0xf]
      %v3939 = vld [vmem:[%s3 + $0x218] sm:$0xf]
      %v3940 = vld [vmem:[%s3 + $0x21c] sm:$0xf]
      %v3941 = vld [vmem:[%s3 + $0x220] sm:$0xf]
      %v3942 = vld [vmem:[%s3 + $0x224] sm:$0xf]
      %v3943 = vld [vmem:[%s3 + $0x228] sm:$0xf]
      %v3944 = vld [vmem:[%s3 + $0x22c] sm:$0xf]
      %v3945 = vld [vmem:[%s3 + $0x230] sm:$0xf]
      %v3946 = vld [vmem:[%s3 + $0x234] sm:$0xf]
      %v3947 = vld [vmem:[%s3 + $0x238] sm:$0xf]
      %v3948 = vld [vmem:[%s3 + $0x23c] sm:$0xf]
      %v4109 = vunpack.c.l.b16 %v3645
      %v4110 = vunpack.c.h.b16 %v3645
      %v4111 = vunpack.c.l.b16 %v3646
      %v4112 = vunpack.c.h.b16 %v3646
      %v4113 = vunpack.c.l.b16 %v3647
      %v4114 = vunpack.c.h.b16 %v3647
      %v4115 = vunpack.c.l.b16 %v3648
      %v4116 = vunpack.c.h.b16 %v3648
      %v4117 = vunpack.c.l.b16 %v3649
      %v4118 = vunpack.c.l.b16 %v3650
      %v4119 = vunpack.c.h.b16 %v3650
      %v4120 = vunpack.c.l.b16 %v3651
      %v4121 = vunpack.c.h.b16 %v3651
      %v4122 = vunpack.c.l.b16 %v3652
      %v4123 = vunpack.c.h.b16 %v3652
      %v4124 = vunpack.c.l.b16 %v3653
      %v4125 = vunpack.c.h.b16 %v3653
      %v4126 = vunpack.c.l.b16 %v3654
      %v4127 = vunpack.c.l.b16 %v3655
      %v4128 = vunpack.c.h.b16 %v3655
      %v4129 = vunpack.c.l.b16 %v3656
      %v4130 = vunpack.c.h.b16 %v3656
      %v4131 = vunpack.c.l.b16 %v3657
      %v4132 = vunpack.c.h.b16 %v3657
      %v4133 = vunpack.c.l.b16 %v3658
      %v4134 = vunpack.c.h.b16 %v3658
      %v4135 = vunpack.c.l.b16 %v3659
      %v4136 = vunpack.c.l.b16 %v3660
      %v4137 = vunpack.c.h.b16 %v3660
      %v4138 = vunpack.c.l.b16 %v3661
      %v4139 = vunpack.c.h.b16 %v3661
      %v4140 = vunpack.c.l.b16 %v3662
      %v4141 = vunpack.c.h.b16 %v3662
      %v4142 = vunpack.c.l.b16 %v3663
      %v4143 = vunpack.c.h.b16 %v3663
      %v4144 = vunpack.c.l.b16 %v3664
      %v4145 = vunpack.c.l.b16 %v3665
      %v4146 = vunpack.c.h.b16 %v3665
      %v4147 = vunpack.c.l.b16 %v3666
      %v4148 = vunpack.c.h.b16 %v3666
      %v4149 = vunpack.c.l.b16 %v3667
      %v4150 = vunpack.c.h.b16 %v3667
      %v4151 = vunpack.c.l.b16 %v3668
      %v4152 = vunpack.c.h.b16 %v3668
      %v4153 = vunpack.c.l.b16 %v3669
      %v4154 = vunpack.c.l.b16 %v3670
      %v4155 = vunpack.c.h.b16 %v3670
      %v4156 = vunpack.c.l.b16 %v3671
      %v4157 = vunpack.c.h.b16 %v3671
      %v4158 = vunpack.c.l.b16 %v3672
      %v4159 = vunpack.c.h.b16 %v3672
      %v4160 = vunpack.c.l.b16 %v3673
      %v4161 = vunpack.c.h.b16 %v3673
      %v4162 = vunpack.c.l.b16 %v3674
      %v4163 = vunpack.c.l.b16 %v3675
      %v4164 = vunpack.c.h.b16 %v3675
      %v4165 = vunpack.c.l.b16 %v3676
      %v4166 = vunpack.c.h.b16 %v3676
      %v4167 = vunpack.c.l.b16 %v3677
      %v4168 = vunpack.c.h.b16 %v3677
      %v4169 = vunpack.c.l.b16 %v3678
      %v4170 = vunpack.c.h.b16 %v3678
      %v4171 = vunpack.c.l.b16 %v3679
      %v4172 = vunpack.c.l.b16 %v3680
      %v4173 = vunpack.c.h.b16 %v3680
      %v4174 = vunpack.c.l.b16 %v3681
      %v4175 = vunpack.c.h.b16 %v3681
      %v4176 = vunpack.c.l.b16 %v3682
      %v4177 = vunpack.c.h.b16 %v3682
      %v4178 = vunpack.c.l.b16 %v3683
      %v4179 = vunpack.c.h.b16 %v3683
      %v4180 = vunpack.c.l.b16 %v3684
      %v4181 = vunpack.c.l.b16 %v3685
      %v4182 = vunpack.c.h.b16 %v3685
      %v4183 = vunpack.c.l.b16 %v3686
      %v4184 = vunpack.c.h.b16 %v3686
      %v4185 = vunpack.c.l.b16 %v3687
      %v4186 = vunpack.c.h.b16 %v3687
      %v4187 = vunpack.c.l.b16 %v3688
      %v4188 = vunpack.c.h.b16 %v3688
      %v4189 = vunpack.c.l.b16 %v3689
      %v4190 = vunpack.c.l.b16 %v3690
      %v4191 = vunpack.c.h.b16 %v3690
      %v4192 = vunpack.c.l.b16 %v3691
      %v4193 = vunpack.c.h.b16 %v3691
      %v4194 = vunpack.c.l.b16 %v3692
      %v4195 = vunpack.c.h.b16 %v3692
      %v4196 = vunpack.c.l.b16 %v3693
      %v4197 = vunpack.c.h.b16 %v3693
      %v4198 = vunpack.c.l.b16 %v3694
      %v4199 = vunpack.c.l.b16 %v3695
      %v4200 = vunpack.c.h.b16 %v3695
      %v4201 = vunpack.c.l.b16 %v3696
      %v4202 = vunpack.c.h.b16 %v3696
      %v4203 = vunpack.c.l.b16 %v3697
      %v4204 = vunpack.c.h.b16 %v3697
      %v4205 = vunpack.c.l.b16 %v3698
      %v4206 = vunpack.c.h.b16 %v3698
      %v4207 = vunpack.c.l.b16 %v3699
      %v4208 = vunpack.c.l.b16 %v3700
      %v4209 = vunpack.c.h.b16 %v3700
      %v4210 = vunpack.c.l.b16 %v3701
      %v4211 = vunpack.c.h.b16 %v3701
      %v4212 = vunpack.c.l.b16 %v3702
      %v4213 = vunpack.c.h.b16 %v3702
      %v4214 = vunpack.c.l.b16 %v3703
      %v4215 = vunpack.c.h.b16 %v3703
      %v4216 = vunpack.c.l.b16 %v3704
      %v4217 = vunpack.c.l.b16 %v3705
      %v4218 = vunpack.c.h.b16 %v3705
      %v4219 = vunpack.c.l.b16 %v3706
      %v4220 = vunpack.c.h.b16 %v3706
      %v4221 = vunpack.c.l.b16 %v3707
      %v4222 = vunpack.c.h.b16 %v3707
      %v4223 = vunpack.c.l.b16 %v3708
      %v4224 = vunpack.c.h.b16 %v3708
      %v4225 = vunpack.c.l.b16 %v3709
      %v4226 = vunpack.c.l.b16 %v3710
      %v4227 = vunpack.c.h.b16 %v3710
      %v4228 = vunpack.c.l.b16 %v3711
      %v4229 = vunpack.c.h.b16 %v3711
      %v4230 = vunpack.c.l.b16 %v3712
      %v4231 = vunpack.c.h.b16 %v3712
      %v4232 = vunpack.c.l.b16 %v3713
      %v4233 = vunpack.c.h.b16 %v3713
      %v4234 = vunpack.c.l.b16 %v3714
      %v4235 = vunpack.c.l.b16 %v3715
      %v4236 = vunpack.c.h.b16 %v3715
      %v4237 = vunpack.c.l.b16 %v3716
      %v4238 = vunpack.c.h.b16 %v3716
      %v4239 = vunpack.c.l.b16 %v3717
      %v4240 = vunpack.c.h.b16 %v3717
      %v4241 = vunpack.c.l.b16 %v3718
      %v4242 = vunpack.c.h.b16 %v3718
      %v4243 = vunpack.c.l.b16 %v3719
      %v4244 = vunpack.c.l.b16 %v3720
      %v4245 = vunpack.c.h.b16 %v3720
      %v4246 = vunpack.c.l.b16 %v3721
      %v4247 = vunpack.c.h.b16 %v3721
      %v4248 = vunpack.c.l.b16 %v3722
      %v4249 = vunpack.c.h.b16 %v3722
      %v4250 = vunpack.c.l.b16 %v3723
      %v4251 = vunpack.c.h.b16 %v3723
      %v4252 = vunpack.c.l.b16 %v3724
      %v4253 = vunpack.c.l.b16 %v3725
      %v4254 = vunpack.c.h.b16 %v3725
      %v4255 = vunpack.c.l.b16 %v3726
      %v4256 = vunpack.c.h.b16 %v3726
      %v4257 = vunpack.c.l.b16 %v3727
      %v4258 = vunpack.c.h.b16 %v3727
      %v4259 = vunpack.c.l.b16 %v3728
      %v4260 = vunpack.c.h.b16 %v3728
      %v4261 = vunpack.c.l.b16 %v3729
      %v4262 = vunpack.c.l.b16 %v3730
      %v4263 = vunpack.c.h.b16 %v3730
      %v4264 = vunpack.c.l.b16 %v3731
      %v4265 = vunpack.c.h.b16 %v3731
      %v4266 = vunpack.c.l.b16 %v3732
      %v4267 = vunpack.c.h.b16 %v3732
      %v4268 = vunpack.c.l.b16 %v3733
      %v4269 = vunpack.c.h.b16 %v3733
      %v4270 = vunpack.c.l.b16 %v3734
      %v4271 = vunpack.c.l.b16 %v3735
      %v4272 = vunpack.c.h.b16 %v3735
      %v4273 = vunpack.c.l.b16 %v3736
      %v4274 = vunpack.c.h.b16 %v3736
      %v4275 = vunpack.c.l.b16 %v3737
      %v4276 = vunpack.c.h.b16 %v3737
      %v4277 = vunpack.c.l.b16 %v3738
      %v4278 = vunpack.c.h.b16 %v3738
      %v4279 = vunpack.c.l.b16 %v3739
      %v4280 = vunpack.c.l.b16 %v3740
      %v4281 = vunpack.c.h.b16 %v3740
      %v4282 = vunpack.c.l.b16 %v3741
      %v4283 = vunpack.c.h.b16 %v3741
      %v4284 = vunpack.c.l.b16 %v3742
      %v4285 = vunpack.c.h.b16 %v3742
      %v4286 = vunpack.c.l.b16 %v3743
      %v4287 = vunpack.c.h.b16 %v3743
      %v4288 = vunpack.c.l.b16 %v3744
      %v4289 = vunpack.c.l.b16 %v3745
      %v4290 = vunpack.c.h.b16 %v3745
      %v4291 = vunpack.c.l.b16 %v3746
      %v4292 = vunpack.c.h.b16 %v3746
      %v4293 = vunpack.c.l.b16 %v3747
      %v4294 = vunpack.c.h.b16 %v3747
      %v4295 = vunpack.c.l.b16 %v3748
      %v4296 = vunpack.c.h.b16 %v3748
      %v4297 = vunpack.c.l.b16 %v3749
      %v4298 = vunpack.c.l.b16 %v3750
      %v4299 = vunpack.c.h.b16 %v3750
      %v4300 = vunpack.c.l.b16 %v3751
      %v4301 = vunpack.c.h.b16 %v3751
      %v4302 = vunpack.c.l.b16 %v3752
      %v4303 = vunpack.c.h.b16 %v3752
      %v4304 = vunpack.c.l.b16 %v3753
      %v4305 = vunpack.c.h.b16 %v3753
      %v4306 = vunpack.c.l.b16 %v3754
      %v4307 = vunpack.c.l.b16 %v3755
      %v4308 = vunpack.c.h.b16 %v3755
      %v4309 = vunpack.c.l.b16 %v3756
      %v4310 = vunpack.c.h.b16 %v3756
      %v4311 = vunpack.c.l.b16 %v3757
      %v4312 = vunpack.c.h.b16 %v3757
      %v4313 = vunpack.c.l.b16 %v3758
      %v4314 = vunpack.c.h.b16 %v3758
      %v4315 = vunpack.c.l.b16 %v3759
      %v4316 = vunpack.c.l.b16 %v3760
      %v4317 = vunpack.c.h.b16 %v3760
      %v4318 = vunpack.c.l.b16 %v3761
      %v4319 = vunpack.c.h.b16 %v3761
      %v4320 = vunpack.c.l.b16 %v3762
      %v4321 = vunpack.c.h.b16 %v3762
      %v4322 = vunpack.c.l.b16 %v3763
      %v4323 = vunpack.c.h.b16 %v3763
      %v4324 = vunpack.c.l.b16 %v3764
      %v4325 = vunpack.c.l.b16 %v3765
      %v4326 = vunpack.c.h.b16 %v3765
      %v4327 = vunpack.c.l.b16 %v3766
      %v4328 = vunpack.c.h.b16 %v3766
      %v4329 = vunpack.c.l.b16 %v3767
      %v4330 = vunpack.c.h.b16 %v3767
      %v4331 = vunpack.c.l.b16 %v3768
      %v4332 = vunpack.c.h.b16 %v3768
      %v4333 = vunpack.c.l.b16 %v3769
      %v4334 = vunpack.c.l.b16 %v3770
      %v4335 = vunpack.c.h.b16 %v3770
      %v4336 = vunpack.c.l.b16 %v3771
      %v4337 = vunpack.c.h.b16 %v3771
      %v4338 = vunpack.c.l.b16 %v3772
      %v4339 = vunpack.c.h.b16 %v3772
      %v4340 = vunpack.c.l.b16 %v3773
      %v4341 = vunpack.c.h.b16 %v3773
      %v4342 = vunpack.c.l.b16 %v3774
      %v4343 = vunpack.c.l.b16 %v3775
      %v4344 = vunpack.c.h.b16 %v3775
      %v4345 = vunpack.c.l.b16 %v3776
      %v4346 = vunpack.c.h.b16 %v3776
      %v4347 = vunpack.c.l.b16 %v3777
      %v4348 = vunpack.c.h.b16 %v3777
      %v4349 = vunpack.c.l.b16 %v3778
      %v4350 = vunpack.c.h.b16 %v3778
      %v4351 = vunpack.c.l.b16 %v3779
      %v4352 = vunpack.c.l.b16 %v3780
      %v4353 = vunpack.c.h.b16 %v3780
      %v4354 = vunpack.c.l.b16 %v3781
      %v4355 = vunpack.c.h.b16 %v3781
      %v4356 = vunpack.c.l.b16 %v3782
      %v4357 = vunpack.c.h.b16 %v3782
      %v4358 = vunpack.c.l.b16 %v3783
      %v4359 = vunpack.c.h.b16 %v3783
      %v4360 = vunpack.c.l.b16 %v3784
      %v4361 = vunpack.c.l.b16 %v3785
      %v4362 = vunpack.c.h.b16 %v3785
      %v4363 = vunpack.c.l.b16 %v3786
      %v4364 = vunpack.c.h.b16 %v3786
      %v4365 = vunpack.c.l.b16 %v3787
      %v4366 = vunpack.c.h.b16 %v3787
      %v4367 = vunpack.c.l.b16 %v3788
      %v4368 = vunpack.c.h.b16 %v3788
      %v4369 = vunpack.c.l.b16 %v3789
      %v4370 = vunpack.c.l.b16 %v3790
      %v4371 = vunpack.c.h.b16 %v3790
      %v4372 = vunpack.c.l.b16 %v3791
      %v4373 = vunpack.c.h.b16 %v3791
      %v4374 = vunpack.c.l.b16 %v3792
      %v4375 = vunpack.c.h.b16 %v3792
      %v4376 = vunpack.c.l.b16 %v3793
      %v4377 = vunpack.c.h.b16 %v3793
      %v4378 = vunpack.c.l.b16 %v3794
      %v4379 = vunpack.c.l.b16 %v3795
      %v4380 = vunpack.c.h.b16 %v3795
      %v4381 = vunpack.c.l.b16 %v3796
      %v4382 = vunpack.c.h.b16 %v3796
      %v4383 = vunpack.c.l.b16 %v3797
      %v4384 = vunpack.c.h.b16 %v3797
      %v4385 = vunpack.c.l.b16 %v3798
      %v4386 = vunpack.c.h.b16 %v3798
      %v4387 = vunpack.c.l.b16 %v3799
      %v4388 = vunpack.c.l.b16 %v3800
      %v4389 = vunpack.c.h.b16 %v3800
      %v4390 = vunpack.c.l.b16 %v3801
      %v4391 = vunpack.c.h.b16 %v3801
      %v4392 = vunpack.c.l.b16 %v3802
      %v4393 = vunpack.c.h.b16 %v3802
      %v4394 = vunpack.c.l.b16 %v3803
      %v4395 = vunpack.c.h.b16 %v3803
      %v4396 = vunpack.c.l.b16 %v3804
      %v4397 = vpack.c.b16 %v4118, %v4109
      %v4398 = vpack.c.b16 %v4119, %v4110
      %v4399 = vpack.c.b16 %v4120, %v4111
      %v4400 = vpack.c.b16 %v4121, %v4112
      %v4401 = vpack.c.b16 %v4122, %v4113
      %v4402 = vpack.c.b16 %v4123, %v4114
      %v4403 = vpack.c.b16 %v4124, %v4115
      %v4404 = vpack.c.b16 %v4125, %v4116
      %v4405 = vpack.c.b16 %v4126, %v4117
      %v4406 = vpack.c.b16 %v4136, %v4127
      %v4407 = vpack.c.b16 %v4137, %v4128
      %v4408 = vpack.c.b16 %v4138, %v4129
      %v4409 = vpack.c.b16 %v4139, %v4130
      %v4410 = vpack.c.b16 %v4140, %v4131
      %v4411 = vpack.c.b16 %v4141, %v4132
      %v4412 = vpack.c.b16 %v4142, %v4133
      %v4413 = vpack.c.b16 %v4143, %v4134
      %v4414 = vpack.c.b16 %v4144, %v4135
      %v4415 = vpack.c.b16 %v4154, %v4145
      %v4416 = vpack.c.b16 %v4155, %v4146
      %v4417 = vpack.c.b16 %v4156, %v4147
      %v4418 = vpack.c.b16 %v4157, %v4148
      %v4419 = vpack.c.b16 %v4158, %v4149
      %v4420 = vpack.c.b16 %v4159, %v4150
      %v4421 = vpack.c.b16 %v4160, %v4151
      %v4422 = vpack.c.b16 %v4161, %v4152
      %v4423 = vpack.c.b16 %v4162, %v4153
      %v4424 = vpack.c.b16 %v4172, %v4163
      %v4425 = vpack.c.b16 %v4173, %v4164
      %v4426 = vpack.c.b16 %v4174, %v4165
      %v4427 = vpack.c.b16 %v4175, %v4166
      %v4428 = vpack.c.b16 %v4176, %v4167
      %v4429 = vpack.c.b16 %v4177, %v4168
      %v4430 = vpack.c.b16 %v4178, %v4169
      %v4431 = vpack.c.b16 %v4179, %v4170
      %v4432 = vpack.c.b16 %v4180, %v4171
      %v4433 = vpack.c.b16 %v4190, %v4181
      %v4434 = vpack.c.b16 %v4191, %v4182
      %v4435 = vpack.c.b16 %v4192, %v4183
      %v4436 = vpack.c.b16 %v4193, %v4184
      %v4437 = vpack.c.b16 %v4194, %v4185
      %v4438 = vpack.c.b16 %v4195, %v4186
      %v4439 = vpack.c.b16 %v4196, %v4187
      %v4440 = vpack.c.b16 %v4197, %v4188
      %v4441 = vpack.c.b16 %v4198, %v4189
      %v4442 = vpack.c.b16 %v4208, %v4199
      %v4443 = vpack.c.b16 %v4209, %v4200
      %v4444 = vpack.c.b16 %v4210, %v4201
      %v4445 = vpack.c.b16 %v4211, %v4202
      %v4446 = vpack.c.b16 %v4212, %v4203
      %v4447 = vpack.c.b16 %v4213, %v4204
      %v4448 = vpack.c.b16 %v4214, %v4205
      %v4449 = vpack.c.b16 %v4215, %v4206
      %v4450 = vpack.c.b16 %v4216, %v4207
      %v4451 = vpack.c.b16 %v4226, %v4217
      %v4452 = vpack.c.b16 %v4227, %v4218
      %v4453 = vpack.c.b16 %v4228, %v4219
      %v4454 = vpack.c.b16 %v4229, %v4220
      %v4455 = vpack.c.b16 %v4230, %v4221
      %v4456 = vpack.c.b16 %v4231, %v4222
      %v4457 = vpack.c.b16 %v4232, %v4223
      %v4458 = vpack.c.b16 %v4233, %v4224
      %v4459 = vpack.c.b16 %v4234, %v4225
      %v4460 = vpack.c.b16 %v4244, %v4235
      %v4461 = vpack.c.b16 %v4245, %v4236
      %v4462 = vpack.c.b16 %v4246, %v4237
      %v4463 = vpack.c.b16 %v4247, %v4238
      %v4464 = vpack.c.b16 %v4248, %v4239
      %v4465 = vpack.c.b16 %v4249, %v4240
      %v4466 = vpack.c.b16 %v4250, %v4241
      %v4467 = vpack.c.b16 %v4251, %v4242
      %v4468 = vpack.c.b16 %v4252, %v4243
      %v4469 = vpack.c.b16 %v4262, %v4253
      %v4470 = vpack.c.b16 %v4263, %v4254
      %v4471 = vpack.c.b16 %v4264, %v4255
      %v4472 = vpack.c.b16 %v4265, %v4256
      %v4473 = vpack.c.b16 %v4266, %v4257
      %v4474 = vpack.c.b16 %v4267, %v4258
      %v4475 = vpack.c.b16 %v4268, %v4259
      %v4476 = vpack.c.b16 %v4269, %v4260
      %v4477 = vpack.c.b16 %v4270, %v4261
      %v4478 = vpack.c.b16 %v4280, %v4271
      %v4479 = vpack.c.b16 %v4281, %v4272
      %v4480 = vpack.c.b16 %v4282, %v4273
      %v4481 = vpack.c.b16 %v4283, %v4274
      %v4482 = vpack.c.b16 %v4284, %v4275
      %v4483 = vpack.c.b16 %v4285, %v4276
      %v4484 = vpack.c.b16 %v4286, %v4277
      %v4485 = vpack.c.b16 %v4287, %v4278
      %v4486 = vpack.c.b16 %v4288, %v4279
      %v4487 = vpack.c.b16 %v4298, %v4289
      %v4488 = vpack.c.b16 %v4299, %v4290
      %v4489 = vpack.c.b16 %v4300, %v4291
      %v4490 = vpack.c.b16 %v4301, %v4292
      %v4491 = vpack.c.b16 %v4302, %v4293
      %v4492 = vpack.c.b16 %v4303, %v4294
      %v4493 = vpack.c.b16 %v4304, %v4295
      %v4494 = vpack.c.b16 %v4305, %v4296
      %v4495 = vpack.c.b16 %v4306, %v4297
      %v4496 = vpack.c.b16 %v4316, %v4307
      %v4497 = vpack.c.b16 %v4317, %v4308
      %v4498 = vpack.c.b16 %v4318, %v4309
      %v4499 = vpack.c.b16 %v4319, %v4310
      %v4500 = vpack.c.b16 %v4320, %v4311
      %v4501 = vpack.c.b16 %v4321, %v4312
      %v4502 = vpack.c.b16 %v4322, %v4313
      %v4503 = vpack.c.b16 %v4323, %v4314
      %v4504 = vpack.c.b16 %v4324, %v4315
      %v4505 = vpack.c.b16 %v4334, %v4325
      %v4506 = vpack.c.b16 %v4335, %v4326
      %v4507 = vpack.c.b16 %v4336, %v4327
      %v4508 = vpack.c.b16 %v4337, %v4328
      %v4509 = vpack.c.b16 %v4338, %v4329
      %v4510 = vpack.c.b16 %v4339, %v4330
      %v4511 = vpack.c.b16 %v4340, %v4331
      %v4512 = vpack.c.b16 %v4341, %v4332
      %v4513 = vpack.c.b16 %v4342, %v4333
      %v4514 = vpack.c.b16 %v4352, %v4343
      %v4515 = vpack.c.b16 %v4353, %v4344
      %v4516 = vpack.c.b16 %v4354, %v4345
      %v4517 = vpack.c.b16 %v4355, %v4346
      %v4518 = vpack.c.b16 %v4356, %v4347
      %v4519 = vpack.c.b16 %v4357, %v4348
      %v4520 = vpack.c.b16 %v4358, %v4349
      %v4521 = vpack.c.b16 %v4359, %v4350
      %v4522 = vpack.c.b16 %v4360, %v4351
      %v4523 = vpack.c.b16 %v4370, %v4361
      %v4524 = vpack.c.b16 %v4371, %v4362
      %v4525 = vpack.c.b16 %v4372, %v4363
      %v4526 = vpack.c.b16 %v4373, %v4364
      %v4527 = vpack.c.b16 %v4374, %v4365
      %v4528 = vpack.c.b16 %v4375, %v4366
      %v4529 = vpack.c.b16 %v4376, %v4367
      %v4530 = vpack.c.b16 %v4377, %v4368
      %v4531 = vpack.c.b16 %v4378, %v4369
      %v4532 = vpack.c.b16 %v4388, %v4379
      %v4533 = vpack.c.b16 %v4389, %v4380
      %v4534 = vpack.c.b16 %v4390, %v4381
      %v4535 = vpack.c.b16 %v4391, %v4382
      %v4536 = vpack.c.b16 %v4392, %v4383
      %v4537 = vpack.c.b16 %v4393, %v4384
      %v4538 = vpack.c.b16 %v4394, %v4385
      %v4539 = vpack.c.b16 %v4395, %v4386
      %v4540 = vpack.c.b16 %v4396, %v4387
      %v4829 = vunpack.c.l.b16 %v3805
      %v4830 = vunpack.c.l.b16 %v3806
      %v4831 = vunpack.c.l.b16 %v3807
      %v4832 = vunpack.c.l.b16 %v3808
      %v4833 = vunpack.c.l.b16 %v3809
      %v4834 = vunpack.c.l.b16 %v3810
      %v4835 = vunpack.c.l.b16 %v3811
      %v4836 = vunpack.c.l.b16 %v3812
      %v4837 = vunpack.c.l.b16 %v3813
      %v4838 = vunpack.c.l.b16 %v3814
      %v4839 = vunpack.c.l.b16 %v3815
      %v4840 = vunpack.c.l.b16 %v3816
      %v4841 = vunpack.c.l.b16 %v3817
      %v4842 = vunpack.c.l.b16 %v3818
      %v4843 = vunpack.c.l.b16 %v3819
      %v4844 = vunpack.c.l.b16 %v3820
      %v4845 = vunpack.c.l.b16 %v3821
      %v4846 = vunpack.c.l.b16 %v3822
      %v4847 = vunpack.c.l.b16 %v3823
      %v4848 = vunpack.c.l.b16 %v3824
      %v4849 = vunpack.c.l.b16 %v3825
      %v4850 = vunpack.c.l.b16 %v3826
      %v4851 = vunpack.c.l.b16 %v3827
      %v4852 = vunpack.c.l.b16 %v3828
      %v4853 = vunpack.c.l.b16 %v3829
      %v4854 = vunpack.c.l.b16 %v3830
      %v4855 = vunpack.c.l.b16 %v3831
      %v4856 = vunpack.c.l.b16 %v3832
      %v4857 = vunpack.c.l.b16 %v3833
      %v4858 = vunpack.c.l.b16 %v3834
      %v4859 = vunpack.c.l.b16 %v3835
      %v4860 = vunpack.c.l.b16 %v3836
      %v4861 = vunpack.c.l.b16 %v3837
      %v4862 = vunpack.c.l.b16 %v3838
      %v4863 = vunpack.c.l.b16 %v3839
      %v4864 = vunpack.c.l.b16 %v3840
      %v4865 = vunpack.c.l.b16 %v3841
      %v4866 = vunpack.c.l.b16 %v3842
      %v4867 = vunpack.c.l.b16 %v3843
      %v4868 = vunpack.c.l.b16 %v3844
      %v4869 = vunpack.c.l.b16 %v3845
      %v4870 = vunpack.c.l.b16 %v3846
      %v4871 = vunpack.c.l.b16 %v3847
      %v4872 = vunpack.c.l.b16 %v3848
      %v4873 = vunpack.c.l.b16 %v3849
      %v4874 = vunpack.c.l.b16 %v3850
      %v4875 = vunpack.c.l.b16 %v3851
      %v4876 = vunpack.c.l.b16 %v3852
      %v4877 = vunpack.c.l.b16 %v3853
      %v4878 = vunpack.c.l.b16 %v3854
      %v4879 = vunpack.c.l.b16 %v3855
      %v4880 = vunpack.c.l.b16 %v3856
      %v4881 = vunpack.c.l.b16 %v3857
      %v4882 = vunpack.c.l.b16 %v3858
      %v4883 = vunpack.c.l.b16 %v3859
      %v4884 = vunpack.c.l.b16 %v3860
      %v4885 = vunpack.c.l.b16 %v3861
      %v4886 = vunpack.c.l.b16 %v3862
      %v4887 = vunpack.c.l.b16 %v3863
      %v4888 = vunpack.c.l.b16 %v3864
      %v4889 = vunpack.c.l.b16 %v3865
      %v4890 = vunpack.c.l.b16 %v3866
      %v4891 = vunpack.c.l.b16 %v3867
      %v4892 = vunpack.c.l.b16 %v3868
      %v4893 = vunpack.c.l.b16 %v3869
      %v4894 = vunpack.c.l.b16 %v3870
      %v4895 = vunpack.c.l.b16 %v3871
      %v4896 = vunpack.c.l.b16 %v3872
      %v4897 = vunpack.c.l.b16 %v3873
      %v4898 = vunpack.c.l.b16 %v3874
      %v4899 = vunpack.c.l.b16 %v3875
      %v4900 = vunpack.c.l.b16 %v3876
      %v4901 = vunpack.c.l.b16 %v3877
      %v4902 = vunpack.c.l.b16 %v3878
      %v4903 = vunpack.c.l.b16 %v3879
      %v4904 = vunpack.c.l.b16 %v3880
      %v4905 = vunpack.c.l.b16 %v3881
      %v4906 = vunpack.c.l.b16 %v3882
      %v4907 = vunpack.c.l.b16 %v3883
      %v4908 = vunpack.c.l.b16 %v3884
      %v4909 = vunpack.c.l.b16 %v3885
      %v4910 = vunpack.c.l.b16 %v3886
      %v4911 = vunpack.c.l.b16 %v3887
      %v4912 = vunpack.c.l.b16 %v3888
      %v4913 = vunpack.c.l.b16 %v3889
      %v4914 = vunpack.c.l.b16 %v3890
      %v4915 = vunpack.c.l.b16 %v3891
      %v4916 = vunpack.c.l.b16 %v3892
      %v4917 = vunpack.c.l.b16 %v3893
      %v4918 = vunpack.c.l.b16 %v3894
      %v4919 = vunpack.c.l.b16 %v3895
      %v4920 = vunpack.c.l.b16 %v3896
      %v4921 = vunpack.c.l.b16 %v3897
      %v4922 = vunpack.c.l.b16 %v3898
      %v4923 = vunpack.c.l.b16 %v3899
      %v4924 = vunpack.c.l.b16 %v3900
      %v4925 = vunpack.c.l.b16 %v3901
      %v4926 = vunpack.c.l.b16 %v3902
      %v4927 = vunpack.c.l.b16 %v3903
      %v4928 = vunpack.c.l.b16 %v3904
      %v4929 = vunpack.c.l.b16 %v3905
      %v4930 = vunpack.c.l.b16 %v3906
      %v4931 = vunpack.c.l.b16 %v3907
      %v4932 = vunpack.c.l.b16 %v3908
      %v4933 = vunpack.c.l.b16 %v3909
      %v4934 = vunpack.c.l.b16 %v3910
      %v4935 = vunpack.c.l.b16 %v3911
      %v4936 = vunpack.c.l.b16 %v3912
      %v4937 = vunpack.c.l.b16 %v3913
      %v4938 = vunpack.c.l.b16 %v3914
      %v4939 = vunpack.c.l.b16 %v3915
      %v4940 = vunpack.c.l.b16 %v3916
      %v4941 = vunpack.c.l.b16 %v3917
      %v4942 = vunpack.c.l.b16 %v3918
      %v4943 = vunpack.c.l.b16 %v3919
      %v4944 = vunpack.c.l.b16 %v3920
      %v4945 = vunpack.c.l.b16 %v3921
      %v4946 = vunpack.c.l.b16 %v3922
      %v4947 = vunpack.c.l.b16 %v3923
      %v4948 = vunpack.c.l.b16 %v3924
      %v4949 = vunpack.c.l.b16 %v3925
      %v4950 = vunpack.c.l.b16 %v3926
      %v4951 = vunpack.c.l.b16 %v3927
      %v4952 = vunpack.c.l.b16 %v3928
      %v4953 = vunpack.c.l.b16 %v3929
      %v4954 = vunpack.c.l.b16 %v3930
      %v4955 = vunpack.c.l.b16 %v3931
      %v4956 = vunpack.c.l.b16 %v3932
      %v4957 = vunpack.c.l.b16 %v3933
      %v4958 = vunpack.c.l.b16 %v3934
      %v4959 = vunpack.c.l.b16 %v3935
      %v4960 = vunpack.c.l.b16 %v3936
      %v4961 = vunpack.c.l.b16 %v3937
      %v4962 = vunpack.c.l.b16 %v3938
      %v4963 = vunpack.c.l.b16 %v3939
      %v4964 = vunpack.c.l.b16 %v3940
      %v4965 = vunpack.c.l.b16 %v3941
      %v4966 = vunpack.c.l.b16 %v3942
      %v4967 = vunpack.c.l.b16 %v3943
      %v4968 = vunpack.c.l.b16 %v3944
      %v4969 = vunpack.c.l.b16 %v3945
      %v4970 = vunpack.c.l.b16 %v3946
      %v4971 = vunpack.c.l.b16 %v3947
      %v4972 = vunpack.c.l.b16 %v3948
      %v4973 = vpack.c.b16 %v4830, %v4829
      %v4974 = vpack.c.b16 %v4832, %v4831
      %v4975 = vpack.c.b16 %v4834, %v4833
      %v4976 = vpack.c.b16 %v4836, %v4835
      %v4977 = vpack.c.b16 %v4838, %v4837
      %v4978 = vpack.c.b16 %v4840, %v4839
      %v4979 = vpack.c.b16 %v4842, %v4841
      %v4980 = vpack.c.b16 %v4844, %v4843
      %v4981 = vpack.c.b16 %v4846, %v4845
      %v4982 = vpack.c.b16 %v4848, %v4847
      %v4983 = vpack.c.b16 %v4850, %v4849
      %v4984 = vpack.c.b16 %v4852, %v4851
      %v4985 = vpack.c.b16 %v4854, %v4853
      %v4986 = vpack.c.b16 %v4856, %v4855
      %v4987 = vpack.c.b16 %v4858, %v4857
      %v4988 = vpack.c.b16 %v4860, %v4859
      %v4989 = vpack.c.b16 %v4862, %v4861
      %v4990 = vpack.c.b16 %v4864, %v4863
      %v4991 = vpack.c.b16 %v4866, %v4865
      %v4992 = vpack.c.b16 %v4868, %v4867
      %v4993 = vpack.c.b16 %v4870, %v4869
      %v4994 = vpack.c.b16 %v4872, %v4871
      %v4995 = vpack.c.b16 %v4874, %v4873
      %v4996 = vpack.c.b16 %v4876, %v4875
      %v4997 = vpack.c.b16 %v4878, %v4877
      %v4998 = vpack.c.b16 %v4880, %v4879
      %v4999 = vpack.c.b16 %v4882, %v4881
      %v5000 = vpack.c.b16 %v4884, %v4883
      %v5001 = vpack.c.b16 %v4886, %v4885
      %v5002 = vpack.c.b16 %v4888, %v4887
      %v5003 = vpack.c.b16 %v4890, %v4889
      %v5004 = vpack.c.b16 %v4892, %v4891
      %v5005 = vpack.c.b16 %v4894, %v4893
      %v5006 = vpack.c.b16 %v4896, %v4895
      %v5007 = vpack.c.b16 %v4898, %v4897
      %v5008 = vpack.c.b16 %v4900, %v4899
      %v5009 = vpack.c.b16 %v4902, %v4901
      %v5010 = vpack.c.b16 %v4904, %v4903
      %v5011 = vpack.c.b16 %v4906, %v4905
      %v5012 = vpack.c.b16 %v4908, %v4907
      %v5013 = vpack.c.b16 %v4910, %v4909
      %v5014 = vpack.c.b16 %v4912, %v4911
      %v5015 = vpack.c.b16 %v4914, %v4913
      %v5016 = vpack.c.b16 %v4916, %v4915
      %v5017 = vpack.c.b16 %v4918, %v4917
      %v5018 = vpack.c.b16 %v4920, %v4919
      %v5019 = vpack.c.b16 %v4922, %v4921
      %v5020 = vpack.c.b16 %v4924, %v4923
      %v5021 = vpack.c.b16 %v4926, %v4925
      %v5022 = vpack.c.b16 %v4928, %v4927
      %v5023 = vpack.c.b16 %v4930, %v4929
      %v5024 = vpack.c.b16 %v4932, %v4931
      %v5025 = vpack.c.b16 %v4934, %v4933
      %v5026 = vpack.c.b16 %v4936, %v4935
      %v5027 = vpack.c.b16 %v4938, %v4937
      %v5028 = vpack.c.b16 %v4940, %v4939
      %v5029 = vpack.c.b16 %v4942, %v4941
      %v5030 = vpack.c.b16 %v4944, %v4943
      %v5031 = vpack.c.b16 %v4946, %v4945
      %v5032 = vpack.c.b16 %v4948, %v4947
      %v5033 = vpack.c.b16 %v4950, %v4949
      %v5034 = vpack.c.b16 %v4952, %v4951
      %v5035 = vpack.c.b16 %v4954, %v4953
      %v5036 = vpack.c.b16 %v4956, %v4955
      %v5037 = vpack.c.b16 %v4958, %v4957
      %v5038 = vpack.c.b16 %v4960, %v4959
      %v5039 = vpack.c.b16 %v4962, %v4961
      %v5040 = vpack.c.b16 %v4964, %v4963
      %v5041 = vpack.c.b16 %v4966, %v4965
      %v5042 = vpack.c.b16 %v4968, %v4967
      %v5043 = vpack.c.b16 %v4970, %v4969
      %v5044 = vpack.c.b16 %v4972, %v4971
      %5117 = vmatprep.subr.bf16.mxu0 0
      %5118 = vmatpush1.bf16.msra.mxu0 %v4980
      %5119 = vmatprep.subr.bf16.mxu0 0
      %5120 = vmatpush1.bf16.msra.mxu0 %v4979
      %5121 = vmatprep.subr.bf16.mxu0 0
      %5122 = vmatpush1.bf16.msra.mxu0 %v4978
      %5123 = vmatprep.subr.bf16.mxu0 0
      %5124 = vmatpush1.bf16.msra.mxu0 %v4977
      %5125 = vmatprep.subr.bf16.mxu0 0
      %5126 = vmatpush1.bf16.msra.mxu0 %v4976
      %5127 = vmatprep.subr.bf16.mxu0 0
      %5128 = vmatpush1.bf16.msra.mxu0 %v4975
      %5129 = vmatprep.subr.bf16.mxu0 0
      %5130 = vmatpush1.bf16.msra.mxu0 %v4974
      %5131 = vmatprep.subr.bf16.mxu0 0
      %5132 = vmatpush1.bf16.msra.mxu0 %v4973
      %5133 = vmatprep.subr.bf16.mxu0 0
      %5134 = vmatpush2.bf16.msra.mxu0 %v4988
      %5135 = vmatprep.subr.bf16.mxu0 0
      %5136 = vmatpush2.bf16.msra.mxu0 %v4987
      %5137 = vmatprep.subr.bf16.mxu0 0
      %5138 = vmatpush2.bf16.msra.mxu0 %v4986
      %5139 = vmatprep.subr.bf16.mxu0 0
      %5140 = vmatpush2.bf16.msra.mxu0 %v4985
      %5141 = vmatprep.subr.bf16.mxu0 0
      %5142 = vmatpush2.bf16.msra.mxu0 %v4984
      %5143 = vmatprep.subr.bf16.mxu0 0
      %5144 = vmatpush2.bf16.msra.mxu0 %v4983
      %5145 = vmatprep.subr.bf16.mxu0 0
      %5146 = vmatpush2.bf16.msra.mxu0 %v4982
      %5147 = vmatprep.subr.bf16.mxu0 0
      %5148 = vmatpush2.bf16.msra.mxu0 %v4981
      %5149 = vmatprep.mubr.bf16.mxu0 %v4398
      %5150 = vmatmul.mubr.bf16.gmra.mxu0 %v4397
      %v5151 = vpop.f32.mrf.mxu0
      %v5152 = vadd.f32 0.0, %v5151
      %v5153 = vpop.f32.mrf.mxu0
      %v5154 = vpop.f32.mrf.mxu0
      %v5155 = vadd.f32 0.0, %v5154
      %v5156 = vpop.f32.mrf.mxu0
      %5157 = vmatprep.mubr.bf16.mxu0 %v4407
      %5158 = vmatmul.mubr.bf16.gmra.mxu0 %v4406
      %v5159 = vpop.f32.mrf.mxu0
      %v5160 = vadd.f32 0.0, %v5159
      %v5161 = vpop.f32.mrf.mxu0
      %v5162 = vpop.f32.mrf.mxu0
      %v5163 = vadd.f32 0.0, %v5162
      %v5164 = vpop.f32.mrf.mxu0
      %5165 = vmatprep.mubr.bf16.mxu0 %v4416
      %5166 = vmatmul.mubr.bf16.gmra.mxu0 %v4415
      %v5167 = vpop.f32.mrf.mxu0
      %v5168 = vadd.f32 0.0, %v5167
      %v5169 = vpop.f32.mrf.mxu0
      %v5170 = vpop.f32.mrf.mxu0
      %v5171 = vadd.f32 0.0, %v5170
      %v5172 = vpop.f32.mrf.mxu0
      %5173 = vmatprep.mubr.bf16.mxu0 %v4425
      %5174 = vmatmul.mubr.bf16.gmra.mxu0 %v4424
      %v5175 = vpop.f32.mrf.mxu0
      %v5176 = vadd.f32 0.0, %v5175
      %v5177 = vpop.f32.mrf.mxu0
      %v5178 = vpop.f32.mrf.mxu0
      %v5179 = vadd.f32 0.0, %v5178
      %v5180 = vpop.f32.mrf.mxu0
      %5181 = vmatprep.mubr.bf16.mxu0 %v4434
      %5182 = vmatmul.mubr.bf16.gmra.mxu0 %v4433
      %v5183 = vpop.f32.mrf.mxu0
      %v5184 = vadd.f32 0.0, %v5183
      %v5185 = vpop.f32.mrf.mxu0
      %v5186 = vpop.f32.mrf.mxu0
      %v5187 = vadd.f32 0.0, %v5186
      %v5188 = vpop.f32.mrf.mxu0
      %5189 = vmatprep.mubr.bf16.mxu0 %v4443
      %5190 = vmatmul.mubr.bf16.gmra.mxu0 %v4442
      %v5191 = vpop.f32.mrf.mxu0
      %v5192 = vadd.f32 0.0, %v5191
      %v5193 = vpop.f32.mrf.mxu0
      %v5194 = vpop.f32.mrf.mxu0
      %v5195 = vadd.f32 0.0, %v5194
      %v5196 = vpop.f32.mrf.mxu0
      %5197 = vmatprep.mubr.bf16.mxu0 %v4452
      %5198 = vmatmul.mubr.bf16.gmra.mxu0 %v4451
      %v5199 = vpop.f32.mrf.mxu0
      %v5200 = vadd.f32 0.0, %v5199
      %v5201 = vpop.f32.mrf.mxu0
      %v5202 = vpop.f32.mrf.mxu0
      %v5203 = vadd.f32 0.0, %v5202
      %v5204 = vpop.f32.mrf.mxu0
      %5205 = vmatprep.mubr.bf16.mxu0 %v4461
      %5206 = vmatmul.mubr.bf16.gmra.mxu0 %v4460
      %v5207 = vpop.f32.mrf.mxu0
      %v5208 = vadd.f32 0.0, %v5207
      %v5209 = vpop.f32.mrf.mxu0
      %v5210 = vpop.f32.mrf.mxu0
      %v5211 = vadd.f32 0.0, %v5210
      %v5212 = vpop.f32.mrf.mxu0
      %5213 = vmatprep.mubr.bf16.mxu0 %v4470
      %5214 = vmatmul.mubr.bf16.gmra.mxu0 %v4469
      %v5215 = vpop.f32.mrf.mxu0
      %v5216 = vadd.f32 0.0, %v5215
      %v5217 = vpop.f32.mrf.mxu0
      %v5218 = vpop.f32.mrf.mxu0
      %v5219 = vadd.f32 0.0, %v5218
      %v5220 = vpop.f32.mrf.mxu0
      %5221 = vmatprep.mubr.bf16.mxu0 %v4479
      %5222 = vmatmul.mubr.bf16.gmra.mxu0 %v4478
      %v5223 = vpop.f32.mrf.mxu0
      %v5224 = vadd.f32 0.0, %v5223
      %v5225 = vpop.f32.mrf.mxu0
      %v5226 = vpop.f32.mrf.mxu0
      %v5227 = vadd.f32 0.0, %v5226
      %v5228 = vpop.f32.mrf.mxu0
      %5229 = vmatprep.mubr.bf16.mxu0 %v4488
      %5230 = vmatmul.mubr.bf16.gmra.mxu0 %v4487
      %v5231 = vpop.f32.mrf.mxu0
      %v5232 = vadd.f32 0.0, %v5231
      %v5233 = vpop.f32.mrf.mxu0
      %v5234 = vpop.f32.mrf.mxu0
      %v5235 = vadd.f32 0.0, %v5234
      %v5236 = vpop.f32.mrf.mxu0
      %5237 = vmatprep.mubr.bf16.mxu0 %v4497
      %5238 = vmatmul.mubr.bf16.gmra.mxu0 %v4496
      %v5239 = vpop.f32.mrf.mxu0
      %v5240 = vadd.f32 0.0, %v5239
      %v5241 = vpop.f32.mrf.mxu0
      %v5242 = vpop.f32.mrf.mxu0
      %v5243 = vadd.f32 0.0, %v5242
      %v5244 = vpop.f32.mrf.mxu0
      %5245 = vmatprep.mubr.bf16.mxu0 %v4506
      %5246 = vmatmul.mubr.bf16.gmra.mxu0 %v4505
      %v5247 = vpop.f32.mrf.mxu0
      %v5248 = vadd.f32 0.0, %v5247
      %v5249 = vpop.f32.mrf.mxu0
      %v5250 = vpop.f32.mrf.mxu0
      %v5251 = vadd.f32 0.0, %v5250
      %v5252 = vpop.f32.mrf.mxu0
      %5253 = vmatprep.mubr.bf16.mxu0 %v4515
      %5254 = vmatmul.mubr.bf16.gmra.mxu0 %v4514
      %v5255 = vpop.f32.mrf.mxu0
      %v5256 = vadd.f32 0.0, %v5255
      %v5257 = vpop.f32.mrf.mxu0
      %v5258 = vpop.f32.mrf.mxu0
      %v5259 = vadd.f32 0.0, %v5258
      %v5260 = vpop.f32.mrf.mxu0
      %5261 = vmatprep.mubr.bf16.mxu0 %v4524
      %5262 = vmatmul.mubr.bf16.gmra.mxu0 %v4523
      %v5263 = vpop.f32.mrf.mxu0
      %v5264 = vadd.f32 0.0, %v5263
      %v5265 = vpop.f32.mrf.mxu0
      %v5266 = vpop.f32.mrf.mxu0
      %v5267 = vadd.f32 0.0, %v5266
      %v5268 = vpop.f32.mrf.mxu0
      %5269 = vmatprep.mubr.bf16.mxu0 %v4533
      %5270 = vmatmul.mubr.bf16.gmra.mxu0 %v4532
      %v5271 = vpop.f32.mrf.mxu0
      %v5272 = vadd.f32 0.0, %v5271
      %v5273 = vpop.f32.mrf.mxu0
      %v5274 = vpop.f32.mrf.mxu0
      %v5275 = vadd.f32 0.0, %v5274
      %v5276 = vpop.f32.mrf.mxu0
      %5277 = vdwg.mxu0
      %5278 = vmatprep.subr.bf16.mxu0 0
      %5279 = vmatpush1.bf16.msra.mxu0 %v4996
      %5280 = vmatprep.subr.bf16.mxu0 0
      %5281 = vmatpush1.bf16.msra.mxu0 %v4995
      %5282 = vmatprep.subr.bf16.mxu0 0
      %5283 = vmatpush1.bf16.msra.mxu0 %v4994
      %5284 = vmatprep.subr.bf16.mxu0 0
      %5285 = vmatpush1.bf16.msra.mxu0 %v4993
      %5286 = vmatprep.subr.bf16.mxu0 0
      %5287 = vmatpush1.bf16.msra.mxu0 %v4992
      %5288 = vmatprep.subr.bf16.mxu0 0
      %5289 = vmatpush1.bf16.msra.mxu0 %v4991
      %5290 = vmatprep.subr.bf16.mxu0 0
      %5291 = vmatpush1.bf16.msra.mxu0 %v4990
      %5292 = vmatprep.subr.bf16.mxu0 0
      %5293 = vmatpush1.bf16.msra.mxu0 %v4989
      %5294 = vmatprep.subr.bf16.mxu0 0
      %5295 = vmatpush2.bf16.msra.mxu0 %v5004
      %5296 = vmatprep.subr.bf16.mxu0 0
      %5297 = vmatpush2.bf16.msra.mxu0 %v5003
      %5298 = vmatprep.subr.bf16.mxu0 0
      %5299 = vmatpush2.bf16.msra.mxu0 %v5002
      %5300 = vmatprep.subr.bf16.mxu0 0
      %5301 = vmatpush2.bf16.msra.mxu0 %v5001
      %5302 = vmatprep.subr.bf16.mxu0 0
      %5303 = vmatpush2.bf16.msra.mxu0 %v5000
      %5304 = vmatprep.subr.bf16.mxu0 0
      %5305 = vmatpush2.bf16.msra.mxu0 %v4999
      %5306 = vmatprep.subr.bf16.mxu0 0
      %5307 = vmatpush2.bf16.msra.mxu0 %v4998
      %5308 = vmatprep.subr.bf16.mxu0 0
      %5309 = vmatpush2.bf16.msra.mxu0 %v4997
      %5310 = vmatprep.mubr.bf16.mxu0 %v4400
      %5311 = vmatmul.mubr.bf16.gmra.mxu0 %v4399
      %v5312 = vpop.f32.mrf.mxu0
      %v5313 = vadd.f32 %v5152, %v5312
      %v5314 = vpop.f32.mrf.mxu0
      %v5315 = vpop.f32.mrf.mxu0
      %v5316 = vadd.f32 %v5155, %v5315
      %v5317 = vpop.f32.mrf.mxu0
      %5318 = vmatprep.mubr.bf16.mxu0 %v4409
      %5319 = vmatmul.mubr.bf16.gmra.mxu0 %v4408
      %v5320 = vpop.f32.mrf.mxu0
      %v5321 = vadd.f32 %v5160, %v5320
      %v5322 = vpop.f32.mrf.mxu0
      %v5323 = vpop.f32.mrf.mxu0
      %v5324 = vadd.f32 %v5163, %v5323
      %v5325 = vpop.f32.mrf.mxu0
      %5326 = vmatprep.mubr.bf16.mxu0 %v4418
      %5327 = vmatmul.mubr.bf16.gmra.mxu0 %v4417
      %v5328 = vpop.f32.mrf.mxu0
      %v5329 = vadd.f32 %v5168, %v5328
      %v5330 = vpop.f32.mrf.mxu0
      %v5331 = vpop.f32.mrf.mxu0
      %v5332 = vadd.f32 %v5171, %v5331
      %v5333 = vpop.f32.mrf.mxu0
      %5334 = vmatprep.mubr.bf16.mxu0 %v4427
      %5335 = vmatmul.mubr.bf16.gmra.mxu0 %v4426
      %v5336 = vpop.f32.mrf.mxu0
      %v5337 = vadd.f32 %v5176, %v5336
      %v5338 = vpop.f32.mrf.mxu0
      %v5339 = vpop.f32.mrf.mxu0
      %v5340 = vadd.f32 %v5179, %v5339
      %v5341 = vpop.f32.mrf.mxu0
      %5342 = vmatprep.mubr.bf16.mxu0 %v4436
      %5343 = vmatmul.mubr.bf16.gmra.mxu0 %v4435
      %v5344 = vpop.f32.mrf.mxu0
      %v5345 = vadd.f32 %v5184, %v5344
      %v5346 = vpop.f32.mrf.mxu0
      %v5347 = vpop.f32.mrf.mxu0
      %v5348 = vadd.f32 %v5187, %v5347
      %v5349 = vpop.f32.mrf.mxu0
      %5350 = vmatprep.mubr.bf16.mxu0 %v4445
      %5351 = vmatmul.mubr.bf16.gmra.mxu0 %v4444
      %v5352 = vpop.f32.mrf.mxu0
      %v5353 = vadd.f32 %v5192, %v5352
      %v5354 = vpop.f32.mrf.mxu0
      %v5355 = vpop.f32.mrf.mxu0
      %v5356 = vadd.f32 %v5195, %v5355
      %v5357 = vpop.f32.mrf.mxu0
      %5358 = vmatprep.mubr.bf16.mxu0 %v4454
      %5359 = vmatmul.mubr.bf16.gmra.mxu0 %v4453
      %v5360 = vpop.f32.mrf.mxu0
      %v5361 = vadd.f32 %v5200, %v5360
      %v5362 = vpop.f32.mrf.mxu0
      %v5363 = vpop.f32.mrf.mxu0
      %v5364 = vadd.f32 %v5203, %v5363
      %v5365 = vpop.f32.mrf.mxu0
      %5366 = vmatprep.mubr.bf16.mxu0 %v4463
      %5367 = vmatmul.mubr.bf16.gmra.mxu0 %v4462
      %v5368 = vpop.f32.mrf.mxu0
      %v5369 = vadd.f32 %v5208, %v5368
      %v5370 = vpop.f32.mrf.mxu0
      %v5371 = vpop.f32.mrf.mxu0
      %v5372 = vadd.f32 %v5211, %v5371
      %v5373 = vpop.f32.mrf.mxu0
      %5374 = vmatprep.mubr.bf16.mxu0 %v4472
      %5375 = vmatmul.mubr.bf16.gmra.mxu0 %v4471
      %v5376 = vpop.f32.mrf.mxu0
      %v5377 = vadd.f32 %v5216, %v5376
      %v5378 = vpop.f32.mrf.mxu0
      %v5379 = vpop.f32.mrf.mxu0
      %v5380 = vadd.f32 %v5219, %v5379
      %v5381 = vpop.f32.mrf.mxu0
      %5382 = vmatprep.mubr.bf16.mxu0 %v4481
      %5383 = vmatmul.mubr.bf16.gmra.mxu0 %v4480
      %v5384 = vpop.f32.mrf.mxu0
      %v5385 = vadd.f32 %v5224, %v5384
      %v5386 = vpop.f32.mrf.mxu0
      %v5387 = vpop.f32.mrf.mxu0
      %v5388 = vadd.f32 %v5227, %v5387
      %v5389 = vpop.f32.mrf.mxu0
      %5390 = vmatprep.mubr.bf16.mxu0 %v4490
      %5391 = vmatmul.mubr.bf16.gmra.mxu0 %v4489
      %v5392 = vpop.f32.mrf.mxu0
      %v5393 = vadd.f32 %v5232, %v5392
      %v5394 = vpop.f32.mrf.mxu0
      %v5395 = vpop.f32.mrf.mxu0
      %v5396 = vadd.f32 %v5235, %v5395
      %v5397 = vpop.f32.mrf.mxu0
      %5398 = vmatprep.mubr.bf16.mxu0 %v4499
      %5399 = vmatmul.mubr.bf16.gmra.mxu0 %v4498
      %v5400 = vpop.f32.mrf.mxu0
      %v5401 = vadd.f32 %v5240, %v5400
      %v5402 = vpop.f32.mrf.mxu0
      %v5403 = vpop.f32.mrf.mxu0
      %v5404 = vadd.f32 %v5243, %v5403
      %v5405 = vpop.f32.mrf.mxu0
      %5406 = vmatprep.mubr.bf16.mxu0 %v4508
      %5407 = vmatmul.mubr.bf16.gmra.mxu0 %v4507
      %v5408 = vpop.f32.mrf.mxu0
      %v5409 = vadd.f32 %v5248, %v5408
      %v5410 = vpop.f32.mrf.mxu0
      %v5411 = vpop.f32.mrf.mxu0
      %v5412 = vadd.f32 %v5251, %v5411
      %v5413 = vpop.f32.mrf.mxu0
      %5414 = vmatprep.mubr.bf16.mxu0 %v4517
      %5415 = vmatmul.mubr.bf16.gmra.mxu0 %v4516
      %v5416 = vpop.f32.mrf.mxu0
      %v5417 = vadd.f32 %v5256, %v5416
      %v5418 = vpop.f32.mrf.mxu0
      %v5419 = vpop.f32.mrf.mxu0
      %v5420 = vadd.f32 %v5259, %v5419
      %v5421 = vpop.f32.mrf.mxu0
      %5422 = vmatprep.mubr.bf16.mxu0 %v4526
      %5423 = vmatmul.mubr.bf16.gmra.mxu0 %v4525
      %v5424 = vpop.f32.mrf.mxu0
      %v5425 = vadd.f32 %v5264, %v5424
      %v5426 = vpop.f32.mrf.mxu0
      %v5427 = vpop.f32.mrf.mxu0
      %v5428 = vadd.f32 %v5267, %v5427
      %v5429 = vpop.f32.mrf.mxu0
      %5430 = vmatprep.mubr.bf16.mxu0 %v4535
      %5431 = vmatmul.mubr.bf16.gmra.mxu0 %v4534
      %v5432 = vpop.f32.mrf.mxu0
      %v5433 = vadd.f32 %v5272, %v5432
      %v5434 = vpop.f32.mrf.mxu0
      %v5435 = vpop.f32.mrf.mxu0
      %v5436 = vadd.f32 %v5275, %v5435
      %v5437 = vpop.f32.mrf.mxu0
      %5438 = vdwg.mxu0
      %5439 = vmatprep.subr.bf16.mxu0 0
      %5440 = vmatpush1.bf16.msra.mxu0 %v5012
      %5441 = vmatprep.subr.bf16.mxu0 0
      %5442 = vmatpush1.bf16.msra.mxu0 %v5011
      %5443 = vmatprep.subr.bf16.mxu0 0
      %5444 = vmatpush1.bf16.msra.mxu0 %v5010
      %5445 = vmatprep.subr.bf16.mxu0 0
      %5446 = vmatpush1.bf16.msra.mxu0 %v5009
      %5447 = vmatprep.subr.bf16.mxu0 0
      %5448 = vmatpush1.bf16.msra.mxu0 %v5008
      %5449 = vmatprep.subr.bf16.mxu0 0
      %5450 = vmatpush1.bf16.msra.mxu0 %v5007
      %5451 = vmatprep.subr.bf16.mxu0 0
      %5452 = vmatpush1.bf16.msra.mxu0 %v5006
      %5453 = vmatprep.subr.bf16.mxu0 0
      %5454 = vmatpush1.bf16.msra.mxu0 %v5005
      %5455 = vmatprep.subr.bf16.mxu0 0
      %5456 = vmatpush2.bf16.msra.mxu0 %v5020
      %5457 = vmatprep.subr.bf16.mxu0 0
      %5458 = vmatpush2.bf16.msra.mxu0 %v5019
      %5459 = vmatprep.subr.bf16.mxu0 0
      %5460 = vmatpush2.bf16.msra.mxu0 %v5018
      %5461 = vmatprep.subr.bf16.mxu0 0
      %5462 = vmatpush2.bf16.msra.mxu0 %v5017
      %5463 = vmatprep.subr.bf16.mxu0 0
      %5464 = vmatpush2.bf16.msra.mxu0 %v5016
      %5465 = vmatprep.subr.bf16.mxu0 0
      %5466 = vmatpush2.bf16.msra.mxu0 %v5015
      %5467 = vmatprep.subr.bf16.mxu0 0
      %5468 = vmatpush2.bf16.msra.mxu0 %v5014
      %5469 = vmatprep.subr.bf16.mxu0 0
      %5470 = vmatpush2.bf16.msra.mxu0 %v5013
      %5471 = vmatprep.mubr.bf16.mxu0 %v4402
      %5472 = vmatmul.mubr.bf16.gmra.mxu0 %v4401
      %v5473 = vpop.f32.mrf.mxu0
      %v5474 = vadd.f32 %v5313, %v5473
      %v5475 = vpop.f32.mrf.mxu0
      %v5476 = vpop.f32.mrf.mxu0
      %v5477 = vadd.f32 %v5316, %v5476
      %v5478 = vpop.f32.mrf.mxu0
      %5479 = vmatprep.mubr.bf16.mxu0 %v4411
      %5480 = vmatmul.mubr.bf16.gmra.mxu0 %v4410
      %v5481 = vpop.f32.mrf.mxu0
      %v5482 = vadd.f32 %v5321, %v5481
      %v5483 = vpop.f32.mrf.mxu0
      %v5484 = vpop.f32.mrf.mxu0
      %v5485 = vadd.f32 %v5324, %v5484
      %v5486 = vpop.f32.mrf.mxu0
      %5487 = vmatprep.mubr.bf16.mxu0 %v4420
      %5488 = vmatmul.mubr.bf16.gmra.mxu0 %v4419
      %v5489 = vpop.f32.mrf.mxu0
      %v5490 = vadd.f32 %v5329, %v5489
      %v5491 = vpop.f32.mrf.mxu0
      %v5492 = vpop.f32.mrf.mxu0
      %v5493 = vadd.f32 %v5332, %v5492
      %v5494 = vpop.f32.mrf.mxu0
      %5495 = vmatprep.mubr.bf16.mxu0 %v4429
      %5496 = vmatmul.mubr.bf16.gmra.mxu0 %v4428
      %v5497 = vpop.f32.mrf.mxu0
      %v5498 = vadd.f32 %v5337, %v5497
      %v5499 = vpop.f32.mrf.mxu0
      %v5500 = vpop.f32.mrf.mxu0
      %v5501 = vadd.f32 %v5340, %v5500
      %v5502 = vpop.f32.mrf.mxu0
      %5503 = vmatprep.mubr.bf16.mxu0 %v4438
      %5504 = vmatmul.mubr.bf16.gmra.mxu0 %v4437
      %v5505 = vpop.f32.mrf.mxu0
      %v5506 = vadd.f32 %v5345, %v5505
      %v5507 = vpop.f32.mrf.mxu0
      %v5508 = vpop.f32.mrf.mxu0
      %v5509 = vadd.f32 %v5348, %v5508
      %v5510 = vpop.f32.mrf.mxu0
      %5511 = vmatprep.mubr.bf16.mxu0 %v4447
      %5512 = vmatmul.mubr.bf16.gmra.mxu0 %v4446
      %v5513 = vpop.f32.mrf.mxu0
      %v5514 = vadd.f32 %v5353, %v5513
      %v5515 = vpop.f32.mrf.mxu0
      %v5516 = vpop.f32.mrf.mxu0
      %v5517 = vadd.f32 %v5356, %v5516
      %v5518 = vpop.f32.mrf.mxu0
      %5519 = vmatprep.mubr.bf16.mxu0 %v4456
      %5520 = vmatmul.mubr.bf16.gmra.mxu0 %v4455
      %v5521 = vpop.f32.mrf.mxu0
      %v5522 = vadd.f32 %v5361, %v5521
      %v5523 = vpop.f32.mrf.mxu0
      %v5524 = vpop.f32.mrf.mxu0
      %v5525 = vadd.f32 %v5364, %v5524
      %v5526 = vpop.f32.mrf.mxu0
      %5527 = vmatprep.mubr.bf16.mxu0 %v4465
      %5528 = vmatmul.mubr.bf16.gmra.mxu0 %v4464
      %v5529 = vpop.f32.mrf.mxu0
      %v5530 = vadd.f32 %v5369, %v5529
      %v5531 = vpop.f32.mrf.mxu0
      %v5532 = vpop.f32.mrf.mxu0
      %v5533 = vadd.f32 %v5372, %v5532
      %v5534 = vpop.f32.mrf.mxu0
      %5535 = vmatprep.mubr.bf16.mxu0 %v4474
      %5536 = vmatmul.mubr.bf16.gmra.mxu0 %v4473
      %v5537 = vpop.f32.mrf.mxu0
      %v5538 = vadd.f32 %v5377, %v5537
      %v5539 = vpop.f32.mrf.mxu0
      %v5540 = vpop.f32.mrf.mxu0
      %v5541 = vadd.f32 %v5380, %v5540
      %v5542 = vpop.f32.mrf.mxu0
      %5543 = vmatprep.mubr.bf16.mxu0 %v4483
      %5544 = vmatmul.mubr.bf16.gmra.mxu0 %v4482
      %v5545 = vpop.f32.mrf.mxu0
      %v5546 = vadd.f32 %v5385, %v5545
      %v5547 = vpop.f32.mrf.mxu0
      %v5548 = vpop.f32.mrf.mxu0
      %v5549 = vadd.f32 %v5388, %v5548
      %v5550 = vpop.f32.mrf.mxu0
      %5551 = vmatprep.mubr.bf16.mxu0 %v4492
      %5552 = vmatmul.mubr.bf16.gmra.mxu0 %v4491
      %v5553 = vpop.f32.mrf.mxu0
      %v5554 = vadd.f32 %v5393, %v5553
      %v5555 = vpop.f32.mrf.mxu0
      %v5556 = vpop.f32.mrf.mxu0
      %v5557 = vadd.f32 %v5396, %v5556
      %v5558 = vpop.f32.mrf.mxu0
      %5559 = vmatprep.mubr.bf16.mxu0 %v4501
      %5560 = vmatmul.mubr.bf16.gmra.mxu0 %v4500
      %v5561 = vpop.f32.mrf.mxu0
      %v5562 = vadd.f32 %v5401, %v5561
      %v5563 = vpop.f32.mrf.mxu0
      %v5564 = vpop.f32.mrf.mxu0
      %v5565 = vadd.f32 %v5404, %v5564
      %v5566 = vpop.f32.mrf.mxu0
      %5567 = vmatprep.mubr.bf16.mxu0 %v4510
      %5568 = vmatmul.mubr.bf16.gmra.mxu0 %v4509
      %v5569 = vpop.f32.mrf.mxu0
      %v5570 = vadd.f32 %v5409, %v5569
      %v5571 = vpop.f32.mrf.mxu0
      %v5572 = vpop.f32.mrf.mxu0
      %v5573 = vadd.f32 %v5412, %v5572
      %v5574 = vpop.f32.mrf.mxu0
      %5575 = vmatprep.mubr.bf16.mxu0 %v4519
      %5576 = vmatmul.mubr.bf16.gmra.mxu0 %v4518
      %v5577 = vpop.f32.mrf.mxu0
      %v5578 = vadd.f32 %v5417, %v5577
      %v5579 = vpop.f32.mrf.mxu0
      %v5580 = vpop.f32.mrf.mxu0
      %v5581 = vadd.f32 %v5420, %v5580
      %v5582 = vpop.f32.mrf.mxu0
      %5583 = vmatprep.mubr.bf16.mxu0 %v4528
      %5584 = vmatmul.mubr.bf16.gmra.mxu0 %v4527
      %v5585 = vpop.f32.mrf.mxu0
      %v5586 = vadd.f32 %v5425, %v5585
      %v5587 = vpop.f32.mrf.mxu0
      %v5588 = vpop.f32.mrf.mxu0
      %v5589 = vadd.f32 %v5428, %v5588
      %v5590 = vpop.f32.mrf.mxu0
      %5591 = vmatprep.mubr.bf16.mxu0 %v4537
      %5592 = vmatmul.mubr.bf16.gmra.mxu0 %v4536
      %v5593 = vpop.f32.mrf.mxu0
      %v5594 = vadd.f32 %v5433, %v5593
      %v5595 = vpop.f32.mrf.mxu0
      %v5596 = vpop.f32.mrf.mxu0
      %v5597 = vadd.f32 %v5436, %v5596
      %v5598 = vpop.f32.mrf.mxu0
      %5599 = vdwg.mxu0
      %5600 = vmatprep.subr.bf16.mxu0 0
      %5601 = vmatpush1.bf16.msra.mxu0 %v5028
      %5602 = vmatprep.subr.bf16.mxu0 0
      %5603 = vmatpush1.bf16.msra.mxu0 %v5027
      %5604 = vmatprep.subr.bf16.mxu0 0
      %5605 = vmatpush1.bf16.msra.mxu0 %v5026
      %5606 = vmatprep.subr.bf16.mxu0 0
      %5607 = vmatpush1.bf16.msra.mxu0 %v5025
      %5608 = vmatprep.subr.bf16.mxu0 0
      %5609 = vmatpush1.bf16.msra.mxu0 %v5024
      %5610 = vmatprep.subr.bf16.mxu0 0
      %5611 = vmatpush1.bf16.msra.mxu0 %v5023
      %5612 = vmatprep.subr.bf16.mxu0 0
      %5613 = vmatpush1.bf16.msra.mxu0 %v5022
      %5614 = vmatprep.subr.bf16.mxu0 0
      %5615 = vmatpush1.bf16.msra.mxu0 %v5021
      %5616 = vmatprep.subr.bf16.mxu0 0
      %5617 = vmatpush2.bf16.msra.mxu0 %v5036
      %5618 = vmatprep.subr.bf16.mxu0 0
      %5619 = vmatpush2.bf16.msra.mxu0 %v5035
      %5620 = vmatprep.subr.bf16.mxu0 0
      %5621 = vmatpush2.bf16.msra.mxu0 %v5034
      %5622 = vmatprep.subr.bf16.mxu0 0
      %5623 = vmatpush2.bf16.msra.mxu0 %v5033
      %5624 = vmatprep.subr.bf16.mxu0 0
      %5625 = vmatpush2.bf16.msra.mxu0 %v5032
      %5626 = vmatprep.subr.bf16.mxu0 0
      %5627 = vmatpush2.bf16.msra.mxu0 %v5031
      %5628 = vmatprep.subr.bf16.mxu0 0
      %5629 = vmatpush2.bf16.msra.mxu0 %v5030
      %5630 = vmatprep.subr.bf16.mxu0 0
      %5631 = vmatpush2.bf16.msra.mxu0 %v5029
      %5632 = vmatprep.mubr.bf16.mxu0 %v4404
      %5633 = vmatmul.mubr.bf16.gmra.mxu0 %v4403
      %v5634 = vpop.f32.mrf.mxu0
      %v5635 = vadd.f32 %v5474, %v5634
      %v5636 = vpop.f32.mrf.mxu0
      %v5637 = vpop.f32.mrf.mxu0
      %v5638 = vadd.f32 %v5477, %v5637
      %v5639 = vpop.f32.mrf.mxu0
      %5640 = vmatprep.mubr.bf16.mxu0 %v4413
      %5641 = vmatmul.mubr.bf16.gmra.mxu0 %v4412
      %v5642 = vpop.f32.mrf.mxu0
      %v5643 = vadd.f32 %v5482, %v5642
      %v5644 = vpop.f32.mrf.mxu0
      %v5645 = vpop.f32.mrf.mxu0
      %v5646 = vadd.f32 %v5485, %v5645
      %v5647 = vpop.f32.mrf.mxu0
      %5648 = vmatprep.mubr.bf16.mxu0 %v4422
      %5649 = vmatmul.mubr.bf16.gmra.mxu0 %v4421
      %v5650 = vpop.f32.mrf.mxu0
      %v5651 = vadd.f32 %v5490, %v5650
      %v5652 = vpop.f32.mrf.mxu0
      %v5653 = vpop.f32.mrf.mxu0
      %v5654 = vadd.f32 %v5493, %v5653
      %v5655 = vpop.f32.mrf.mxu0
      %5656 = vmatprep.mubr.bf16.mxu0 %v4431
      %5657 = vmatmul.mubr.bf16.gmra.mxu0 %v4430
      %v5658 = vpop.f32.mrf.mxu0
      %v5659 = vadd.f32 %v5498, %v5658
      %v5660 = vpop.f32.mrf.mxu0
      %v5661 = vpop.f32.mrf.mxu0
      %v5662 = vadd.f32 %v5501, %v5661
      %v5663 = vpop.f32.mrf.mxu0
      %5664 = vmatprep.mubr.bf16.mxu0 %v4440
      %5665 = vmatmul.mubr.bf16.gmra.mxu0 %v4439
      %v5666 = vpop.f32.mrf.mxu0
      %v5667 = vadd.f32 %v5506, %v5666
      %v5668 = vpop.f32.mrf.mxu0
      %v5669 = vpop.f32.mrf.mxu0
      %v5670 = vadd.f32 %v5509, %v5669
      %v5671 = vpop.f32.mrf.mxu0
      %5672 = vmatprep.mubr.bf16.mxu0 %v4449
      %5673 = vmatmul.mubr.bf16.gmra.mxu0 %v4448
      %v5674 = vpop.f32.mrf.mxu0
      %v5675 = vadd.f32 %v5514, %v5674
      %v5676 = vpop.f32.mrf.mxu0
      %v5677 = vpop.f32.mrf.mxu0
      %v5678 = vadd.f32 %v5517, %v5677
      %v5679 = vpop.f32.mrf.mxu0
      %5680 = vmatprep.mubr.bf16.mxu0 %v4458
      %5681 = vmatmul.mubr.bf16.gmra.mxu0 %v4457
      %v5682 = vpop.f32.mrf.mxu0
      %v5683 = vadd.f32 %v5522, %v5682
      %v5684 = vpop.f32.mrf.mxu0
      %v5685 = vpop.f32.mrf.mxu0
      %v5686 = vadd.f32 %v5525, %v5685
      %v5687 = vpop.f32.mrf.mxu0
      %5688 = vmatprep.mubr.bf16.mxu0 %v4467
      %5689 = vmatmul.mubr.bf16.gmra.mxu0 %v4466
      %v5690 = vpop.f32.mrf.mxu0
      %v5691 = vadd.f32 %v5530, %v5690
      %v5692 = vpop.f32.mrf.mxu0
      %v5693 = vpop.f32.mrf.mxu0
      %v5694 = vadd.f32 %v5533, %v5693
      %v5695 = vpop.f32.mrf.mxu0
      %5696 = vmatprep.mubr.bf16.mxu0 %v4476
      %5697 = vmatmul.mubr.bf16.gmra.mxu0 %v4475
      %v5698 = vpop.f32.mrf.mxu0
      %v5699 = vadd.f32 %v5538, %v5698
      %v5700 = vpop.f32.mrf.mxu0
      %v5701 = vpop.f32.mrf.mxu0
      %v5702 = vadd.f32 %v5541, %v5701
      %v5703 = vpop.f32.mrf.mxu0
      %5704 = vmatprep.mubr.bf16.mxu0 %v4485
      %5705 = vmatmul.mubr.bf16.gmra.mxu0 %v4484
      %v5706 = vpop.f32.mrf.mxu0
      %v5707 = vadd.f32 %v5546, %v5706
      %v5708 = vpop.f32.mrf.mxu0
      %v5709 = vpop.f32.mrf.mxu0
      %v5710 = vadd.f32 %v5549, %v5709
      %v5711 = vpop.f32.mrf.mxu0
      %5712 = vmatprep.mubr.bf16.mxu0 %v4494
      %5713 = vmatmul.mubr.bf16.gmra.mxu0 %v4493
      %v5714 = vpop.f32.mrf.mxu0
      %v5715 = vadd.f32 %v5554, %v5714
      %v5716 = vpop.f32.mrf.mxu0
      %v5717 = vpop.f32.mrf.mxu0
      %v5718 = vadd.f32 %v5557, %v5717
      %v5719 = vpop.f32.mrf.mxu0
      %5720 = vmatprep.mubr.bf16.mxu0 %v4503
      %5721 = vmatmul.mubr.bf16.gmra.mxu0 %v4502
      %v5722 = vpop.f32.mrf.mxu0
      %v5723 = vadd.f32 %v5562, %v5722
      %v5724 = vpop.f32.mrf.mxu0
      %v5725 = vpop.f32.mrf.mxu0
      %v5726 = vadd.f32 %v5565, %v5725
      %v5727 = vpop.f32.mrf.mxu0
      %5728 = vmatprep.mubr.bf16.mxu0 %v4512
      %5729 = vmatmul.mubr.bf16.gmra.mxu0 %v4511
      %v5730 = vpop.f32.mrf.mxu0
      %v5731 = vadd.f32 %v5570, %v5730
      %v5732 = vpop.f32.mrf.mxu0
      %v5733 = vpop.f32.mrf.mxu0
      %v5734 = vadd.f32 %v5573, %v5733
      %v5735 = vpop.f32.mrf.mxu0
      %5736 = vmatprep.mubr.bf16.mxu0 %v4521
      %5737 = vmatmul.mubr.bf16.gmra.mxu0 %v4520
      %v5738 = vpop.f32.mrf.mxu0
      %v5739 = vadd.f32 %v5578, %v5738
      %v5740 = vpop.f32.mrf.mxu0
      %v5741 = vpop.f32.mrf.mxu0
      %v5742 = vadd.f32 %v5581, %v5741
      %v5743 = vpop.f32.mrf.mxu0
      %5744 = vmatprep.mubr.bf16.mxu0 %v4530
      %5745 = vmatmul.mubr.bf16.gmra.mxu0 %v4529
      %v5746 = vpop.f32.mrf.mxu0
      %v5747 = vadd.f32 %v5586, %v5746
      %v5748 = vpop.f32.mrf.mxu0
      %v5749 = vpop.f32.mrf.mxu0
      %v5750 = vadd.f32 %v5589, %v5749
      %v5751 = vpop.f32.mrf.mxu0
      %5752 = vmatprep.mubr.bf16.mxu0 %v4539
      %5753 = vmatmul.mubr.bf16.gmra.mxu0 %v4538
      %v5754 = vpop.f32.mrf.mxu0
      %v5755 = vadd.f32 %v5594, %v5754
      %v5756 = vpop.f32.mrf.mxu0
      %v5757 = vpop.f32.mrf.mxu0
      %v5758 = vadd.f32 %v5597, %v5757
      %v5759 = vpop.f32.mrf.mxu0
      %5760 = vdwg.mxu0
      %5761 = vmatprep.subr.bf16.mxu0 0
      %5762 = vmatpush1.bf16.msra.mxu0 %v5044
      %5763 = vmatprep.subr.bf16.mxu0 0
      %5764 = vmatpush1.bf16.msra.mxu0 %v5043
      %5765 = vmatprep.subr.bf16.mxu0 0
      %5766 = vmatpush1.bf16.msra.mxu0 %v5042
      %5767 = vmatprep.subr.bf16.mxu0 0
      %5768 = vmatpush1.bf16.msra.mxu0 %v5041
      %5769 = vmatprep.subr.bf16.mxu0 0
      %5770 = vmatpush1.bf16.msra.mxu0 %v5040
      %5771 = vmatprep.subr.bf16.mxu0 0
      %5772 = vmatpush1.bf16.msra.mxu0 %v5039
      %5773 = vmatprep.subr.bf16.mxu0 0
      %5774 = vmatpush1.bf16.msra.mxu0 %v5038
      %5775 = vmatprep.subr.bf16.mxu0 0
      %5776 = vmatpush1.bf16.msra.mxu0 %v5037
      %5777 = vmatprep.subr.bf16.mxu0 0
      %5778 = vmatpush2.bf16.msra.mxu0 0
      %5779 = vmatprep.subr.bf16.mxu0 0
      %5780 = vmatpush2.bf16.msra.mxu0 0
      %5781 = vmatprep.subr.bf16.mxu0 0
      %5782 = vmatpush2.bf16.msra.mxu0 0
      %5783 = vmatprep.subr.bf16.mxu0 0
      %5784 = vmatpush2.bf16.msra.mxu0 0
      %5785 = vmatprep.subr.bf16.mxu0 0
      %5786 = vmatpush2.bf16.msra.mxu0 0
      %5787 = vmatprep.subr.bf16.mxu0 0
      %5788 = vmatpush2.bf16.msra.mxu0 0
      %5789 = vmatprep.subr.bf16.mxu0 0
      %5790 = vmatpush2.bf16.msra.mxu0 0
      %5791 = vmatprep.subr.bf16.mxu0 0
      %5792 = vmatpush2.bf16.msra.mxu0 0
      %5793 = vmatprep.mubr.bf16.mxu0 0
      %5794 = vmatmul.mubr.bf16.gmra.mxu0 %v4405
      %v5795 = vpop.f32.mrf.mxu0
      %v5796 = vadd.f32 %v5635, %v5795
      %v5797 = vpop.f32.mrf.mxu0
      %v5798 = vpop.f32.mrf.mxu0
      %v5799 = vadd.f32 %v5638, %v5798
      %v5800 = vpop.f32.mrf.mxu0
      %5801 = vmatprep.mubr.bf16.mxu0 0
      %5802 = vmatmul.mubr.bf16.gmra.mxu0 %v4414
      %v5803 = vpop.f32.mrf.mxu0
      %v5804 = vadd.f32 %v5643, %v5803
      %v5805 = vpop.f32.mrf.mxu0
      %v5806 = vpop.f32.mrf.mxu0
      %v5807 = vadd.f32 %v5646, %v5806
      %v5808 = vpop.f32.mrf.mxu0
      %5809 = vmatprep.mubr.bf16.mxu0 0
      %5810 = vmatmul.mubr.bf16.gmra.mxu0 %v4423
      %v5811 = vpop.f32.mrf.mxu0
      %v5812 = vadd.f32 %v5651, %v5811
      %v5813 = vpop.f32.mrf.mxu0
      %v5814 = vpop.f32.mrf.mxu0
      %v5815 = vadd.f32 %v5654, %v5814
      %v5816 = vpop.f32.mrf.mxu0
      %5817 = vmatprep.mubr.bf16.mxu0 0
      %5818 = vmatmul.mubr.bf16.gmra.mxu0 %v4432
      %v5819 = vpop.f32.mrf.mxu0
      %v5820 = vadd.f32 %v5659, %v5819
      %v5821 = vpop.f32.mrf.mxu0
      %v5822 = vpop.f32.mrf.mxu0
      %v5823 = vadd.f32 %v5662, %v5822
      %v5824 = vpop.f32.mrf.mxu0
      %5825 = vmatprep.mubr.bf16.mxu0 0
      %5826 = vmatmul.mubr.bf16.gmra.mxu0 %v4441
      %v5827 = vpop.f32.mrf.mxu0
      %v5828 = vadd.f32 %v5667, %v5827
      %v5829 = vpop.f32.mrf.mxu0
      %v5830 = vpop.f32.mrf.mxu0
      %v5831 = vadd.f32 %v5670, %v5830
      %v5832 = vpop.f32.mrf.mxu0
      %5833 = vmatprep.mubr.bf16.mxu0 0
      %5834 = vmatmul.mubr.bf16.gmra.mxu0 %v4450
      %v5835 = vpop.f32.mrf.mxu0
      %v5836 = vadd.f32 %v5675, %v5835
      %v5837 = vpop.f32.mrf.mxu0
      %v5838 = vpop.f32.mrf.mxu0
      %v5839 = vadd.f32 %v5678, %v5838
      %v5840 = vpop.f32.mrf.mxu0
      %5841 = vmatprep.mubr.bf16.mxu0 0
      %5842 = vmatmul.mubr.bf16.gmra.mxu0 %v4459
      %v5843 = vpop.f32.mrf.mxu0
      %v5844 = vadd.f32 %v5683, %v5843
      %v5845 = vpop.f32.mrf.mxu0
      %v5846 = vpop.f32.mrf.mxu0
      %v5847 = vadd.f32 %v5686, %v5846
      %v5848 = vpop.f32.mrf.mxu0
      %5849 = vmatprep.mubr.bf16.mxu0 0
      %5850 = vmatmul.mubr.bf16.gmra.mxu0 %v4468
      %v5851 = vpop.f32.mrf.mxu0
      %v5852 = vadd.f32 %v5691, %v5851
      %v5853 = vpop.f32.mrf.mxu0
      %v5854 = vpop.f32.mrf.mxu0
      %v5855 = vadd.f32 %v5694, %v5854
      %v5856 = vpop.f32.mrf.mxu0
      %5857 = vmatprep.mubr.bf16.mxu0 0
      %5858 = vmatmul.mubr.bf16.gmra.mxu0 %v4477
      %v5859 = vpop.f32.mrf.mxu0
      %v5860 = vadd.f32 %v5699, %v5859
      %v5861 = vpop.f32.mrf.mxu0
      %v5862 = vpop.f32.mrf.mxu0
      %v5863 = vadd.f32 %v5702, %v5862
      %v5864 = vpop.f32.mrf.mxu0
      %5865 = vmatprep.mubr.bf16.mxu0 0
      %5866 = vmatmul.mubr.bf16.gmra.mxu0 %v4486
      %v5867 = vpop.f32.mrf.mxu0
      %v5868 = vadd.f32 %v5707, %v5867
      %v5869 = vpop.f32.mrf.mxu0
      %v5870 = vpop.f32.mrf.mxu0
      %v5871 = vadd.f32 %v5710, %v5870
      %v5872 = vpop.f32.mrf.mxu0
      %5873 = vmatprep.mubr.bf16.mxu0 0
      %5874 = vmatmul.mubr.bf16.gmra.mxu0 %v4495
      %v5875 = vpop.f32.mrf.mxu0
      %v5876 = vadd.f32 %v5715, %v5875
      %v5877 = vpop.f32.mrf.mxu0
      %v5878 = vpop.f32.mrf.mxu0
      %v5879 = vadd.f32 %v5718, %v5878
      %v5880 = vpop.f32.mrf.mxu0
      %5881 = vmatprep.mubr.bf16.mxu0 0
      %5882 = vmatmul.mubr.bf16.gmra.mxu0 %v4504
      %v5883 = vpop.f32.mrf.mxu0
      %v5884 = vadd.f32 %v5723, %v5883
      %v5885 = vpop.f32.mrf.mxu0
      %v5886 = vpop.f32.mrf.mxu0
      %v5887 = vadd.f32 %v5726, %v5886
      %v5888 = vpop.f32.mrf.mxu0
      %5889 = vmatprep.mubr.bf16.mxu0 0
      %5890 = vmatmul.mubr.bf16.gmra.mxu0 %v4513
      %v5891 = vpop.f32.mrf.mxu0
      %v5892 = vadd.f32 %v5731, %v5891
      %v5893 = vpop.f32.mrf.mxu0
      %v5894 = vpop.f32.mrf.mxu0
      %v5895 = vadd.f32 %v5734, %v5894
      %v5896 = vpop.f32.mrf.mxu0
      %5897 = vmatprep.mubr.bf16.mxu0 0
      %5898 = vmatmul.mubr.bf16.gmra.mxu0 %v4522
      %v5899 = vpop.f32.mrf.mxu0
      %v5900 = vadd.f32 %v5739, %v5899
      %v5901 = vpop.f32.mrf.mxu0
      %v5902 = vpop.f32.mrf.mxu0
      %v5903 = vadd.f32 %v5742, %v5902
      %v5904 = vpop.f32.mrf.mxu0
      %5905 = vmatprep.mubr.bf16.mxu0 0
      %5906 = vmatmul.mubr.bf16.gmra.mxu0 %v4531
      %v5907 = vpop.f32.mrf.mxu0
      %v5908 = vadd.f32 %v5747, %v5907
      %v5909 = vpop.f32.mrf.mxu0
      %v5910 = vpop.f32.mrf.mxu0
      %v5911 = vadd.f32 %v5750, %v5910
      %v5912 = vpop.f32.mrf.mxu0
      %5913 = vmatprep.mubr.bf16.mxu0 0
      %5914 = vmatmul.mubr.bf16.gmra.mxu0 %v4540
      %v5915 = vpop.f32.mrf.mxu0
      %v5916 = vadd.f32 %v5755, %v5915
      %v5917 = vpop.f32.mrf.mxu0
      %v5918 = vpop.f32.mrf.mxu0
      %v5919 = vadd.f32 %v5758, %v5918
      %v5920 = vpop.f32.mrf.mxu0
      %5921 = vdwg.mxu0
      %v5922 = vpack.c.bf16 %v5799, %v5796
      %v5923 = vpack.c.bf16 %v5807, %v5804
      %v5924 = vpack.c.bf16 %v5815, %v5812
      %v5925 = vpack.c.bf16 %v5823, %v5820
      %v5926 = vpack.c.bf16 %v5831, %v5828
      %v5927 = vpack.c.bf16 %v5839, %v5836
      %v5928 = vpack.c.bf16 %v5847, %v5844
      %v5929 = vpack.c.bf16 %v5855, %v5852
      %v5930 = vpack.c.bf16 %v5863, %v5860
      %v5931 = vpack.c.bf16 %v5871, %v5868
      %v5932 = vpack.c.bf16 %v5879, %v5876
      %v5933 = vpack.c.bf16 %v5887, %v5884
      %v5934 = vpack.c.bf16 %v5895, %v5892
      %v5935 = vpack.c.bf16 %v5903, %v5900
      %v5936 = vpack.c.bf16 %v5911, %v5908
      %v5937 = vpack.c.bf16 %v5919, %v5916
      %v5954 = vunpack.c.l.b16 %v5922
      %v5955 = vunpack.c.h.b16 %v5922
      %v5956 = vunpack.c.l.b16 %v5923
      %v5957 = vunpack.c.h.b16 %v5923
      %v5958 = vunpack.c.l.b16 %v5924
      %v5959 = vunpack.c.h.b16 %v5924
      %v5960 = vunpack.c.l.b16 %v5925
      %v5961 = vunpack.c.h.b16 %v5925
      %v5962 = vunpack.c.l.b16 %v5926
      %v5963 = vunpack.c.h.b16 %v5926
      %v5964 = vunpack.c.l.b16 %v5927
      %v5965 = vunpack.c.h.b16 %v5927
      %v5966 = vunpack.c.l.b16 %v5928
      %v5967 = vunpack.c.h.b16 %v5928
      %v5968 = vunpack.c.l.b16 %v5929
      %v5969 = vunpack.c.h.b16 %v5929
      %v5970 = vunpack.c.l.b16 %v5930
      %v5971 = vunpack.c.h.b16 %v5930
      %v5972 = vunpack.c.l.b16 %v5931
      %v5973 = vunpack.c.h.b16 %v5931
      %v5974 = vunpack.c.l.b16 %v5932
      %v5975 = vunpack.c.h.b16 %v5932
      %v5976 = vunpack.c.l.b16 %v5933
      %v5977 = vunpack.c.h.b16 %v5933
      %v5978 = vunpack.c.l.b16 %v5934
      %v5979 = vunpack.c.h.b16 %v5934
      %v5980 = vunpack.c.l.b16 %v5935
      %v5981 = vunpack.c.h.b16 %v5935
      %v5982 = vunpack.c.l.b16 %v5936
      %v5983 = vunpack.c.h.b16 %v5936
      %v5984 = vunpack.c.l.b16 %v5937
      %v5985 = vunpack.c.h.b16 %v5937
      %v5986 = vpack.c.b16 %v5954, %v5954
      %v5987 = vpack.c.b16 %v5955, %v5955
      %v5988 = vpack.c.b16 %v5956, %v5956
      %v5989 = vpack.c.b16 %v5957, %v5957
      %v5990 = vpack.c.b16 %v5958, %v5958
      %v5991 = vpack.c.b16 %v5959, %v5959
      %v5992 = vpack.c.b16 %v5960, %v5960
      %v5993 = vpack.c.b16 %v5961, %v5961
      %v5994 = vpack.c.b16 %v5962, %v5962
      %v5995 = vpack.c.b16 %v5963, %v5963
      %v5996 = vpack.c.b16 %v5964, %v5964
      %v5997 = vpack.c.b16 %v5965, %v5965
      %v5998 = vpack.c.b16 %v5966, %v5966
      %v5999 = vpack.c.b16 %v5967, %v5967
      %v6000 = vpack.c.b16 %v5968, %v5968
      %v6001 = vpack.c.b16 %v5969, %v5969
      %v6002 = vpack.c.b16 %v5970, %v5970
      %v6003 = vpack.c.b16 %v5971, %v5971
      %v6004 = vpack.c.b16 %v5972, %v5972
      %v6005 = vpack.c.b16 %v5973, %v5973
      %v6006 = vpack.c.b16 %v5974, %v5974
      %v6007 = vpack.c.b16 %v5975, %v5975
      %v6008 = vpack.c.b16 %v5976, %v5976
      %v6009 = vpack.c.b16 %v5977, %v5977
      %v6010 = vpack.c.b16 %v5978, %v5978
      %v6011 = vpack.c.b16 %v5979, %v5979
      %v6012 = vpack.c.b16 %v5980, %v5980
      %v6013 = vpack.c.b16 %v5981, %v5981
      %v6014 = vpack.c.b16 %v5982, %v5982
      %v6015 = vpack.c.b16 %v5983, %v5983
      %v6016 = vpack.c.b16 %v5984, %v5984
      %v6017 = vpack.c.b16 %v5985, %v5985
      %6050 = vst [vmem:[%s260] sm:$0xf] %v5986
      %6051 = vst [vmem:[%s260 + $0x4] sm:$0xf] %v5987
      %6052 = vst [vmem:[%s260 + $0x8] sm:$0xf] %v5988
      %6053 = vst [vmem:[%s260 + $0xc] sm:$0xf] %v5989
      %6054 = vst [vmem:[%s260 + $0x10] sm:$0xf] %v5990
      %6055 = vst [vmem:[%s260 + $0x14] sm:$0xf] %v5991
      %6056 = vst [vmem:[%s260 + $0x18] sm:$0xf] %v5992
      %6057 = vst [vmem:[%s260 + $0x1c] sm:$0xf] %v5993
      %6058 = vst [vmem:[%s260 + $0x20] sm:$0xf] %v5994
      %6059 = vst [vmem:[%s260 + $0x24] sm:$0xf] %v5995
      %6060 = vst [vmem:[%s260 + $0x28] sm:$0xf] %v5996
      %6061 = vst [vmem:[%s260 + $0x2c] sm:$0xf] %v5997
      %6062 = vst [vmem:[%s260 + $0x30] sm:$0xf] %v5998
      %6063 = vst [vmem:[%s260 + $0x34] sm:$0xf] %v5999
      %6064 = vst [vmem:[%s260 + $0x38] sm:$0xf] %v6000
      %6065 = vst [vmem:[%s260 + $0x3c] sm:$0xf] %v6001
      %6066 = vst [vmem:[%s260 + $0x40] sm:$0xf] %v6002
      %6067 = vst [vmem:[%s260 + $0x44] sm:$0xf] %v6003
      %6068 = vst [vmem:[%s260 + $0x48] sm:$0xf] %v6004
      %6069 = vst [vmem:[%s260 + $0x4c] sm:$0xf] %v6005
      %6070 = vst [vmem:[%s260 + $0x50] sm:$0xf] %v6006
      %6071 = vst [vmem:[%s260 + $0x54] sm:$0xf] %v6007
      %6072 = vst [vmem:[%s260 + $0x58] sm:$0xf] %v6008
      %6073 = vst [vmem:[%s260 + $0x5c] sm:$0xf] %v6009
      %6074 = vst [vmem:[%s260 + $0x60] sm:$0xf] %v6010
      %6075 = vst [vmem:[%s260 + $0x64] sm:$0xf] %v6011
      %6076 = vst [vmem:[%s260 + $0x68] sm:$0xf] %v6012
      %6077 = vst [vmem:[%s260 + $0x6c] sm:$0xf] %v6013
      %6078 = vst [vmem:[%s260 + $0x70] sm:$0xf] %v6014
      %6079 = vst [vmem:[%s260 + $0x74] sm:$0xf] %v6015
      %6080 = vst [vmem:[%s260 + $0x78] sm:$0xf] %v6016
      %6081 = vst [vmem:[%s260 + $0x7c] sm:$0xf] %v6017
      %v6082 = vadd.f32 %v5796, %v5799
      %v6083 = vadd.f32 %v6082, %v5804
      %v6084 = vadd.f32 %v6083, %v5807
      %v6085 = vadd.f32 %v6084, %v5812
      %v6086 = vadd.f32 %v6085, %v5815
      %v6087 = vadd.f32 %v6086, %v5820
      %v6088 = vadd.f32 %v6087, %v5823
      %v6089 = vadd.f32 %v6088, %v5828
      %v6090 = vadd.f32 %v6089, %v5831
      %v6091 = vadd.f32 %v6090, %v5836
      %v6092 = vadd.f32 %v6091, %v5839
      %v6093 = vadd.f32 %v6092, %v5844
      %v6094 = vadd.f32 %v6093, %v5847
      %v6095 = vadd.f32 %v6094, %v5852
      %v6096 = vadd.f32 %v6095, %v5855
      %v6097 = vadd.f32 %v6096, %v5860
      %v6098 = vadd.f32 %v6097, %v5863
      %v6099 = vadd.f32 %v6098, %v5868
      %v6100 = vadd.f32 %v6099, %v5871
      %v6101 = vadd.f32 %v6100, %v5876
      %v6102 = vadd.f32 %v6101, %v5879
      %v6103 = vadd.f32 %v6102, %v5884
      %v6104 = vadd.f32 %v6103, %v5887
      %v6105 = vadd.f32 %v6104, %v5892
      %v6106 = vadd.f32 %v6105, %v5895
      %v6107 = vadd.f32 %v6106, %v5900
      %v6108 = vadd.f32 %v6107, %v5903
      %v6109 = vadd.f32 %v6108, %v5908
      %v6110 = vadd.f32 %v6109, %v5911
      %v6111 = vadd.f32 %v6110, %v5916
      %v6112 = vadd.f32 %v6111, %v5919
      %v6113 = vrot.slane %v6112, 4
      %v6114 = vadd.f32 %v6112, %v6113
      %v6115 = vrot.slane %v6114, 2
      %v6116 = vadd.f32 %v6114, %v6115
      %v6117 = vrot.slane %v6116, 1
      %v6118 = vadd.f32 %v6116, %v6117
      %v6119 = vmul.f32 %v6118, 0.00390625
      %v6120 = vsub.f32 %v5796, %v6119
      %v6121 = vsub.f32 %v5799, %v6119
      %v6122 = vsub.f32 %v5804, %v6119
      %v6123 = vsub.f32 %v5807, %v6119
      %v6124 = vsub.f32 %v5812, %v6119
      %v6125 = vsub.f32 %v5815, %v6119
      %v6126 = vsub.f32 %v5820, %v6119
      %v6127 = vsub.f32 %v5823, %v6119
      %v6128 = vsub.f32 %v5828, %v6119
      %v6129 = vsub.f32 %v5831, %v6119
      %v6130 = vsub.f32 %v5836, %v6119
      %v6131 = vsub.f32 %v5839, %v6119
      %v6132 = vsub.f32 %v5844, %v6119
      %v6133 = vsub.f32 %v5847, %v6119
      %v6134 = vsub.f32 %v5852, %v6119
      %v6135 = vsub.f32 %v5855, %v6119
      %v6136 = vsub.f32 %v5860, %v6119
      %v6137 = vsub.f32 %v5863, %v6119
      %v6138 = vsub.f32 %v5868, %v6119
      %v6139 = vsub.f32 %v5871, %v6119
      %v6140 = vsub.f32 %v5876, %v6119
      %v6141 = vsub.f32 %v5879, %v6119
      %v6142 = vsub.f32 %v5884, %v6119
      %v6143 = vsub.f32 %v5887, %v6119
      %v6144 = vsub.f32 %v5892, %v6119
      %v6145 = vsub.f32 %v5895, %v6119
      %v6146 = vsub.f32 %v5900, %v6119
      %v6147 = vsub.f32 %v5903, %v6119
      %v6148 = vsub.f32 %v5908, %v6119
      %v6149 = vsub.f32 %v5911, %v6119
      %v6150 = vsub.f32 %v5916, %v6119
      %v6151 = vsub.f32 %v5919, %v6119
      %v6152 = vmul.f32 %v6120, %v6120
      %v6153 = vmul.f32 %v6121, %v6121
      %v6154 = vmul.f32 %v6122, %v6122
      %v6155 = vmul.f32 %v6123, %v6123
      %v6156 = vmul.f32 %v6124, %v6124
      %v6157 = vmul.f32 %v6125, %v6125
      %v6158 = vmul.f32 %v6126, %v6126
      %v6159 = vmul.f32 %v6127, %v6127
      %v6160 = vmul.f32 %v6128, %v6128
      %v6161 = vmul.f32 %v6129, %v6129
      %v6162 = vmul.f32 %v6130, %v6130
      %v6163 = vmul.f32 %v6131, %v6131
      %v6164 = vmul.f32 %v6132, %v6132
      %v6165 = vmul.f32 %v6133, %v6133
      %v6166 = vmul.f32 %v6134, %v6134
      %v6167 = vmul.f32 %v6135, %v6135
      %v6168 = vmul.f32 %v6136, %v6136
      %v6169 = vmul.f32 %v6137, %v6137
      %v6170 = vmul.f32 %v6138, %v6138
      %v6171 = vmul.f32 %v6139, %v6139
      %v6172 = vmul.f32 %v6140, %v6140
      %v6173 = vmul.f32 %v6141, %v6141
      %v6174 = vmul.f32 %v6142, %v6142
      %v6175 = vmul.f32 %v6143, %v6143
      %v6176 = vmul.f32 %v6144, %v6144
      %v6177 = vmul.f32 %v6145, %v6145
      %v6178 = vmul.f32 %v6146, %v6146
      %v6179 = vmul.f32 %v6147, %v6147
      %v6180 = vmul.f32 %v6148, %v6148
      %v6181 = vmul.f32 %v6149, %v6149
      %v6182 = vmul.f32 %v6150, %v6150
      %v6183 = vmul.f32 %v6151, %v6151
      %v6184 = vadd.f32 %v6152, %v6153
      %v6185 = vadd.f32 %v6184, %v6154
      %v6186 = vadd.f32 %v6185, %v6155
      %v6187 = vadd.f32 %v6186, %v6156
      %v6188 = vadd.f32 %v6187, %v6157
      %v6189 = vadd.f32 %v6188, %v6158
      %v6190 = vadd.f32 %v6189, %v6159
      %v6191 = vadd.f32 %v6190, %v6160
      %v6192 = vadd.f32 %v6191, %v6161
      %v6193 = vadd.f32 %v6192, %v6162
      %v6194 = vadd.f32 %v6193, %v6163
      %v6195 = vadd.f32 %v6194, %v6164
      %v6196 = vadd.f32 %v6195, %v6165
      %v6197 = vadd.f32 %v6196, %v6166
      %v6198 = vadd.f32 %v6197, %v6167
      %v6199 = vadd.f32 %v6198, %v6168
      %v6200 = vadd.f32 %v6199, %v6169
      %v6201 = vadd.f32 %v6200, %v6170
      %v6202 = vadd.f32 %v6201, %v6171
      %v6203 = vadd.f32 %v6202, %v6172
      %v6204 = vadd.f32 %v6203, %v6173
      %v6205 = vadd.f32 %v6204, %v6174
      %v6206 = vadd.f32 %v6205, %v6175
      %v6207 = vadd.f32 %v6206, %v6176
      %v6208 = vadd.f32 %v6207, %v6177
      %v6209 = vadd.f32 %v6208, %v6178
      %v6210 = vadd.f32 %v6209, %v6179
      %v6211 = vadd.f32 %v6210, %v6180
      %v6212 = vadd.f32 %v6211, %v6181
      %v6213 = vadd.f32 %v6212, %v6182
      %v6214 = vadd.f32 %v6213, %v6183
      %v6215 = vrot.slane %v6214, 4
      %v6216 = vadd.f32 %v6214, %v6215
      %v6217 = vrot.slane %v6216, 2
      %v6218 = vadd.f32 %v6216, %v6217
      %v6219 = vrot.slane %v6218, 1
      %v6220 = vadd.f32 %v6218, %v6219
      %6221 = vst [vmem:[%s268] sm:$0x1] %v6118
      %6222 = vst [vmem:[%s268 + $0x1] sm:$0x1] %v6220
      %s6223 = smul.u32 16, %s22
      %p6224 = scmp.lt.s32.totalorder %s21, 1
      %s6225 = scalar_select %p6224, %s21, 1
      %p6226 = scmp.lt.s32.totalorder %s6223, 15
      %s6227 = scalar_select %p6226, %s6223, 15
      %s6228 = smul.addr %s6227, 2
      %s6229 = smul.addr %s6225, 32
      %s6230 = sadd.s32 %s6228, %s6229
      %s6231 = smul.addr %s6230, 4
      %s6232 = scalar_lea.vmem %s4, %s6231
      %p6233 = scmp.lt.s32.totalorder %s21, 1
      %s6234 = scalar_select %p6233, %s21, 1
      %p6235 = scmp.lt.s32.totalorder %s22, 0
      %s6236 = scalar_select %p6235, %s22, 0
      %s6237 = sadd.s32 %s6236, %s6234
      %s6238 = smul.addr %s6237, 2
      %s6239 = scalar_lea.vmem %s5, %s6238
      // Predicated region
      $region45: #{vgg_block.4} parent=35 // pred_check
        %p6240 = pneg %p138
      $region46: #{vgg_block.4} parent=35 // pred_check_branch
        %6242 = sbr.rel (%p6240) target = $region48
      $region47: #{vgg_block.4} parent=35 // pred_region
        %s6243 = smul.u32 16, %s22
      $region48: #{vgg_block.4} parent=35 // pred_fallthru
        _
      // Predicated region
      $region49: #{vgg_block.4} parent=35 // pred_check
        %p6244 = pneg %p166
      $region50: #{vgg_block.4} parent=35 // pred_check_branch
        %6246 = sbr.rel (%p6244) target = $region52
      $region51: #{vgg_block.4} parent=35 // pred_region
        _
      $region52: #{vgg_block.4} parent=35 // pred_fallthru
        _
    $region36: #{vgg_block.4} parent=5 // pred_fallthru
      _
    %p6247 = scmp.le.s32.totalorder 2, %s12
    // Predicated region
    $region53: #{vgg_block.4} parent=5 // pred_check
      %p6248 = pneg %p6247
    $region54: #{vgg_block.4} parent=5 // pred_check_branch
      %6250 = sbr.rel (%p6248) target = $region56
    $region55: #{vgg_block.4} parent=5 // pred_region
      %s6251 = ssub.s32 %s12, 2
      // Predicated region
      $region57: #{vgg_block.4} parent=55 // pred_check
        %p6252 = pneg %p144
      $region58: #{vgg_block.4} parent=55 // pred_check_branch
        %6254 = sbr.rel (%p6252) target = $region60
      $region59: #{vgg_block.4} parent=55 // pred_region
        %s6255 = smul.u32 16, %s24
        %p6256 = scmp.lt.s32.totalorder %s23, 1
        %s6257 = scalar_select %p6256, %s23, 1
        %p6258 = scmp.lt.s32.totalorder %s6255, 15
        %s6259 = scalar_select %p6258, %s6255, 15
        %s6260 = smul.addr %s6259, 2
        %s6261 = smul.addr %s6257, 32
        %s6262 = sadd.s32 %s6260, %s6261
        %s6263 = smul.addr %s6262, 4
        %s6264 = scalar_lea.vmem %s4, %s6263
      $region60: #{vgg_block.4} parent=55 // pred_fallthru
        _
      // Predicated region
      $region61: #{vgg_block.4} parent=55 // pred_check
        %p6265 = pneg %p172
      $region62: #{vgg_block.4} parent=55 // pred_check_branch
        %6267 = sbr.rel (%p6265) target = $region64
      $region63: #{vgg_block.4} parent=55 // pred_region
        %p6268 = scmp.lt.s32.totalorder %s23, 1
        %s6269 = scalar_select %p6268, %s23, 1
        %p6270 = scmp.lt.s32.totalorder %s24, 0
        %s6271 = scalar_select %p6270, %s24, 0
        %s6272 = sadd.s32 %s6271, %s6269
        %s6273 = smul.addr %s6272, 2
        %s6274 = scalar_lea.vmem %s5, %s6273
      $region64: #{vgg_block.4} parent=55 // pred_fallthru
        _
    $region56: #{vgg_block.4} parent=5 // pred_fallthru
      _
  $region6: #{vgg_block.4} parent=0 // loop_footer
    %s16 = sadd.s32 1, %s12
  $region7: #{vgg_block.4} parent=0 // loop_footer_branch
    %11 = sbr.rel target = $region3
  $region8: #{vgg_block.4} parent=0 // loop_exit
    _

</llo_original>
